<compile_context>
chip_gen: v5e
topology: v5e:2x2
jax: 0.10.0
libtpu: 0.0.40
codegen_flags: <defaults>
</compile_context>

<pallas_src>
import jax
import jax.numpy as jnp
from jax.experimental import pallas as pl
from jax.experimental.pallas import tpu as pltpu

_BN_EPS = 1e-5
_LANE = 128
_MXU_DTYPE = jnp.bfloat16                      # bf16 MXU operands / bf16 HBM intermediates
_MXU_BYTES = 2 if _MXU_DTYPE == jnp.bfloat16 else 4


def _round_up(x, m):
    return (x + m - 1) // m * m


def _vmem_budget_bytes():
    """~75% of this generation's physical per-core VMEM (48 MiB on v7x,
    96 MiB on v5e/v6e); conservative 48 MiB fallback if the query fails."""
    try:
        cap = int(pltpu.get_tpu_info().vmem_capacity_bytes)
    except Exception:
        cap = 64 * 1024 * 1024
    return max(32 * 1024 * 1024, (cap * 3) // 4)


def _largest_divisor_leq(n, cap):
    cap = max(1, min(n, int(cap)))
    for d in range(cap, 0, -1):
        if n % d == 0:
            return d
    return 1


def _pick_conv_tile_h(H, W, c_pad, n_branches, budget):
    """Largest row tile whose conv working set stays inside `budget`."""
    per_row = W * c_pad * (
        n_branches * _MXU_BYTES * 2      # streamed center tiles (double-buffered)
        + _MXU_BYTES * 2                 # streamed output tile (double-buffered)
        + n_branches * _MXU_BYTES        # zero-padded input slab
        + n_branches * 3 * _MXU_BYTES    # per-row-band im2col LHS
        + 4                              # f32 accumulator
        + n_branches * 4                 # f32 staging for fused BN / masks
    )
    fixed = (n_branches * 9 * c_pad * c_pad * _MXU_BYTES * 2   # resident weights (x2 buffers)
             + (2 << 20))                                      # halos, bias, compiler slack
    avail = max(int(budget * 0.7) - fixed, per_row)
    return int(max(1, min(avail // per_row, H, 1024)))


def _pick_ew_tile_h(Hp, W, c, budget):
    """Row tile for the memory-bound bn+relu epilogue (bigger is better)."""
    per_row = W * c * (2 * _MXU_BYTES + 2 * 4)   # double-buffered bf16 in + f32 out
    t = max(1, int((budget * 0.6) // per_row))
    return _largest_divisor_leq(Hp, t)


def _row_halos(x, tile_h):
    """Combined 1-row halo strips per row tile, shape (N, nt, 2, W, C):
    [:, i, 0] = row i*tile_h - 1 (zeros for i == 0),
    [:, i, 1] = row (i+1)*tile_h (zeros for the last tile)."""
    n, h, w, c = x.shape
    zero = jnp.zeros((n, 1, w, c), x.dtype)
    top = jnp.concatenate([zero, x[:, tile_h - 1:h - 1:tile_h]], axis=1)
    bot = jnp.concatenate([x[:, tile_h:h:tile_h], zero], axis=1)
    return jnp.stack([top, bot], axis=2)


# ---------------------------------------------------------------------------
# Kernels
# ---------------------------------------------------------------------------
def _make_conv_kernel(tH, W, cins, cout, in_affine, emit_stats, mask_rows, h_valid):
    """3x3 'same' conv (+bias) over `len(cins)` fused input branches.

    Each branch provides (center tile, combined top/bot halo block); the
    spatial zero pad is built in-kernel.  Optionally applies a per-channel
    affine+ReLU (fused BN of the previous layer) to the input, and emits
    per-tile sum / sum^2 partials of the (pre-BN) output for the next BN.
    `mask_rows` handles a zero-padded H (rows >= h_valid act as conv zero pad
    and are excluded from the statistics)."""
    nb = len(cins)

    def kernel(*refs):
        it = iter(refs)
        branches = [(next(it), next(it)) for _ in range(nb)]
        if in_affine:
            scale_ref = next(it)
            shift_ref = next(it)
        w_refs = [next(it) for _ in range(nb)]
        b_ref = next(it)
        o_ref = next(it)
        stats_ref = next(it) if emit_stats else None

        i = pl.program_id(1)
        nt = pl.num_programs(1)

        if mask_rows:
            ridx = jax.lax.broadcasted_iota(jnp.int32, (tH, 1), 0)
            row_ok = (i * tH + ridx) < h_valid                 # (tH, 1) bool
        if in_affine:
            s = scale_ref[...]
            sh = shift_ref[...]
            top_ok = (i > 0).astype(jnp.float32)
            bot_ok = (i < nt - 1).astype(jnp.float32)

        acc = jnp.zeros((tH * W, cout), jnp.float32)
        for (c_ref, h_ref), w_ref, cin in zip(branches, w_refs, cins):
            halo = h_ref[0, 0]                                 # (2, W, cin)
            top, bot = halo[0:1], halo[1:2]
            mid = c_ref[0]                                     # (tH, W, cin)
            if in_affine:
                # Fused BN(batch stats) + ReLU on the raw input, in f32; out-of-
                # image halo / padded rows must be zero *after* this transform.
                topf = jnp.maximum(top.astype(jnp.float32) * s + sh, 0.0) * top_ok
                midf = jnp.maximum(mid.astype(jnp.float32) * s + sh, 0.0)
                botf = jnp.maximum(bot.astype(jnp.float32) * s + sh, 0.0) * bot_ok
                if mask_rows:
                    midf = midf * row_ok[:, :, None].astype(jnp.float32)
                top = topf.astype(_MXU_DTYPE)
                mid = midf.astype(_MXU_DTYPE)
                bot = botf.astype(_MXU_DTYPE)
            else:
                top = top.astype(_MXU_DTYPE)
                mid = mid.astype(_MXU_DTYPE)
                bot = bot.astype(_MXU_DTYPE)
                if mask_rows:
                    mid = mid * row_ok[:, :, None].astype(_MXU_DTYPE)

            x = jnp.concatenate([top, mid, bot], axis=0)       # (tH+2, W, cin)
            zc = jnp.zeros((tH + 2, 1, cin), _MXU_DTYPE)
            xp = jnp.concatenate([zc, x, zc], axis=1)          # (tH+2, W+2, cin)

            # 3 accumulated dots (one per kernel-row band): the live im2col
            # buffer is (tH*W, 3*cin) instead of (tH*W, 9*cin); identical MACs.
            for dy in range(3):
                band = xp[dy:dy + tH]                          # (tH, W+2, cin)
                lhs = jnp.concatenate(
                    [band[:, dx:dx + W, :] for dx in range(3)],
                    axis=-1).reshape(tH * W, 3 * cin)
                acc = acc + jnp.dot(lhs, w_ref[dy * 3 * cin:(dy + 1) * 3 * cin, :],
                                    preferred_element_type=jnp.float32)

        y = acc + b_ref[...]                                   # + bias, f32
        o_ref[...] = y.reshape(1, tH, W, cout).astype(o_ref.dtype)

        if emit_stats:
            ys = y
            if mask_rows:
                rflat = jax.lax.broadcasted_iota(jnp.int32, (tH * W, 1), 0) // W
                ys = ys * ((i * tH + rflat) < h_valid).astype(jnp.float32)
            ps = jnp.sum(ys, axis=0, keepdims=True)            # (1, cout)
            pss = jnp.sum(ys * ys, axis=0, keepdims=True)      # (1, cout)
            # Pad to an 8-sublane block so the stats store is an unmasked vst.
            stats_ref[...] = jnp.concatenate(
                [ps, pss, jnp.zeros((6, cout), jnp.float32)],
                axis=0).reshape(1, 1, 8, cout)

    return kernel


def _bn_relu_kernel(x_ref, scale_ref, shift_ref, o_ref):
    x = x_ref[...].astype(jnp.float32)
    o_ref[...] = jnp.maximum(x * scale_ref[...] + shift_ref[...], 0.0)


# ---------------------------------------------------------------------------
# pallas_call builders
# ---------------------------------------------------------------------------
def _conv3x3_call(branches, weights, bias, *, tile_h, h_valid, vmem_limit,
                  in_affine=None, emit_stats=False, out_dtype=None):
    """branches: list of (center NHWC, halo (N,nt,2,W,C)) arrays.
    weights: list of (9*Cin_i, Cout) matrices (MXU dtype). bias: (1, Cout)."""
    N, Hp, W, _ = branches[0][0].shape
    cout = weights[0].shape[-1]
    cins = [b[0].shape[-1] for b in branches]
    nt = Hp // tile_h
    mask_rows = h_valid < Hp
    out_dtype = _MXU_DTYPE if out_dtype is None else out_dtype

    inputs, in_specs = [], []
    for (center, halos), cin in zip(branches, cins):
        inputs += [center, halos]
        in_specs += [
            pl.BlockSpec((1, tile_h, W, cin), lambda n, i: (n, i, 0, 0)),
            pl.BlockSpec((1, 1, 2, W, cin), lambda n, i: (n, i, 0, 0, 0)),
        ]
    if in_affine is not None:
        scale, shift = in_affine
        inputs += [scale, shift]
        in_specs += [pl.BlockSpec(scale.shape, lambda n, i: (0, 0)),
                     pl.BlockSpec(shift.shape, lambda n, i: (0, 0))]
    for w in weights:
        inputs.append(w)
        # Constant index_map -> weights stay VMEM-resident across grid steps.
        in_specs.append(pl.BlockSpec(w.shape, lambda n, i: (0, 0)))
    inputs.append(bias)
    in_specs.append(pl.BlockSpec(bias.shape, lambda n, i: (0, 0)))

    y_shape = jax.ShapeDtypeStruct((N, Hp, W, cout), out_dtype)
    y_spec = pl.BlockSpec((1, tile_h, W, cout), lambda n, i: (n, i, 0, 0))
    if emit_stats:
        out_shape = (y_shape, jax.ShapeDtypeStruct((N, nt, 8, cout), jnp.float32))
        out_specs = (y_spec,
                     pl.BlockSpec((1, 1, 8, cout), lambda n, i: (n, i, 0, 0)))
    else:
        out_shape, out_specs = y_shape, y_spec

    kernel = _make_conv_kernel(tile_h, W, cins, cout, in_affine is not None,
                               emit_stats, mask_rows, h_valid)
    return pl.pallas_call(
        kernel,
        grid=(N, nt),
        in_specs=in_specs,
        out_specs=out_specs,
        out_shape=out_shape,
        compiler_params=pltpu.CompilerParams(
            dimension_semantics=("parallel", "parallel"),
            vmem_limit_bytes=vmem_limit),
    )(*inputs)


def _bn_relu_call(x, scale, shift, tile_h, vmem_limit):
    N, Hp, W, C = x.shape
    nt = Hp // tile_h
    return pl.pallas_call(
        _bn_relu_kernel,
        grid=(N, nt),
        in_specs=[pl.BlockSpec((1, tile_h, W, C), lambda n, i: (n, i, 0, 0)),
                  pl.BlockSpec(scale.shape, lambda n, i: (0, 0)),
                  pl.BlockSpec(shift.shape, lambda n, i: (0, 0))],
        out_specs=pl.BlockSpec((1, tile_h, W, C), lambda n, i: (n, i, 0, 0)),
        out_shape=jax.ShapeDtypeStruct((N, Hp, W, C), jnp.float32),
        compiler_params=pltpu.CompilerParams(
            dimension_semantics=("parallel", "parallel"),
            vmem_limit_bytes=vmem_limit),
    )(x, scale, shift)


# ---------------------------------------------------------------------------
# Parameter prep / BN folding (tiny host/XLA-side math)
# ---------------------------------------------------------------------------
def _prep_params(params, c_pad, cd_pad):
    C = params["b_up"].shape[0]                    # left_channels

    def im2col_w(w, cin_pad):
        kh, kw, cin, cout = w.shape
        w = jnp.pad(w, ((0, 0), (0, 0), (0, cin_pad - cin), (0, c_pad - cout)))
        return w.reshape(kh * kw * cin_pad, c_pad).astype(_MXU_DTYPE)

    def bias(b):
        return jnp.pad(b, (0, c_pad - b.shape[0])).reshape(1, c_pad).astype(jnp.float32)

    def vec(v):
        return jnp.pad(v, (0, c_pad - v.shape[0])).astype(jnp.float32)

    # torch.cat((left, x), 1): input channels [0:C] = left, [C:2C] = up.
    w1_left = params["w1"][:, :, :C, :]
    w1_up = params["w1"][:, :, C:, :]
    return {
        "w_up": im2col_w(params["w_up"], cd_pad), "b_up": bias(params["b_up"]),
        "w1_left": im2col_w(w1_left, c_pad), "w1_up": im2col_w(w1_up, c_pad),
        "b1": bias(params["b1"]),
        "w2": im2col_w(params["w2"], c_pad), "b2": bias(params["b2"]),
        "g1": vec(params["g1"]), "be1": vec(params["be1"]),
        "g2": vec(params["g2"]), "be2": vec(params["be2"]),
    }


def _bn_scale_shift(stats, count, gamma, beta):
    """stats: (N, nt, 8, Cp) per-tile [sum, sum_sq, 0...] -> training-mode BN
    scale/shift (batch statistics, biased variance)."""
    s = jnp.sum(stats, axis=(0, 1))                          # (8, Cp)
    mean = s[0] / count
    var = jnp.maximum(s[1] / count - mean * mean, 0.0)
    inv = jax.lax.rsqrt(var + _BN_EPS)
    scale = gamma * inv
    shift = beta - mean * scale
    cp = scale.shape[0]
    return scale.reshape(1, cp), shift.reshape(1, cp)


# ---------------------------------------------------------------------------
# Public forward
# ---------------------------------------------------------------------------
def init_decoder_block_params(key, down_channels, left_channels):
    ks = jax.random.split(key, 10)
    cl = left_channels
    return {
        "w_up": 0.1 * jax.random.normal(ks[0], (3, 3, down_channels, cl), jnp.float32),
        "b_up": 0.1 * jax.random.normal(ks[1], (cl,), jnp.float32),
        "w1":   0.1 * jax.random.normal(ks[2], (3, 3, 2 * cl, cl), jnp.float32),
        "b1":   0.1 * jax.random.normal(ks[3], (cl,), jnp.float32),
        "g1":   1.0 + 0.1 * jax.random.normal(ks[4], (cl,), jnp.float32),
        "be1":  0.1 * jax.random.normal(ks[5], (cl,), jnp.float32),
        "w2":   0.1 * jax.random.normal(ks[6], (3, 3, cl, cl), jnp.float32),
        "b2":   0.1 * jax.random.normal(ks[7], (cl,), jnp.float32),
        "g2":   1.0 + 0.1 * jax.random.normal(ks[8], (cl,), jnp.float32),
        "be2":  0.1 * jax.random.normal(ks[9], (cl,), jnp.float32),
    }


def decoder_block_forward(down_nchw, left_nchw, params, *, tile_h=None):
    """Equivalent of DecoderBlock.forward. Inputs/outputs are NCHW like PyTorch."""
    down = jnp.transpose(down_nchw, (0, 2, 3, 1)).astype(jnp.float32)  # NHWC
    left = jnp.transpose(left_nchw, (0, 2, 3, 1)).astype(jnp.float32)  # NHWC
    N, H, W, _ = left.shape
    C = params["b_up"].shape[0]
    Cd = params["w_up"].shape[2]
    c_pad = _round_up(C, _LANE)
    cd_pad = _round_up(Cd, _LANE)

    if down.shape[1:3] != (H, W):
        # F.interpolate(mode='bilinear', align_corners=False) == half-pixel
        # centers; jax.image.resize matches for the upsampling case.
        down = jax.image.resize(down, (down.shape[0], H, W, down.shape[3]),
                                method="bilinear")

    budget = _vmem_budget_bytes()
    if tile_h is None:
        # Size the tile for the worst case (conv1 reads 2 input branches).
        tile_h = _pick_conv_tile_h(H, W, c_pad, 2, budget)
    tile_h = max(1, min(int(tile_h), H))
    H_pad = int(pl.cdiv(H, tile_h)) * tile_h            # masked in-kernel if > H
    ew_tile = _pick_ew_tile_h(H_pad, W, c_pad, budget)  # epilogue tile (bigger)

    def prep(x, cpad):
        # lane-aligned channels + row pad + bf16 storage, fused into one pass.
        return jnp.pad(x, ((0, 0), (0, H_pad - x.shape[1]), (0, 0),
                           (0, cpad - x.shape[-1]))).astype(_MXU_DTYPE)

    down = prep(down, cd_pad)
    left = prep(left, c_pad)

    p = _prep_params(params, c_pad, cd_pad)
    count = float(N * H * W)

    # --- upconv: 3x3 conv + bias; output channel-padded bf16 so conv1 reads
    # lane-dense, matmul-ready tiles straight from HBM.
    up = _conv3x3_call([(down, _row_halos(down, tile_h))], [p["w_up"]], p["b_up"],
                       tile_h=tile_h, h_valid=H, vmem_limit=budget)

    # --- conv1 with the channel concat fused as a split contraction
    # (cat((left, up), C) -> left @ W1[:C] + up @ W1[C:]); emits BN1 partials.
    y1, st1 = _conv3x3_call(
        [(left, _row_halos(left, tile_h)), (up, _row_halos(up, tile_h))],
        [p["w1_left"], p["w1_up"]], p["b1"],
        tile_h=tile_h, h_valid=H, emit_stats=True, vmem_limit=budget)
    scale1, shift1 = _bn_scale_shift(st1, count, p["g1"], p["be1"])

    # --- conv2 with bn1+relu1 fused on its input side; emits BN2 partials.
    y2, st2 = _conv3x3_call([(y1, _row_halos(y1, tile_h))], [p["w2"]], p["b2"],
                            tile_h=tile_h, h_valid=H,
                            in_affine=(scale1, shift1), emit_stats=True,
                            vmem_limit=budget)
    scale2, shift2 = _bn_scale_shift(st2, count, p["g2"], p["be2"])

    # --- bn2 + relu2 epilogue (memory-bound; runs on its own larger tile).
    out = _bn_relu_call(y2, scale2, shift2, ew_tile, budget)

    return jnp.transpose(out[:, :H, :, :C], (0, 3, 1, 2))     # back to NCHW


# ---------------------------------------------------------------------------
# Pure-JAX reference (for self-check)
# ---------------------------------------------------------------------------
def _reference_forward(down_nchw, left_nchw, params):
    down = jnp.transpose(down_nchw, (0, 2, 3, 1)).astype(jnp.float32)
    left = jnp.transpose(left_nchw, (0, 2, 3, 1)).astype(jnp.float32)
    if down.shape[1:3] != left.shape[1:3]:
        down = jax.image.resize(
            down, (down.shape[0], left.shape[1], left.shape[2], down.shape[3]),
            method="bilinear")

    def conv(x, w, b):
        y = jax.lax.conv_general_dilated(
            x, w, (1, 1), "SAME", dimension_numbers=("NHWC", "HWIO", "NHWC"))
        return y + b

    def bn_relu(x, g, be):
        m = jnp.mean(x, axis=(0, 1, 2))
        v = jnp.var(x, axis=(0, 1, 2))
        return jnp.maximum((x - m) * jax.lax.rsqrt(v + _BN_EPS) * g + be, 0.0)

    up = conv(down, params["w_up"], params["b_up"])
    x = jnp.concatenate([left, up], axis=-1)
    x = bn_relu(conv(x, params["w1"], params["b1"]), params["g1"], params["be1"])
    x = bn_relu(conv(x, params["w2"], params["b2"]), params["g2"], params["be2"])
    return jnp.transpose(x, (0, 3, 1, 2))


if __name__ == "__main__":
    key = jax.random.PRNGKey(0)
    k_down, k_left, k_par = jax.random.split(key, 3)

    down_channels, left_channels = 8, 4
    # down at half resolution -> exercises the bilinear-resize branch.
    down = jax.random.normal(k_down, (2, down_channels, 8, 8), jnp.float32)    # NCHW
    left = jax.random.normal(k_left, (2, left_channels, 16, 16), jnp.float32)  # NCHW
    params = init_decoder_block_params(k_par, down_channels, left_channels)

    fwd = jax.jit(decoder_block_forward, static_argnames=("tile_h",))
    ref = _reference_forward(down, left, params)

    def check(out):
        assert out.shape == (2, left_channels, 16, 16), out.shape
        assert bool(jnp.all(jnp.isfinite(out)))
        assert bool(jnp.all(out >= 0.0))          # final ReLU
        max_err = float(jnp.max(jnp.abs(out - ref)))
        rel_err = float(jnp.linalg.norm(out - ref) / (jnp.linalg.norm(ref) + 1e-12))
        assert max_err < 3e-1 and rel_err < 7e-2, (max_err, rel_err)  # bf16 tol

    # tile_h=8 -> 2 row tiles per image: exercises the halo path.
    out = fwd(down, left, params, tile_h=8)
    jax.block_until_ready(out)
    check(out)

    # tile_h=6 does not divide H=16 -> exercises the padded/masked last tile.
    out2 = fwd(down, left, params, tile_h=6)
    jax.block_until_ready(out2)
    check(out2)

    print("KERNEL_OK")
</pallas_src>

<mosaic_0001>
module attributes {stable_mosaic.version = 11 : i64} {
  func.func @kernel(%arg0: i32, %arg1: i32, %arg2: memref<1x8x16x128xbf16, #tpu.memory_space<vmem>>, %arg3: memref<1x1x2x16x128xbf16, #tpu.memory_space<vmem>>, %arg4: memref<1152x128xbf16, #tpu.memory_space<vmem>>, %arg5: memref<1x128xf32, #tpu.memory_space<vmem>>, %arg6: memref<1x8x16x128xbf16, #tpu.memory_space<vmem>>) attributes {dimension_semantics = [#tpu.dimension_semantics<parallel>, #tpu.dimension_semantics<parallel>], iteration_bounds = array<i64: 2, 2>, scalar_prefetch = 0 : i64, scratch_operands = 0 : i64, tpu.core_type = #tpu.core_type<tc>, window_params = [{transform_indices = @transform_0, window_bounds = array<i64: 1, 8, 16, 128>}, {transform_indices = @transform_1, window_bounds = array<i64: 1, 1, 2, 16, 128>}, {pipeline_mode = #tpu.pipeline_mode<synchronous>, transform_indices = @transform_2, window_bounds = array<i64: 1152, 128>}, {pipeline_mode = #tpu.pipeline_mode<synchronous>, transform_indices = @transform_3, window_bounds = array<i64: 1, 128>}, {transform_indices = @transform_4, window_bounds = array<i64: 1, 8, 16, 128>}]} {
    %cst = arith.constant 0.000000e+00 : f32
    %0 = vector.broadcast %cst : f32 to vector<128x128xf32>
    %c0 = arith.constant 0 : index
    %c0_0 = arith.constant 0 : index
    %c0_1 = arith.constant 0 : index
    %c0_2 = arith.constant 0 : index
    %c0_3 = arith.constant 0 : index
    %1 = vector.load %arg3[%c0, %c0_0, %c0_1, %c0_2, %c0_3] : memref<1x1x2x16x128xbf16, #tpu.memory_space<vmem>>, vector<1x1x2x16x128xbf16>
    %2 = vector.shape_cast %1 : vector<1x1x2x16x128xbf16> to vector<2x16x128xbf16>
    %3 = vector.extract_strided_slice %2 {offsets = [0, 0, 0], sizes = [1, 16, 128], strides = [1, 1, 1]} : vector<2x16x128xbf16> to vector<1x16x128xbf16>
    %4 = vector.extract_strided_slice %2 {offsets = [1, 0, 0], sizes = [1, 16, 128], strides = [1, 1, 1]} : vector<2x16x128xbf16> to vector<1x16x128xbf16>
    %c0_4 = arith.constant 0 : index
    %c0_5 = arith.constant 0 : index
    %c0_6 = arith.constant 0 : index
    %c0_7 = arith.constant 0 : index
    %5 = vector.load %arg2[%c0_4, %c0_5, %c0_6, %c0_7] : memref<1x8x16x128xbf16, #tpu.memory_space<vmem>>, vector<1x8x16x128xbf16>
    %6 = vector.shape_cast %5 : vector<1x8x16x128xbf16> to vector<8x16x128xbf16>
    %7 = tpu.concatenate %3, %6, %4 in 0 : vector<1x16x128xbf16>, vector<8x16x128xbf16>, vector<1x16x128xbf16> -> vector<10x16x128xbf16>
    %cst_8 = arith.constant 0.000000e+00 : bf16
    %8 = vector.broadcast %cst_8 : bf16 to vector<10x1x128xbf16>
    %9 = tpu.concatenate %8, %7, %8 in 1 : vector<10x1x128xbf16>, vector<10x16x128xbf16>, vector<10x1x128xbf16> -> vector<10x18x128xbf16>
    %10 = vector.extract_strided_slice %9 {offsets = [0, 0, 0], sizes = [8, 18, 128], strides = [1, 1, 1]} : vector<10x18x128xbf16> to vector<8x18x128xbf16>
    %11 = vector.extract_strided_slice %10 {offsets = [0, 0, 0], sizes = [8, 16, 128], strides = [1, 1, 1]} : vector<8x18x128xbf16> to vector<8x16x128xbf16>
    %12 = vector.extract_strided_slice %10 {offsets = [0, 1, 0], sizes = [8, 16, 128], strides = [1, 1, 1]} : vector<8x18x128xbf16> to vector<8x16x128xbf16>
    %13 = vector.extract_strided_slice %10 {offsets = [0, 2, 0], sizes = [8, 16, 128], strides = [1, 1, 1]} : vector<8x18x128xbf16> to vector<8x16x128xbf16>
    %14 = tpu.concatenate %11, %12, %13 in 2 : vector<8x16x128xbf16>, vector<8x16x128xbf16>, vector<8x16x128xbf16> -> vector<8x16x384xbf16>
    %15 = vector.shape_cast %14 : vector<8x16x384xbf16> to vector<128x384xbf16>
    %c0_9 = arith.constant 0 : index
    %c0_10 = arith.constant 0 : index
    %16 = vector.load %arg4[%c0_9, %c0_10] : memref<1152x128xbf16, #tpu.memory_space<vmem>>, vector<384x128xbf16>
    %cst_11 = arith.constant dense<0.000000e+00> : vector<128x128xf32>
    %17 = tpu.matmul %15, %16, %cst_11 {dimension_numbers = #tpu.dot_dimension_numbers<[1], [0], [0], [1], [0, 0, 1, 1], [], []>} : vector<128x384xbf16>, vector<384x128xbf16>, vector<128x128xf32> -> vector<128x128xf32>
    %18 = arith.addf %0, %17 : vector<128x128xf32>
    %19 = vector.extract_strided_slice %9 {offsets = [1, 0, 0], sizes = [8, 18, 128], strides = [1, 1, 1]} : vector<10x18x128xbf16> to vector<8x18x128xbf16>
    %20 = vector.extract_strided_slice %19 {offsets = [0, 0, 0], sizes = [8, 16, 128], strides = [1, 1, 1]} : vector<8x18x128xbf16> to vector<8x16x128xbf16>
    %21 = vector.extract_strided_slice %19 {offsets = [0, 1, 0], sizes = [8, 16, 128], strides = [1, 1, 1]} : vector<8x18x128xbf16> to vector<8x16x128xbf16>
    %22 = vector.extract_strided_slice %19 {offsets = [0, 2, 0], sizes = [8, 16, 128], strides = [1, 1, 1]} : vector<8x18x128xbf16> to vector<8x16x128xbf16>
    %23 = tpu.concatenate %20, %21, %22 in 2 : vector<8x16x128xbf16>, vector<8x16x128xbf16>, vector<8x16x128xbf16> -> vector<8x16x384xbf16>
    %24 = vector.shape_cast %23 : vector<8x16x384xbf16> to vector<128x384xbf16>
    %c384 = arith.constant 384 : index
    %c0_12 = arith.constant 0 : index
    %25 = vector.load %arg4[%c384, %c0_12] : memref<1152x128xbf16, #tpu.memory_space<vmem>>, vector<384x128xbf16>
    %cst_13 = arith.constant dense<0.000000e+00> : vector<128x128xf32>
    %26 = tpu.matmul %24, %25, %cst_13 {dimension_numbers = #tpu.dot_dimension_numbers<[1], [0], [0], [1], [0, 0, 1, 1], [], []>} : vector<128x384xbf16>, vector<384x128xbf16>, vector<128x128xf32> -> vector<128x128xf32>
    %27 = arith.addf %18, %26 : vector<128x128xf32>
    %28 = vector.extract_strided_slice %9 {offsets = [2, 0, 0], sizes = [8, 18, 128], strides = [1, 1, 1]} : vector<10x18x128xbf16> to vector<8x18x128xbf16>
    %29 = vector.extract_strided_slice %28 {offsets = [0, 0, 0], sizes = [8, 16, 128], strides = [1, 1, 1]} : vector<8x18x128xbf16> to vector<8x16x128xbf16>
    %30 = vector.extract_strided_slice %28 {offsets = [0, 1, 0], sizes = [8, 16, 128], strides = [1, 1, 1]} : vector<8x18x128xbf16> to vector<8x16x128xbf16>
    %31 = vector.extract_strided_slice %28 {offsets = [0, 2, 0], sizes = [8, 16, 128], strides = [1, 1, 1]} : vector<8x18x128xbf16> to vector<8x16x128xbf16>
    %32 = tpu.concatenate %29, %30, %31 in 2 : vector<8x16x128xbf16>, vector<8x16x128xbf16>, vector<8x16x128xbf16> -> vector<8x16x384xbf16>
    %33 = vector.shape_cast %32 : vector<8x16x384xbf16> to vector<128x384xbf16>
    %c768 = arith.constant 768 : index
    %c0_14 = arith.constant 0 : index
    %34 = vector.load %arg4[%c768, %c0_14] : memref<1152x128xbf16, #tpu.memory_space<vmem>>, vector<384x128xbf16>
    %cst_15 = arith.constant dense<0.000000e+00> : vector<128x128xf32>
    %35 = tpu.matmul %33, %34, %cst_15 {dimension_numbers = #tpu.dot_dimension_numbers<[1], [0], [0], [1], [0, 0, 1, 1], [], []>} : vector<128x384xbf16>, vector<384x128xbf16>, vector<128x128xf32> -> vector<128x128xf32>
    %36 = arith.addf %27, %35 : vector<128x128xf32>
    %c0_16 = arith.constant 0 : index
    %c0_17 = arith.constant 0 : index
    %37 = vector.load %arg5[%c0_16, %c0_17] : memref<1x128xf32, #tpu.memory_space<vmem>>, vector<1x128xf32>
    %38 = vector.broadcast %37 : vector<1x128xf32> to vector<128x128xf32>
    %39 = arith.addf %36, %38 : vector<128x128xf32>
    %40 = vector.shape_cast %39 : vector<128x128xf32> to vector<1x8x16x128xf32>
    %41 = arith.truncf %40 : vector<1x8x16x128xf32> to vector<1x8x16x128xbf16>
    %c0_18 = arith.constant 0 : index
    %c0_19 = arith.constant 0 : index
    %c0_20 = arith.constant 0 : index
    %c0_21 = arith.constant 0 : index
    %42 = vector.load %arg6[%c0_18, %c0_19, %c0_20, %c0_21] : memref<1x8x16x128xbf16, #tpu.memory_space<vmem>>, vector<1x8x16x128xbf16>
    tpu.vector_store %arg6[%c0_18, %c0_19, %c0_20, %c0_21], %41 {strides = array<i32>} : memref<1x8x16x128xbf16, #tpu.memory_space<vmem>>, vector<1x8x16x128xbf16>,
    return
  }
  func.func @transform_0(%arg0: i32, %arg1: i32) -> (i32, i32, i32, i32) {
    %c0_i32 = arith.constant 0 : i32
    %c0_i32_0 = arith.constant 0 : i32
    %c0_i32_1 = arith.constant 0 : i32
    return %arg0, %arg1, %c0_i32, %c0_i32_0 : i32, i32, i32, i32
  }
  func.func @transform_1(%arg0: i32, %arg1: i32) -> (i32, i32, i32, i32, i32) {
    %c0_i32 = arith.constant 0 : i32
    %c0_i32_0 = arith.constant 0 : i32
    %c0_i32_1 = arith.constant 0 : i32
    %c0_i32_2 = arith.constant 0 : i32
    return %arg0, %arg1, %c0_i32, %c0_i32_0, %c0_i32_1 : i32, i32, i32, i32, i32
  }
  func.func @transform_2(%arg0: i32, %arg1: i32) -> (i32, i32) {
    %c0_i32 = arith.constant 0 : i32
    %c0_i32_0 = arith.constant 0 : i32
    %c0_i32_1 = arith.constant 0 : i32
    return %c0_i32, %c0_i32_0 : i32, i32
  }
  func.func @transform_3(%arg0: i32, %arg1: i32) -> (i32, i32) {
    %c0_i32 = arith.constant 0 : i32
    %c0_i32_0 = arith.constant 0 : i32
    %c0_i32_1 = arith.constant 0 : i32
    return %c0_i32, %c0_i32_0 : i32, i32
  }
  func.func @transform_4(%arg0: i32, %arg1: i32) -> (i32, i32, i32, i32) {
    %c0_i32 = arith.constant 0 : i32
    %c0_i32_0 = arith.constant 0 : i32
    %c0_i32_1 = arith.constant 0 : i32
    return %arg0, %arg1, %c0_i32, %c0_i32_0 : i32, i32, i32, i32
  }
}

module attributes {stable_mosaic.version = 11 : i64} {
  func.func @kernel(%arg0: i32, %arg1: i32, %arg2: memref<1x8x16x128xbf16, #tpu.memory_space<vmem>>, %arg3: memref<1x1x2x16x128xbf16, #tpu.memory_space<vmem>>, %arg4: memref<1x8x16x128xbf16, #tpu.memory_space<vmem>>, %arg5: memref<1x1x2x16x128xbf16, #tpu.memory_space<vmem>>, %arg6: memref<1152x128xbf16, #tpu.memory_space<vmem>>, %arg7: memref<1152x128xbf16, #tpu.memory_space<vmem>>, %arg8: memref<1x128xf32, #tpu.memory_space<vmem>>, %arg9: memref<1x8x16x128xbf16, #tpu.memory_space<vmem>>, %arg10: memref<1x1x8x128xf32, #tpu.memory_space<vmem>>) attributes {dimension_semantics = [#tpu.dimension_semantics<parallel>, #tpu.dimension_semantics<parallel>], iteration_bounds = array<i64: 2, 2>, scalar_prefetch = 0 : i64, scratch_operands = 0 : i64, tpu.core_type = #tpu.core_type<tc>, window_params = [{transform_indices = @transform_0, window_bounds = array<i64: 1, 8, 16, 128>}, {transform_indices = @transform_1, window_bounds = array<i64: 1, 1, 2, 16, 128>}, {transform_indices = @transform_2, window_bounds = array<i64: 1, 8, 16, 128>}, {transform_indices = @transform_3, window_bounds = array<i64: 1, 1, 2, 16, 128>}, {pipeline_mode = #tpu.pipeline_mode<synchronous>, transform_indices = @transform_4, window_bounds = array<i64: 1152, 128>}, {pipeline_mode = #tpu.pipeline_mode<synchronous>, transform_indices = @transform_5, window_bounds = array<i64: 1152, 128>}, {pipeline_mode = #tpu.pipeline_mode<synchronous>, transform_indices = @transform_6, window_bounds = array<i64: 1, 128>}, {transform_indices = @transform_7, window_bounds = array<i64: 1, 8, 16, 128>}, {transform_indices = @transform_8, window_bounds = array<i64: 1, 1, 8, 128>}]} {
    %cst = arith.constant 0.000000e+00 : f32
    %0 = vector.broadcast %cst : f32 to vector<128x128xf32>
    %c0 = arith.constant 0 : index
    %c0_0 = arith.constant 0 : index
    %c0_1 = arith.constant 0 : index
    %c0_2 = arith.constant 0 : index
    %c0_3 = arith.constant 0 : index
    %1 = vector.load %arg3[%c0, %c0_0, %c0_1, %c0_2, %c0_3] : memref<1x1x2x16x128xbf16, #tpu.memory_space<vmem>>, vector<1x1x2x16x128xbf16>
    %2 = vector.shape_cast %1 : vector<1x1x2x16x128xbf16> to vector<2x16x128xbf16>
    %3 = vector.extract_strided_slice %2 {offsets = [0, 0, 0], sizes = [1, 16, 128], strides = [1, 1, 1]} : vector<2x16x128xbf16> to vector<1x16x128xbf16>
    %4 = vector.extract_strided_slice %2 {offsets = [1, 0, 0], sizes = [1, 16, 128], strides = [1, 1, 1]} : vector<2x16x128xbf16> to vector<1x16x128xbf16>
    %c0_4 = arith.constant 0 : index
    %c0_5 = arith.constant 0 : index
    %c0_6 = arith.constant 0 : index
    %c0_7 = arith.constant 0 : index
    %5 = vector.load %arg2[%c0_4, %c0_5, %c0_6, %c0_7] : memref<1x8x16x128xbf16, #tpu.memory_space<vmem>>, vector<1x8x16x128xbf16>
    %6 = vector.shape_cast %5 : vector<1x8x16x128xbf16> to vector<8x16x128xbf16>
    %7 = tpu.concatenate %3, %6, %4 in 0 : vector<1x16x128xbf16>, vector<8x16x128xbf16>, vector<1x16x128xbf16> -> vector<10x16x128xbf16>
    %cst_8 = arith.constant 0.000000e+00 : bf16
    %8 = vector.broadcast %cst_8 : bf16 to vector<10x1x128xbf16>
    %9 = tpu.concatenate %8, %7, %8 in 1 : vector<10x1x128xbf16>, vector<10x16x128xbf16>, vector<10x1x128xbf16> -> vector<10x18x128xbf16>
    %10 = vector.extract_strided_slice %9 {offsets = [0, 0, 0], sizes = [8, 18, 128], strides = [1, 1, 1]} : vector<10x18x128xbf16> to vector<8x18x128xbf16>
    %11 = vector.extract_strided_slice %10 {offsets = [0, 0, 0], sizes = [8, 16, 128], strides = [1, 1, 1]} : vector<8x18x128xbf16> to vector<8x16x128xbf16>
    %12 = vector.extract_strided_slice %10 {offsets = [0, 1, 0], sizes = [8, 16, 128], strides = [1, 1, 1]} : vector<8x18x128xbf16> to vector<8x16x128xbf16>
    %13 = vector.extract_strided_slice %10 {offsets = [0, 2, 0], sizes = [8, 16, 128], strides = [1, 1, 1]} : vector<8x18x128xbf16> to vector<8x16x128xbf16>
    %14 = tpu.concatenate %11, %12, %13 in 2 : vector<8x16x128xbf16>, vector<8x16x128xbf16>, vector<8x16x128xbf16> -> vector<8x16x384xbf16>
    %15 = vector.shape_cast %14 : vector<8x16x384xbf16> to vector<128x384xbf16>
    %c0_9 = arith.constant 0 : index
    %c0_10 = arith.constant 0 : index
    %16 = vector.load %arg6[%c0_9, %c0_10] : memref<1152x128xbf16, #tpu.memory_space<vmem>>, vector<384x128xbf16>
    %cst_11 = arith.constant dense<0.000000e+00> : vector<128x128xf32>
    %17 = tpu.matmul %15, %16, %cst_11 {dimension_numbers = #tpu.dot_dimension_numbers<[1], [0], [0], [1], [0, 0, 1, 1], [], []>} : vector<128x384xbf16>, vector<384x128xbf16>, vector<128x128xf32> -> vector<128x128xf32>
    %18 = arith.addf %0, %17 : vector<128x128xf32>
    %19 = vector.extract_strided_slice %9 {offsets = [1, 0, 0], sizes = [8, 18, 128], strides = [1, 1, 1]} : vector<10x18x128xbf16> to vector<8x18x128xbf16>
    %20 = vector.extract_strided_slice %19 {offsets = [0, 0, 0], sizes = [8, 16, 128], strides = [1, 1, 1]} : vector<8x18x128xbf16> to vector<8x16x128xbf16>
    %21 = vector.extract_strided_slice %19 {offsets = [0, 1, 0], sizes = [8, 16, 128], strides = [1, 1, 1]} : vector<8x18x128xbf16> to vector<8x16x128xbf16>
    %22 = vector.extract_strided_slice %19 {offsets = [0, 2, 0], sizes = [8, 16, 128], strides = [1, 1, 1]} : vector<8x18x128xbf16> to vector<8x16x128xbf16>
    %23 = tpu.concatenate %20, %21, %22 in 2 : vector<8x16x128xbf16>, vector<8x16x128xbf16>, vector<8x16x128xbf16> -> vector<8x16x384xbf16>
    %24 = vector.shape_cast %23 : vector<8x16x384xbf16> to vector<128x384xbf16>
    %c384 = arith.constant 384 : index
    %c0_12 = arith.constant 0 : index
    %25 = vector.load %arg6[%c384, %c0_12] : memref<1152x128xbf16, #tpu.memory_space<vmem>>, vector<384x128xbf16>
    %cst_13 = arith.constant dense<0.000000e+00> : vector<128x128xf32>
    %26 = tpu.matmul %24, %25, %cst_13 {dimension_numbers = #tpu.dot_dimension_numbers<[1], [0], [0], [1], [0, 0, 1, 1], [], []>} : vector<128x384xbf16>, vector<384x128xbf16>, vector<128x128xf32> -> vector<128x128xf32>
    %27 = arith.addf %18, %26 : vector<128x128xf32>
    %28 = vector.extract_strided_slice %9 {offsets = [2, 0, 0], sizes = [8, 18, 128], strides = [1, 1, 1]} : vector<10x18x128xbf16> to vector<8x18x128xbf16>
    %29 = vector.extract_strided_slice %28 {offsets = [0, 0, 0], sizes = [8, 16, 128], strides = [1, 1, 1]} : vector<8x18x128xbf16> to vector<8x16x128xbf16>
    %30 = vector.extract_strided_slice %28 {offsets = [0, 1, 0], sizes = [8, 16, 128], strides = [1, 1, 1]} : vector<8x18x128xbf16> to vector<8x16x128xbf16>
    %31 = vector.extract_strided_slice %28 {offsets = [0, 2, 0], sizes = [8, 16, 128], strides = [1, 1, 1]} : vector<8x18x128xbf16> to vector<8x16x128xbf16>
    %32 = tpu.concatenate %29, %30, %31 in 2 : vector<8x16x128xbf16>, vector<8x16x128xbf16>, vector<8x16x128xbf16> -> vector<8x16x384xbf16>
    %33 = vector.shape_cast %32 : vector<8x16x384xbf16> to vector<128x384xbf16>
    %c768 = arith.constant 768 : index
    %c0_14 = arith.constant 0 : index
    %34 = vector.load %arg6[%c768, %c0_14] : memref<1152x128xbf16, #tpu.memory_space<vmem>>, vector<384x128xbf16>
    %cst_15 = arith.constant dense<0.000000e+00> : vector<128x128xf32>
    %35 = tpu.matmul %33, %34, %cst_15 {dimension_numbers = #tpu.dot_dimension_numbers<[1], [0], [0], [1], [0, 0, 1, 1], [], []>} : vector<128x384xbf16>, vector<384x128xbf16>, vector<128x128xf32> -> vector<128x128xf32>
    %36 = arith.addf %27, %35 : vector<128x128xf32>
    %c0_16 = arith.constant 0 : index
    %c0_17 = arith.constant 0 : index
    %c0_18 = arith.constant 0 : index
    %c0_19 = arith.constant 0 : index
    %c0_20 = arith.constant 0 : index
    %37 = vector.load %arg5[%c0_16, %c0_17, %c0_18, %c0_19, %c0_20] : memref<1x1x2x16x128xbf16, #tpu.memory_space<vmem>>, vector<1x1x2x16x128xbf16>
    %38 = vector.shape_cast %37 : vector<1x1x2x16x128xbf16> to vector<2x16x128xbf16>
    %39 = vector.extract_strided_slice %38 {offsets = [0, 0, 0], sizes = [1, 16, 128], strides = [1, 1, 1]} : vector<2x16x128xbf16> to vector<1x16x128xbf16>
    %40 = vector.extract_strided_slice %38 {offsets = [1, 0, 0], sizes = [1, 16, 128], strides = [1, 1, 1]} : vector<2x16x128xbf16> to vector<1x16x128xbf16>
    %c0_21 = arith.constant 0 : index
    %c0_22 = arith.constant 0 : index
    %c0_23 = arith.constant 0 : index
    %c0_24 = arith.constant 0 : index
    %41 = vector.load %arg4[%c0_21, %c0_22, %c0_23, %c0_24] : memref<1x8x16x128xbf16, #tpu.memory_space<vmem>>, vector<1x8x16x128xbf16>
    %42 = vector.shape_cast %41 : vector<1x8x16x128xbf16> to vector<8x16x128xbf16>
    %43 = tpu.concatenate %39, %42, %40 in 0 : vector<1x16x128xbf16>, vector<8x16x128xbf16>, vector<1x16x128xbf16> -> vector<10x16x128xbf16>
    %cst_25 = arith.constant 0.000000e+00 : bf16
    %44 = vector.broadcast %cst_25 : bf16 to vector<10x1x128xbf16>
    %45 = tpu.concatenate %44, %43, %44 in 1 : vector<10x1x128xbf16>, vector<10x16x128xbf16>, vector<10x1x128xbf16> -> vector<10x18x128xbf16>
    %46 = vector.extract_strided_slice %45 {offsets = [0, 0, 0], sizes = [8, 18, 128], strides = [1, 1, 1]} : vector<10x18x128xbf16> to vector<8x18x128xbf16>
    %47 = vector.extract_strided_slice %46 {offsets = [0, 0, 0], sizes = [8, 16, 128], strides = [1, 1, 1]} : vector<8x18x128xbf16> to vector<8x16x128xbf16>
    %48 = vector.extract_strided_slice %46 {offsets = [0, 1, 0], sizes = [8, 16, 128], strides = [1, 1, 1]} : vector<8x18x128xbf16> to vector<8x16x128xbf16>
    %49 = vector.extract_strided_slice %46 {offsets = [0, 2, 0], sizes = [8, 16, 128], strides = [1, 1, 1]} : vector<8x18x128xbf16> to vector<8x16x128xbf16>
    %50 = tpu.concatenate %47, %48, %49 in 2 : vector<8x16x128xbf16>, vector<8x16x128xbf16>, vector<8x16x128xbf16> -> vector<8x16x384xbf16>
    %51 = vector.shape_cast %50 : vector<8x16x384xbf16> to vector<128x384xbf16>
    %c0_26 = arith.constant 0 : index
    %c0_27 = arith.constant 0 : index
    %52 = vector.load %arg7[%c0_26, %c0_27] : memref<1152x128xbf16, #tpu.memory_space<vmem>>, vector<384x128xbf16>
    %cst_28 = arith.constant dense<0.000000e+00> : vector<128x128xf32>
    %53 = tpu.matmul %51, %52, %cst_28 {dimension_numbers = #tpu.dot_dimension_numbers<[1], [0], [0], [1], [0, 0, 1, 1], [], []>} : vector<128x384xbf16>, vector<384x128xbf16>, vector<128x128xf32> -> vector<128x128xf32>
    %54 = arith.addf %36, %53 : vector<128x128xf32>
    %55 = vector.extract_strided_slice %45 {offsets = [1, 0, 0], sizes = [8, 18, 128], strides = [1, 1, 1]} : vector<10x18x128xbf16> to vector<8x18x128xbf16>
    %56 = vector.extract_strided_slice %55 {offsets = [0, 0, 0], sizes = [8, 16, 128], strides = [1, 1, 1]} : vector<8x18x128xbf16> to vector<8x16x128xbf16>
    %57 = vector.extract_strided_slice %55 {offsets = [0, 1, 0], sizes = [8, 16, 128], strides = [1, 1, 1]} : vector<8x18x128xbf16> to vector<8x16x128xbf16>
    %58 = vector.extract_strided_slice %55 {offsets = [0, 2, 0], sizes = [8, 16, 128], strides = [1, 1, 1]} : vector<8x18x128xbf16> to vector<8x16x128xbf16>
    %59 = tpu.concatenate %56, %57, %58 in 2 : vector<8x16x128xbf16>, vector<8x16x128xbf16>, vector<8x16x128xbf16> -> vector<8x16x384xbf16>
    %60 = vector.shape_cast %59 : vector<8x16x384xbf16> to vector<128x384xbf16>
    %c384_29 = arith.constant 384 : index
    %c0_30 = arith.constant 0 : index
    %61 = vector.load %arg7[%c384_29, %c0_30] : memref<1152x128xbf16, #tpu.memory_space<vmem>>, vector<384x128xbf16>
    %cst_31 = arith.constant dense<0.000000e+00> : vector<128x128xf32>
    %62 = tpu.matmul %60, %61, %cst_31 {dimension_numbers = #tpu.dot_dimension_numbers<[1], [0], [0], [1], [0, 0, 1, 1], [], []>} : vector<128x384xbf16>, vector<384x128xbf16>, vector<128x128xf32> -> vector<128x128xf32>
    %63 = arith.addf %54, %62 : vector<128x128xf32>
    %64 = vector.extract_strided_slice %45 {offsets = [2, 0, 0], sizes = [8, 18, 128], strides = [1, 1, 1]} : vector<10x18x128xbf16> to vector<8x18x128xbf16>
    %65 = vector.extract_strided_slice %64 {offsets = [0, 0, 0], sizes = [8, 16, 128], strides = [1, 1, 1]} : vector<8x18x128xbf16> to vector<8x16x128xbf16>
    %66 = vector.extract_strided_slice %64 {offsets = [0, 1, 0], sizes = [8, 16, 128], strides = [1, 1, 1]} : vector<8x18x128xbf16> to vector<8x16x128xbf16>
    %67 = vector.extract_strided_slice %64 {offsets = [0, 2, 0], sizes = [8, 16, 128], strides = [1, 1, 1]} : vector<8x18x128xbf16> to vector<8x16x128xbf16>
    %68 = tpu.concatenate %65, %66, %67 in 2 : vector<8x16x128xbf16>, vector<8x16x128xbf16>, vector<8x16x128xbf16> -> vector<8x16x384xbf16>
    %69 = vector.shape_cast %68 : vector<8x16x384xbf16> to vector<128x384xbf16>
    %c768_32 = arith.constant 768 : index
    %c0_33 = arith.constant 0 : index
    %70 = vector.load %arg7[%c768_32, %c0_33] : memref<1152x128xbf16, #tpu.memory_space<vmem>>, vector<384x128xbf16>
    %cst_34 = arith.constant dense<0.000000e+00> : vector<128x128xf32>
    %71 = tpu.matmul %69, %70, %cst_34 {dimension_numbers = #tpu.dot_dimension_numbers<[1], [0], [0], [1], [0, 0, 1, 1], [], []>} : vector<128x384xbf16>, vector<384x128xbf16>, vector<128x128xf32> -> vector<128x128xf32>
    %72 = arith.addf %63, %71 : vector<128x128xf32>
    %c0_35 = arith.constant 0 : index
    %c0_36 = arith.constant 0 : index
    %73 = vector.load %arg8[%c0_35, %c0_36] : memref<1x128xf32, #tpu.memory_space<vmem>>, vector<1x128xf32>
    %74 = vector.broadcast %73 : vector<1x128xf32> to vector<128x128xf32>
    %75 = arith.addf %72, %74 : vector<128x128xf32>
    %76 = vector.shape_cast %75 : vector<128x128xf32> to vector<1x8x16x128xf32>
    %77 = arith.truncf %76 : vector<1x8x16x128xf32> to vector<1x8x16x128xbf16>
    %c0_37 = arith.constant 0 : index
    %c0_38 = arith.constant 0 : index
    %c0_39 = arith.constant 0 : index
    %c0_40 = arith.constant 0 : index
    %78 = vector.load %arg9[%c0_37, %c0_38, %c0_39, %c0_40] : memref<1x8x16x128xbf16, #tpu.memory_space<vmem>>, vector<1x8x16x128xbf16>
    tpu.vector_store %arg9[%c0_37, %c0_38, %c0_39, %c0_40], %77 {strides = array<i32>} : memref<1x8x16x128xbf16, #tpu.memory_space<vmem>>, vector<1x8x16x128xbf16>,
    %cst_41 = arith.constant dense<0.000000e+00> : vector<128xf32>
    %79 = vector.multi_reduction <add>, %75, %cst_41 [0] : vector<128x128xf32> to vector<128xf32>
    %80 = vector.shape_cast %79 : vector<128xf32> to vector<1x128xf32>
    %81 = arith.mulf %75, %75 : vector<128x128xf32>
    %cst_42 = arith.constant dense<0.000000e+00> : vector<128xf32>
    %82 = vector.multi_reduction <add>, %81, %cst_42 [0] : vector<128x128xf32> to vector<128xf32>
    %83 = vector.shape_cast %82 : vector<128xf32> to vector<1x128xf32>
    %cst_43 = arith.constant 0.000000e+00 : f32
    %84 = vector.broadcast %cst_43 : f32 to vector<6x128xf32>
    %85 = tpu.concatenate %80, %83, %84 in 0 : vector<1x128xf32>, vector<1x128xf32>, vector<6x128xf32> -> vector<8x128xf32>
    %86 = vector.shape_cast %85 : vector<8x128xf32> to vector<1x1x8x128xf32>
    %c0_44 = arith.constant 0 : index
    %c0_45 = arith.constant 0 : index
    %c0_46 = arith.constant 0 : index
    %c0_47 = arith.constant 0 : index
    %87 = vector.load %arg10[%c0_44, %c0_45, %c0_46, %c0_47] : memref<1x1x8x128xf32, #tpu.memory_space<vmem>>, vector<1x1x8x128xf32>
    tpu.vector_store %arg10[%c0_44, %c0_45, %c0_46, %c0_47], %86 {strides = array<i32>} : memref<1x1x8x128xf32, #tpu.memory_space<vmem>>, vector<1x1x8x128xf32>,
    return
  }
  func.func @transform_0(%arg0: i32, %arg1: i32) -> (i32, i32, i32, i32) {
    %c0_i32 = arith.constant 0 : i32
    %c0_i32_0 = arith.constant 0 : i32
    %c0_i32_1 = arith.constant 0 : i32
    return %arg0, %arg1, %c0_i32, %c0_i32_0 : i32, i32, i32, i32
  }
  func.func @transform_1(%arg0: i32, %arg1: i32) -> (i32, i32, i32, i32, i32) {
    %c0_i32 = arith.constant 0 : i32
    %c0_i32_0 = arith.constant 0 : i32
    %c0_i32_1 = arith.constant 0 : i32
    %c0_i32_2 = arith.constant 0 : i32
    return %arg0, %arg1, %c0_i32, %c0_i32_0, %c0_i32_1 : i32, i32, i32, i32, i32
  }
  func.func @transform_2(%arg0: i32, %arg1: i32) -> (i32, i32, i32, i32) {
    %c0_i32 = arith.constant 0 : i32
    %c0_i32_0 = arith.constant 0 : i32
    %c0_i32_1 = arith.constant 0 : i32
    return %arg0, %arg1, %c0_i32, %c0_i32_0 : i32, i32, i32, i32
  }
  func.func @transform_3(%arg0: i32, %arg1: i32) -> (i32, i32, i32, i32, i32) {
    %c0_i32 = arith.constant 0 : i32
    %c0_i32_0 = arith.constant 0 : i32
    %c0_i32_1 = arith.constant 0 : i32
    %c0_i32_2 = arith.constant 0 : i32
    return %arg0, %arg1, %c0_i32, %c0_i32_0, %c0_i32_1 : i32, i32, i32, i32, i32
  }
  func.func @transform_4(%arg0: i32, %arg1: i32) -> (i32, i32) {
    %c0_i32 = arith.constant 0 : i32
    %c0_i32_0 = arith.constant 0 : i32
    %c0_i32_1 = arith.constant 0 : i32
    return %c0_i32, %c0_i32_0 : i32, i32
  }
  func.func @transform_5(%arg0: i32, %arg1: i32) -> (i32, i32) {
    %c0_i32 = arith.constant 0 : i32
    %c0_i32_0 = arith.constant 0 : i32
    %c0_i32_1 = arith.constant 0 : i32
    return %c0_i32, %c0_i32_0 : i32, i32
  }
  func.func @transform_6(%arg0: i32, %arg1: i32) -> (i32, i32) {
    %c0_i32 = arith.constant 0 : i32
    %c0_i32_0 = arith.constant 0 : i32
    %c0_i32_1 = arith.constant 0 : i32
    return %c0_i32, %c0_i32_0 : i32, i32
  }
  func.func @transform_7(%arg0: i32, %arg1: i32) -> (i32, i32, i32, i32) {
    %c0_i32 = arith.constant 0 : i32
    %c0_i32_0 = arith.constant 0 : i32
    %c0_i32_1 = arith.constant 0 : i32
    return %arg0, %arg1, %c0_i32, %c0_i32_0 : i32, i32, i32, i32
  }
  func.func @transform_8(%arg0: i32, %arg1: i32) -> (i32, i32, i32, i32) {
    %c0_i32 = arith.constant 0 : i32
    %c0_i32_0 = arith.constant 0 : i32
    %c0_i32_1 = arith.constant 0 : i32
    return %arg0, %arg1, %c0_i32, %c0_i32_0 : i32, i32, i32, i32
  }
}

module attributes {stable_mosaic.version = 11 : i64} {
  func.func @_bn_relu_kernel(%arg0: i32, %arg1: i32, %arg2: memref<1x16x16x128xbf16, #tpu.memory_space<vmem>>, %arg3: memref<1x128xf32, #tpu.memory_space<vmem>>, %arg4: memref<1x128xf32, #tpu.memory_space<vmem>>, %arg5: memref<1x16x16x128xf32, #tpu.memory_space<vmem>>) attributes {dimension_semantics = [#tpu.dimension_semantics<parallel>, #tpu.dimension_semantics<parallel>], iteration_bounds = array<i64: 2, 1>, scalar_prefetch = 0 : i64, scratch_operands = 0 : i64, tpu.core_type = #tpu.core_type<tc>, window_params = [{transform_indices = @transform_0, window_bounds = array<i64: 1, 16, 16, 128>}, {pipeline_mode = #tpu.pipeline_mode<synchronous>, transform_indices = @transform_1, window_bounds = array<i64: 1, 128>}, {pipeline_mode = #tpu.pipeline_mode<synchronous>, transform_indices = @transform_2, window_bounds = array<i64: 1, 128>}, {transform_indices = @transform_3, window_bounds = array<i64: 1, 16, 16, 128>}]} {
    %c0 = arith.constant 0 : index
    %c0_0 = arith.constant 0 : index
    %c0_1 = arith.constant 0 : index
    %c0_2 = arith.constant 0 : index
    %0 = vector.load %arg2[%c0, %c0_0, %c0_1, %c0_2] : memref<1x16x16x128xbf16, #tpu.memory_space<vmem>>, vector<1x16x16x128xbf16>
    %1 = arith.extf %0 : vector<1x16x16x128xbf16> to vector<1x16x16x128xf32>
    %c0_3 = arith.constant 0 : index
    %c0_4 = arith.constant 0 : index
    %2 = vector.load %arg3[%c0_3, %c0_4] : memref<1x128xf32, #tpu.memory_space<vmem>>, vector<1x128xf32>
    %3 = vector.shape_cast %2 : vector<1x128xf32> to vector<1x1x1x128xf32>
    %4 = vector.broadcast %3 : vector<1x1x1x128xf32> to vector<1x16x16x128xf32>
    %5 = arith.mulf %1, %4 : vector<1x16x16x128xf32>
    %c0_5 = arith.constant 0 : index
    %c0_6 = arith.constant 0 : index
    %6 = vector.load %arg4[%c0_5, %c0_6] : memref<1x128xf32, #tpu.memory_space<vmem>>, vector<1x128xf32>
    %7 = vector.shape_cast %6 : vector<1x128xf32> to vector<1x1x1x128xf32>
    %8 = vector.broadcast %7 : vector<1x1x1x128xf32> to vector<1x16x16x128xf32>
    %9 = arith.addf %5, %8 : vector<1x16x16x128xf32>
    %cst = arith.constant 0.000000e+00 : f32
    %10 = vector.broadcast %cst : f32 to vector<1x16x16x128xf32>
    %11 = arith.maximumf %9, %10 : vector<1x16x16x128xf32>
    %c0_7 = arith.constant 0 : index
    %c0_8 = arith.constant 0 : index
    %c0_9 = arith.constant 0 : index
    %c0_10 = arith.constant 0 : index
    %12 = vector.load %arg5[%c0_7, %c0_8, %c0_9, %c0_10] : memref<1x16x16x128xf32, #tpu.memory_space<vmem>>, vector<1x16x16x128xf32>
    tpu.vector_store %arg5[%c0_7, %c0_8, %c0_9, %c0_10], %11 {strides = array<i32>} : memref<1x16x16x128xf32, #tpu.memory_space<vmem>>, vector<1x16x16x128xf32>,
    return
  }
  func.func @transform_0(%arg0: i32, %arg1: i32) -> (i32, i32, i32, i32) {
    %c0_i32 = arith.constant 0 : i32
    %c0_i32_0 = arith.constant 0 : i32
    %c0_i32_1 = arith.constant 0 : i32
    return %arg0, %arg1, %c0_i32, %c0_i32_0 : i32, i32, i32, i32
  }
  func.func @transform_1(%arg0: i32, %arg1: i32) -> (i32, i32) {
    %c0_i32 = arith.constant 0 : i32
    %c0_i32_0 = arith.constant 0 : i32
    %c0_i32_1 = arith.constant 0 : i32
    return %c0_i32, %c0_i32_0 : i32, i32
  }
  func.func @transform_2(%arg0: i32, %arg1: i32) -> (i32, i32) {
    %c0_i32 = arith.constant 0 : i32
    %c0_i32_0 = arith.constant 0 : i32
    %c0_i32_1 = arith.constant 0 : i32
    return %c0_i32, %c0_i32_0 : i32, i32
  }
  func.func @transform_3(%arg0: i32, %arg1: i32) -> (i32, i32, i32, i32) {
    %c0_i32 = arith.constant 0 : i32
    %c0_i32_0 = arith.constant 0 : i32
    %c0_i32_1 = arith.constant 0 : i32
    return %arg0, %arg1, %c0_i32, %c0_i32_0 : i32, i32, i32, i32
  }
}

module attributes {stable_mosaic.version = 11 : i64} {
  func.func @kernel(%arg0: i32, %arg1: i32, %arg2: memref<1x8x16x128xbf16, #tpu.memory_space<vmem>>, %arg3: memref<1x1x2x16x128xbf16, #tpu.memory_space<vmem>>, %arg4: memref<1x128xf32, #tpu.memory_space<vmem>>, %arg5: memref<1x128xf32, #tpu.memory_space<vmem>>, %arg6: memref<1152x128xbf16, #tpu.memory_space<vmem>>, %arg7: memref<1x128xf32, #tpu.memory_space<vmem>>, %arg8: memref<1x8x16x128xbf16, #tpu.memory_space<vmem>>, %arg9: memref<1x1x8x128xf32, #tpu.memory_space<vmem>>) attributes {dimension_semantics = [#tpu.dimension_semantics<parallel>, #tpu.dimension_semantics<parallel>], iteration_bounds = array<i64: 2, 2>, scalar_prefetch = 0 : i64, scratch_operands = 0 : i64, tpu.core_type = #tpu.core_type<tc>, window_params = [{transform_indices = @transform_0, window_bounds = array<i64: 1, 8, 16, 128>}, {transform_indices = @transform_1, window_bounds = array<i64: 1, 1, 2, 16, 128>}, {pipeline_mode = #tpu.pipeline_mode<synchronous>, transform_indices = @transform_2, window_bounds = array<i64: 1, 128>}, {pipeline_mode = #tpu.pipeline_mode<synchronous>, transform_indices = @transform_3, window_bounds = array<i64: 1, 128>}, {pipeline_mode = #tpu.pipeline_mode<synchronous>, transform_indices = @transform_4, window_bounds = array<i64: 1152, 128>}, {pipeline_mode = #tpu.pipeline_mode<synchronous>, transform_indices = @transform_5, window_bounds = array<i64: 1, 128>}, {transform_indices = @transform_6, window_bounds = array<i64: 1, 8, 16, 128>}, {transform_indices = @transform_7, window_bounds = array<i64: 1, 1, 8, 128>}]} {
    %c0 = arith.constant 0 : index
    %c0_0 = arith.constant 0 : index
    %0 = vector.load %arg4[%c0, %c0_0] : memref<1x128xf32, #tpu.memory_space<vmem>>, vector<1x128xf32>
    %c0_1 = arith.constant 0 : index
    %c0_2 = arith.constant 0 : index
    %1 = vector.load %arg5[%c0_1, %c0_2] : memref<1x128xf32, #tpu.memory_space<vmem>>, vector<1x128xf32>
    %c0_i32 = arith.constant 0 : i32
    %2 = arith.cmpi sgt, %arg1, %c0_i32 : i32
    %3 = arith.extui %2 : i1 to i32
    %4 = arith.sitofp %3 : i32 to f32
    %c1_i32 = arith.constant 1 : i32
    %5 = arith.cmpi slt, %arg1, %c1_i32 : i32
    %6 = arith.extui %5 : i1 to i32
    %7 = arith.sitofp %6 : i32 to f32
    %cst = arith.constant 0.000000e+00 : f32
    %8 = vector.broadcast %cst : f32 to vector<128x128xf32>
    %c0_3 = arith.constant 0 : index
    %c0_4 = arith.constant 0 : index
    %c0_5 = arith.constant 0 : index
    %c0_6 = arith.constant 0 : index
    %c0_7 = arith.constant 0 : index
    %9 = vector.load %arg3[%c0_3, %c0_4, %c0_5, %c0_6, %c0_7] : memref<1x1x2x16x128xbf16, #tpu.memory_space<vmem>>, vector<1x1x2x16x128xbf16>
    %10 = vector.shape_cast %9 : vector<1x1x2x16x128xbf16> to vector<2x16x128xbf16>
    %11 = vector.extract_strided_slice %10 {offsets = [0, 0, 0], sizes = [1, 16, 128], strides = [1, 1, 1]} : vector<2x16x128xbf16> to vector<1x16x128xbf16>
    %12 = vector.extract_strided_slice %10 {offsets = [1, 0, 0], sizes = [1, 16, 128], strides = [1, 1, 1]} : vector<2x16x128xbf16> to vector<1x16x128xbf16>
    %c0_8 = arith.constant 0 : index
    %c0_9 = arith.constant 0 : index
    %c0_10 = arith.constant 0 : index
    %c0_11 = arith.constant 0 : index
    %13 = vector.load %arg2[%c0_8, %c0_9, %c0_10, %c0_11] : memref<1x8x16x128xbf16, #tpu.memory_space<vmem>>, vector<1x8x16x128xbf16>
    %14 = vector.shape_cast %13 : vector<1x8x16x128xbf16> to vector<8x16x128xbf16>
    %15 = arith.extf %11 : vector<1x16x128xbf16> to vector<1x16x128xf32>
    %16 = vector.shape_cast %0 : vector<1x128xf32> to vector<1x1x128xf32>
    %17 = vector.broadcast %16 : vector<1x1x128xf32> to vector<1x16x128xf32>
    %18 = arith.mulf %15, %17 : vector<1x16x128xf32>
    %19 = vector.shape_cast %1 : vector<1x128xf32> to vector<1x1x128xf32>
    %20 = vector.broadcast %19 : vector<1x1x128xf32> to vector<1x16x128xf32>
    %21 = arith.addf %18, %20 : vector<1x16x128xf32>
    %cst_12 = arith.constant 0.000000e+00 : f32
    %22 = vector.broadcast %cst_12 : f32 to vector<1x16x128xf32>
    %23 = arith.maximumf %21, %22 : vector<1x16x128xf32>
    %24 = vector.broadcast %4 : f32 to vector<1x16x128xf32>
    %25 = arith.mulf %23, %24 : vector<1x16x128xf32>
    %26 = arith.extf %14 : vector<8x16x128xbf16> to vector<8x16x128xf32>
    %27 = vector.shape_cast %0 : vector<1x128xf32> to vector<1x1x128xf32>
    %28 = vector.broadcast %27 : vector<1x1x128xf32> to vector<8x16x128xf32>
    %29 = arith.mulf %26, %28 : vector<8x16x128xf32>
    %30 = vector.shape_cast %1 : vector<1x128xf32> to vector<1x1x128xf32>
    %31 = vector.broadcast %30 : vector<1x1x128xf32> to vector<8x16x128xf32>
    %32 = arith.addf %29, %31 : vector<8x16x128xf32>
    %cst_13 = arith.constant 0.000000e+00 : f32
    %33 = vector.broadcast %cst_13 : f32 to vector<8x16x128xf32>
    %34 = arith.maximumf %32, %33 : vector<8x16x128xf32>
    %35 = arith.extf %12 : vector<1x16x128xbf16> to vector<1x16x128xf32>
    %36 = vector.shape_cast %0 : vector<1x128xf32> to vector<1x1x128xf32>
    %37 = vector.broadcast %36 : vector<1x1x128xf32> to vector<1x16x128xf32>
    %38 = arith.mulf %35, %37 : vector<1x16x128xf32>
    %39 = vector.shape_cast %1 : vector<1x128xf32> to vector<1x1x128xf32>
    %40 = vector.broadcast %39 : vector<1x1x128xf32> to vector<1x16x128xf32>
    %41 = arith.addf %38, %40 : vector<1x16x128xf32>
    %cst_14 = arith.constant 0.000000e+00 : f32
    %42 = vector.broadcast %cst_14 : f32 to vector<1x16x128xf32>
    %43 = arith.maximumf %41, %42 : vector<1x16x128xf32>
    %44 = vector.broadcast %7 : f32 to vector<1x16x128xf32>
    %45 = arith.mulf %43, %44 : vector<1x16x128xf32>
    %46 = arith.truncf %25 : vector<1x16x128xf32> to vector<1x16x128xbf16>
    %47 = arith.truncf %34 : vector<8x16x128xf32> to vector<8x16x128xbf16>
    %48 = arith.truncf %45 : vector<1x16x128xf32> to vector<1x16x128xbf16>
    %49 = tpu.concatenate %46, %47, %48 in 0 : vector<1x16x128xbf16>, vector<8x16x128xbf16>, vector<1x16x128xbf16> -> vector<10x16x128xbf16>
    %cst_15 = arith.constant 0.000000e+00 : bf16
    %50 = vector.broadcast %cst_15 : bf16 to vector<10x1x128xbf16>
    %51 = tpu.concatenate %50, %49, %50 in 1 : vector<10x1x128xbf16>, vector<10x16x128xbf16>, vector<10x1x128xbf16> -> vector<10x18x128xbf16>
    %52 = vector.extract_strided_slice %51 {offsets = [0, 0, 0], sizes = [8, 18, 128], strides = [1, 1, 1]} : vector<10x18x128xbf16> to vector<8x18x128xbf16>
    %53 = vector.extract_strided_slice %52 {offsets = [0, 0, 0], sizes = [8, 16, 128], strides = [1, 1, 1]} : vector<8x18x128xbf16> to vector<8x16x128xbf16>
    %54 = vector.extract_strided_slice %52 {offsets = [0, 1, 0], sizes = [8, 16, 128], strides = [1, 1, 1]} : vector<8x18x128xbf16> to vector<8x16x128xbf16>
    %55 = vector.extract_strided_slice %52 {offsets = [0, 2, 0], sizes = [8, 16, 128], strides = [1, 1, 1]} : vector<8x18x128xbf16> to vector<8x16x128xbf16>
    %56 = tpu.concatenate %53, %54, %55 in 2 : vector<8x16x128xbf16>, vector<8x16x128xbf16>, vector<8x16x128xbf16> -> vector<8x16x384xbf16>
    %57 = vector.shape_cast %56 : vector<8x16x384xbf16> to vector<128x384xbf16>
    %c0_16 = arith.constant 0 : index
    %c0_17 = arith.constant 0 : index
    %58 = vector.load %arg6[%c0_16, %c0_17] : memref<1152x128xbf16, #tpu.memory_space<vmem>>, vector<384x128xbf16>
    %cst_18 = arith.constant dense<0.000000e+00> : vector<128x128xf32>
    %59 = tpu.matmul %57, %58, %cst_18 {dimension_numbers = #tpu.dot_dimension_numbers<[1], [0], [0], [1], [0, 0, 1, 1], [], []>} : vector<128x384xbf16>, vector<384x128xbf16>, vector<128x128xf32> -> vector<128x128xf32>
    %60 = arith.addf %8, %59 : vector<128x128xf32>
    %61 = vector.extract_strided_slice %51 {offsets = [1, 0, 0], sizes = [8, 18, 128], strides = [1, 1, 1]} : vector<10x18x128xbf16> to vector<8x18x128xbf16>
    %62 = vector.extract_strided_slice %61 {offsets = [0, 0, 0], sizes = [8, 16, 128], strides = [1, 1, 1]} : vector<8x18x128xbf16> to vector<8x16x128xbf16>
    %63 = vector.extract_strided_slice %61 {offsets = [0, 1, 0], sizes = [8, 16, 128], strides = [1, 1, 1]} : vector<8x18x128xbf16> to vector<8x16x128xbf16>
    %64 = vector.extract_strided_slice %61 {offsets = [0, 2, 0], sizes = [8, 16, 128], strides = [1, 1, 1]} : vector<8x18x128xbf16> to vector<8x16x128xbf16>
    %65 = tpu.concatenate %62, %63, %64 in 2 : vector<8x16x128xbf16>, vector<8x16x128xbf16>, vector<8x16x128xbf16> -> vector<8x16x384xbf16>
    %66 = vector.shape_cast %65 : vector<8x16x384xbf16> to vector<128x384xbf16>
    %c384 = arith.constant 384 : index
    %c0_19 = arith.constant 0 : index
    %67 = vector.load %arg6[%c384, %c0_19] : memref<1152x128xbf16, #tpu.memory_space<vmem>>, vector<384x128xbf16>
    %cst_20 = arith.constant dense<0.000000e+00> : vector<128x128xf32>
    %68 = tpu.matmul %66, %67, %cst_20 {dimension_numbers = #tpu.dot_dimension_numbers<[1], [0], [0], [1], [0, 0, 1, 1], [], []>} : vector<128x384xbf16>, vector<384x128xbf16>, vector<128x128xf32> -> vector<128x128xf32>
    %69 = arith.addf %60, %68 : vector<128x128xf32>
    %70 = vector.extract_strided_slice %51 {offsets = [2, 0, 0], sizes = [8, 18, 128], strides = [1, 1, 1]} : vector<10x18x128xbf16> to vector<8x18x128xbf16>
    %71 = vector.extract_strided_slice %70 {offsets = [0, 0, 0], sizes = [8, 16, 128], strides = [1, 1, 1]} : vector<8x18x128xbf16> to vector<8x16x128xbf16>
    %72 = vector.extract_strided_slice %70 {offsets = [0, 1, 0], sizes = [8, 16, 128], strides = [1, 1, 1]} : vector<8x18x128xbf16> to vector<8x16x128xbf16>
    %73 = vector.extract_strided_slice %70 {offsets = [0, 2, 0], sizes = [8, 16, 128], strides = [1, 1, 1]} : vector<8x18x128xbf16> to vector<8x16x128xbf16>
    %74 = tpu.concatenate %71, %72, %73 in 2 : vector<8x16x128xbf16>, vector<8x16x128xbf16>, vector<8x16x128xbf16> -> vector<8x16x384xbf16>
    %75 = vector.shape_cast %74 : vector<8x16x384xbf16> to vector<128x384xbf16>
    %c768 = arith.constant 768 : index
    %c0_21 = arith.constant 0 : index
    %76 = vector.load %arg6[%c768, %c0_21] : memref<1152x128xbf16, #tpu.memory_space<vmem>>, vector<384x128xbf16>
    %cst_22 = arith.constant dense<0.000000e+00> : vector<128x128xf32>
    %77 = tpu.matmul %75, %76, %cst_22 {dimension_numbers = #tpu.dot_dimension_numbers<[1], [0], [0], [1], [0, 0, 1, 1], [], []>} : vector<128x384xbf16>, vector<384x128xbf16>, vector<128x128xf32> -> vector<128x128xf32>
    %78 = arith.addf %69, %77 : vector<128x128xf32>
    %c0_23 = arith.constant 0 : index
    %c0_24 = arith.constant 0 : index
    %79 = vector.load %arg7[%c0_23, %c0_24] : memref<1x128xf32, #tpu.memory_space<vmem>>, vector<1x128xf32>
    %80 = vector.broadcast %79 : vector<1x128xf32> to vector<128x128xf32>
    %81 = arith.addf %78, %80 : vector<128x128xf32>
    %82 = vector.shape_cast %81 : vector<128x128xf32> to vector<1x8x16x128xf32>
    %83 = arith.truncf %82 : vector<1x8x16x128xf32> to vector<1x8x16x128xbf16>
    %c0_25 = arith.constant 0 : index
    %c0_26 = arith.constant 0 : index
    %c0_27 = arith.constant 0 : index
    %c0_28 = arith.constant 0 : index
    %84 = vector.load %arg8[%c0_25, %c0_26, %c0_27, %c0_28] : memref<1x8x16x128xbf16, #tpu.memory_space<vmem>>, vector<1x8x16x128xbf16>
    tpu.vector_store %arg8[%c0_25, %c0_26, %c0_27, %c0_28], %83 {strides = array<i32>} : memref<1x8x16x128xbf16, #tpu.memory_space<vmem>>, vector<1x8x16x128xbf16>,
    %cst_29 = arith.constant dense<0.000000e+00> : vector<128xf32>
    %85 = vector.multi_reduction <add>, %81, %cst_29 [0] : vector<128x128xf32> to vector<128xf32>
    %86 = vector.shape_cast %85 : vector<128xf32> to vector<1x128xf32>
    %87 = arith.mulf %81, %81 : vector<128x128xf32>
    %cst_30 = arith.constant dense<0.000000e+00> : vector<128xf32>
    %88 = vector.multi_reduction <add>, %87, %cst_30 [0] : vector<128x128xf32> to vector<128xf32>
    %89 = vector.shape_cast %88 : vector<128xf32> to vector<1x128xf32>
    %cst_31 = arith.constant 0.000000e+00 : f32
    %90 = vector.broadcast %cst_31 : f32 to vector<6x128xf32>
    %91 = tpu.concatenate %86, %89, %90 in 0 : vector<1x128xf32>, vector<1x128xf32>, vector<6x128xf32> -> vector<8x128xf32>
    %92 = vector.shape_cast %91 : vector<8x128xf32> to vector<1x1x8x128xf32>
    %c0_32 = arith.constant 0 : index
    %c0_33 = arith.constant 0 : index
    %c0_34 = arith.constant 0 : index
    %c0_35 = arith.constant 0 : index
    %93 = vector.load %arg9[%c0_32, %c0_33, %c0_34, %c0_35] : memref<1x1x8x128xf32, #tpu.memory_space<vmem>>, vector<1x1x8x128xf32>
    tpu.vector_store %arg9[%c0_32, %c0_33, %c0_34, %c0_35], %92 {strides = array<i32>} : memref<1x1x8x128xf32, #tpu.memory_space<vmem>>, vector<1x1x8x128xf32>,
    return
  }
  func.func @transform_0(%arg0: i32, %arg1: i32) -> (i32, i32, i32, i32) {
    %c0_i32 = arith.constant 0 : i32
    %c0_i32_0 = arith.constant 0 : i32
    %c0_i32_1 = arith.constant 0 : i32
    return %arg0, %arg1, %c0_i32, %c0_i32_0 : i32, i32, i32, i32
  }
  func.func @transform_1(%arg0: i32, %arg1: i32) -> (i32, i32, i32, i32, i32) {
    %c0_i32 = arith.constant 0 : i32
    %c0_i32_0 = arith.constant 0 : i32
    %c0_i32_1 = arith.constant 0 : i32
    %c0_i32_2 = arith.constant 0 : i32
    return %arg0, %arg1, %c0_i32, %c0_i32_0, %c0_i32_1 : i32, i32, i32, i32, i32
  }
  func.func @transform_2(%arg0: i32, %arg1: i32) -> (i32, i32) {
    %c0_i32 = arith.constant 0 : i32
    %c0_i32_0 = arith.constant 0 : i32
    %c0_i32_1 = arith.constant 0 : i32
    return %c0_i32, %c0_i32_0 : i32, i32
  }
  func.func @transform_3(%arg0: i32, %arg1: i32) -> (i32, i32) {
    %c0_i32 = arith.constant 0 : i32
    %c0_i32_0 = arith.constant 0 : i32
    %c0_i32_1 = arith.constant 0 : i32
    return %c0_i32, %c0_i32_0 : i32, i32
  }
  func.func @transform_4(%arg0: i32, %arg1: i32) -> (i32, i32) {
    %c0_i32 = arith.constant 0 : i32
    %c0_i32_0 = arith.constant 0 : i32
    %c0_i32_1 = arith.constant 0 : i32
    return %c0_i32, %c0_i32_0 : i32, i32
  }
  func.func @transform_5(%arg0: i32, %arg1: i32) -> (i32, i32) {
    %c0_i32 = arith.constant 0 : i32
    %c0_i32_0 = arith.constant 0 : i32
    %c0_i32_1 = arith.constant 0 : i32
    return %c0_i32, %c0_i32_0 : i32, i32
  }
  func.func @transform_6(%arg0: i32, %arg1: i32) -> (i32, i32, i32, i32) {
    %c0_i32 = arith.constant 0 : i32
    %c0_i32_0 = arith.constant 0 : i32
    %c0_i32_1 = arith.constant 0 : i32
    return %arg0, %arg1, %c0_i32, %c0_i32_0 : i32, i32, i32, i32
  }
  func.func @transform_7(%arg0: i32, %arg1: i32) -> (i32, i32, i32, i32) {
    %c0_i32 = arith.constant 0 : i32
    %c0_i32_0 = arith.constant 0 : i32
    %c0_i32_1 = arith.constant 0 : i32
    return %arg0, %arg1, %c0_i32, %c0_i32_0 : i32, i32, i32, i32
  }
}

</mosaic_0001>

<llo_original>
// kernel: decoder_block_forward.7
$region0: #{decoder_block_forward.7}
  #allocation0 [shape = 'u32[]', space=smem, size = 0x4, offset = 0x4, fixed_abs, tag = 'smem constant byte address 0x4 - core index']
  #allocation1 [shape = 'u32[72,128]{1,0:T(1,128)}', space=vmem, size = 0x9000, scoped, tag = 'internal scratch']
  %s0 = inlined_call_operand.vmem [shape: bf16[2,16,16,128], index: 0, kind: input, shape index: {}]
  %s1 = inlined_call_operand.vmem [shape: f32[1,128], index: 1, kind: input, shape index: {}]
  %s2 = inlined_call_operand.vmem [shape: f32[1,128], index: 2, kind: input, shape index: {}]
  %s3 = inlined_call_operand.vmem [shape: f32[2,16,16,128], index: 3, kind: output, shape index: {}]
  %s4 = sld [smem:[#allocation0]]
  $region45: #{decoder_block_forward.7} parent=0
    _
  %s6 = ssub.s32 1, %s4
  %s7 = scalar_select 0, %s6, %s4
  loop: start=0, step=1, limit=4
  $region2: #{decoder_block_forward.7} parent=0 // loop_pre_header
    _
  $region3: #{decoder_block_forward.7} parent=0 // loop_header
    %s9 = sphi 0, %s13
    %p10 = scmp.ge.s32.totalorder %s9, 4
    %s16 = sphi 0, %s28
    %s17 = sphi 0, %s24
    %s18 = sphi 0, %s16
    %s19 = sphi 0, %s17
    %s20 = sphi 0, %s18
    %s21 = sphi 0, %s19
    %s33 = sphi 0, %s35
    %s36 = sphi 0, %s33
    %s37 = sphi 0, %s36
    %s53 = sphi 0, %s37
    %s57 = sphi 0, %s57
    %s59 = sphi 0, %s57
    %s60 = sphi 0, %s59
    %s74 = sphi 0, %s60
    %s78 = sphi 0, %s78
    %s80 = sphi 0, %s78
    %s81 = sphi 0, %s80
    %s95 = sphi 0, %s81
    %s103 = sphi 0, %s105
    %s106 = sphi 0, %s103
    %s107 = sphi 0, %s106
    %s123 = sphi 0, %s107
  $region4: #{decoder_block_forward.7} parent=0 // loop_header_branch
    %12 = sbr.rel (%p10) target = $region8
  $region5: #{decoder_block_forward.7} parent=0 // loop_body
    %s14 = ssub.s32 %s9, 1
    %s15 = ssub.s32 %s9, 2
    %s22 = sadd.s32 1, %s17
    %p23 = scmp.ge.s32.totalorder %s22, 1
    %s24 = scalar_select %p23, 0, %s22
    %s25 = sadd.s32 1, %s16
    %s26 = scalar_select %p23, %s25, %s16
    %p27 = scmp.ge.s32.totalorder %s26, 2
    %s28 = scalar_select %p27, 0, %s26
    %s29 = ssub.s32 %s16, %s28
    %s30 = ssub.s32 %s17, %s24
    %s31 = sor.u32 %s29, %s30
    %p32 = scmp.eq.s32.totalorder %s31, 0
    %s34 = sadd.s32 %s33, 1
    %s35 = scalar_select %p32, %s33, %s34
    %p38 = pneg %p32
    %p39 = scmp.eq.s32.totalorder %s9, 1
    %p40 = por %p38, %p39
    %p41 = scmp.ne.s32.totalorder %s33, %s36
    %p42 = scmp.eq.s32.totalorder %s9, 0
    %p43 = por %p41, %p42
    %p44 = scmp.ne.s32.totalorder %s33, %s36
    %p45 = scmp.eq.s32.totalorder %s14, 1
    %p46 = por %p44, %p45
    %p47 = scmp.ne.s32.totalorder %s36, %s37
    %p48 = scmp.eq.s32.totalorder %s14, 0
    %p49 = por %p47, %p48
    %p50 = scmp.ne.s32.totalorder %s36, %s37
    %p51 = scmp.eq.s32.totalorder %s15, 1
    %p52 = por %p50, %p51
    %p54 = scmp.ne.s32.totalorder %s37, %s53
    %p55 = scmp.eq.s32.totalorder %s15, 0
    %p56 = por %p54, %p55
    %s58 = sadd.s32 %s57, 1
    %p61 = scmp.eq.s32.totalorder %s9, 1
    %p62 = scmp.ne.s32.totalorder %s57, %s59
    %p63 = scmp.eq.s32.totalorder %s9, 0
    %p64 = por %p62, %p63
    %p65 = scmp.ne.s32.totalorder %s57, %s59
    %p66 = scmp.eq.s32.totalorder %s14, 1
    %p67 = por %p65, %p66
    %p68 = scmp.ne.s32.totalorder %s59, %s60
    %p69 = scmp.eq.s32.totalorder %s14, 0
    %p70 = por %p68, %p69
    %p71 = scmp.ne.s32.totalorder %s59, %s60
    %p72 = scmp.eq.s32.totalorder %s15, 1
    %p73 = por %p71, %p72
    %p75 = scmp.ne.s32.totalorder %s60, %s74
    %p76 = scmp.eq.s32.totalorder %s15, 0
    %p77 = por %p75, %p76
    %s79 = sadd.s32 %s78, 1
    %p82 = scmp.eq.s32.totalorder %s9, 1
    %p83 = scmp.ne.s32.totalorder %s78, %s80
    %p84 = scmp.eq.s32.totalorder %s9, 0
    %p85 = por %p83, %p84
    %p86 = scmp.ne.s32.totalorder %s78, %s80
    %p87 = scmp.eq.s32.totalorder %s14, 1
    %p88 = por %p86, %p87
    %p89 = scmp.ne.s32.totalorder %s80, %s81
    %p90 = scmp.eq.s32.totalorder %s14, 0
    %p91 = por %p89, %p90
    %p92 = scmp.ne.s32.totalorder %s80, %s81
    %p93 = scmp.eq.s32.totalorder %s15, 1
    %p94 = por %p92, %p93
    %p96 = scmp.ne.s32.totalorder %s81, %s95
    %p97 = scmp.eq.s32.totalorder %s15, 0
    %p98 = por %p96, %p97
    %s99 = ssub.s32 %s16, %s28
    %s100 = ssub.s32 %s17, %s24
    %s101 = sor.u32 %s99, %s100
    %p102 = scmp.eq.s32.totalorder %s101, 0
    %s104 = sadd.s32 %s103, 1
    %s105 = scalar_select %p102, %s103, %s104
    %p108 = pneg %p102
    %p109 = scmp.eq.s32.totalorder %s9, 1
    %p110 = por %p108, %p109
    %p111 = scmp.ne.s32.totalorder %s103, %s106
    %p112 = scmp.eq.s32.totalorder %s9, 0
    %p113 = por %p111, %p112
    %p114 = scmp.ne.s32.totalorder %s103, %s106
    %p115 = scmp.eq.s32.totalorder %s14, 1
    %p116 = por %p114, %p115
    %p117 = scmp.ne.s32.totalorder %s106, %s107
    %p118 = scmp.eq.s32.totalorder %s14, 0
    %p119 = por %p117, %p118
    %p120 = scmp.ne.s32.totalorder %s106, %s107
    %p121 = scmp.eq.s32.totalorder %s15, 1
    %p122 = por %p120, %p121
    %p124 = scmp.ne.s32.totalorder %s107, %s123
    %p125 = scmp.eq.s32.totalorder %s15, 0
    %p126 = por %p124, %p125
    %p127 = scmp.le.s32.totalorder 1, %s9
    %p128 = scmp.lt.s32.totalorder %s9, 3
    %p129 = pnand %p127, %p128
    %p130 = pneg %p129
    // Predicated region
    $region9: #{decoder_block_forward.7} parent=5 // pred_check
      _
    $region10: #{decoder_block_forward.7} parent=5 // pred_check_branch
      %132 = sbr.rel (%p129) target = $region12
    $region11: #{decoder_block_forward.7} parent=5 // pred_region
      %s133 = ssub.s32 %s9, 1
      // Predicated region
      $region13: #{decoder_block_forward.7} parent=11 // pred_check
        %p134 = pneg %p70
      $region14: #{decoder_block_forward.7} parent=11 // pred_check_branch
        %136 = sbr.rel (%p134) target = $region16
      $region15: #{decoder_block_forward.7} parent=11 // pred_region
        _
      $region16: #{decoder_block_forward.7} parent=11 // pred_fallthru
        _
      // Predicated region
      $region17: #{decoder_block_forward.7} parent=11 // pred_check
        %p137 = pneg %p91
      $region18: #{decoder_block_forward.7} parent=11 // pred_check_branch
        %139 = sbr.rel (%p137) target = $region20
      $region19: #{decoder_block_forward.7} parent=11 // pred_region
        _
      $region20: #{decoder_block_forward.7} parent=11 // pred_fallthru
        _
    $region12: #{decoder_block_forward.7} parent=5 // pred_fallthru
      _
    %p140 = scmp.lt.s32.totalorder %s9, 2
    // Predicated region
    $region21: #{decoder_block_forward.7} parent=5 // pred_check
      %p141 = pneg %p140
    $region22: #{decoder_block_forward.7} parent=5 // pred_check_branch
      %143 = sbr.rel (%p141) target = $region24
    $region23: #{decoder_block_forward.7} parent=5 // pred_region
      // Predicated region
      $region25: #{decoder_block_forward.7} parent=23 // pred_check
        %p144 = pneg %p43
      $region26: #{decoder_block_forward.7} parent=23 // pred_check_branch
        %146 = sbr.rel (%p144) target = $region28
      $region27: #{decoder_block_forward.7} parent=23 // pred_region
        %s147 = smul.u32 16, %s17
        %p148 = scmp.lt.s32.totalorder %s16, 1
        %s149 = scalar_select %p148, %s16, 1
        %p150 = scmp.lt.s32.totalorder %s147, 15
        %s151 = scalar_select %p150, %s147, 15
        %s152 = smul.addr %s151, 2
        %s153 = smul.addr %s149, 32
        %s154 = sadd.s32 %s152, %s153
        %s155 = smul.addr %s154, 4
        %s156 = scalar_lea.vmem %s0, %s155
        %s157 = smul.u32 16, %s17
      $region28: #{decoder_block_forward.7} parent=23 // pred_fallthru
        _
    $region24: #{decoder_block_forward.7} parent=5 // pred_fallthru
      _
    %p158 = scmp.le.s32.totalorder 1, %s9
    %p159 = scmp.lt.s32.totalorder %s9, 3
    %p160 = pnand %p158, %p159
    %p161 = pneg %p160
    // Predicated region
    $region29: #{decoder_block_forward.7} parent=5 // pred_check
      _
    $region30: #{decoder_block_forward.7} parent=5 // pred_check_branch
      %163 = sbr.rel (%p160) target = $region32
    $region31: #{decoder_block_forward.7} parent=5 // pred_region
      %s164 = ssub.s32 %s9, 1
      %s165 = smul.u32 16, %s19
      %p166 = scmp.lt.s32.totalorder %s18, 1
      %s167 = scalar_select %p166, %s18, 1
      %p168 = scmp.lt.s32.totalorder %s165, 15
      %s169 = scalar_select %p168, %s165, 15
      %s170 = smul.addr %s169, 2
      %s171 = smul.addr %s167, 32
      %s172 = sadd.s32 %s170, %s171
      %s173 = smul.addr %s172, 4
      %s174 = scalar_lea.vmem %s0, %s173
      %p175 = pneg %p49
      %p176 = pneg %p46
      %p177 = pneg %p70
      %p178 = pneg %p67
      %p179 = pneg %p91
      %p180 = pneg %p88
      %p181 = pneg %p119
      %p182 = pneg %p116
      %s183 = smul.u32 16, %s19
      %p184 = scmp.lt.s32.totalorder %s18, 1
      %s185 = scalar_select %p184, %s18, 1
      %p186 = scmp.lt.s32.totalorder %s183, 15
      %s187 = scalar_select %p186, %s183, 15
      %s188 = smul.addr %s187, 2
      %s189 = smul.addr %s185, 32
      %s190 = sadd.s32 %s188, %s189
      %s191 = smul.addr %s190, 8
      %s192 = scalar_lea.vmem %s3, %s191
      %s193 = smul.u32 16, %s19
      %p194 = scmp.lt.s32.totalorder %s18, 1
      %s195 = scalar_select %p194, %s18, 1
      %p196 = scmp.lt.s32.totalorder %s193, 15
      %s197 = scalar_select %p196, %s193, 15
      %s198 = smul.addr %s197, 2
      %s199 = smul.addr %s195, 32
      %s200 = sadd.s32 %s198, %s199
      %s201 = smul.addr %s200, 4
      %s202 = scalar_lea.vmem %s0, %s201
      %s203 = smul.u32 16, %s19
      %s204 = smul.u32 16, %s19
      %p205 = scmp.lt.s32.totalorder %s18, 1
      %s206 = scalar_select %p205, %s18, 1
      %p207 = scmp.lt.s32.totalorder %s204, 15
      %s208 = scalar_select %p207, %s204, 15
      %s209 = smul.addr %s208, 2
      %s210 = smul.addr %s206, 32
      %s211 = sadd.s32 %s209, %s210
      %s212 = smul.addr %s211, 8
      %s213 = scalar_lea.vmem %s3, %s212
      %s214 = smul.u32 16, %s19
      %v215 = vld [vmem:[%s202] sm:$0xf]
      %v216 = vld [vmem:[%s202 + $0x4] sm:$0xf]
      %v217 = vld [vmem:[%s202 + $0x8] sm:$0xf]
      %v218 = vld [vmem:[%s202 + $0xc] sm:$0xf]
      %v219 = vld [vmem:[%s202 + $0x10] sm:$0xf]
      %v220 = vld [vmem:[%s202 + $0x14] sm:$0xf]
      %v221 = vld [vmem:[%s202 + $0x18] sm:$0xf]
      %v222 = vld [vmem:[%s202 + $0x1c] sm:$0xf]
      %v223 = vld [vmem:[%s202 + $0x20] sm:$0xf]
      %v224 = vld [vmem:[%s202 + $0x24] sm:$0xf]
      %v225 = vld [vmem:[%s202 + $0x28] sm:$0xf]
      %v226 = vld [vmem:[%s202 + $0x2c] sm:$0xf]
      %v227 = vld [vmem:[%s202 + $0x30] sm:$0xf]
      %v228 = vld [vmem:[%s202 + $0x34] sm:$0xf]
      %v229 = vld [vmem:[%s202 + $0x38] sm:$0xf]
      %v230 = vld [vmem:[%s202 + $0x3c] sm:$0xf]
      %v231 = vld [vmem:[%s202 + $0x40] sm:$0xf]
      %v232 = vld [vmem:[%s202 + $0x44] sm:$0xf]
      %v233 = vld [vmem:[%s202 + $0x48] sm:$0xf]
      %v234 = vld [vmem:[%s202 + $0x4c] sm:$0xf]
      %v235 = vld [vmem:[%s202 + $0x50] sm:$0xf]
      %v236 = vld [vmem:[%s202 + $0x54] sm:$0xf]
      %v237 = vld [vmem:[%s202 + $0x58] sm:$0xf]
      %v238 = vld [vmem:[%s202 + $0x5c] sm:$0xf]
      %v239 = vld [vmem:[%s202 + $0x60] sm:$0xf]
      %v240 = vld [vmem:[%s202 + $0x64] sm:$0xf]
      %v241 = vld [vmem:[%s202 + $0x68] sm:$0xf]
      %v242 = vld [vmem:[%s202 + $0x6c] sm:$0xf]
      %v243 = vld [vmem:[%s202 + $0x70] sm:$0xf]
      %v244 = vld [vmem:[%s202 + $0x74] sm:$0xf]
      %v245 = vld [vmem:[%s202 + $0x78] sm:$0xf]
      %v246 = vld [vmem:[%s202 + $0x7c] sm:$0xf]
      %v247 = vunpack.c.l.bf16 %v215
      %v248 = vunpack.c.l.bf16 %v216
      %v249 = vunpack.c.l.bf16 %v217
      %v250 = vunpack.c.l.bf16 %v218
      %v251 = vunpack.c.l.bf16 %v219
      %v252 = vunpack.c.l.bf16 %v220
      %v253 = vunpack.c.l.bf16 %v221
      %v254 = vunpack.c.l.bf16 %v222
      %v255 = vunpack.c.l.bf16 %v223
      %v256 = vunpack.c.l.bf16 %v224
      %v257 = vunpack.c.l.bf16 %v225
      %v258 = vunpack.c.l.bf16 %v226
      %v259 = vunpack.c.l.bf16 %v227
      %v260 = vunpack.c.l.bf16 %v228
      %v261 = vunpack.c.l.bf16 %v229
      %v262 = vunpack.c.l.bf16 %v230
      %v263 = vunpack.c.l.bf16 %v231
      %v264 = vunpack.c.l.bf16 %v232
      %v265 = vunpack.c.l.bf16 %v233
      %v266 = vunpack.c.l.bf16 %v234
      %v267 = vunpack.c.l.bf16 %v235
      %v268 = vunpack.c.l.bf16 %v236
      %v269 = vunpack.c.l.bf16 %v237
      %v270 = vunpack.c.l.bf16 %v238
      %v271 = vunpack.c.l.bf16 %v239
      %v272 = vunpack.c.l.bf16 %v240
      %v273 = vunpack.c.l.bf16 %v241
      %v274 = vunpack.c.l.bf16 %v242
      %v275 = vunpack.c.l.bf16 %v243
      %v276 = vunpack.c.l.bf16 %v244
      %v277 = vunpack.c.l.bf16 %v245
      %v278 = vunpack.c.l.bf16 %v246
      %v279 = vld [vmem:[%s1] sm:$0x1]
      %v281 = vperm.slane %v279, 0
      %v283 = vmul.f32 %v247, %v281
      %v284 = vmul.f32 %v248, %v281
      %v285 = vmul.f32 %v249, %v281
      %v286 = vmul.f32 %v250, %v281
      %v287 = vmul.f32 %v251, %v281
      %v288 = vmul.f32 %v252, %v281
      %v289 = vmul.f32 %v253, %v281
      %v290 = vmul.f32 %v254, %v281
      %v291 = vmul.f32 %v255, %v281
      %v292 = vmul.f32 %v256, %v281
      %v293 = vmul.f32 %v257, %v281
      %v294 = vmul.f32 %v258, %v281
      %v295 = vmul.f32 %v259, %v281
      %v296 = vmul.f32 %v260, %v281
      %v297 = vmul.f32 %v261, %v281
      %v298 = vmul.f32 %v262, %v281
      %v299 = vmul.f32 %v263, %v281
      %v300 = vmul.f32 %v264, %v281
      %v301 = vmul.f32 %v265, %v281
      %v302 = vmul.f32 %v266, %v281
      %v303 = vmul.f32 %v267, %v281
      %v304 = vmul.f32 %v268, %v281
      %v305 = vmul.f32 %v269, %v281
      %v306 = vmul.f32 %v270, %v281
      %v307 = vmul.f32 %v271, %v281
      %v308 = vmul.f32 %v272, %v281
      %v309 = vmul.f32 %v273, %v281
      %v310 = vmul.f32 %v274, %v281
      %v311 = vmul.f32 %v275, %v281
      %v312 = vmul.f32 %v276, %v281
      %v313 = vmul.f32 %v277, %v281
      %v314 = vmul.f32 %v278, %v281
      %v315 = vld [vmem:[%s2] sm:$0x1]
      %v317 = vperm.slane %v315, 0
      %v319 = vadd.f32 %v283, %v317
      %v320 = vadd.f32 %v284, %v317
      %v321 = vadd.f32 %v285, %v317
      %v322 = vadd.f32 %v286, %v317
      %v323 = vadd.f32 %v287, %v317
      %v324 = vadd.f32 %v288, %v317
      %v325 = vadd.f32 %v289, %v317
      %v326 = vadd.f32 %v290, %v317
      %v327 = vadd.f32 %v291, %v317
      %v328 = vadd.f32 %v292, %v317
      %v329 = vadd.f32 %v293, %v317
      %v330 = vadd.f32 %v294, %v317
      %v331 = vadd.f32 %v295, %v317
      %v332 = vadd.f32 %v296, %v317
      %v333 = vadd.f32 %v297, %v317
      %v334 = vadd.f32 %v298, %v317
      %v335 = vadd.f32 %v299, %v317
      %v336 = vadd.f32 %v300, %v317
      %v337 = vadd.f32 %v301, %v317
      %v338 = vadd.f32 %v302, %v317
      %v339 = vadd.f32 %v303, %v317
      %v340 = vadd.f32 %v304, %v317
      %v341 = vadd.f32 %v305, %v317
      %v342 = vadd.f32 %v306, %v317
      %v343 = vadd.f32 %v307, %v317
      %v344 = vadd.f32 %v308, %v317
      %v345 = vadd.f32 %v309, %v317
      %v346 = vadd.f32 %v310, %v317
      %v347 = vadd.f32 %v311, %v317
      %v348 = vadd.f32 %v312, %v317
      %v349 = vadd.f32 %v313, %v317
      %v350 = vadd.f32 %v314, %v317
      %v351 = vmax.f32 %v319, 0.0
      %v352 = vmax.f32 %v320, 0.0
      %v353 = vmax.f32 %v321, 0.0
      %v354 = vmax.f32 %v322, 0.0
      %v355 = vmax.f32 %v323, 0.0
      %v356 = vmax.f32 %v324, 0.0
      %v357 = vmax.f32 %v325, 0.0
      %v358 = vmax.f32 %v326, 0.0
      %v359 = vmax.f32 %v327, 0.0
      %v360 = vmax.f32 %v328, 0.0
      %v361 = vmax.f32 %v329, 0.0
      %v362 = vmax.f32 %v330, 0.0
      %v363 = vmax.f32 %v331, 0.0
      %v364 = vmax.f32 %v332, 0.0
      %v365 = vmax.f32 %v333, 0.0
      %v366 = vmax.f32 %v334, 0.0
      %v367 = vmax.f32 %v335, 0.0
      %v368 = vmax.f32 %v336, 0.0
      %v369 = vmax.f32 %v337, 0.0
      %v370 = vmax.f32 %v338, 0.0
      %v371 = vmax.f32 %v339, 0.0
      %v372 = vmax.f32 %v340, 0.0
      %v373 = vmax.f32 %v341, 0.0
      %v374 = vmax.f32 %v342, 0.0
      %v375 = vmax.f32 %v343, 0.0
      %v376 = vmax.f32 %v344, 0.0
      %v377 = vmax.f32 %v345, 0.0
      %v378 = vmax.f32 %v346, 0.0
      %v379 = vmax.f32 %v347, 0.0
      %v380 = vmax.f32 %v348, 0.0
      %v381 = vmax.f32 %v349, 0.0
      %v382 = vmax.f32 %v350, 0.0
      %383 = vst [vmem:[%s213] sm:$0xff] %v351
      %384 = vst [vmem:[%s213 + $0x8] sm:$0xff] %v352
      %385 = vst [vmem:[%s213 + $0x10] sm:$0xff] %v353
      %386 = vst [vmem:[%s213 + $0x18] sm:$0xff] %v354
      %387 = vst [vmem:[%s213 + $0x20] sm:$0xff] %v355
      %388 = vst [vmem:[%s213 + $0x28] sm:$0xff] %v356
      %389 = vst [vmem:[%s213 + $0x30] sm:$0xff] %v357
      %390 = vst [vmem:[%s213 + $0x38] sm:$0xff] %v358
      %391 = vst [vmem:[%s213 + $0x40] sm:$0xff] %v359
      %392 = vst [vmem:[%s213 + $0x48] sm:$0xff] %v360
      %393 = vst [vmem:[%s213 + $0x50] sm:$0xff] %v361
      %394 = vst [vmem:[%s213 + $0x58] sm:$0xff] %v362
      %395 = vst [vmem:[%s213 + $0x60] sm:$0xff] %v363
      %396 = vst [vmem:[%s213 + $0x68] sm:$0xff] %v364
      %397 = vst [vmem:[%s213 + $0x70] sm:$0xff] %v365
      %398 = vst [vmem:[%s213 + $0x78] sm:$0xff] %v366
      %399 = vst [vmem:[%s213 + $0x80] sm:$0xff] %v367
      %400 = vst [vmem:[%s213 + $0x88] sm:$0xff] %v368
      %401 = vst [vmem:[%s213 + $0x90] sm:$0xff] %v369
      %402 = vst [vmem:[%s213 + $0x98] sm:$0xff] %v370
      %403 = vst [vmem:[%s213 + $0xa0] sm:$0xff] %v371
      %404 = vst [vmem:[%s213 + $0xa8] sm:$0xff] %v372
      %405 = vst [vmem:[%s213 + $0xb0] sm:$0xff] %v373
      %406 = vst [vmem:[%s213 + $0xb8] sm:$0xff] %v374
      %407 = vst [vmem:[%s213 + $0xc0] sm:$0xff] %v375
      %408 = vst [vmem:[%s213 + $0xc8] sm:$0xff] %v376
      %409 = vst [vmem:[%s213 + $0xd0] sm:$0xff] %v377
      %410 = vst [vmem:[%s213 + $0xd8] sm:$0xff] %v378
      %411 = vst [vmem:[%s213 + $0xe0] sm:$0xff] %v379
      %412 = vst [vmem:[%s213 + $0xe8] sm:$0xff] %v380
      %413 = vst [vmem:[%s213 + $0xf0] sm:$0xff] %v381
      %414 = vst [vmem:[%s213 + $0xf8] sm:$0xff] %v382
      %s415 = smul.u32 16, %s19
      %p416 = scmp.lt.s32.totalorder %s18, 1
      %s417 = scalar_select %p416, %s18, 1
      %p418 = scmp.lt.s32.totalorder %s415, 15
      %s419 = scalar_select %p418, %s415, 15
      %s420 = smul.addr %s419, 2
      %s421 = smul.addr %s417, 32
      %s422 = sadd.s32 %s420, %s421
      %s423 = smul.addr %s422, 8
      %s424 = scalar_lea.vmem %s3, %s423
      // Predicated region
      $region33: #{decoder_block_forward.7} parent=31 // pred_check
        %p425 = pneg %p116
      $region34: #{decoder_block_forward.7} parent=31 // pred_check_branch
        %427 = sbr.rel (%p425) target = $region36
      $region35: #{decoder_block_forward.7} parent=31 // pred_region
        %s428 = smul.u32 16, %s19
      $region36: #{decoder_block_forward.7} parent=31 // pred_fallthru
        _
    $region32: #{decoder_block_forward.7} parent=5 // pred_fallthru
      _
    %p429 = scmp.le.s32.totalorder 2, %s9
    // Predicated region
    $region37: #{decoder_block_forward.7} parent=5 // pred_check
      %p430 = pneg %p429
    $region38: #{decoder_block_forward.7} parent=5 // pred_check_branch
      %432 = sbr.rel (%p430) target = $region40
    $region39: #{decoder_block_forward.7} parent=5 // pred_region
      %s433 = ssub.s32 %s9, 2
      // Predicated region
      $region41: #{decoder_block_forward.7} parent=39 // pred_check
        %p434 = pneg %p122
      $region42: #{decoder_block_forward.7} parent=39 // pred_check_branch
        %436 = sbr.rel (%p434) target = $region44
      $region43: #{decoder_block_forward.7} parent=39 // pred_region
        %s437 = smul.u32 16, %s21
        %p438 = scmp.lt.s32.totalorder %s20, 1
        %s439 = scalar_select %p438, %s20, 1
        %p440 = scmp.lt.s32.totalorder %s437, 15
        %s441 = scalar_select %p440, %s437, 15
        %s442 = smul.addr %s441, 2
        %s443 = smul.addr %s439, 32
        %s444 = sadd.s32 %s442, %s443
        %s445 = smul.addr %s444, 8
        %s446 = scalar_lea.vmem %s3, %s445
      $region44: #{decoder_block_forward.7} parent=39 // pred_fallthru
        _
    $region40: #{decoder_block_forward.7} parent=5 // pred_fallthru
      _
  $region6: #{decoder_block_forward.7} parent=0 // loop_footer
    %s13 = sadd.s32 1, %s9
  $region7: #{decoder_block_forward.7} parent=0 // loop_footer_branch
    %8 = sbr.rel target = $region3
  $region8: #{decoder_block_forward.7} parent=0 // loop_exit
    _

// kernel: decoder_block_forward.4
$region0: #{decoder_block_forward.4}
  #allocation0 [shape = 'u32[]', space=smem, size = 0x4, offset = 0x4, fixed_abs, tag = 'smem constant byte address 0x4 - core index']
  #allocation1 [shape = 'u32[72,128]{1,0:T(1,128)}', space=vmem, size = 0x9000, scoped, tag = 'internal scratch']
  %s0 = inlined_call_operand.vmem [shape: bf16[2,16,16,128], index: 0, kind: input, shape index: {}]
  %s1 = inlined_call_operand.vmem [shape: bf16[2,2,2,16,128], index: 1, kind: input, shape index: {}]
  %s2 = inlined_call_operand.vmem [shape: bf16[1152,128], index: 2, kind: input, shape index: {}]
  %s3 = inlined_call_operand.vmem [shape: f32[1,128], index: 3, kind: input, shape index: {}]
  %s4 = inlined_call_operand.vmem [shape: bf16[2,16,16,128], index: 4, kind: output, shape index: {}]
  %s5 = sld [smem:[#allocation0]]
  $region49: #{decoder_block_forward.4} parent=0
    _
  %s7 = ssub.s32 1, %s5
  %s8 = scalar_select 0, %s7, %s5
  loop: start=0, step=1, limit=6
  $region2: #{decoder_block_forward.4} parent=0 // loop_pre_header
    _
  $region3: #{decoder_block_forward.4} parent=0 // loop_header
    %s10 = sphi 0, %s14
    %p11 = scmp.ge.s32.totalorder %s10, 6
    %s17 = sphi 0, %s29
    %s18 = sphi 0, %s25
    %s19 = sphi 0, %s17
    %s20 = sphi 0, %s18
    %s21 = sphi 0, %s19
    %s22 = sphi 0, %s20
    %s34 = sphi 0, %s36
    %s37 = sphi 0, %s34
    %s38 = sphi 0, %s37
    %s54 = sphi 0, %s38
    %s62 = sphi 0, %s64
    %s65 = sphi 0, %s62
    %s66 = sphi 0, %s65
    %s82 = sphi 0, %s66
    %s86 = sphi 0, %s86
    %s88 = sphi 0, %s86
    %s89 = sphi 0, %s88
    %s103 = sphi 0, %s89
    %s107 = sphi 0, %s107
    %s109 = sphi 0, %s107
    %s110 = sphi 0, %s109
    %s124 = sphi 0, %s110
    %s132 = sphi 0, %s134
    %s135 = sphi 0, %s132
    %s136 = sphi 0, %s135
    %s152 = sphi 0, %s136
  $region4: #{decoder_block_forward.4} parent=0 // loop_header_branch
    %13 = sbr.rel (%p11) target = $region8
  $region5: #{decoder_block_forward.4} parent=0 // loop_body
    %s15 = ssub.s32 %s10, 1
    %s16 = ssub.s32 %s10, 2
    %s23 = sadd.s32 1, %s18
    %p24 = scmp.ge.s32.totalorder %s23, 2
    %s25 = scalar_select %p24, 0, %s23
    %s26 = sadd.s32 1, %s17
    %s27 = scalar_select %p24, %s26, %s17
    %p28 = scmp.ge.s32.totalorder %s27, 2
    %s29 = scalar_select %p28, 0, %s27
    %s30 = ssub.s32 %s17, %s29
    %s31 = ssub.s32 %s18, %s25
    %s32 = sor.u32 %s30, %s31
    %p33 = scmp.eq.s32.totalorder %s32, 0
    %s35 = sadd.s32 %s34, 1
    %s36 = scalar_select %p33, %s34, %s35
    %p39 = pneg %p33
    %p40 = scmp.eq.s32.totalorder %s10, 3
    %p41 = por %p39, %p40
    %p42 = scmp.ne.s32.totalorder %s34, %s37
    %p43 = scmp.eq.s32.totalorder %s10, 0
    %p44 = por %p42, %p43
    %p45 = scmp.ne.s32.totalorder %s34, %s37
    %p46 = scmp.eq.s32.totalorder %s15, 3
    %p47 = por %p45, %p46
    %p48 = scmp.ne.s32.totalorder %s37, %s38
    %p49 = scmp.eq.s32.totalorder %s15, 0
    %p50 = por %p48, %p49
    %p51 = scmp.ne.s32.totalorder %s37, %s38
    %p52 = scmp.eq.s32.totalorder %s16, 3
    %p53 = por %p51, %p52
    %p55 = scmp.ne.s32.totalorder %s38, %s54
    %p56 = scmp.eq.s32.totalorder %s16, 0
    %p57 = por %p55, %p56
    %s58 = ssub.s32 %s17, %s29
    %s59 = ssub.s32 %s18, %s25
    %s60 = sor.u32 %s58, %s59
    %p61 = scmp.eq.s32.totalorder %s60, 0
    %s63 = sadd.s32 %s62, 1
    %s64 = scalar_select %p61, %s62, %s63
    %p67 = pneg %p61
    %p68 = scmp.eq.s32.totalorder %s10, 3
    %p69 = por %p67, %p68
    %p70 = scmp.ne.s32.totalorder %s62, %s65
    %p71 = scmp.eq.s32.totalorder %s10, 0
    %p72 = por %p70, %p71
    %p73 = scmp.ne.s32.totalorder %s62, %s65
    %p74 = scmp.eq.s32.totalorder %s15, 3
    %p75 = por %p73, %p74
    %p76 = scmp.ne.s32.totalorder %s65, %s66
    %p77 = scmp.eq.s32.totalorder %s15, 0
    %p78 = por %p76, %p77
    %p79 = scmp.ne.s32.totalorder %s65, %s66
    %p80 = scmp.eq.s32.totalorder %s16, 3
    %p81 = por %p79, %p80
    %p83 = scmp.ne.s32.totalorder %s66, %s82
    %p84 = scmp.eq.s32.totalorder %s16, 0
    %p85 = por %p83, %p84
    %s87 = sadd.s32 %s86, 1
    %p90 = scmp.eq.s32.totalorder %s10, 3
    %p91 = scmp.ne.s32.totalorder %s86, %s88
    %p92 = scmp.eq.s32.totalorder %s10, 0
    %p93 = por %p91, %p92
    %p94 = scmp.ne.s32.totalorder %s86, %s88
    %p95 = scmp.eq.s32.totalorder %s15, 3
    %p96 = por %p94, %p95
    %p97 = scmp.ne.s32.totalorder %s88, %s89
    %p98 = scmp.eq.s32.totalorder %s15, 0
    %p99 = por %p97, %p98
    %p100 = scmp.ne.s32.totalorder %s88, %s89
    %p101 = scmp.eq.s32.totalorder %s16, 3
    %p102 = por %p100, %p101
    %p104 = scmp.ne.s32.totalorder %s89, %s103
    %p105 = scmp.eq.s32.totalorder %s16, 0
    %p106 = por %p104, %p105
    %s108 = sadd.s32 %s107, 1
    %p111 = scmp.eq.s32.totalorder %s10, 3
    %p112 = scmp.ne.s32.totalorder %s107, %s109
    %p113 = scmp.eq.s32.totalorder %s10, 0
    %p114 = por %p112, %p113
    %p115 = scmp.ne.s32.totalorder %s107, %s109
    %p116 = scmp.eq.s32.totalorder %s15, 3
    %p117 = por %p115, %p116
    %p118 = scmp.ne.s32.totalorder %s109, %s110
    %p119 = scmp.eq.s32.totalorder %s15, 0
    %p120 = por %p118, %p119
    %p121 = scmp.ne.s32.totalorder %s109, %s110
    %p122 = scmp.eq.s32.totalorder %s16, 3
    %p123 = por %p121, %p122
    %p125 = scmp.ne.s32.totalorder %s110, %s124
    %p126 = scmp.eq.s32.totalorder %s16, 0
    %p127 = por %p125, %p126
    %s128 = ssub.s32 %s17, %s29
    %s129 = ssub.s32 %s18, %s25
    %s130 = sor.u32 %s128, %s129
    %p131 = scmp.eq.s32.totalorder %s130, 0
    %s133 = sadd.s32 %s132, 1
    %s134 = scalar_select %p131, %s132, %s133
    %p137 = pneg %p131
    %p138 = scmp.eq.s32.totalorder %s10, 3
    %p139 = por %p137, %p138
    %p140 = scmp.ne.s32.totalorder %s132, %s135
    %p141 = scmp.eq.s32.totalorder %s10, 0
    %p142 = por %p140, %p141
    %p143 = scmp.ne.s32.totalorder %s132, %s135
    %p144 = scmp.eq.s32.totalorder %s15, 3
    %p145 = por %p143, %p144
    %p146 = scmp.ne.s32.totalorder %s135, %s136
    %p147 = scmp.eq.s32.totalorder %s15, 0
    %p148 = por %p146, %p147
    %p149 = scmp.ne.s32.totalorder %s135, %s136
    %p150 = scmp.eq.s32.totalorder %s16, 3
    %p151 = por %p149, %p150
    %p153 = scmp.ne.s32.totalorder %s136, %s152
    %p154 = scmp.eq.s32.totalorder %s16, 0
    %p155 = por %p153, %p154
    %p156 = scmp.le.s32.totalorder 1, %s10
    %p157 = scmp.lt.s32.totalorder %s10, 5
    %p158 = pnand %p156, %p157
    %p159 = pneg %p158
    // Predicated region
    $region9: #{decoder_block_forward.4} parent=5 // pred_check
      _
    $region10: #{decoder_block_forward.4} parent=5 // pred_check_branch
      %161 = sbr.rel (%p158) target = $region12
    $region11: #{decoder_block_forward.4} parent=5 // pred_region
      %s162 = ssub.s32 %s10, 1
      // Predicated region
      $region13: #{decoder_block_forward.4} parent=11 // pred_check
        %p163 = pneg %p99
      $region14: #{decoder_block_forward.4} parent=11 // pred_check_branch
        %165 = sbr.rel (%p163) target = $region16
      $region15: #{decoder_block_forward.4} parent=11 // pred_region
        _
      $region16: #{decoder_block_forward.4} parent=11 // pred_fallthru
        _
      // Predicated region
      $region17: #{decoder_block_forward.4} parent=11 // pred_check
        %p166 = pneg %p120
      $region18: #{decoder_block_forward.4} parent=11 // pred_check_branch
        %168 = sbr.rel (%p166) target = $region20
      $region19: #{decoder_block_forward.4} parent=11 // pred_region
        _
      $region20: #{decoder_block_forward.4} parent=11 // pred_fallthru
        _
    $region12: #{decoder_block_forward.4} parent=5 // pred_fallthru
      _
    %p169 = scmp.lt.s32.totalorder %s10, 4
    // Predicated region
    $region21: #{decoder_block_forward.4} parent=5 // pred_check
      %p170 = pneg %p169
    $region22: #{decoder_block_forward.4} parent=5 // pred_check_branch
      %172 = sbr.rel (%p170) target = $region24
    $region23: #{decoder_block_forward.4} parent=5 // pred_region
      // Predicated region
      $region25: #{decoder_block_forward.4} parent=23 // pred_check
        %p173 = pneg %p44
      $region26: #{decoder_block_forward.4} parent=23 // pred_check_branch
        %175 = sbr.rel (%p173) target = $region28
      $region27: #{decoder_block_forward.4} parent=23 // pred_region
        %s176 = smul.u32 8, %s18
        %p177 = scmp.lt.s32.totalorder %s17, 1
        %s178 = scalar_select %p177, %s17, 1
        %p179 = scmp.lt.s32.totalorder %s176, 15
        %s180 = scalar_select %p179, %s176, 15
        %s181 = smul.addr %s180, 2
        %s182 = smul.addr %s178, 32
        %s183 = sadd.s32 %s181, %s182
        %s184 = smul.addr %s183, 4
        %s185 = scalar_lea.vmem %s0, %s184
        %s186 = smul.u32 8, %s18
      $region28: #{decoder_block_forward.4} parent=23 // pred_fallthru
        _
      // Predicated region
      $region29: #{decoder_block_forward.4} parent=23 // pred_check
        %p187 = pneg %p72
      $region30: #{decoder_block_forward.4} parent=23 // pred_check_branch
        %189 = sbr.rel (%p187) target = $region32
      $region31: #{decoder_block_forward.4} parent=23 // pred_region
        %p190 = scmp.lt.s32.totalorder %s17, 1
        %s191 = scalar_select %p190, %s17, 1
        %p192 = scmp.lt.s32.totalorder %s18, 1
        %s193 = scalar_select %p192, %s18, 1
        %s194 = smul.addr %s193, 4
        %s195 = smul.addr %s191, 8
        %s196 = sadd.s32 %s194, %s195
        %s197 = smul.addr %s196, 4
        %s198 = scalar_lea.vmem %s1, %s197
      $region32: #{decoder_block_forward.4} parent=23 // pred_fallthru
        _
    $region24: #{decoder_block_forward.4} parent=5 // pred_fallthru
      _
    %p199 = scmp.le.s32.totalorder 1, %s10
    %p200 = scmp.lt.s32.totalorder %s10, 5
    %p201 = pnand %p199, %p200
    %p202 = pneg %p201
    // Predicated region
    $region33: #{decoder_block_forward.4} parent=5 // pred_check
      _
    $region34: #{decoder_block_forward.4} parent=5 // pred_check_branch
      %204 = sbr.rel (%p201) target = $region36
    $region35: #{decoder_block_forward.4} parent=5 // pred_region
      %s205 = ssub.s32 %s10, 1
      %s206 = smul.u32 8, %s20
      %p207 = scmp.lt.s32.totalorder %s19, 1
      %s208 = scalar_select %p207, %s19, 1
      %p209 = scmp.lt.s32.totalorder %s206, 15
      %s210 = scalar_select %p209, %s206, 15
      %s211 = smul.addr %s210, 2
      %s212 = smul.addr %s208, 32
      %s213 = sadd.s32 %s211, %s212
      %s214 = smul.addr %s213, 4
      %s215 = scalar_lea.vmem %s0, %s214
      %p216 = pneg %p50
      %p217 = pneg %p47
      %p218 = scmp.lt.s32.totalorder %s19, 1
      %s219 = scalar_select %p218, %s19, 1
      %p220 = scmp.lt.s32.totalorder %s20, 1
      %s221 = scalar_select %p220, %s20, 1
      %s222 = smul.addr %s221, 4
      %s223 = smul.addr %s219, 8
      %s224 = sadd.s32 %s222, %s223
      %s225 = smul.addr %s224, 4
      %s226 = scalar_lea.vmem %s1, %s225
      %p227 = pneg %p78
      %p228 = pneg %p75
      %p229 = pneg %p99
      %p230 = pneg %p96
      %p231 = pneg %p120
      %p232 = pneg %p117
      %p233 = pneg %p148
      %p234 = pneg %p145
      %s235 = smul.u32 8, %s20
      %p236 = scmp.lt.s32.totalorder %s19, 1
      %s237 = scalar_select %p236, %s19, 1
      %p238 = scmp.lt.s32.totalorder %s235, 15
      %s239 = scalar_select %p238, %s235, 15
      %s240 = smul.addr %s239, 2
      %s241 = smul.addr %s237, 32
      %s242 = sadd.s32 %s240, %s241
      %s243 = smul.addr %s242, 4
      %s244 = scalar_lea.vmem %s4, %s243
      %s245 = smul.u32 8, %s20
      %p246 = scmp.lt.s32.totalorder %s19, 1
      %s247 = scalar_select %p246, %s19, 1
      %p248 = scmp.lt.s32.totalorder %s245, 15
      %s249 = scalar_select %p248, %s245, 15
      %s250 = smul.addr %s249, 2
      %s251 = smul.addr %s247, 32
      %s252 = sadd.s32 %s250, %s251
      %s253 = smul.addr %s252, 4
      %s254 = scalar_lea.vmem %s0, %s253
      %s255 = smul.u32 8, %s20
      %p256 = scmp.lt.s32.totalorder %s19, 1
      %s257 = scalar_select %p256, %s19, 1
      %p258 = scmp.lt.s32.totalorder %s20, 1
      %s259 = scalar_select %p258, %s20, 1
      %s260 = smul.addr %s259, 4
      %s261 = smul.addr %s257, 8
      %s262 = sadd.s32 %s260, %s261
      %s263 = smul.addr %s262, 4
      %s264 = scalar_lea.vmem %s1, %s263
      %s265 = smul.u32 8, %s20
      %p266 = scmp.lt.s32.totalorder %s19, 1
      %s267 = scalar_select %p266, %s19, 1
      %p268 = scmp.lt.s32.totalorder %s265, 15
      %s269 = scalar_select %p268, %s265, 15
      %s270 = smul.addr %s269, 2
      %s271 = smul.addr %s267, 32
      %s272 = sadd.s32 %s270, %s271
      %s273 = smul.addr %s272, 4
      %s274 = scalar_lea.vmem %s4, %s273
      %s275 = smul.u32 8, %s20
      %v277 = vld [vmem:[%s264] sm:$0xf]
      %v278 = vld [vmem:[%s264 + $0x4] sm:$0xf]
      %v279 = vld [vmem:[%s264 + $0x8] sm:$0xf]
      %v280 = vld [vmem:[%s264 + $0xc] sm:$0xf]
      %v281 = vld [vmem:[%s254] sm:$0xf]
      %v282 = vld [vmem:[%s254 + $0x4] sm:$0xf]
      %v283 = vld [vmem:[%s254 + $0x8] sm:$0xf]
      %v284 = vld [vmem:[%s254 + $0xc] sm:$0xf]
      %v285 = vld [vmem:[%s254 + $0x10] sm:$0xf]
      %v286 = vld [vmem:[%s254 + $0x14] sm:$0xf]
      %v287 = vld [vmem:[%s254 + $0x18] sm:$0xf]
      %v288 = vld [vmem:[%s254 + $0x1c] sm:$0xf]
      %v289 = vld [vmem:[%s254 + $0x20] sm:$0xf]
      %v290 = vld [vmem:[%s254 + $0x24] sm:$0xf]
      %v291 = vld [vmem:[%s254 + $0x28] sm:$0xf]
      %v292 = vld [vmem:[%s254 + $0x2c] sm:$0xf]
      %v293 = vld [vmem:[%s254 + $0x30] sm:$0xf]
      %v294 = vld [vmem:[%s254 + $0x34] sm:$0xf]
      %v295 = vld [vmem:[%s254 + $0x38] sm:$0xf]
      %v296 = vld [vmem:[%s254 + $0x3c] sm:$0xf]
      %v317 = vunpack.c.l.b16 %v277
      %v318 = vunpack.c.l.b16 %v278
      %v319 = vunpack.c.l.b16 %v281
      %v320 = vunpack.c.l.b16 %v282
      %v321 = vunpack.c.l.b16 %v283
      %v322 = vunpack.c.l.b16 %v284
      %v323 = vunpack.c.l.b16 %v285
      %v324 = vunpack.c.l.b16 %v286
      %v325 = vunpack.c.l.b16 %v287
      %v326 = vunpack.c.l.b16 %v288
      %v327 = vunpack.c.l.b16 %v289
      %v328 = vunpack.c.l.b16 %v290
      %v329 = vunpack.c.l.b16 %v291
      %v330 = vunpack.c.l.b16 %v292
      %v331 = vunpack.c.l.b16 %v293
      %v332 = vunpack.c.l.b16 %v294
      %v333 = vunpack.c.l.b16 %v295
      %v334 = vunpack.c.l.b16 %v296
      %v335 = vunpack.c.l.b16 %v279
      %v336 = vunpack.c.l.b16 %v280
      %v337 = vpack.c.b16 %v318, %v317
      %v338 = vpack.c.b16 %v320, %v319
      %v339 = vpack.c.b16 %v322, %v321
      %v340 = vpack.c.b16 %v324, %v323
      %v341 = vpack.c.b16 %v326, %v325
      %v342 = vpack.c.b16 %v328, %v327
      %v343 = vpack.c.b16 %v330, %v329
      %v344 = vpack.c.b16 %v332, %v331
      %v345 = vpack.c.b16 %v334, %v333
      %v346 = vpack.c.b16 %v336, %v335
      %v348 = vshrl.u32 %v337, 16
      %v350 = vrot.slane %v348, 7
      %v351 = vshll.u32 %v337, 16
      %v353 = vor.u32 %v350, %v351
      %v355 = vshrl.u32 %v338, 16
      %v357 = vrot.slane %v355, 7
      %v358 = vshll.u32 %v338, 16
      %v360 = vor.u32 %v357, %v358
      %v362 = vshrl.u32 %v339, 16
      %v364 = vrot.slane %v362, 7
      %v365 = vshll.u32 %v339, 16
      %v367 = vor.u32 %v364, %v365
      %v369 = vshrl.u32 %v340, 16
      %v371 = vrot.slane %v369, 7
      %v372 = vshll.u32 %v340, 16
      %v374 = vor.u32 %v371, %v372
      %v376 = vshrl.u32 %v341, 16
      %v378 = vrot.slane %v376, 7
      %v379 = vshll.u32 %v341, 16
      %v381 = vor.u32 %v378, %v379
      %v383 = vshrl.u32 %v342, 16
      %v385 = vrot.slane %v383, 7
      %v386 = vshll.u32 %v342, 16
      %v388 = vor.u32 %v385, %v386
      %v390 = vshrl.u32 %v343, 16
      %v392 = vrot.slane %v390, 7
      %v393 = vshll.u32 %v343, 16
      %v395 = vor.u32 %v392, %v393
      %v397 = vshrl.u32 %v344, 16
      %v399 = vrot.slane %v397, 7
      %v400 = vshll.u32 %v344, 16
      %v402 = vor.u32 %v399, %v400
      %v404 = vshrl.u32 %v345, 16
      %v406 = vrot.slane %v404, 7
      %v407 = vshll.u32 %v345, 16
      %v409 = vor.u32 %v406, %v407
      %v411 = vshrl.u32 %v346, 16
      %v413 = vrot.slane %v411, 7
      %v414 = vshll.u32 %v346, 16
      %v416 = vor.u32 %v413, %v414
      %vm437 = vcmask 1040384
      %vm438 = vsmask.f32 256
      %vm439 = vmand %vm437, %vm438
      %v440 = vsel %vm439, 0, %v353
      %v441 = vsel %vm439, 0, %v360
      %v442 = vsel %vm439, 0, %v367
      %v443 = vsel %vm439, 0, %v374
      %v444 = vsel %vm439, 0, %v381
      %v445 = vsel %vm439, 0, %v388
      %v446 = vsel %vm439, 0, %v395
      %v447 = vsel %vm439, 0, %v402
      %v448 = vsel %vm439, 0, %v409
      %v449 = vsel %vm439, 0, %v416
      %v450 = vsel %vm439, %v350, 0
      %v451 = vsel %vm439, %v357, 0
      %v452 = vsel %vm439, %v364, 0
      %v453 = vsel %vm439, %v371, 0
      %v454 = vsel %vm439, %v378, 0
      %v455 = vsel %vm439, %v385, 0
      %v456 = vsel %vm439, %v392, 0
      %v457 = vsel %vm439, %v399, 0
      %v458 = vsel %vm439, %v406, 0
      %v459 = vsel %vm439, %v413, 0
      %vm460 = vsmask.f32 7424
      %v462 = vshrl.u32 %v440, 16
      %v464 = vshll.u32 %v440, 16
      %v466 = vrot.slane %v464, 1
      %v467 = vor.u32 %v462, %v466
      %v469 = vshll.u32 %v450, 16
      %v471 = vrot.slane %v469, 1
      %v472 = vsel %vm460, %v467, %v471
      %v474 = vshrl.u32 %v441, 16
      %v476 = vshll.u32 %v441, 16
      %v478 = vrot.slane %v476, 1
      %v479 = vor.u32 %v474, %v478
      %v481 = vshll.u32 %v451, 16
      %v483 = vrot.slane %v481, 1
      %v484 = vsel %vm460, %v479, %v483
      %v486 = vshrl.u32 %v442, 16
      %v488 = vshll.u32 %v442, 16
      %v490 = vrot.slane %v488, 1
      %v491 = vor.u32 %v486, %v490
      %v493 = vshll.u32 %v452, 16
      %v495 = vrot.slane %v493, 1
      %v496 = vsel %vm460, %v491, %v495
      %v498 = vshrl.u32 %v443, 16
      %v500 = vshll.u32 %v443, 16
      %v502 = vrot.slane %v500, 1
      %v503 = vor.u32 %v498, %v502
      %v505 = vshll.u32 %v453, 16
      %v507 = vrot.slane %v505, 1
      %v508 = vsel %vm460, %v503, %v507
      %v510 = vshrl.u32 %v444, 16
      %v512 = vshll.u32 %v444, 16
      %v514 = vrot.slane %v512, 1
      %v515 = vor.u32 %v510, %v514
      %v517 = vshll.u32 %v454, 16
      %v519 = vrot.slane %v517, 1
      %v520 = vsel %vm460, %v515, %v519
      %v522 = vshrl.u32 %v445, 16
      %v524 = vshll.u32 %v445, 16
      %v526 = vrot.slane %v524, 1
      %v527 = vor.u32 %v522, %v526
      %v529 = vshll.u32 %v455, 16
      %v531 = vrot.slane %v529, 1
      %v532 = vsel %vm460, %v527, %v531
      %v534 = vshrl.u32 %v446, 16
      %v536 = vshll.u32 %v446, 16
      %v538 = vrot.slane %v536, 1
      %v539 = vor.u32 %v534, %v538
      %v541 = vshll.u32 %v456, 16
      %v543 = vrot.slane %v541, 1
      %v544 = vsel %vm460, %v539, %v543
      %v546 = vshrl.u32 %v447, 16
      %v548 = vshll.u32 %v447, 16
      %v550 = vrot.slane %v548, 1
      %v551 = vor.u32 %v546, %v550
      %v553 = vshll.u32 %v457, 16
      %v555 = vrot.slane %v553, 1
      %v556 = vsel %vm460, %v551, %v555
      %vm581 = vcmask 1046528
      %v582 = vrot.slane %v440, 1
      %v583 = vrot.slane %v450, 1
      %v584 = vsel %vm581, %v582, %v583
      %v585 = vrot.slane %v441, 1
      %v586 = vrot.slane %v451, 1
      %v587 = vsel %vm581, %v585, %v586
      %v588 = vrot.slane %v442, 1
      %v589 = vrot.slane %v452, 1
      %v590 = vsel %vm581, %v588, %v589
      %v591 = vrot.slane %v443, 1
      %v592 = vrot.slane %v453, 1
      %v593 = vsel %vm581, %v591, %v592
      %v594 = vrot.slane %v444, 1
      %v595 = vrot.slane %v454, 1
      %v596 = vsel %vm581, %v594, %v595
      %v597 = vrot.slane %v445, 1
      %v598 = vrot.slane %v455, 1
      %v599 = vsel %vm581, %v597, %v598
      %v600 = vrot.slane %v446, 1
      %v601 = vrot.slane %v456, 1
      %v602 = vsel %vm581, %v600, %v601
      %v603 = vrot.slane %v447, 1
      %v604 = vrot.slane %v457, 1
      %v605 = vsel %vm581, %v603, %v604
      %v614 = vld [vmem:[%s2] sm:$0xf]
      %v615 = vld [vmem:[%s2 + $0x4] sm:$0xf]
      %v616 = vld [vmem:[%s2 + $0x8] sm:$0xf]
      %v617 = vld [vmem:[%s2 + $0xc] sm:$0xf]
      %v618 = vld [vmem:[%s2 + $0x10] sm:$0xf]
      %v619 = vld [vmem:[%s2 + $0x14] sm:$0xf]
      %v620 = vld [vmem:[%s2 + $0x18] sm:$0xf]
      %v621 = vld [vmem:[%s2 + $0x1c] sm:$0xf]
      %v622 = vld [vmem:[%s2 + $0x20] sm:$0xf]
      %v623 = vld [vmem:[%s2 + $0x24] sm:$0xf]
      %v624 = vld [vmem:[%s2 + $0x28] sm:$0xf]
      %v625 = vld [vmem:[%s2 + $0x2c] sm:$0xf]
      %v626 = vld [vmem:[%s2 + $0x30] sm:$0xf]
      %v627 = vld [vmem:[%s2 + $0x34] sm:$0xf]
      %v628 = vld [vmem:[%s2 + $0x38] sm:$0xf]
      %v629 = vld [vmem:[%s2 + $0x3c] sm:$0xf]
      %v630 = vld [vmem:[%s2 + $0x40] sm:$0xf]
      %v631 = vld [vmem:[%s2 + $0x44] sm:$0xf]
      %v632 = vld [vmem:[%s2 + $0x48] sm:$0xf]
      %v633 = vld [vmem:[%s2 + $0x4c] sm:$0xf]
      %v634 = vld [vmem:[%s2 + $0x50] sm:$0xf]
      %v635 = vld [vmem:[%s2 + $0x54] sm:$0xf]
      %v636 = vld [vmem:[%s2 + $0x58] sm:$0xf]
      %v637 = vld [vmem:[%s2 + $0x5c] sm:$0xf]
      %v638 = vld [vmem:[%s2 + $0x60] sm:$0xf]
      %v639 = vld [vmem:[%s2 + $0x64] sm:$0xf]
      %v640 = vld [vmem:[%s2 + $0x68] sm:$0xf]
      %v641 = vld [vmem:[%s2 + $0x6c] sm:$0xf]
      %v642 = vld [vmem:[%s2 + $0x70] sm:$0xf]
      %v643 = vld [vmem:[%s2 + $0x74] sm:$0xf]
      %v644 = vld [vmem:[%s2 + $0x78] sm:$0xf]
      %v645 = vld [vmem:[%s2 + $0x7c] sm:$0xf]
      %v646 = vld [vmem:[%s2 + $0x80] sm:$0xf]
      %v647 = vld [vmem:[%s2 + $0x84] sm:$0xf]
      %v648 = vld [vmem:[%s2 + $0x88] sm:$0xf]
      %v649 = vld [vmem:[%s2 + $0x8c] sm:$0xf]
      %v650 = vld [vmem:[%s2 + $0x90] sm:$0xf]
      %v651 = vld [vmem:[%s2 + $0x94] sm:$0xf]
      %v652 = vld [vmem:[%s2 + $0x98] sm:$0xf]
      %v653 = vld [vmem:[%s2 + $0x9c] sm:$0xf]
      %v654 = vld [vmem:[%s2 + $0xa0] sm:$0xf]
      %v655 = vld [vmem:[%s2 + $0xa4] sm:$0xf]
      %v656 = vld [vmem:[%s2 + $0xa8] sm:$0xf]
      %v657 = vld [vmem:[%s2 + $0xac] sm:$0xf]
      %v658 = vld [vmem:[%s2 + $0xb0] sm:$0xf]
      %v659 = vld [vmem:[%s2 + $0xb4] sm:$0xf]
      %v660 = vld [vmem:[%s2 + $0xb8] sm:$0xf]
      %v661 = vld [vmem:[%s2 + $0xbc] sm:$0xf]
      %v663 = vshrl.u32 %v448, 16
      %v665 = vshll.u32 %v448, 16
      %v667 = vrot.slane %v665, 1
      %v668 = vor.u32 %v663, %v667
      %v670 = vshll.u32 %v458, 16
      %v672 = vrot.slane %v670, 1
      %v673 = vsel %vm460, %v668, %v672
      %v677 = vrot.slane %v448, 1
      %v678 = vrot.slane %v458, 1
      %v679 = vsel %vm581, %v677, %v678
      %v681 = vld [vmem:[%s2 + $0xc0] sm:$0xf]
      %v682 = vld [vmem:[%s2 + $0xc4] sm:$0xf]
      %v683 = vld [vmem:[%s2 + $0xc8] sm:$0xf]
      %v684 = vld [vmem:[%s2 + $0xcc] sm:$0xf]
      %v685 = vld [vmem:[%s2 + $0xd0] sm:$0xf]
      %v686 = vld [vmem:[%s2 + $0xd4] sm:$0xf]
      %v687 = vld [vmem:[%s2 + $0xd8] sm:$0xf]
      %v688 = vld [vmem:[%s2 + $0xdc] sm:$0xf]
      %v689 = vld [vmem:[%s2 + $0xe0] sm:$0xf]
      %v690 = vld [vmem:[%s2 + $0xe4] sm:$0xf]
      %v691 = vld [vmem:[%s2 + $0xe8] sm:$0xf]
      %v692 = vld [vmem:[%s2 + $0xec] sm:$0xf]
      %v693 = vld [vmem:[%s2 + $0xf0] sm:$0xf]
      %v694 = vld [vmem:[%s2 + $0xf4] sm:$0xf]
      %v695 = vld [vmem:[%s2 + $0xf8] sm:$0xf]
      %v696 = vld [vmem:[%s2 + $0xfc] sm:$0xf]
      %v697 = vld [vmem:[%s2 + $0x100] sm:$0xf]
      %v698 = vld [vmem:[%s2 + $0x104] sm:$0xf]
      %v699 = vld [vmem:[%s2 + $0x108] sm:$0xf]
      %v700 = vld [vmem:[%s2 + $0x10c] sm:$0xf]
      %v701 = vld [vmem:[%s2 + $0x110] sm:$0xf]
      %v702 = vld [vmem:[%s2 + $0x114] sm:$0xf]
      %v703 = vld [vmem:[%s2 + $0x118] sm:$0xf]
      %v704 = vld [vmem:[%s2 + $0x11c] sm:$0xf]
      %v705 = vld [vmem:[%s2 + $0x120] sm:$0xf]
      %v706 = vld [vmem:[%s2 + $0x124] sm:$0xf]
      %v707 = vld [vmem:[%s2 + $0x128] sm:$0xf]
      %v708 = vld [vmem:[%s2 + $0x12c] sm:$0xf]
      %v709 = vld [vmem:[%s2 + $0x130] sm:$0xf]
      %v710 = vld [vmem:[%s2 + $0x134] sm:$0xf]
      %v711 = vld [vmem:[%s2 + $0x138] sm:$0xf]
      %v712 = vld [vmem:[%s2 + $0x13c] sm:$0xf]
      %v713 = vld [vmem:[%s2 + $0x140] sm:$0xf]
      %v714 = vld [vmem:[%s2 + $0x144] sm:$0xf]
      %v715 = vld [vmem:[%s2 + $0x148] sm:$0xf]
      %v716 = vld [vmem:[%s2 + $0x14c] sm:$0xf]
      %v717 = vld [vmem:[%s2 + $0x150] sm:$0xf]
      %v718 = vld [vmem:[%s2 + $0x154] sm:$0xf]
      %v719 = vld [vmem:[%s2 + $0x158] sm:$0xf]
      %v720 = vld [vmem:[%s2 + $0x15c] sm:$0xf]
      %v721 = vld [vmem:[%s2 + $0x160] sm:$0xf]
      %v722 = vld [vmem:[%s2 + $0x164] sm:$0xf]
      %v723 = vld [vmem:[%s2 + $0x168] sm:$0xf]
      %v724 = vld [vmem:[%s2 + $0x16c] sm:$0xf]
      %v725 = vld [vmem:[%s2 + $0x170] sm:$0xf]
      %v726 = vld [vmem:[%s2 + $0x174] sm:$0xf]
      %v727 = vld [vmem:[%s2 + $0x178] sm:$0xf]
      %v728 = vld [vmem:[%s2 + $0x17c] sm:$0xf]
      %v777 = vunpack.c.l.b16 %v681
      %v778 = vunpack.c.l.b16 %v682
      %v779 = vunpack.c.l.b16 %v683
      %v780 = vunpack.c.l.b16 %v684
      %v781 = vunpack.c.l.b16 %v685
      %v782 = vunpack.c.l.b16 %v686
      %v783 = vunpack.c.l.b16 %v687
      %v784 = vunpack.c.l.b16 %v688
      %v785 = vunpack.c.l.b16 %v689
      %v786 = vunpack.c.l.b16 %v690
      %v787 = vunpack.c.l.b16 %v691
      %v788 = vunpack.c.l.b16 %v692
      %v789 = vunpack.c.l.b16 %v693
      %v790 = vunpack.c.l.b16 %v694
      %v791 = vunpack.c.l.b16 %v695
      %v792 = vunpack.c.l.b16 %v696
      %v793 = vunpack.c.l.b16 %v697
      %v794 = vunpack.c.l.b16 %v698
      %v795 = vunpack.c.l.b16 %v699
      %v796 = vunpack.c.l.b16 %v700
      %v797 = vunpack.c.l.b16 %v701
      %v798 = vunpack.c.l.b16 %v702
      %v799 = vunpack.c.l.b16 %v703
      %v800 = vunpack.c.l.b16 %v704
      %v801 = vunpack.c.l.b16 %v705
      %v802 = vunpack.c.l.b16 %v706
      %v803 = vunpack.c.l.b16 %v707
      %v804 = vunpack.c.l.b16 %v708
      %v805 = vunpack.c.l.b16 %v709
      %v806 = vunpack.c.l.b16 %v710
      %v807 = vunpack.c.l.b16 %v711
      %v808 = vunpack.c.l.b16 %v712
      %v809 = vunpack.c.l.b16 %v713
      %v810 = vunpack.c.l.b16 %v714
      %v811 = vunpack.c.l.b16 %v715
      %v812 = vunpack.c.l.b16 %v716
      %v813 = vunpack.c.l.b16 %v717
      %v814 = vunpack.c.l.b16 %v718
      %v815 = vunpack.c.l.b16 %v719
      %v816 = vunpack.c.l.b16 %v720
      %v817 = vunpack.c.l.b16 %v721
      %v818 = vunpack.c.l.b16 %v722
      %v819 = vunpack.c.l.b16 %v723
      %v820 = vunpack.c.l.b16 %v724
      %v821 = vunpack.c.l.b16 %v725
      %v822 = vunpack.c.l.b16 %v726
      %v823 = vunpack.c.l.b16 %v727
      %v824 = vunpack.c.l.b16 %v728
      %v825 = vpack.c.b16 %v778, %v777
      %v826 = vpack.c.b16 %v780, %v779
      %v827 = vpack.c.b16 %v782, %v781
      %v828 = vpack.c.b16 %v784, %v783
      %v829 = vpack.c.b16 %v786, %v785
      %v830 = vpack.c.b16 %v788, %v787
      %v831 = vpack.c.b16 %v790, %v789
      %v832 = vpack.c.b16 %v792, %v791
      %v833 = vpack.c.b16 %v794, %v793
      %v834 = vpack.c.b16 %v796, %v795
      %v835 = vpack.c.b16 %v798, %v797
      %v836 = vpack.c.b16 %v800, %v799
      %v837 = vpack.c.b16 %v802, %v801
      %v838 = vpack.c.b16 %v804, %v803
      %v839 = vpack.c.b16 %v806, %v805
      %v840 = vpack.c.b16 %v808, %v807
      %v841 = vpack.c.b16 %v810, %v809
      %v842 = vpack.c.b16 %v812, %v811
      %v843 = vpack.c.b16 %v814, %v813
      %v844 = vpack.c.b16 %v816, %v815
      %v845 = vpack.c.b16 %v818, %v817
      %v846 = vpack.c.b16 %v820, %v819
      %v847 = vpack.c.b16 %v822, %v821
      %v848 = vpack.c.b16 %v824, %v823
      %873 = vmatpush.bf16.msra.mxu0 %v832
      %874 = vmatpush.bf16.msra.mxu0 %v831
      %875 = vmatpush.bf16.msra.mxu0 %v830
      %876 = vmatpush.bf16.msra.mxu0 %v829
      %877 = vmatpush.bf16.msra.mxu0 %v828
      %878 = vmatpush.bf16.msra.mxu0 %v827
      %879 = vmatpush.bf16.msra.mxu0 %v826
      %880 = vmatpush.bf16.msra.mxu0 %v825
      %881 = vmatmul.bf16.gmra.mxu0 %v441
      %v882 = vpop.f32.mrf.mxu0
      %v883 = vadd.f32 0.0, %v882
      %v884 = vpop.f32.mrf.mxu0
      %v885 = vadd.f32 0.0, %v884
      %886 = vmatmul.bf16.gmra.mxu0 %v442
      %v887 = vpop.f32.mrf.mxu0
      %v888 = vadd.f32 0.0, %v887
      %v889 = vpop.f32.mrf.mxu0
      %v890 = vadd.f32 0.0, %v889
      %891 = vmatmul.bf16.gmra.mxu0 %v443
      %v892 = vpop.f32.mrf.mxu0
      %v893 = vadd.f32 0.0, %v892
      %v894 = vpop.f32.mrf.mxu0
      %v895 = vadd.f32 0.0, %v894
      %896 = vmatmul.bf16.gmra.mxu0 %v444
      %v897 = vpop.f32.mrf.mxu0
      %v898 = vadd.f32 0.0, %v897
      %v899 = vpop.f32.mrf.mxu0
      %v900 = vadd.f32 0.0, %v899
      %901 = vmatmul.bf16.gmra.mxu0 %v445
      %v902 = vpop.f32.mrf.mxu0
      %v903 = vadd.f32 0.0, %v902
      %v904 = vpop.f32.mrf.mxu0
      %v905 = vadd.f32 0.0, %v904
      %906 = vmatmul.bf16.gmra.mxu0 %v446
      %v907 = vpop.f32.mrf.mxu0
      %v908 = vadd.f32 0.0, %v907
      %v909 = vpop.f32.mrf.mxu0
      %v910 = vadd.f32 0.0, %v909
      %911 = vmatmul.bf16.gmra.mxu0 %v447
      %v912 = vpop.f32.mrf.mxu0
      %v913 = vadd.f32 0.0, %v912
      %v914 = vpop.f32.mrf.mxu0
      %v915 = vadd.f32 0.0, %v914
      %916 = vmatmul.bf16.gmra.mxu0 %v448
      %v917 = vpop.f32.mrf.mxu0
      %v918 = vadd.f32 0.0, %v917
      %v919 = vpop.f32.mrf.mxu0
      %v920 = vadd.f32 0.0, %v919
      %921 = vdwg.mxu0
      %922 = vmatpush.bf16.msra.mxu0 %v840
      %923 = vmatpush.bf16.msra.mxu0 %v839
      %924 = vmatpush.bf16.msra.mxu0 %v838
      %925 = vmatpush.bf16.msra.mxu0 %v837
      %926 = vmatpush.bf16.msra.mxu0 %v836
      %927 = vmatpush.bf16.msra.mxu0 %v835
      %928 = vmatpush.bf16.msra.mxu0 %v834
      %929 = vmatpush.bf16.msra.mxu0 %v833
      %930 = vmatmul.bf16.gmra.mxu0 %v484
      %v931 = vpop.f32.mrf.mxu0
      %v932 = vadd.f32 %v883, %v931
      %v933 = vpop.f32.mrf.mxu0
      %v934 = vadd.f32 %v885, %v933
      %935 = vmatmul.bf16.gmra.mxu0 %v496
      %v936 = vpop.f32.mrf.mxu0
      %v937 = vadd.f32 %v888, %v936
      %v938 = vpop.f32.mrf.mxu0
      %v939 = vadd.f32 %v890, %v938
      %940 = vmatmul.bf16.gmra.mxu0 %v508
      %v941 = vpop.f32.mrf.mxu0
      %v942 = vadd.f32 %v893, %v941
      %v943 = vpop.f32.mrf.mxu0
      %v944 = vadd.f32 %v895, %v943
      %945 = vmatmul.bf16.gmra.mxu0 %v520
      %v946 = vpop.f32.mrf.mxu0
      %v947 = vadd.f32 %v898, %v946
      %v948 = vpop.f32.mrf.mxu0
      %v949 = vadd.f32 %v900, %v948
      %950 = vmatmul.bf16.gmra.mxu0 %v532
      %v951 = vpop.f32.mrf.mxu0
      %v952 = vadd.f32 %v903, %v951
      %v953 = vpop.f32.mrf.mxu0
      %v954 = vadd.f32 %v905, %v953
      %955 = vmatmul.bf16.gmra.mxu0 %v544
      %v956 = vpop.f32.mrf.mxu0
      %v957 = vadd.f32 %v908, %v956
      %v958 = vpop.f32.mrf.mxu0
      %v959 = vadd.f32 %v910, %v958
      %960 = vmatmul.bf16.gmra.mxu0 %v556
      %v961 = vpop.f32.mrf.mxu0
      %v962 = vadd.f32 %v913, %v961
      %v963 = vpop.f32.mrf.mxu0
      %v964 = vadd.f32 %v915, %v963
      %965 = vmatmul.bf16.gmra.mxu0 %v673
      %v966 = vpop.f32.mrf.mxu0
      %v967 = vadd.f32 %v918, %v966
      %v968 = vpop.f32.mrf.mxu0
      %v969 = vadd.f32 %v920, %v968
      %970 = vdwg.mxu0
      %971 = vmatpush.bf16.msra.mxu0 %v848
      %972 = vmatpush.bf16.msra.mxu0 %v847
      %973 = vmatpush.bf16.msra.mxu0 %v846
      %974 = vmatpush.bf16.msra.mxu0 %v845
      %975 = vmatpush.bf16.msra.mxu0 %v844
      %976 = vmatpush.bf16.msra.mxu0 %v843
      %977 = vmatpush.bf16.msra.mxu0 %v842
      %978 = vmatpush.bf16.msra.mxu0 %v841
      %979 = vmatmul.bf16.gmra.mxu0 %v587
      %v980 = vpop.f32.mrf.mxu0
      %v981 = vadd.f32 %v932, %v980
      %v982 = vpop.f32.mrf.mxu0
      %v983 = vadd.f32 %v934, %v982
      %984 = vmatmul.bf16.gmra.mxu0 %v590
      %v985 = vpop.f32.mrf.mxu0
      %v986 = vadd.f32 %v937, %v985
      %v987 = vpop.f32.mrf.mxu0
      %v988 = vadd.f32 %v939, %v987
      %989 = vmatmul.bf16.gmra.mxu0 %v593
      %v990 = vpop.f32.mrf.mxu0
      %v991 = vadd.f32 %v942, %v990
      %v992 = vpop.f32.mrf.mxu0
      %v993 = vadd.f32 %v944, %v992
      %994 = vmatmul.bf16.gmra.mxu0 %v596
      %v995 = vpop.f32.mrf.mxu0
      %v996 = vadd.f32 %v947, %v995
      %v997 = vpop.f32.mrf.mxu0
      %v998 = vadd.f32 %v949, %v997
      %999 = vmatmul.bf16.gmra.mxu0 %v599
      %v1000 = vpop.f32.mrf.mxu0
      %v1001 = vadd.f32 %v952, %v1000
      %v1002 = vpop.f32.mrf.mxu0
      %v1003 = vadd.f32 %v954, %v1002
      %1004 = vmatmul.bf16.gmra.mxu0 %v602
      %v1005 = vpop.f32.mrf.mxu0
      %v1006 = vadd.f32 %v957, %v1005
      %v1007 = vpop.f32.mrf.mxu0
      %v1008 = vadd.f32 %v959, %v1007
      %1009 = vmatmul.bf16.gmra.mxu0 %v605
      %v1010 = vpop.f32.mrf.mxu0
      %v1011 = vadd.f32 %v962, %v1010
      %v1012 = vpop.f32.mrf.mxu0
      %v1013 = vadd.f32 %v964, %v1012
      %1014 = vmatmul.bf16.gmra.mxu0 %v679
      %v1015 = vpop.f32.mrf.mxu0
      %v1016 = vadd.f32 %v967, %v1015
      %v1017 = vpop.f32.mrf.mxu0
      %v1018 = vadd.f32 %v969, %v1017
      %1019 = vdwg.mxu0
      %v1068 = vunpack.c.l.b16 %v614
      %v1069 = vunpack.c.l.b16 %v615
      %v1070 = vunpack.c.l.b16 %v616
      %v1071 = vunpack.c.l.b16 %v617
      %v1072 = vunpack.c.l.b16 %v618
      %v1073 = vunpack.c.l.b16 %v619
      %v1074 = vunpack.c.l.b16 %v620
      %v1075 = vunpack.c.l.b16 %v621
      %v1076 = vunpack.c.l.b16 %v622
      %v1077 = vunpack.c.l.b16 %v623
      %v1078 = vunpack.c.l.b16 %v624
      %v1079 = vunpack.c.l.b16 %v625
      %v1080 = vunpack.c.l.b16 %v626
      %v1081 = vunpack.c.l.b16 %v627
      %v1082 = vunpack.c.l.b16 %v628
      %v1083 = vunpack.c.l.b16 %v629
      %v1084 = vunpack.c.l.b16 %v630
      %v1085 = vunpack.c.l.b16 %v631
      %v1086 = vunpack.c.l.b16 %v632
      %v1087 = vunpack.c.l.b16 %v633
      %v1088 = vunpack.c.l.b16 %v634
      %v1089 = vunpack.c.l.b16 %v635
      %v1090 = vunpack.c.l.b16 %v636
      %v1091 = vunpack.c.l.b16 %v637
      %v1092 = vunpack.c.l.b16 %v638
      %v1093 = vunpack.c.l.b16 %v639
      %v1094 = vunpack.c.l.b16 %v640
      %v1095 = vunpack.c.l.b16 %v641
      %v1096 = vunpack.c.l.b16 %v642
      %v1097 = vunpack.c.l.b16 %v643
      %v1098 = vunpack.c.l.b16 %v644
      %v1099 = vunpack.c.l.b16 %v645
      %v1100 = vunpack.c.l.b16 %v646
      %v1101 = vunpack.c.l.b16 %v647
      %v1102 = vunpack.c.l.b16 %v648
      %v1103 = vunpack.c.l.b16 %v649
      %v1104 = vunpack.c.l.b16 %v650
      %v1105 = vunpack.c.l.b16 %v651
      %v1106 = vunpack.c.l.b16 %v652
      %v1107 = vunpack.c.l.b16 %v653
      %v1108 = vunpack.c.l.b16 %v654
      %v1109 = vunpack.c.l.b16 %v655
      %v1110 = vunpack.c.l.b16 %v656
      %v1111 = vunpack.c.l.b16 %v657
      %v1112 = vunpack.c.l.b16 %v658
      %v1113 = vunpack.c.l.b16 %v659
      %v1114 = vunpack.c.l.b16 %v660
      %v1115 = vunpack.c.l.b16 %v661
      %v1116 = vpack.c.b16 %v1069, %v1068
      %v1117 = vpack.c.b16 %v1071, %v1070
      %v1118 = vpack.c.b16 %v1073, %v1072
      %v1119 = vpack.c.b16 %v1075, %v1074
      %v1120 = vpack.c.b16 %v1077, %v1076
      %v1121 = vpack.c.b16 %v1079, %v1078
      %v1122 = vpack.c.b16 %v1081, %v1080
      %v1123 = vpack.c.b16 %v1083, %v1082
      %v1124 = vpack.c.b16 %v1085, %v1084
      %v1125 = vpack.c.b16 %v1087, %v1086
      %v1126 = vpack.c.b16 %v1089, %v1088
      %v1127 = vpack.c.b16 %v1091, %v1090
      %v1128 = vpack.c.b16 %v1093, %v1092
      %v1129 = vpack.c.b16 %v1095, %v1094
      %v1130 = vpack.c.b16 %v1097, %v1096
      %v1131 = vpack.c.b16 %v1099, %v1098
      %v1132 = vpack.c.b16 %v1101, %v1100
      %v1133 = vpack.c.b16 %v1103, %v1102
      %v1134 = vpack.c.b16 %v1105, %v1104
      %v1135 = vpack.c.b16 %v1107, %v1106
      %v1136 = vpack.c.b16 %v1109, %v1108
      %v1137 = vpack.c.b16 %v1111, %v1110
      %v1138 = vpack.c.b16 %v1113, %v1112
      %v1139 = vpack.c.b16 %v1115, %v1114
      %1164 = vmatpush.bf16.msra.mxu0 %v1123
      %1165 = vmatpush.bf16.msra.mxu0 %v1122
      %1166 = vmatpush.bf16.msra.mxu0 %v1121
      %1167 = vmatpush.bf16.msra.mxu0 %v1120
      %1168 = vmatpush.bf16.msra.mxu0 %v1119
      %1169 = vmatpush.bf16.msra.mxu0 %v1118
      %1170 = vmatpush.bf16.msra.mxu0 %v1117
      %1171 = vmatpush.bf16.msra.mxu0 %v1116
      %1172 = vmatmul.bf16.gmra.mxu0 %v440
      %v1173 = vpop.f32.mrf.mxu0
      %v1174 = vadd.f32 %v981, %v1173
      %v1175 = vpop.f32.mrf.mxu0
      %v1176 = vadd.f32 %v983, %v1175
      %1177 = vmatmul.bf16.gmra.mxu0 %v441
      %v1178 = vpop.f32.mrf.mxu0
      %v1179 = vadd.f32 %v986, %v1178
      %v1180 = vpop.f32.mrf.mxu0
      %v1181 = vadd.f32 %v988, %v1180
      %1182 = vmatmul.bf16.gmra.mxu0 %v442
      %v1183 = vpop.f32.mrf.mxu0
      %v1184 = vadd.f32 %v991, %v1183
      %v1185 = vpop.f32.mrf.mxu0
      %v1186 = vadd.f32 %v993, %v1185
      %1187 = vmatmul.bf16.gmra.mxu0 %v443
      %v1188 = vpop.f32.mrf.mxu0
      %v1189 = vadd.f32 %v996, %v1188
      %v1190 = vpop.f32.mrf.mxu0
      %v1191 = vadd.f32 %v998, %v1190
      %1192 = vmatmul.bf16.gmra.mxu0 %v444
      %v1193 = vpop.f32.mrf.mxu0
      %v1194 = vadd.f32 %v1001, %v1193
      %v1195 = vpop.f32.mrf.mxu0
      %v1196 = vadd.f32 %v1003, %v1195
      %1197 = vmatmul.bf16.gmra.mxu0 %v445
      %v1198 = vpop.f32.mrf.mxu0
      %v1199 = vadd.f32 %v1006, %v1198
      %v1200 = vpop.f32.mrf.mxu0
      %v1201 = vadd.f32 %v1008, %v1200
      %1202 = vmatmul.bf16.gmra.mxu0 %v446
      %v1203 = vpop.f32.mrf.mxu0
      %v1204 = vadd.f32 %v1011, %v1203
      %v1205 = vpop.f32.mrf.mxu0
      %v1206 = vadd.f32 %v1013, %v1205
      %1207 = vmatmul.bf16.gmra.mxu0 %v447
      %v1208 = vpop.f32.mrf.mxu0
      %v1209 = vadd.f32 %v1016, %v1208
      %v1210 = vpop.f32.mrf.mxu0
      %v1211 = vadd.f32 %v1018, %v1210
      %1212 = vdwg.mxu0
      %1213 = vmatpush.bf16.msra.mxu0 %v1131
      %1214 = vmatpush.bf16.msra.mxu0 %v1130
      %1215 = vmatpush.bf16.msra.mxu0 %v1129
      %1216 = vmatpush.bf16.msra.mxu0 %v1128
      %1217 = vmatpush.bf16.msra.mxu0 %v1127
      %1218 = vmatpush.bf16.msra.mxu0 %v1126
      %1219 = vmatpush.bf16.msra.mxu0 %v1125
      %1220 = vmatpush.bf16.msra.mxu0 %v1124
      %1221 = vmatmul.bf16.gmra.mxu0 %v472
      %v1222 = vpop.f32.mrf.mxu0
      %v1223 = vadd.f32 %v1174, %v1222
      %v1224 = vpop.f32.mrf.mxu0
      %v1225 = vadd.f32 %v1176, %v1224
      %1226 = vmatmul.bf16.gmra.mxu0 %v484
      %v1227 = vpop.f32.mrf.mxu0
      %v1228 = vadd.f32 %v1179, %v1227
      %v1229 = vpop.f32.mrf.mxu0
      %v1230 = vadd.f32 %v1181, %v1229
      %1231 = vmatmul.bf16.gmra.mxu0 %v496
      %v1232 = vpop.f32.mrf.mxu0
      %v1233 = vadd.f32 %v1184, %v1232
      %v1234 = vpop.f32.mrf.mxu0
      %v1235 = vadd.f32 %v1186, %v1234
      %1236 = vmatmul.bf16.gmra.mxu0 %v508
      %v1237 = vpop.f32.mrf.mxu0
      %v1238 = vadd.f32 %v1189, %v1237
      %v1239 = vpop.f32.mrf.mxu0
      %v1240 = vadd.f32 %v1191, %v1239
      %1241 = vmatmul.bf16.gmra.mxu0 %v520
      %v1242 = vpop.f32.mrf.mxu0
      %v1243 = vadd.f32 %v1194, %v1242
      %v1244 = vpop.f32.mrf.mxu0
      %v1245 = vadd.f32 %v1196, %v1244
      %1246 = vmatmul.bf16.gmra.mxu0 %v532
      %v1247 = vpop.f32.mrf.mxu0
      %v1248 = vadd.f32 %v1199, %v1247
      %v1249 = vpop.f32.mrf.mxu0
      %v1250 = vadd.f32 %v1201, %v1249
      %1251 = vmatmul.bf16.gmra.mxu0 %v544
      %v1252 = vpop.f32.mrf.mxu0
      %v1253 = vadd.f32 %v1204, %v1252
      %v1254 = vpop.f32.mrf.mxu0
      %v1255 = vadd.f32 %v1206, %v1254
      %1256 = vmatmul.bf16.gmra.mxu0 %v556
      %v1257 = vpop.f32.mrf.mxu0
      %v1258 = vadd.f32 %v1209, %v1257
      %v1259 = vpop.f32.mrf.mxu0
      %v1260 = vadd.f32 %v1211, %v1259
      %1261 = vdwg.mxu0
      %1262 = vmatpush.bf16.msra.mxu0 %v1139
      %1263 = vmatpush.bf16.msra.mxu0 %v1138
      %1264 = vmatpush.bf16.msra.mxu0 %v1137
      %1265 = vmatpush.bf16.msra.mxu0 %v1136
      %1266 = vmatpush.bf16.msra.mxu0 %v1135
      %1267 = vmatpush.bf16.msra.mxu0 %v1134
      %1268 = vmatpush.bf16.msra.mxu0 %v1133
      %1269 = vmatpush.bf16.msra.mxu0 %v1132
      %1270 = vmatmul.bf16.gmra.mxu0 %v584
      %v1271 = vpop.f32.mrf.mxu0
      %v1272 = vadd.f32 %v1223, %v1271
      %v1273 = vpop.f32.mrf.mxu0
      %v1274 = vadd.f32 %v1225, %v1273
      %1275 = vmatmul.bf16.gmra.mxu0 %v587
      %v1276 = vpop.f32.mrf.mxu0
      %v1277 = vadd.f32 %v1228, %v1276
      %v1278 = vpop.f32.mrf.mxu0
      %v1279 = vadd.f32 %v1230, %v1278
      %1280 = vmatmul.bf16.gmra.mxu0 %v590
      %v1281 = vpop.f32.mrf.mxu0
      %v1282 = vadd.f32 %v1233, %v1281
      %v1283 = vpop.f32.mrf.mxu0
      %v1284 = vadd.f32 %v1235, %v1283
      %1285 = vmatmul.bf16.gmra.mxu0 %v593
      %v1286 = vpop.f32.mrf.mxu0
      %v1287 = vadd.f32 %v1238, %v1286
      %v1288 = vpop.f32.mrf.mxu0
      %v1289 = vadd.f32 %v1240, %v1288
      %1290 = vmatmul.bf16.gmra.mxu0 %v596
      %v1291 = vpop.f32.mrf.mxu0
      %v1292 = vadd.f32 %v1243, %v1291
      %v1293 = vpop.f32.mrf.mxu0
      %v1294 = vadd.f32 %v1245, %v1293
      %1295 = vmatmul.bf16.gmra.mxu0 %v599
      %v1296 = vpop.f32.mrf.mxu0
      %v1297 = vadd.f32 %v1248, %v1296
      %v1298 = vpop.f32.mrf.mxu0
      %v1299 = vadd.f32 %v1250, %v1298
      %1300 = vmatmul.bf16.gmra.mxu0 %v602
      %v1301 = vpop.f32.mrf.mxu0
      %v1302 = vadd.f32 %v1253, %v1301
      %v1303 = vpop.f32.mrf.mxu0
      %v1304 = vadd.f32 %v1255, %v1303
      %1305 = vmatmul.bf16.gmra.mxu0 %v605
      %v1306 = vpop.f32.mrf.mxu0
      %v1307 = vadd.f32 %v1258, %v1306
      %v1308 = vpop.f32.mrf.mxu0
      %v1309 = vadd.f32 %v1260, %v1308
      %1310 = vdwg.mxu0
      %v1312 = vshrl.u32 %v449, 16
      %v1314 = vshll.u32 %v449, 16
      %v1316 = vrot.slane %v1314, 1
      %v1317 = vor.u32 %v1312, %v1316
      %v1319 = vshll.u32 %v459, 16
      %v1321 = vrot.slane %v1319, 1
      %v1322 = vsel %vm460, %v1317, %v1321
      %v1326 = vrot.slane %v449, 1
      %v1327 = vrot.slane %v459, 1
      %v1328 = vsel %vm581, %v1326, %v1327
      %v1330 = vld [vmem:[%s2 + $0x180] sm:$0xf]
      %v1331 = vld [vmem:[%s2 + $0x184] sm:$0xf]
      %v1332 = vld [vmem:[%s2 + $0x188] sm:$0xf]
      %v1333 = vld [vmem:[%s2 + $0x18c] sm:$0xf]
      %v1334 = vld [vmem:[%s2 + $0x190] sm:$0xf]
      %v1335 = vld [vmem:[%s2 + $0x194] sm:$0xf]
      %v1336 = vld [vmem:[%s2 + $0x198] sm:$0xf]
      %v1337 = vld [vmem:[%s2 + $0x19c] sm:$0xf]
      %v1338 = vld [vmem:[%s2 + $0x1a0] sm:$0xf]
      %v1339 = vld [vmem:[%s2 + $0x1a4] sm:$0xf]
      %v1340 = vld [vmem:[%s2 + $0x1a8] sm:$0xf]
      %v1341 = vld [vmem:[%s2 + $0x1ac] sm:$0xf]
      %v1342 = vld [vmem:[%s2 + $0x1b0] sm:$0xf]
      %v1343 = vld [vmem:[%s2 + $0x1b4] sm:$0xf]
      %v1344 = vld [vmem:[%s2 + $0x1b8] sm:$0xf]
      %v1345 = vld [vmem:[%s2 + $0x1bc] sm:$0xf]
      %v1346 = vld [vmem:[%s2 + $0x1c0] sm:$0xf]
      %v1347 = vld [vmem:[%s2 + $0x1c4] sm:$0xf]
      %v1348 = vld [vmem:[%s2 + $0x1c8] sm:$0xf]
      %v1349 = vld [vmem:[%s2 + $0x1cc] sm:$0xf]
      %v1350 = vld [vmem:[%s2 + $0x1d0] sm:$0xf]
      %v1351 = vld [vmem:[%s2 + $0x1d4] sm:$0xf]
      %v1352 = vld [vmem:[%s2 + $0x1d8] sm:$0xf]
      %v1353 = vld [vmem:[%s2 + $0x1dc] sm:$0xf]
      %v1354 = vld [vmem:[%s2 + $0x1e0] sm:$0xf]
      %v1355 = vld [vmem:[%s2 + $0x1e4] sm:$0xf]
      %v1356 = vld [vmem:[%s2 + $0x1e8] sm:$0xf]
      %v1357 = vld [vmem:[%s2 + $0x1ec] sm:$0xf]
      %v1358 = vld [vmem:[%s2 + $0x1f0] sm:$0xf]
      %v1359 = vld [vmem:[%s2 + $0x1f4] sm:$0xf]
      %v1360 = vld [vmem:[%s2 + $0x1f8] sm:$0xf]
      %v1361 = vld [vmem:[%s2 + $0x1fc] sm:$0xf]
      %v1362 = vld [vmem:[%s2 + $0x200] sm:$0xf]
      %v1363 = vld [vmem:[%s2 + $0x204] sm:$0xf]
      %v1364 = vld [vmem:[%s2 + $0x208] sm:$0xf]
      %v1365 = vld [vmem:[%s2 + $0x20c] sm:$0xf]
      %v1366 = vld [vmem:[%s2 + $0x210] sm:$0xf]
      %v1367 = vld [vmem:[%s2 + $0x214] sm:$0xf]
      %v1368 = vld [vmem:[%s2 + $0x218] sm:$0xf]
      %v1369 = vld [vmem:[%s2 + $0x21c] sm:$0xf]
      %v1370 = vld [vmem:[%s2 + $0x220] sm:$0xf]
      %v1371 = vld [vmem:[%s2 + $0x224] sm:$0xf]
      %v1372 = vld [vmem:[%s2 + $0x228] sm:$0xf]
      %v1373 = vld [vmem:[%s2 + $0x22c] sm:$0xf]
      %v1374 = vld [vmem:[%s2 + $0x230] sm:$0xf]
      %v1375 = vld [vmem:[%s2 + $0x234] sm:$0xf]
      %v1376 = vld [vmem:[%s2 + $0x238] sm:$0xf]
      %v1377 = vld [vmem:[%s2 + $0x23c] sm:$0xf]
      %v1426 = vunpack.c.l.b16 %v1330
      %v1427 = vunpack.c.l.b16 %v1331
      %v1428 = vunpack.c.l.b16 %v1332
      %v1429 = vunpack.c.l.b16 %v1333
      %v1430 = vunpack.c.l.b16 %v1334
      %v1431 = vunpack.c.l.b16 %v1335
      %v1432 = vunpack.c.l.b16 %v1336
      %v1433 = vunpack.c.l.b16 %v1337
      %v1434 = vunpack.c.l.b16 %v1338
      %v1435 = vunpack.c.l.b16 %v1339
      %v1436 = vunpack.c.l.b16 %v1340
      %v1437 = vunpack.c.l.b16 %v1341
      %v1438 = vunpack.c.l.b16 %v1342
      %v1439 = vunpack.c.l.b16 %v1343
      %v1440 = vunpack.c.l.b16 %v1344
      %v1441 = vunpack.c.l.b16 %v1345
      %v1442 = vunpack.c.l.b16 %v1346
      %v1443 = vunpack.c.l.b16 %v1347
      %v1444 = vunpack.c.l.b16 %v1348
      %v1445 = vunpack.c.l.b16 %v1349
      %v1446 = vunpack.c.l.b16 %v1350
      %v1447 = vunpack.c.l.b16 %v1351
      %v1448 = vunpack.c.l.b16 %v1352
      %v1449 = vunpack.c.l.b16 %v1353
      %v1450 = vunpack.c.l.b16 %v1354
      %v1451 = vunpack.c.l.b16 %v1355
      %v1452 = vunpack.c.l.b16 %v1356
      %v1453 = vunpack.c.l.b16 %v1357
      %v1454 = vunpack.c.l.b16 %v1358
      %v1455 = vunpack.c.l.b16 %v1359
      %v1456 = vunpack.c.l.b16 %v1360
      %v1457 = vunpack.c.l.b16 %v1361
      %v1458 = vunpack.c.l.b16 %v1362
      %v1459 = vunpack.c.l.b16 %v1363
      %v1460 = vunpack.c.l.b16 %v1364
      %v1461 = vunpack.c.l.b16 %v1365
      %v1462 = vunpack.c.l.b16 %v1366
      %v1463 = vunpack.c.l.b16 %v1367
      %v1464 = vunpack.c.l.b16 %v1368
      %v1465 = vunpack.c.l.b16 %v1369
      %v1466 = vunpack.c.l.b16 %v1370
      %v1467 = vunpack.c.l.b16 %v1371
      %v1468 = vunpack.c.l.b16 %v1372
      %v1469 = vunpack.c.l.b16 %v1373
      %v1470 = vunpack.c.l.b16 %v1374
      %v1471 = vunpack.c.l.b16 %v1375
      %v1472 = vunpack.c.l.b16 %v1376
      %v1473 = vunpack.c.l.b16 %v1377
      %v1474 = vpack.c.b16 %v1427, %v1426
      %v1475 = vpack.c.b16 %v1429, %v1428
      %v1476 = vpack.c.b16 %v1431, %v1430
      %v1477 = vpack.c.b16 %v1433, %v1432
      %v1478 = vpack.c.b16 %v1435, %v1434
      %v1479 = vpack.c.b16 %v1437, %v1436
      %v1480 = vpack.c.b16 %v1439, %v1438
      %v1481 = vpack.c.b16 %v1441, %v1440
      %v1482 = vpack.c.b16 %v1443, %v1442
      %v1483 = vpack.c.b16 %v1445, %v1444
      %v1484 = vpack.c.b16 %v1447, %v1446
      %v1485 = vpack.c.b16 %v1449, %v1448
      %v1486 = vpack.c.b16 %v1451, %v1450
      %v1487 = vpack.c.b16 %v1453, %v1452
      %v1488 = vpack.c.b16 %v1455, %v1454
      %v1489 = vpack.c.b16 %v1457, %v1456
      %v1490 = vpack.c.b16 %v1459, %v1458
      %v1491 = vpack.c.b16 %v1461, %v1460
      %v1492 = vpack.c.b16 %v1463, %v1462
      %v1493 = vpack.c.b16 %v1465, %v1464
      %v1494 = vpack.c.b16 %v1467, %v1466
      %v1495 = vpack.c.b16 %v1469, %v1468
      %v1496 = vpack.c.b16 %v1471, %v1470
      %v1497 = vpack.c.b16 %v1473, %v1472
      %1522 = vmatpush.bf16.msra.mxu0 %v1481
      %1523 = vmatpush.bf16.msra.mxu0 %v1480
      %1524 = vmatpush.bf16.msra.mxu0 %v1479
      %1525 = vmatpush.bf16.msra.mxu0 %v1478
      %1526 = vmatpush.bf16.msra.mxu0 %v1477
      %1527 = vmatpush.bf16.msra.mxu0 %v1476
      %1528 = vmatpush.bf16.msra.mxu0 %v1475
      %1529 = vmatpush.bf16.msra.mxu0 %v1474
      %1530 = vmatmul.bf16.gmra.mxu0 %v442
      %v1531 = vpop.f32.mrf.mxu0
      %v1532 = vadd.f32 0.0, %v1531
      %v1533 = vpop.f32.mrf.mxu0
      %v1534 = vadd.f32 0.0, %v1533
      %1535 = vmatmul.bf16.gmra.mxu0 %v443
      %v1536 = vpop.f32.mrf.mxu0
      %v1537 = vadd.f32 0.0, %v1536
      %v1538 = vpop.f32.mrf.mxu0
      %v1539 = vadd.f32 0.0, %v1538
      %1540 = vmatmul.bf16.gmra.mxu0 %v444
      %v1541 = vpop.f32.mrf.mxu0
      %v1542 = vadd.f32 0.0, %v1541
      %v1543 = vpop.f32.mrf.mxu0
      %v1544 = vadd.f32 0.0, %v1543
      %1545 = vmatmul.bf16.gmra.mxu0 %v445
      %v1546 = vpop.f32.mrf.mxu0
      %v1547 = vadd.f32 0.0, %v1546
      %v1548 = vpop.f32.mrf.mxu0
      %v1549 = vadd.f32 0.0, %v1548
      %1550 = vmatmul.bf16.gmra.mxu0 %v446
      %v1551 = vpop.f32.mrf.mxu0
      %v1552 = vadd.f32 0.0, %v1551
      %v1553 = vpop.f32.mrf.mxu0
      %v1554 = vadd.f32 0.0, %v1553
      %1555 = vmatmul.bf16.gmra.mxu0 %v447
      %v1556 = vpop.f32.mrf.mxu0
      %v1557 = vadd.f32 0.0, %v1556
      %v1558 = vpop.f32.mrf.mxu0
      %v1559 = vadd.f32 0.0, %v1558
      %1560 = vmatmul.bf16.gmra.mxu0 %v448
      %v1561 = vpop.f32.mrf.mxu0
      %v1562 = vadd.f32 0.0, %v1561
      %v1563 = vpop.f32.mrf.mxu0
      %v1564 = vadd.f32 0.0, %v1563
      %1565 = vmatmul.bf16.gmra.mxu0 %v449
      %v1566 = vpop.f32.mrf.mxu0
      %v1567 = vadd.f32 0.0, %v1566
      %v1568 = vpop.f32.mrf.mxu0
      %v1569 = vadd.f32 0.0, %v1568
      %1570 = vdwg.mxu0
      %1571 = vmatpush.bf16.msra.mxu0 %v1489
      %1572 = vmatpush.bf16.msra.mxu0 %v1488
      %1573 = vmatpush.bf16.msra.mxu0 %v1487
      %1574 = vmatpush.bf16.msra.mxu0 %v1486
      %1575 = vmatpush.bf16.msra.mxu0 %v1485
      %1576 = vmatpush.bf16.msra.mxu0 %v1484
      %1577 = vmatpush.bf16.msra.mxu0 %v1483
      %1578 = vmatpush.bf16.msra.mxu0 %v1482
      %1579 = vmatmul.bf16.gmra.mxu0 %v496
      %v1580 = vpop.f32.mrf.mxu0
      %v1581 = vadd.f32 %v1532, %v1580
      %v1582 = vpop.f32.mrf.mxu0
      %v1583 = vadd.f32 %v1534, %v1582
      %1584 = vmatmul.bf16.gmra.mxu0 %v508
      %v1585 = vpop.f32.mrf.mxu0
      %v1586 = vadd.f32 %v1537, %v1585
      %v1587 = vpop.f32.mrf.mxu0
      %v1588 = vadd.f32 %v1539, %v1587
      %1589 = vmatmul.bf16.gmra.mxu0 %v520
      %v1590 = vpop.f32.mrf.mxu0
      %v1591 = vadd.f32 %v1542, %v1590
      %v1592 = vpop.f32.mrf.mxu0
      %v1593 = vadd.f32 %v1544, %v1592
      %1594 = vmatmul.bf16.gmra.mxu0 %v532
      %v1595 = vpop.f32.mrf.mxu0
      %v1596 = vadd.f32 %v1547, %v1595
      %v1597 = vpop.f32.mrf.mxu0
      %v1598 = vadd.f32 %v1549, %v1597
      %1599 = vmatmul.bf16.gmra.mxu0 %v544
      %v1600 = vpop.f32.mrf.mxu0
      %v1601 = vadd.f32 %v1552, %v1600
      %v1602 = vpop.f32.mrf.mxu0
      %v1603 = vadd.f32 %v1554, %v1602
      %1604 = vmatmul.bf16.gmra.mxu0 %v556
      %v1605 = vpop.f32.mrf.mxu0
      %v1606 = vadd.f32 %v1557, %v1605
      %v1607 = vpop.f32.mrf.mxu0
      %v1608 = vadd.f32 %v1559, %v1607
      %1609 = vmatmul.bf16.gmra.mxu0 %v673
      %v1610 = vpop.f32.mrf.mxu0
      %v1611 = vadd.f32 %v1562, %v1610
      %v1612 = vpop.f32.mrf.mxu0
      %v1613 = vadd.f32 %v1564, %v1612
      %1614 = vmatmul.bf16.gmra.mxu0 %v1322
      %v1615 = vpop.f32.mrf.mxu0
      %v1616 = vadd.f32 %v1567, %v1615
      %v1617 = vpop.f32.mrf.mxu0
      %v1618 = vadd.f32 %v1569, %v1617
      %1619 = vdwg.mxu0
      %1620 = vmatpush.bf16.msra.mxu0 %v1497
      %1621 = vmatpush.bf16.msra.mxu0 %v1496
      %1622 = vmatpush.bf16.msra.mxu0 %v1495
      %1623 = vmatpush.bf16.msra.mxu0 %v1494
      %1624 = vmatpush.bf16.msra.mxu0 %v1493
      %1625 = vmatpush.bf16.msra.mxu0 %v1492
      %1626 = vmatpush.bf16.msra.mxu0 %v1491
      %1627 = vmatpush.bf16.msra.mxu0 %v1490
      %1628 = vmatmul.bf16.gmra.mxu0 %v590
      %v1629 = vpop.f32.mrf.mxu0
      %v1630 = vadd.f32 %v1581, %v1629
      %v1631 = vpop.f32.mrf.mxu0
      %v1632 = vadd.f32 %v1583, %v1631
      %1633 = vmatmul.bf16.gmra.mxu0 %v593
      %v1634 = vpop.f32.mrf.mxu0
      %v1635 = vadd.f32 %v1586, %v1634
      %v1636 = vpop.f32.mrf.mxu0
      %v1637 = vadd.f32 %v1588, %v1636
      %1638 = vmatmul.bf16.gmra.mxu0 %v596
      %v1639 = vpop.f32.mrf.mxu0
      %v1640 = vadd.f32 %v1591, %v1639
      %v1641 = vpop.f32.mrf.mxu0
      %v1642 = vadd.f32 %v1593, %v1641
      %1643 = vmatmul.bf16.gmra.mxu0 %v599
      %v1644 = vpop.f32.mrf.mxu0
      %v1645 = vadd.f32 %v1596, %v1644
      %v1646 = vpop.f32.mrf.mxu0
      %v1647 = vadd.f32 %v1598, %v1646
      %1648 = vmatmul.bf16.gmra.mxu0 %v602
      %v1649 = vpop.f32.mrf.mxu0
      %v1650 = vadd.f32 %v1601, %v1649
      %v1651 = vpop.f32.mrf.mxu0
      %v1652 = vadd.f32 %v1603, %v1651
      %1653 = vmatmul.bf16.gmra.mxu0 %v605
      %v1654 = vpop.f32.mrf.mxu0
      %v1655 = vadd.f32 %v1606, %v1654
      %v1656 = vpop.f32.mrf.mxu0
      %v1657 = vadd.f32 %v1608, %v1656
      %1658 = vmatmul.bf16.gmra.mxu0 %v679
      %v1659 = vpop.f32.mrf.mxu0
      %v1660 = vadd.f32 %v1611, %v1659
      %v1661 = vpop.f32.mrf.mxu0
      %v1662 = vadd.f32 %v1613, %v1661
      %1663 = vmatmul.bf16.gmra.mxu0 %v1328
      %v1664 = vpop.f32.mrf.mxu0
      %v1665 = vadd.f32 %v1616, %v1664
      %v1666 = vpop.f32.mrf.mxu0
      %v1667 = vadd.f32 %v1618, %v1666
      %1668 = vdwg.mxu0
      %v1669 = vadd.f32 %v1272, %v1630
      %v1670 = vadd.f32 %v1274, %v1632
      %v1671 = vadd.f32 %v1277, %v1635
      %v1672 = vadd.f32 %v1279, %v1637
      %v1673 = vadd.f32 %v1282, %v1640
      %v1674 = vadd.f32 %v1284, %v1642
      %v1675 = vadd.f32 %v1287, %v1645
      %v1676 = vadd.f32 %v1289, %v1647
      %v1677 = vadd.f32 %v1292, %v1650
      %v1678 = vadd.f32 %v1294, %v1652
      %v1679 = vadd.f32 %v1297, %v1655
      %v1680 = vadd.f32 %v1299, %v1657
      %v1681 = vadd.f32 %v1302, %v1660
      %v1682 = vadd.f32 %v1304, %v1662
      %v1683 = vadd.f32 %v1307, %v1665
      %v1684 = vadd.f32 %v1309, %v1667
      %v1685 = vld [vmem:[%s3] sm:$0x1]
      %v1687 = vperm.slane %v1685, 0
      %v1689 = vadd.f32 %v1669, %v1687
      %v1690 = vadd.f32 %v1670, %v1687
      %v1691 = vadd.f32 %v1671, %v1687
      %v1692 = vadd.f32 %v1672, %v1687
      %v1693 = vadd.f32 %v1673, %v1687
      %v1694 = vadd.f32 %v1674, %v1687
      %v1695 = vadd.f32 %v1675, %v1687
      %v1696 = vadd.f32 %v1676, %v1687
      %v1697 = vadd.f32 %v1677, %v1687
      %v1698 = vadd.f32 %v1678, %v1687
      %v1699 = vadd.f32 %v1679, %v1687
      %v1700 = vadd.f32 %v1680, %v1687
      %v1701 = vadd.f32 %v1681, %v1687
      %v1702 = vadd.f32 %v1682, %v1687
      %v1703 = vadd.f32 %v1683, %v1687
      %v1704 = vadd.f32 %v1684, %v1687
      %v1705 = vpack.c.bf16 %v1689, %v1689
      %v1706 = vpack.c.bf16 %v1690, %v1690
      %v1707 = vpack.c.bf16 %v1691, %v1691
      %v1708 = vpack.c.bf16 %v1692, %v1692
      %v1709 = vpack.c.bf16 %v1693, %v1693
      %v1710 = vpack.c.bf16 %v1694, %v1694
      %v1711 = vpack.c.bf16 %v1695, %v1695
      %v1712 = vpack.c.bf16 %v1696, %v1696
      %v1713 = vpack.c.bf16 %v1697, %v1697
      %v1714 = vpack.c.bf16 %v1698, %v1698
      %v1715 = vpack.c.bf16 %v1699, %v1699
      %v1716 = vpack.c.bf16 %v1700, %v1700
      %v1717 = vpack.c.bf16 %v1701, %v1701
      %v1718 = vpack.c.bf16 %v1702, %v1702
      %v1719 = vpack.c.bf16 %v1703, %v1703
      %v1720 = vpack.c.bf16 %v1704, %v1704
      %1721 = vst [vmem:[%s274] sm:$0xf] %v1705
      %1722 = vst [vmem:[%s274 + $0x4] sm:$0xf] %v1706
      %1723 = vst [vmem:[%s274 + $0x8] sm:$0xf] %v1707
      %1724 = vst [vmem:[%s274 + $0xc] sm:$0xf] %v1708
      %1725 = vst [vmem:[%s274 + $0x10] sm:$0xf] %v1709
      %1726 = vst [vmem:[%s274 + $0x14] sm:$0xf] %v1710
      %1727 = vst [vmem:[%s274 + $0x18] sm:$0xf] %v1711
      %1728 = vst [vmem:[%s274 + $0x1c] sm:$0xf] %v1712
      %1729 = vst [vmem:[%s274 + $0x20] sm:$0xf] %v1713
      %1730 = vst [vmem:[%s274 + $0x24] sm:$0xf] %v1714
      %1731 = vst [vmem:[%s274 + $0x28] sm:$0xf] %v1715
      %1732 = vst [vmem:[%s274 + $0x2c] sm:$0xf] %v1716
      %1733 = vst [vmem:[%s274 + $0x30] sm:$0xf] %v1717
      %1734 = vst [vmem:[%s274 + $0x34] sm:$0xf] %v1718
      %1735 = vst [vmem:[%s274 + $0x38] sm:$0xf] %v1719
      %1736 = vst [vmem:[%s274 + $0x3c] sm:$0xf] %v1720
      %s1737 = smul.u32 8, %s20
      %p1738 = scmp.lt.s32.totalorder %s19, 1
      %s1739 = scalar_select %p1738, %s19, 1
      %p1740 = scmp.lt.s32.totalorder %s1737, 15
      %s1741 = scalar_select %p1740, %s1737, 15
      %s1742 = smul.addr %s1741, 2
      %s1743 = smul.addr %s1739, 32
      %s1744 = sadd.s32 %s1742, %s1743
      %s1745 = smul.addr %s1744, 4
      %s1746 = scalar_lea.vmem %s4, %s1745
      // Predicated region
      $region37: #{decoder_block_forward.4} parent=35 // pred_check
        %p1747 = pneg %p145
      $region38: #{decoder_block_forward.4} parent=35 // pred_check_branch
        %1749 = sbr.rel (%p1747) target = $region40
      $region39: #{decoder_block_forward.4} parent=35 // pred_region
        %s1750 = smul.u32 8, %s20
      $region40: #{decoder_block_forward.4} parent=35 // pred_fallthru
        _
    $region36: #{decoder_block_forward.4} parent=5 // pred_fallthru
      _
    %p1751 = scmp.le.s32.totalorder 2, %s10
    // Predicated region
    $region41: #{decoder_block_forward.4} parent=5 // pred_check
      %p1752 = pneg %p1751
    $region42: #{decoder_block_forward.4} parent=5 // pred_check_branch
      %1754 = sbr.rel (%p1752) target = $region44
    $region43: #{decoder_block_forward.4} parent=5 // pred_region
      %s1755 = ssub.s32 %s10, 2
      // Predicated region
      $region45: #{decoder_block_forward.4} parent=43 // pred_check
        %p1756 = pneg %p151
      $region46: #{decoder_block_forward.4} parent=43 // pred_check_branch
        %1758 = sbr.rel (%p1756) target = $region48
      $region47: #{decoder_block_forward.4} parent=43 // pred_region
        %s1759 = smul.u32 8, %s22
        %p1760 = scmp.lt.s32.totalorder %s21, 1
        %s1761 = scalar_select %p1760, %s21, 1
        %p1762 = scmp.lt.s32.totalorder %s1759, 15
        %s1763 = scalar_select %p1762, %s1759, 15
        %s1764 = smul.addr %s1763, 2
        %s1765 = smul.addr %s1761, 32
        %s1766 = sadd.s32 %s1764, %s1765
        %s1767 = smul.addr %s1766, 4
        %s1768 = scalar_lea.vmem %s4, %s1767
      $region48: #{decoder_block_forward.4} parent=43 // pred_fallthru
        _
    $region44: #{decoder_block_forward.4} parent=5 // pred_fallthru
      _
  $region6: #{decoder_block_forward.4} parent=0 // loop_footer
    %s14 = sadd.s32 1, %s10
  $region7: #{decoder_block_forward.4} parent=0 // loop_footer_branch
    %9 = sbr.rel target = $region3
  $region8: #{decoder_block_forward.4} parent=0 // loop_exit
    _

// kernel: decoder_block_forward.6
$region0: #{decoder_block_forward.6}
  #allocation0 [shape = 'u32[]', space=smem, size = 0x4, offset = 0x4, fixed_abs, tag = 'smem constant byte address 0x4 - core index']
  #allocation1 [shape = 'u32[72,128]{1,0:T(1,128)}', space=vmem, size = 0x9000, scoped, tag = 'internal scratch']
  %s0 = inlined_call_operand.vmem [shape: bf16[2,16,16,128], index: 0, kind: input, shape index: {}]
  %s1 = inlined_call_operand.vmem [shape: bf16[2,2,2,16,128], index: 1, kind: input, shape index: {}]
  %s2 = inlined_call_operand.vmem [shape: f32[1,128], index: 2, kind: input, shape index: {}]
  %s3 = inlined_call_operand.vmem [shape: f32[1,128], index: 3, kind: input, shape index: {}]
  %s4 = inlined_call_operand.vmem [shape: bf16[1152,128], index: 4, kind: input, shape index: {}]
  %s5 = inlined_call_operand.vmem [shape: f32[1,128], index: 5, kind: input, shape index: {}]
  %s6 = inlined_call_operand.vmem [shape: bf16[2,16,16,128], index: 6, kind: output, shape index: {0}]
  %s7 = inlined_call_operand.vmem [shape: f32[2,2,8,128], index: 7, kind: output, shape index: {1}]
  %8 = xla_tuple %s6, %s7
  %s9 = sld [smem:[#allocation0]]
  $region65: #{decoder_block_forward.6} parent=0
    _
  %s11 = ssub.s32 1, %s9
  %s12 = scalar_select 0, %s11, %s9
  loop: start=0, step=1, limit=6
  $region2: #{decoder_block_forward.6} parent=0 // loop_pre_header
    _
  $region3: #{decoder_block_forward.6} parent=0 // loop_header
    %s14 = sphi 0, %s18
    %p15 = scmp.ge.s32.totalorder %s14, 6
    %s21 = sphi 0, %s33
    %s22 = sphi 0, %s29
    %s23 = sphi 0, %s21
    %s24 = sphi 0, %s22
    %s25 = sphi 0, %s23
    %s26 = sphi 0, %s24
    %s38 = sphi 0, %s40
    %s41 = sphi 0, %s38
    %s42 = sphi 0, %s41
    %s58 = sphi 0, %s42
    %s66 = sphi 0, %s68
    %s69 = sphi 0, %s66
    %s70 = sphi 0, %s69
    %s86 = sphi 0, %s70
    %s90 = sphi 0, %s90
    %s92 = sphi 0, %s90
    %s93 = sphi 0, %s92
    %s107 = sphi 0, %s93
    %s111 = sphi 0, %s111
    %s113 = sphi 0, %s111
    %s114 = sphi 0, %s113
    %s128 = sphi 0, %s114
    %s132 = sphi 0, %s132
    %s134 = sphi 0, %s132
    %s135 = sphi 0, %s134
    %s149 = sphi 0, %s135
    %s153 = sphi 0, %s153
    %s155 = sphi 0, %s153
    %s156 = sphi 0, %s155
    %s170 = sphi 0, %s156
    %s178 = sphi 0, %s180
    %s181 = sphi 0, %s178
    %s182 = sphi 0, %s181
    %s198 = sphi 0, %s182
    %s206 = sphi 0, %s208
    %s209 = sphi 0, %s206
    %s210 = sphi 0, %s209
    %s226 = sphi 0, %s210
  $region4: #{decoder_block_forward.6} parent=0 // loop_header_branch
    %17 = sbr.rel (%p15) target = $region8
  $region5: #{decoder_block_forward.6} parent=0 // loop_body
    %s19 = ssub.s32 %s14, 1
    %s20 = ssub.s32 %s14, 2
    %s27 = sadd.s32 1, %s22
    %p28 = scmp.ge.s32.totalorder %s27, 2
    %s29 = scalar_select %p28, 0, %s27
    %s30 = sadd.s32 1, %s21
    %s31 = scalar_select %p28, %s30, %s21
    %p32 = scmp.ge.s32.totalorder %s31, 2
    %s33 = scalar_select %p32, 0, %s31
    %s34 = ssub.s32 %s21, %s33
    %s35 = ssub.s32 %s22, %s29
    %s36 = sor.u32 %s34, %s35
    %p37 = scmp.eq.s32.totalorder %s36, 0
    %s39 = sadd.s32 %s38, 1
    %s40 = scalar_select %p37, %s38, %s39
    %p43 = pneg %p37
    %p44 = scmp.eq.s32.totalorder %s14, 3
    %p45 = por %p43, %p44
    %p46 = scmp.ne.s32.totalorder %s38, %s41
    %p47 = scmp.eq.s32.totalorder %s14, 0
    %p48 = por %p46, %p47
    %p49 = scmp.ne.s32.totalorder %s38, %s41
    %p50 = scmp.eq.s32.totalorder %s19, 3
    %p51 = por %p49, %p50
    %p52 = scmp.ne.s32.totalorder %s41, %s42
    %p53 = scmp.eq.s32.totalorder %s19, 0
    %p54 = por %p52, %p53
    %p55 = scmp.ne.s32.totalorder %s41, %s42
    %p56 = scmp.eq.s32.totalorder %s20, 3
    %p57 = por %p55, %p56
    %p59 = scmp.ne.s32.totalorder %s42, %s58
    %p60 = scmp.eq.s32.totalorder %s20, 0
    %p61 = por %p59, %p60
    %s62 = ssub.s32 %s21, %s33
    %s63 = ssub.s32 %s22, %s29
    %s64 = sor.u32 %s62, %s63
    %p65 = scmp.eq.s32.totalorder %s64, 0
    %s67 = sadd.s32 %s66, 1
    %s68 = scalar_select %p65, %s66, %s67
    %p71 = pneg %p65
    %p72 = scmp.eq.s32.totalorder %s14, 3
    %p73 = por %p71, %p72
    %p74 = scmp.ne.s32.totalorder %s66, %s69
    %p75 = scmp.eq.s32.totalorder %s14, 0
    %p76 = por %p74, %p75
    %p77 = scmp.ne.s32.totalorder %s66, %s69
    %p78 = scmp.eq.s32.totalorder %s19, 3
    %p79 = por %p77, %p78
    %p80 = scmp.ne.s32.totalorder %s69, %s70
    %p81 = scmp.eq.s32.totalorder %s19, 0
    %p82 = por %p80, %p81
    %p83 = scmp.ne.s32.totalorder %s69, %s70
    %p84 = scmp.eq.s32.totalorder %s20, 3
    %p85 = por %p83, %p84
    %p87 = scmp.ne.s32.totalorder %s70, %s86
    %p88 = scmp.eq.s32.totalorder %s20, 0
    %p89 = por %p87, %p88
    %s91 = sadd.s32 %s90, 1
    %p94 = scmp.eq.s32.totalorder %s14, 3
    %p95 = scmp.ne.s32.totalorder %s90, %s92
    %p96 = scmp.eq.s32.totalorder %s14, 0
    %p97 = por %p95, %p96
    %p98 = scmp.ne.s32.totalorder %s90, %s92
    %p99 = scmp.eq.s32.totalorder %s19, 3
    %p100 = por %p98, %p99
    %p101 = scmp.ne.s32.totalorder %s92, %s93
    %p102 = scmp.eq.s32.totalorder %s19, 0
    %p103 = por %p101, %p102
    %p104 = scmp.ne.s32.totalorder %s92, %s93
    %p105 = scmp.eq.s32.totalorder %s20, 3
    %p106 = por %p104, %p105
    %p108 = scmp.ne.s32.totalorder %s93, %s107
    %p109 = scmp.eq.s32.totalorder %s20, 0
    %p110 = por %p108, %p109
    %s112 = sadd.s32 %s111, 1
    %p115 = scmp.eq.s32.totalorder %s14, 3
    %p116 = scmp.ne.s32.totalorder %s111, %s113
    %p117 = scmp.eq.s32.totalorder %s14, 0
    %p118 = por %p116, %p117
    %p119 = scmp.ne.s32.totalorder %s111, %s113
    %p120 = scmp.eq.s32.totalorder %s19, 3
    %p121 = por %p119, %p120
    %p122 = scmp.ne.s32.totalorder %s113, %s114
    %p123 = scmp.eq.s32.totalorder %s19, 0
    %p124 = por %p122, %p123
    %p125 = scmp.ne.s32.totalorder %s113, %s114
    %p126 = scmp.eq.s32.totalorder %s20, 3
    %p127 = por %p125, %p126
    %p129 = scmp.ne.s32.totalorder %s114, %s128
    %p130 = scmp.eq.s32.totalorder %s20, 0
    %p131 = por %p129, %p130
    %s133 = sadd.s32 %s132, 1
    %p136 = scmp.eq.s32.totalorder %s14, 3
    %p137 = scmp.ne.s32.totalorder %s132, %s134
    %p138 = scmp.eq.s32.totalorder %s14, 0
    %p139 = por %p137, %p138
    %p140 = scmp.ne.s32.totalorder %s132, %s134
    %p141 = scmp.eq.s32.totalorder %s19, 3
    %p142 = por %p140, %p141
    %p143 = scmp.ne.s32.totalorder %s134, %s135
    %p144 = scmp.eq.s32.totalorder %s19, 0
    %p145 = por %p143, %p144
    %p146 = scmp.ne.s32.totalorder %s134, %s135
    %p147 = scmp.eq.s32.totalorder %s20, 3
    %p148 = por %p146, %p147
    %p150 = scmp.ne.s32.totalorder %s135, %s149
    %p151 = scmp.eq.s32.totalorder %s20, 0
    %p152 = por %p150, %p151
    %s154 = sadd.s32 %s153, 1
    %p157 = scmp.eq.s32.totalorder %s14, 3
    %p158 = scmp.ne.s32.totalorder %s153, %s155
    %p159 = scmp.eq.s32.totalorder %s14, 0
    %p160 = por %p158, %p159
    %p161 = scmp.ne.s32.totalorder %s153, %s155
    %p162 = scmp.eq.s32.totalorder %s19, 3
    %p163 = por %p161, %p162
    %p164 = scmp.ne.s32.totalorder %s155, %s156
    %p165 = scmp.eq.s32.totalorder %s19, 0
    %p166 = por %p164, %p165
    %p167 = scmp.ne.s32.totalorder %s155, %s156
    %p168 = scmp.eq.s32.totalorder %s20, 3
    %p169 = por %p167, %p168
    %p171 = scmp.ne.s32.totalorder %s156, %s170
    %p172 = scmp.eq.s32.totalorder %s20, 0
    %p173 = por %p171, %p172
    %s174 = ssub.s32 %s21, %s33
    %s175 = ssub.s32 %s22, %s29
    %s176 = sor.u32 %s174, %s175
    %p177 = scmp.eq.s32.totalorder %s176, 0
    %s179 = sadd.s32 %s178, 1
    %s180 = scalar_select %p177, %s178, %s179
    %p183 = pneg %p177
    %p184 = scmp.eq.s32.totalorder %s14, 3
    %p185 = por %p183, %p184
    %p186 = scmp.ne.s32.totalorder %s178, %s181
    %p187 = scmp.eq.s32.totalorder %s14, 0
    %p188 = por %p186, %p187
    %p189 = scmp.ne.s32.totalorder %s178, %s181
    %p190 = scmp.eq.s32.totalorder %s19, 3
    %p191 = por %p189, %p190
    %p192 = scmp.ne.s32.totalorder %s181, %s182
    %p193 = scmp.eq.s32.totalorder %s19, 0
    %p194 = por %p192, %p193
    %p195 = scmp.ne.s32.totalorder %s181, %s182
    %p196 = scmp.eq.s32.totalorder %s20, 3
    %p197 = por %p195, %p196
    %p199 = scmp.ne.s32.totalorder %s182, %s198
    %p200 = scmp.eq.s32.totalorder %s20, 0
    %p201 = por %p199, %p200
    %s202 = ssub.s32 %s21, %s33
    %s203 = ssub.s32 %s22, %s29
    %s204 = sor.u32 %s202, %s203
    %p205 = scmp.eq.s32.totalorder %s204, 0
    %s207 = sadd.s32 %s206, 1
    %s208 = scalar_select %p205, %s206, %s207
    %p211 = pneg %p205
    %p212 = scmp.eq.s32.totalorder %s14, 3
    %p213 = por %p211, %p212
    %p214 = scmp.ne.s32.totalorder %s206, %s209
    %p215 = scmp.eq.s32.totalorder %s14, 0
    %p216 = por %p214, %p215
    %p217 = scmp.ne.s32.totalorder %s206, %s209
    %p218 = scmp.eq.s32.totalorder %s19, 3
    %p219 = por %p217, %p218
    %p220 = scmp.ne.s32.totalorder %s209, %s210
    %p221 = scmp.eq.s32.totalorder %s19, 0
    %p222 = por %p220, %p221
    %p223 = scmp.ne.s32.totalorder %s209, %s210
    %p224 = scmp.eq.s32.totalorder %s20, 3
    %p225 = por %p223, %p224
    %p227 = scmp.ne.s32.totalorder %s210, %s226
    %p228 = scmp.eq.s32.totalorder %s20, 0
    %p229 = por %p227, %p228
    %p230 = scmp.le.s32.totalorder 1, %s14
    %p231 = scmp.lt.s32.totalorder %s14, 5
    %p232 = pnand %p230, %p231
    %p233 = pneg %p232
    // Predicated region
    $region9: #{decoder_block_forward.6} parent=5 // pred_check
      _
    $region10: #{decoder_block_forward.6} parent=5 // pred_check_branch
      %235 = sbr.rel (%p232) target = $region12
    $region11: #{decoder_block_forward.6} parent=5 // pred_region
      %s236 = ssub.s32 %s14, 1
      // Predicated region
      $region13: #{decoder_block_forward.6} parent=11 // pred_check
        %p237 = pneg %p103
      $region14: #{decoder_block_forward.6} parent=11 // pred_check_branch
        %239 = sbr.rel (%p237) target = $region16
      $region15: #{decoder_block_forward.6} parent=11 // pred_region
        _
      $region16: #{decoder_block_forward.6} parent=11 // pred_fallthru
        _
      // Predicated region
      $region17: #{decoder_block_forward.6} parent=11 // pred_check
        %p240 = pneg %p124
      $region18: #{decoder_block_forward.6} parent=11 // pred_check_branch
        %242 = sbr.rel (%p240) target = $region20
      $region19: #{decoder_block_forward.6} parent=11 // pred_region
        _
      $region20: #{decoder_block_forward.6} parent=11 // pred_fallthru
        _
      // Predicated region
      $region21: #{decoder_block_forward.6} parent=11 // pred_check
        %p243 = pneg %p145
      $region22: #{decoder_block_forward.6} parent=11 // pred_check_branch
        %245 = sbr.rel (%p243) target = $region24
      $region23: #{decoder_block_forward.6} parent=11 // pred_region
        _
      $region24: #{decoder_block_forward.6} parent=11 // pred_fallthru
        _
      // Predicated region
      $region25: #{decoder_block_forward.6} parent=11 // pred_check
        %p246 = pneg %p166
      $region26: #{decoder_block_forward.6} parent=11 // pred_check_branch
        %248 = sbr.rel (%p246) target = $region28
      $region27: #{decoder_block_forward.6} parent=11 // pred_region
        _
      $region28: #{decoder_block_forward.6} parent=11 // pred_fallthru
        _
    $region12: #{decoder_block_forward.6} parent=5 // pred_fallthru
      _
    %p249 = scmp.lt.s32.totalorder %s14, 4
    // Predicated region
    $region29: #{decoder_block_forward.6} parent=5 // pred_check
      %p250 = pneg %p249
    $region30: #{decoder_block_forward.6} parent=5 // pred_check_branch
      %252 = sbr.rel (%p250) target = $region32
    $region31: #{decoder_block_forward.6} parent=5 // pred_region
      // Predicated region
      $region33: #{decoder_block_forward.6} parent=31 // pred_check
        %p253 = pneg %p48
      $region34: #{decoder_block_forward.6} parent=31 // pred_check_branch
        %255 = sbr.rel (%p253) target = $region36
      $region35: #{decoder_block_forward.6} parent=31 // pred_region
        %s256 = smul.u32 8, %s22
        %p257 = scmp.lt.s32.totalorder %s21, 1
        %s258 = scalar_select %p257, %s21, 1
        %p259 = scmp.lt.s32.totalorder %s256, 15
        %s260 = scalar_select %p259, %s256, 15
        %s261 = smul.addr %s260, 2
        %s262 = smul.addr %s258, 32
        %s263 = sadd.s32 %s261, %s262
        %s264 = smul.addr %s263, 4
        %s265 = scalar_lea.vmem %s0, %s264
        %s266 = smul.u32 8, %s22
      $region36: #{decoder_block_forward.6} parent=31 // pred_fallthru
        _
      // Predicated region
      $region37: #{decoder_block_forward.6} parent=31 // pred_check
        %p267 = pneg %p76
      $region38: #{decoder_block_forward.6} parent=31 // pred_check_branch
        %269 = sbr.rel (%p267) target = $region40
      $region39: #{decoder_block_forward.6} parent=31 // pred_region
        %p270 = scmp.lt.s32.totalorder %s21, 1
        %s271 = scalar_select %p270, %s21, 1
        %p272 = scmp.lt.s32.totalorder %s22, 1
        %s273 = scalar_select %p272, %s22, 1
        %s274 = smul.addr %s273, 4
        %s275 = smul.addr %s271, 8
        %s276 = sadd.s32 %s274, %s275
        %s277 = smul.addr %s276, 4
        %s278 = scalar_lea.vmem %s1, %s277
      $region40: #{decoder_block_forward.6} parent=31 // pred_fallthru
        _
    $region32: #{decoder_block_forward.6} parent=5 // pred_fallthru
      _
    %p279 = scmp.le.s32.totalorder 1, %s14
    %p280 = scmp.lt.s32.totalorder %s14, 5
    %p281 = pnand %p279, %p280
    %p282 = pneg %p281
    // Predicated region
    $region41: #{decoder_block_forward.6} parent=5 // pred_check
      _
    $region42: #{decoder_block_forward.6} parent=5 // pred_check_branch
      %284 = sbr.rel (%p281) target = $region44
    $region43: #{decoder_block_forward.6} parent=5 // pred_region
      %s285 = ssub.s32 %s14, 1
      %s286 = smul.u32 8, %s24
      %p287 = scmp.lt.s32.totalorder %s23, 1
      %s288 = scalar_select %p287, %s23, 1
      %p289 = scmp.lt.s32.totalorder %s286, 15
      %s290 = scalar_select %p289, %s286, 15
      %s291 = smul.addr %s290, 2
      %s292 = smul.addr %s288, 32
      %s293 = sadd.s32 %s291, %s292
      %s294 = smul.addr %s293, 4
      %s295 = scalar_lea.vmem %s0, %s294
      %p296 = pneg %p54
      %p297 = pneg %p51
      %p298 = scmp.lt.s32.totalorder %s23, 1
      %s299 = scalar_select %p298, %s23, 1
      %p300 = scmp.lt.s32.totalorder %s24, 1
      %s301 = scalar_select %p300, %s24, 1
      %s302 = smul.addr %s301, 4
      %s303 = smul.addr %s299, 8
      %s304 = sadd.s32 %s302, %s303
      %s305 = smul.addr %s304, 4
      %s306 = scalar_lea.vmem %s1, %s305
      %p307 = pneg %p82
      %p308 = pneg %p79
      %p309 = pneg %p103
      %p310 = pneg %p100
      %p311 = pneg %p124
      %p312 = pneg %p121
      %p313 = pneg %p145
      %p314 = pneg %p142
      %p315 = pneg %p166
      %p316 = pneg %p163
      %p317 = pneg %p194
      %p318 = pneg %p191
      %s319 = smul.u32 8, %s24
      %p320 = scmp.lt.s32.totalorder %s23, 1
      %s321 = scalar_select %p320, %s23, 1
      %p322 = scmp.lt.s32.totalorder %s319, 15
      %s323 = scalar_select %p322, %s319, 15
      %s324 = smul.addr %s323, 2
      %s325 = smul.addr %s321, 32
      %s326 = sadd.s32 %s324, %s325
      %s327 = smul.addr %s326, 4
      %s328 = scalar_lea.vmem %s6, %s327
      %p329 = pneg %p222
      %p330 = pneg %p219
      %p331 = scmp.lt.s32.totalorder %s23, 1
      %s332 = scalar_select %p331, %s23, 1
      %p333 = scmp.lt.s32.totalorder %s24, 1
      %s334 = scalar_select %p333, %s24, 1
      %s335 = smul.addr %s332, 2
      %s336 = sadd.s32 %s334, %s335
      %s337 = smul.addr %s336, 8
      %s338 = scalar_lea.vmem %s7, %s337
      %s339 = smul.u32 8, %s24
      %p340 = scmp.lt.s32.totalorder %s23, 1
      %s341 = scalar_select %p340, %s23, 1
      %p342 = scmp.lt.s32.totalorder %s339, 15
      %s343 = scalar_select %p342, %s339, 15
      %s344 = smul.addr %s343, 2
      %s345 = smul.addr %s341, 32
      %s346 = sadd.s32 %s344, %s345
      %s347 = smul.addr %s346, 4
      %s348 = scalar_lea.vmem %s0, %s347
      %s349 = smul.u32 8, %s24
      %p350 = scmp.lt.s32.totalorder %s23, 1
      %s351 = scalar_select %p350, %s23, 1
      %p352 = scmp.lt.s32.totalorder %s24, 1
      %s353 = scalar_select %p352, %s24, 1
      %s354 = smul.addr %s353, 4
      %s355 = smul.addr %s351, 8
      %s356 = sadd.s32 %s354, %s355
      %s357 = smul.addr %s356, 4
      %s358 = scalar_lea.vmem %s1, %s357
      %s359 = smul.u32 8, %s24
      %p360 = scmp.lt.s32.totalorder %s23, 1
      %s361 = scalar_select %p360, %s23, 1
      %p362 = scmp.lt.s32.totalorder %s359, 15
      %s363 = scalar_select %p362, %s359, 15
      %s364 = smul.addr %s363, 2
      %s365 = smul.addr %s361, 32
      %s366 = sadd.s32 %s364, %s365
      %s367 = smul.addr %s366, 4
      %s368 = scalar_lea.vmem %s6, %s367
      %s369 = smul.u32 8, %s24
      %p370 = scmp.lt.s32.totalorder %s23, 1
      %s371 = scalar_select %p370, %s23, 1
      %p372 = scmp.lt.s32.totalorder %s24, 1
      %s373 = scalar_select %p372, %s24, 1
      %s374 = smul.addr %s371, 2
      %s375 = sadd.s32 %s373, %s374
      %s376 = smul.addr %s375, 8
      %s377 = scalar_lea.vmem %s7, %s376
      %v379 = vld [vmem:[%s2] sm:$0x1]
      %v380 = vld [vmem:[%s3] sm:$0x1]
      %p381 = scmp.gt.s32.totalorder %s24, 0
      %s382 = scalar_select %p381, 1, 0
      %s383 = scvt.s32.f32 %s382
      %p384 = scmp.lt.s32.totalorder %s24, 1
      %s385 = scalar_select %p384, 1, 0
      %s386 = scvt.s32.f32 %s385
      %v387 = vld [vmem:[%s358] sm:$0xf]
      %v388 = vld [vmem:[%s358 + $0x4] sm:$0xf]
      %v389 = vld [vmem:[%s358 + $0x8] sm:$0xf]
      %v390 = vld [vmem:[%s358 + $0xc] sm:$0xf]
      %v391 = vld [vmem:[%s348] sm:$0xf]
      %v392 = vld [vmem:[%s348 + $0x4] sm:$0xf]
      %v393 = vld [vmem:[%s348 + $0x8] sm:$0xf]
      %v394 = vld [vmem:[%s348 + $0xc] sm:$0xf]
      %v395 = vld [vmem:[%s348 + $0x10] sm:$0xf]
      %v396 = vld [vmem:[%s348 + $0x14] sm:$0xf]
      %v397 = vld [vmem:[%s348 + $0x18] sm:$0xf]
      %v398 = vld [vmem:[%s348 + $0x1c] sm:$0xf]
      %v399 = vld [vmem:[%s348 + $0x20] sm:$0xf]
      %v400 = vld [vmem:[%s348 + $0x24] sm:$0xf]
      %v401 = vld [vmem:[%s348 + $0x28] sm:$0xf]
      %v402 = vld [vmem:[%s348 + $0x2c] sm:$0xf]
      %v403 = vld [vmem:[%s348 + $0x30] sm:$0xf]
      %v404 = vld [vmem:[%s348 + $0x34] sm:$0xf]
      %v405 = vld [vmem:[%s348 + $0x38] sm:$0xf]
      %v406 = vld [vmem:[%s348 + $0x3c] sm:$0xf]
      %v407 = vunpack.c.l.bf16 %v387
      %v408 = vunpack.c.l.bf16 %v388
      %v410 = vperm.slane %v379, 0
      %v412 = vmul.f32 %v407, %v410
      %v413 = vmul.f32 %v408, %v410
      %v415 = vperm.slane %v380, 0
      %v417 = vadd.f32 %v412, %v415
      %v418 = vadd.f32 %v413, %v415
      %v419 = vmax.f32 %v417, 0.0
      %v420 = vmax.f32 %v418, 0.0
      %v421 = vstv %s383
      %v422 = vmul.f32 %v419, %v421
      %v423 = vmul.f32 %v420, %v421
      %v424 = vunpack.c.l.bf16 %v391
      %v425 = vunpack.c.l.bf16 %v392
      %v426 = vunpack.c.l.bf16 %v393
      %v427 = vunpack.c.l.bf16 %v394
      %v428 = vunpack.c.l.bf16 %v395
      %v429 = vunpack.c.l.bf16 %v396
      %v430 = vunpack.c.l.bf16 %v397
      %v431 = vunpack.c.l.bf16 %v398
      %v432 = vunpack.c.l.bf16 %v399
      %v433 = vunpack.c.l.bf16 %v400
      %v434 = vunpack.c.l.bf16 %v401
      %v435 = vunpack.c.l.bf16 %v402
      %v436 = vunpack.c.l.bf16 %v403
      %v437 = vunpack.c.l.bf16 %v404
      %v438 = vunpack.c.l.bf16 %v405
      %v439 = vunpack.c.l.bf16 %v406
      %v440 = vmul.f32 %v424, %v410
      %v441 = vmul.f32 %v425, %v410
      %v442 = vmul.f32 %v426, %v410
      %v443 = vmul.f32 %v427, %v410
      %v444 = vmul.f32 %v428, %v410
      %v445 = vmul.f32 %v429, %v410
      %v446 = vmul.f32 %v430, %v410
      %v447 = vmul.f32 %v431, %v410
      %v448 = vmul.f32 %v432, %v410
      %v449 = vmul.f32 %v433, %v410
      %v450 = vmul.f32 %v434, %v410
      %v451 = vmul.f32 %v435, %v410
      %v452 = vmul.f32 %v436, %v410
      %v453 = vmul.f32 %v437, %v410
      %v454 = vmul.f32 %v438, %v410
      %v455 = vmul.f32 %v439, %v410
      %v456 = vadd.f32 %v440, %v415
      %v457 = vadd.f32 %v441, %v415
      %v458 = vadd.f32 %v442, %v415
      %v459 = vadd.f32 %v443, %v415
      %v460 = vadd.f32 %v444, %v415
      %v461 = vadd.f32 %v445, %v415
      %v462 = vadd.f32 %v446, %v415
      %v463 = vadd.f32 %v447, %v415
      %v464 = vadd.f32 %v448, %v415
      %v465 = vadd.f32 %v449, %v415
      %v466 = vadd.f32 %v450, %v415
      %v467 = vadd.f32 %v451, %v415
      %v468 = vadd.f32 %v452, %v415
      %v469 = vadd.f32 %v453, %v415
      %v470 = vadd.f32 %v454, %v415
      %v471 = vadd.f32 %v455, %v415
      %v472 = vmax.f32 %v456, 0.0
      %v473 = vmax.f32 %v457, 0.0
      %v474 = vmax.f32 %v458, 0.0
      %v475 = vmax.f32 %v459, 0.0
      %v476 = vmax.f32 %v460, 0.0
      %v477 = vmax.f32 %v461, 0.0
      %v478 = vmax.f32 %v462, 0.0
      %v479 = vmax.f32 %v463, 0.0
      %v480 = vmax.f32 %v464, 0.0
      %v481 = vmax.f32 %v465, 0.0
      %v482 = vmax.f32 %v466, 0.0
      %v483 = vmax.f32 %v467, 0.0
      %v484 = vmax.f32 %v468, 0.0
      %v485 = vmax.f32 %v469, 0.0
      %v486 = vmax.f32 %v470, 0.0
      %v487 = vmax.f32 %v471, 0.0
      %v488 = vunpack.c.l.bf16 %v389
      %v489 = vunpack.c.l.bf16 %v390
      %v490 = vmul.f32 %v488, %v410
      %v491 = vmul.f32 %v489, %v410
      %v492 = vadd.f32 %v490, %v415
      %v493 = vadd.f32 %v491, %v415
      %v494 = vmax.f32 %v492, 0.0
      %v495 = vmax.f32 %v493, 0.0
      %v496 = vstv %s386
      %v497 = vmul.f32 %v494, %v496
      %v498 = vmul.f32 %v495, %v496
      %v499 = vpack.c.bf16 %v422, %v422
      %v500 = vpack.c.bf16 %v423, %v423
      %v501 = vpack.c.bf16 %v472, %v472
      %v502 = vpack.c.bf16 %v473, %v473
      %v503 = vpack.c.bf16 %v474, %v474
      %v504 = vpack.c.bf16 %v475, %v475
      %v505 = vpack.c.bf16 %v476, %v476
      %v506 = vpack.c.bf16 %v477, %v477
      %v507 = vpack.c.bf16 %v478, %v478
      %v508 = vpack.c.bf16 %v479, %v479
      %v509 = vpack.c.bf16 %v480, %v480
      %v510 = vpack.c.bf16 %v481, %v481
      %v511 = vpack.c.bf16 %v482, %v482
      %v512 = vpack.c.bf16 %v483, %v483
      %v513 = vpack.c.bf16 %v484, %v484
      %v514 = vpack.c.bf16 %v485, %v485
      %v515 = vpack.c.bf16 %v486, %v486
      %v516 = vpack.c.bf16 %v487, %v487
      %v517 = vpack.c.bf16 %v497, %v497
      %v518 = vpack.c.bf16 %v498, %v498
      %v539 = vunpack.c.l.b16 %v499
      %v540 = vunpack.c.l.b16 %v500
      %v541 = vunpack.c.l.b16 %v501
      %v542 = vunpack.c.l.b16 %v502
      %v543 = vunpack.c.l.b16 %v503
      %v544 = vunpack.c.l.b16 %v504
      %v545 = vunpack.c.l.b16 %v505
      %v546 = vunpack.c.l.b16 %v506
      %v547 = vunpack.c.l.b16 %v507
      %v548 = vunpack.c.l.b16 %v508
      %v549 = vunpack.c.l.b16 %v509
      %v550 = vunpack.c.l.b16 %v510
      %v551 = vunpack.c.l.b16 %v511
      %v552 = vunpack.c.l.b16 %v512
      %v553 = vunpack.c.l.b16 %v513
      %v554 = vunpack.c.l.b16 %v514
      %v555 = vunpack.c.l.b16 %v515
      %v556 = vunpack.c.l.b16 %v516
      %v557 = vunpack.c.l.b16 %v517
      %v558 = vunpack.c.l.b16 %v518
      %v559 = vpack.c.b16 %v540, %v539
      %v560 = vpack.c.b16 %v542, %v541
      %v561 = vpack.c.b16 %v544, %v543
      %v562 = vpack.c.b16 %v546, %v545
      %v563 = vpack.c.b16 %v548, %v547
      %v564 = vpack.c.b16 %v550, %v549
      %v565 = vpack.c.b16 %v552, %v551
      %v566 = vpack.c.b16 %v554, %v553
      %v567 = vpack.c.b16 %v556, %v555
      %v568 = vpack.c.b16 %v558, %v557
      %v570 = vshrl.u32 %v559, 16
      %v572 = vrot.slane %v570, 7
      %v573 = vshll.u32 %v559, 16
      %v575 = vor.u32 %v572, %v573
      %v577 = vshrl.u32 %v560, 16
      %v579 = vrot.slane %v577, 7
      %v580 = vshll.u32 %v560, 16
      %v582 = vor.u32 %v579, %v580
      %v584 = vshrl.u32 %v561, 16
      %v586 = vrot.slane %v584, 7
      %v587 = vshll.u32 %v561, 16
      %v589 = vor.u32 %v586, %v587
      %v591 = vshrl.u32 %v562, 16
      %v593 = vrot.slane %v591, 7
      %v594 = vshll.u32 %v562, 16
      %v596 = vor.u32 %v593, %v594
      %v598 = vshrl.u32 %v563, 16
      %v600 = vrot.slane %v598, 7
      %v601 = vshll.u32 %v563, 16
      %v603 = vor.u32 %v600, %v601
      %v605 = vshrl.u32 %v564, 16
      %v607 = vrot.slane %v605, 7
      %v608 = vshll.u32 %v564, 16
      %v610 = vor.u32 %v607, %v608
      %v612 = vshrl.u32 %v565, 16
      %v614 = vrot.slane %v612, 7
      %v615 = vshll.u32 %v565, 16
      %v617 = vor.u32 %v614, %v615
      %v619 = vshrl.u32 %v566, 16
      %v621 = vrot.slane %v619, 7
      %v622 = vshll.u32 %v566, 16
      %v624 = vor.u32 %v621, %v622
      %v626 = vshrl.u32 %v567, 16
      %v628 = vrot.slane %v626, 7
      %v629 = vshll.u32 %v567, 16
      %v631 = vor.u32 %v628, %v629
      %v633 = vshrl.u32 %v568, 16
      %v635 = vrot.slane %v633, 7
      %v636 = vshll.u32 %v568, 16
      %v638 = vor.u32 %v635, %v636
      %vm659 = vcmask 1040384
      %vm660 = vsmask.f32 256
      %vm661 = vmand %vm659, %vm660
      %v662 = vsel %vm661, 0, %v575
      %v663 = vsel %vm661, 0, %v582
      %v664 = vsel %vm661, 0, %v589
      %v665 = vsel %vm661, 0, %v596
      %v666 = vsel %vm661, 0, %v603
      %v667 = vsel %vm661, 0, %v610
      %v668 = vsel %vm661, 0, %v617
      %v669 = vsel %vm661, 0, %v624
      %v670 = vsel %vm661, 0, %v631
      %v671 = vsel %vm661, 0, %v638
      %v672 = vsel %vm661, %v572, 0
      %v673 = vsel %vm661, %v579, 0
      %v674 = vsel %vm661, %v586, 0
      %v675 = vsel %vm661, %v593, 0
      %v676 = vsel %vm661, %v600, 0
      %v677 = vsel %vm661, %v607, 0
      %v678 = vsel %vm661, %v614, 0
      %v679 = vsel %vm661, %v621, 0
      %v680 = vsel %vm661, %v628, 0
      %v681 = vsel %vm661, %v635, 0
      %vm682 = vsmask.f32 7424
      %v684 = vshrl.u32 %v662, 16
      %v686 = vshll.u32 %v662, 16
      %v688 = vrot.slane %v686, 1
      %v689 = vor.u32 %v684, %v688
      %v691 = vshll.u32 %v672, 16
      %v693 = vrot.slane %v691, 1
      %v694 = vsel %vm682, %v689, %v693
      %v696 = vshrl.u32 %v663, 16
      %v698 = vshll.u32 %v663, 16
      %v700 = vrot.slane %v698, 1
      %v701 = vor.u32 %v696, %v700
      %v703 = vshll.u32 %v673, 16
      %v705 = vrot.slane %v703, 1
      %v706 = vsel %vm682, %v701, %v705
      %v708 = vshrl.u32 %v664, 16
      %v710 = vshll.u32 %v664, 16
      %v712 = vrot.slane %v710, 1
      %v713 = vor.u32 %v708, %v712
      %v715 = vshll.u32 %v674, 16
      %v717 = vrot.slane %v715, 1
      %v718 = vsel %vm682, %v713, %v717
      %v720 = vshrl.u32 %v665, 16
      %v722 = vshll.u32 %v665, 16
      %v724 = vrot.slane %v722, 1
      %v725 = vor.u32 %v720, %v724
      %v727 = vshll.u32 %v675, 16
      %v729 = vrot.slane %v727, 1
      %v730 = vsel %vm682, %v725, %v729
      %v732 = vshrl.u32 %v666, 16
      %v734 = vshll.u32 %v666, 16
      %v736 = vrot.slane %v734, 1
      %v737 = vor.u32 %v732, %v736
      %v739 = vshll.u32 %v676, 16
      %v741 = vrot.slane %v739, 1
      %v742 = vsel %vm682, %v737, %v741
      %v744 = vshrl.u32 %v667, 16
      %v746 = vshll.u32 %v667, 16
      %v748 = vrot.slane %v746, 1
      %v749 = vor.u32 %v744, %v748
      %v751 = vshll.u32 %v677, 16
      %v753 = vrot.slane %v751, 1
      %v754 = vsel %vm682, %v749, %v753
      %v756 = vshrl.u32 %v668, 16
      %v758 = vshll.u32 %v668, 16
      %v760 = vrot.slane %v758, 1
      %v761 = vor.u32 %v756, %v760
      %v763 = vshll.u32 %v678, 16
      %v765 = vrot.slane %v763, 1
      %v766 = vsel %vm682, %v761, %v765
      %v768 = vshrl.u32 %v669, 16
      %v770 = vshll.u32 %v669, 16
      %v772 = vrot.slane %v770, 1
      %v773 = vor.u32 %v768, %v772
      %v775 = vshll.u32 %v679, 16
      %v777 = vrot.slane %v775, 1
      %v778 = vsel %vm682, %v773, %v777
      %vm803 = vcmask 1046528
      %v804 = vrot.slane %v662, 1
      %v805 = vrot.slane %v672, 1
      %v806 = vsel %vm803, %v804, %v805
      %v807 = vrot.slane %v663, 1
      %v808 = vrot.slane %v673, 1
      %v809 = vsel %vm803, %v807, %v808
      %v810 = vrot.slane %v664, 1
      %v811 = vrot.slane %v674, 1
      %v812 = vsel %vm803, %v810, %v811
      %v813 = vrot.slane %v665, 1
      %v814 = vrot.slane %v675, 1
      %v815 = vsel %vm803, %v813, %v814
      %v816 = vrot.slane %v666, 1
      %v817 = vrot.slane %v676, 1
      %v818 = vsel %vm803, %v816, %v817
      %v819 = vrot.slane %v667, 1
      %v820 = vrot.slane %v677, 1
      %v821 = vsel %vm803, %v819, %v820
      %v822 = vrot.slane %v668, 1
      %v823 = vrot.slane %v678, 1
      %v824 = vsel %vm803, %v822, %v823
      %v825 = vrot.slane %v669, 1
      %v826 = vrot.slane %v679, 1
      %v827 = vsel %vm803, %v825, %v826
      %v836 = vld [vmem:[%s4] sm:$0xf]
      %v837 = vld [vmem:[%s4 + $0x4] sm:$0xf]
      %v838 = vld [vmem:[%s4 + $0x8] sm:$0xf]
      %v839 = vld [vmem:[%s4 + $0xc] sm:$0xf]
      %v840 = vld [vmem:[%s4 + $0x10] sm:$0xf]
      %v841 = vld [vmem:[%s4 + $0x14] sm:$0xf]
      %v842 = vld [vmem:[%s4 + $0x18] sm:$0xf]
      %v843 = vld [vmem:[%s4 + $0x1c] sm:$0xf]
      %v844 = vld [vmem:[%s4 + $0x20] sm:$0xf]
      %v845 = vld [vmem:[%s4 + $0x24] sm:$0xf]
      %v846 = vld [vmem:[%s4 + $0x28] sm:$0xf]
      %v847 = vld [vmem:[%s4 + $0x2c] sm:$0xf]
      %v848 = vld [vmem:[%s4 + $0x30] sm:$0xf]
      %v849 = vld [vmem:[%s4 + $0x34] sm:$0xf]
      %v850 = vld [vmem:[%s4 + $0x38] sm:$0xf]
      %v851 = vld [vmem:[%s4 + $0x3c] sm:$0xf]
      %v852 = vld [vmem:[%s4 + $0x40] sm:$0xf]
      %v853 = vld [vmem:[%s4 + $0x44] sm:$0xf]
      %v854 = vld [vmem:[%s4 + $0x48] sm:$0xf]
      %v855 = vld [vmem:[%s4 + $0x4c] sm:$0xf]
      %v856 = vld [vmem:[%s4 + $0x50] sm:$0xf]
      %v857 = vld [vmem:[%s4 + $0x54] sm:$0xf]
      %v858 = vld [vmem:[%s4 + $0x58] sm:$0xf]
      %v859 = vld [vmem:[%s4 + $0x5c] sm:$0xf]
      %v860 = vld [vmem:[%s4 + $0x60] sm:$0xf]
      %v861 = vld [vmem:[%s4 + $0x64] sm:$0xf]
      %v862 = vld [vmem:[%s4 + $0x68] sm:$0xf]
      %v863 = vld [vmem:[%s4 + $0x6c] sm:$0xf]
      %v864 = vld [vmem:[%s4 + $0x70] sm:$0xf]
      %v865 = vld [vmem:[%s4 + $0x74] sm:$0xf]
      %v866 = vld [vmem:[%s4 + $0x78] sm:$0xf]
      %v867 = vld [vmem:[%s4 + $0x7c] sm:$0xf]
      %v868 = vld [vmem:[%s4 + $0x80] sm:$0xf]
      %v869 = vld [vmem:[%s4 + $0x84] sm:$0xf]
      %v870 = vld [vmem:[%s4 + $0x88] sm:$0xf]
      %v871 = vld [vmem:[%s4 + $0x8c] sm:$0xf]
      %v872 = vld [vmem:[%s4 + $0x90] sm:$0xf]
      %v873 = vld [vmem:[%s4 + $0x94] sm:$0xf]
      %v874 = vld [vmem:[%s4 + $0x98] sm:$0xf]
      %v875 = vld [vmem:[%s4 + $0x9c] sm:$0xf]
      %v876 = vld [vmem:[%s4 + $0xa0] sm:$0xf]
      %v877 = vld [vmem:[%s4 + $0xa4] sm:$0xf]
      %v878 = vld [vmem:[%s4 + $0xa8] sm:$0xf]
      %v879 = vld [vmem:[%s4 + $0xac] sm:$0xf]
      %v880 = vld [vmem:[%s4 + $0xb0] sm:$0xf]
      %v881 = vld [vmem:[%s4 + $0xb4] sm:$0xf]
      %v882 = vld [vmem:[%s4 + $0xb8] sm:$0xf]
      %v883 = vld [vmem:[%s4 + $0xbc] sm:$0xf]
      %v885 = vshrl.u32 %v670, 16
      %v887 = vshll.u32 %v670, 16
      %v889 = vrot.slane %v887, 1
      %v890 = vor.u32 %v885, %v889
      %v892 = vshll.u32 %v680, 16
      %v894 = vrot.slane %v892, 1
      %v895 = vsel %vm682, %v890, %v894
      %v899 = vrot.slane %v670, 1
      %v900 = vrot.slane %v680, 1
      %v901 = vsel %vm803, %v899, %v900
      %v903 = vld [vmem:[%s4 + $0xc0] sm:$0xf]
      %v904 = vld [vmem:[%s4 + $0xc4] sm:$0xf]
      %v905 = vld [vmem:[%s4 + $0xc8] sm:$0xf]
      %v906 = vld [vmem:[%s4 + $0xcc] sm:$0xf]
      %v907 = vld [vmem:[%s4 + $0xd0] sm:$0xf]
      %v908 = vld [vmem:[%s4 + $0xd4] sm:$0xf]
      %v909 = vld [vmem:[%s4 + $0xd8] sm:$0xf]
      %v910 = vld [vmem:[%s4 + $0xdc] sm:$0xf]
      %v911 = vld [vmem:[%s4 + $0xe0] sm:$0xf]
      %v912 = vld [vmem:[%s4 + $0xe4] sm:$0xf]
      %v913 = vld [vmem:[%s4 + $0xe8] sm:$0xf]
      %v914 = vld [vmem:[%s4 + $0xec] sm:$0xf]
      %v915 = vld [vmem:[%s4 + $0xf0] sm:$0xf]
      %v916 = vld [vmem:[%s4 + $0xf4] sm:$0xf]
      %v917 = vld [vmem:[%s4 + $0xf8] sm:$0xf]
      %v918 = vld [vmem:[%s4 + $0xfc] sm:$0xf]
      %v919 = vld [vmem:[%s4 + $0x100] sm:$0xf]
      %v920 = vld [vmem:[%s4 + $0x104] sm:$0xf]
      %v921 = vld [vmem:[%s4 + $0x108] sm:$0xf]
      %v922 = vld [vmem:[%s4 + $0x10c] sm:$0xf]
      %v923 = vld [vmem:[%s4 + $0x110] sm:$0xf]
      %v924 = vld [vmem:[%s4 + $0x114] sm:$0xf]
      %v925 = vld [vmem:[%s4 + $0x118] sm:$0xf]
      %v926 = vld [vmem:[%s4 + $0x11c] sm:$0xf]
      %v927 = vld [vmem:[%s4 + $0x120] sm:$0xf]
      %v928 = vld [vmem:[%s4 + $0x124] sm:$0xf]
      %v929 = vld [vmem:[%s4 + $0x128] sm:$0xf]
      %v930 = vld [vmem:[%s4 + $0x12c] sm:$0xf]
      %v931 = vld [vmem:[%s4 + $0x130] sm:$0xf]
      %v932 = vld [vmem:[%s4 + $0x134] sm:$0xf]
      %v933 = vld [vmem:[%s4 + $0x138] sm:$0xf]
      %v934 = vld [vmem:[%s4 + $0x13c] sm:$0xf]
      %v935 = vld [vmem:[%s4 + $0x140] sm:$0xf]
      %v936 = vld [vmem:[%s4 + $0x144] sm:$0xf]
      %v937 = vld [vmem:[%s4 + $0x148] sm:$0xf]
      %v938 = vld [vmem:[%s4 + $0x14c] sm:$0xf]
      %v939 = vld [vmem:[%s4 + $0x150] sm:$0xf]
      %v940 = vld [vmem:[%s4 + $0x154] sm:$0xf]
      %v941 = vld [vmem:[%s4 + $0x158] sm:$0xf]
      %v942 = vld [vmem:[%s4 + $0x15c] sm:$0xf]
      %v943 = vld [vmem:[%s4 + $0x160] sm:$0xf]
      %v944 = vld [vmem:[%s4 + $0x164] sm:$0xf]
      %v945 = vld [vmem:[%s4 + $0x168] sm:$0xf]
      %v946 = vld [vmem:[%s4 + $0x16c] sm:$0xf]
      %v947 = vld [vmem:[%s4 + $0x170] sm:$0xf]
      %v948 = vld [vmem:[%s4 + $0x174] sm:$0xf]
      %v949 = vld [vmem:[%s4 + $0x178] sm:$0xf]
      %v950 = vld [vmem:[%s4 + $0x17c] sm:$0xf]
      %v999 = vunpack.c.l.b16 %v903
      %v1000 = vunpack.c.l.b16 %v904
      %v1001 = vunpack.c.l.b16 %v905
      %v1002 = vunpack.c.l.b16 %v906
      %v1003 = vunpack.c.l.b16 %v907
      %v1004 = vunpack.c.l.b16 %v908
      %v1005 = vunpack.c.l.b16 %v909
      %v1006 = vunpack.c.l.b16 %v910
      %v1007 = vunpack.c.l.b16 %v911
      %v1008 = vunpack.c.l.b16 %v912
      %v1009 = vunpack.c.l.b16 %v913
      %v1010 = vunpack.c.l.b16 %v914
      %v1011 = vunpack.c.l.b16 %v915
      %v1012 = vunpack.c.l.b16 %v916
      %v1013 = vunpack.c.l.b16 %v917
      %v1014 = vunpack.c.l.b16 %v918
      %v1015 = vunpack.c.l.b16 %v919
      %v1016 = vunpack.c.l.b16 %v920
      %v1017 = vunpack.c.l.b16 %v921
      %v1018 = vunpack.c.l.b16 %v922
      %v1019 = vunpack.c.l.b16 %v923
      %v1020 = vunpack.c.l.b16 %v924
      %v1021 = vunpack.c.l.b16 %v925
      %v1022 = vunpack.c.l.b16 %v926
      %v1023 = vunpack.c.l.b16 %v927
      %v1024 = vunpack.c.l.b16 %v928
      %v1025 = vunpack.c.l.b16 %v929
      %v1026 = vunpack.c.l.b16 %v930
      %v1027 = vunpack.c.l.b16 %v931
      %v1028 = vunpack.c.l.b16 %v932
      %v1029 = vunpack.c.l.b16 %v933
      %v1030 = vunpack.c.l.b16 %v934
      %v1031 = vunpack.c.l.b16 %v935
      %v1032 = vunpack.c.l.b16 %v936
      %v1033 = vunpack.c.l.b16 %v937
      %v1034 = vunpack.c.l.b16 %v938
      %v1035 = vunpack.c.l.b16 %v939
      %v1036 = vunpack.c.l.b16 %v940
      %v1037 = vunpack.c.l.b16 %v941
      %v1038 = vunpack.c.l.b16 %v942
      %v1039 = vunpack.c.l.b16 %v943
      %v1040 = vunpack.c.l.b16 %v944
      %v1041 = vunpack.c.l.b16 %v945
      %v1042 = vunpack.c.l.b16 %v946
      %v1043 = vunpack.c.l.b16 %v947
      %v1044 = vunpack.c.l.b16 %v948
      %v1045 = vunpack.c.l.b16 %v949
      %v1046 = vunpack.c.l.b16 %v950
      %v1047 = vpack.c.b16 %v1000, %v999
      %v1048 = vpack.c.b16 %v1002, %v1001
      %v1049 = vpack.c.b16 %v1004, %v1003
      %v1050 = vpack.c.b16 %v1006, %v1005
      %v1051 = vpack.c.b16 %v1008, %v1007
      %v1052 = vpack.c.b16 %v1010, %v1009
      %v1053 = vpack.c.b16 %v1012, %v1011
      %v1054 = vpack.c.b16 %v1014, %v1013
      %v1055 = vpack.c.b16 %v1016, %v1015
      %v1056 = vpack.c.b16 %v1018, %v1017
      %v1057 = vpack.c.b16 %v1020, %v1019
      %v1058 = vpack.c.b16 %v1022, %v1021
      %v1059 = vpack.c.b16 %v1024, %v1023
      %v1060 = vpack.c.b16 %v1026, %v1025
      %v1061 = vpack.c.b16 %v1028, %v1027
      %v1062 = vpack.c.b16 %v1030, %v1029
      %v1063 = vpack.c.b16 %v1032, %v1031
      %v1064 = vpack.c.b16 %v1034, %v1033
      %v1065 = vpack.c.b16 %v1036, %v1035
      %v1066 = vpack.c.b16 %v1038, %v1037
      %v1067 = vpack.c.b16 %v1040, %v1039
      %v1068 = vpack.c.b16 %v1042, %v1041
      %v1069 = vpack.c.b16 %v1044, %v1043
      %v1070 = vpack.c.b16 %v1046, %v1045
      %1095 = vmatpush.bf16.msra.mxu0 %v1054
      %1096 = vmatpush.bf16.msra.mxu0 %v1053
      %1097 = vmatpush.bf16.msra.mxu0 %v1052
      %1098 = vmatpush.bf16.msra.mxu0 %v1051
      %1099 = vmatpush.bf16.msra.mxu0 %v1050
      %1100 = vmatpush.bf16.msra.mxu0 %v1049
      %1101 = vmatpush.bf16.msra.mxu0 %v1048
      %1102 = vmatpush.bf16.msra.mxu0 %v1047
      %1103 = vmatmul.bf16.gmra.mxu0 %v663
      %v1104 = vpop.f32.mrf.mxu0
      %v1105 = vadd.f32 0.0, %v1104
      %v1106 = vpop.f32.mrf.mxu0
      %v1107 = vadd.f32 0.0, %v1106
      %1108 = vmatmul.bf16.gmra.mxu0 %v664
      %v1109 = vpop.f32.mrf.mxu0
      %v1110 = vadd.f32 0.0, %v1109
      %v1111 = vpop.f32.mrf.mxu0
      %v1112 = vadd.f32 0.0, %v1111
      %1113 = vmatmul.bf16.gmra.mxu0 %v665
      %v1114 = vpop.f32.mrf.mxu0
      %v1115 = vadd.f32 0.0, %v1114
      %v1116 = vpop.f32.mrf.mxu0
      %v1117 = vadd.f32 0.0, %v1116
      %1118 = vmatmul.bf16.gmra.mxu0 %v666
      %v1119 = vpop.f32.mrf.mxu0
      %v1120 = vadd.f32 0.0, %v1119
      %v1121 = vpop.f32.mrf.mxu0
      %v1122 = vadd.f32 0.0, %v1121
      %1123 = vmatmul.bf16.gmra.mxu0 %v667
      %v1124 = vpop.f32.mrf.mxu0
      %v1125 = vadd.f32 0.0, %v1124
      %v1126 = vpop.f32.mrf.mxu0
      %v1127 = vadd.f32 0.0, %v1126
      %1128 = vmatmul.bf16.gmra.mxu0 %v668
      %v1129 = vpop.f32.mrf.mxu0
      %v1130 = vadd.f32 0.0, %v1129
      %v1131 = vpop.f32.mrf.mxu0
      %v1132 = vadd.f32 0.0, %v1131
      %1133 = vmatmul.bf16.gmra.mxu0 %v669
      %v1134 = vpop.f32.mrf.mxu0
      %v1135 = vadd.f32 0.0, %v1134
      %v1136 = vpop.f32.mrf.mxu0
      %v1137 = vadd.f32 0.0, %v1136
      %1138 = vmatmul.bf16.gmra.mxu0 %v670
      %v1139 = vpop.f32.mrf.mxu0
      %v1140 = vadd.f32 0.0, %v1139
      %v1141 = vpop.f32.mrf.mxu0
      %v1142 = vadd.f32 0.0, %v1141
      %1143 = vdwg.mxu0
      %1144 = vmatpush.bf16.msra.mxu0 %v1062
      %1145 = vmatpush.bf16.msra.mxu0 %v1061
      %1146 = vmatpush.bf16.msra.mxu0 %v1060
      %1147 = vmatpush.bf16.msra.mxu0 %v1059
      %1148 = vmatpush.bf16.msra.mxu0 %v1058
      %1149 = vmatpush.bf16.msra.mxu0 %v1057
      %1150 = vmatpush.bf16.msra.mxu0 %v1056
      %1151 = vmatpush.bf16.msra.mxu0 %v1055
      %1152 = vmatmul.bf16.gmra.mxu0 %v706
      %v1153 = vpop.f32.mrf.mxu0
      %v1154 = vadd.f32 %v1105, %v1153
      %v1155 = vpop.f32.mrf.mxu0
      %v1156 = vadd.f32 %v1107, %v1155
      %1157 = vmatmul.bf16.gmra.mxu0 %v718
      %v1158 = vpop.f32.mrf.mxu0
      %v1159 = vadd.f32 %v1110, %v1158
      %v1160 = vpop.f32.mrf.mxu0
      %v1161 = vadd.f32 %v1112, %v1160
      %1162 = vmatmul.bf16.gmra.mxu0 %v730
      %v1163 = vpop.f32.mrf.mxu0
      %v1164 = vadd.f32 %v1115, %v1163
      %v1165 = vpop.f32.mrf.mxu0
      %v1166 = vadd.f32 %v1117, %v1165
      %1167 = vmatmul.bf16.gmra.mxu0 %v742
      %v1168 = vpop.f32.mrf.mxu0
      %v1169 = vadd.f32 %v1120, %v1168
      %v1170 = vpop.f32.mrf.mxu0
      %v1171 = vadd.f32 %v1122, %v1170
      %1172 = vmatmul.bf16.gmra.mxu0 %v754
      %v1173 = vpop.f32.mrf.mxu0
      %v1174 = vadd.f32 %v1125, %v1173
      %v1175 = vpop.f32.mrf.mxu0
      %v1176 = vadd.f32 %v1127, %v1175
      %1177 = vmatmul.bf16.gmra.mxu0 %v766
      %v1178 = vpop.f32.mrf.mxu0
      %v1179 = vadd.f32 %v1130, %v1178
      %v1180 = vpop.f32.mrf.mxu0
      %v1181 = vadd.f32 %v1132, %v1180
      %1182 = vmatmul.bf16.gmra.mxu0 %v778
      %v1183 = vpop.f32.mrf.mxu0
      %v1184 = vadd.f32 %v1135, %v1183
      %v1185 = vpop.f32.mrf.mxu0
      %v1186 = vadd.f32 %v1137, %v1185
      %1187 = vmatmul.bf16.gmra.mxu0 %v895
      %v1188 = vpop.f32.mrf.mxu0
      %v1189 = vadd.f32 %v1140, %v1188
      %v1190 = vpop.f32.mrf.mxu0
      %v1191 = vadd.f32 %v1142, %v1190
      %1192 = vdwg.mxu0
      %1193 = vmatpush.bf16.msra.mxu0 %v1070
      %1194 = vmatpush.bf16.msra.mxu0 %v1069
      %1195 = vmatpush.bf16.msra.mxu0 %v1068
      %1196 = vmatpush.bf16.msra.mxu0 %v1067
      %1197 = vmatpush.bf16.msra.mxu0 %v1066
      %1198 = vmatpush.bf16.msra.mxu0 %v1065
      %1199 = vmatpush.bf16.msra.mxu0 %v1064
      %1200 = vmatpush.bf16.msra.mxu0 %v1063
      %1201 = vmatmul.bf16.gmra.mxu0 %v809
      %v1202 = vpop.f32.mrf.mxu0
      %v1203 = vadd.f32 %v1154, %v1202
      %v1204 = vpop.f32.mrf.mxu0
      %v1205 = vadd.f32 %v1156, %v1204
      %1206 = vmatmul.bf16.gmra.mxu0 %v812
      %v1207 = vpop.f32.mrf.mxu0
      %v1208 = vadd.f32 %v1159, %v1207
      %v1209 = vpop.f32.mrf.mxu0
      %v1210 = vadd.f32 %v1161, %v1209
      %1211 = vmatmul.bf16.gmra.mxu0 %v815
      %v1212 = vpop.f32.mrf.mxu0
      %v1213 = vadd.f32 %v1164, %v1212
      %v1214 = vpop.f32.mrf.mxu0
      %v1215 = vadd.f32 %v1166, %v1214
      %1216 = vmatmul.bf16.gmra.mxu0 %v818
      %v1217 = vpop.f32.mrf.mxu0
      %v1218 = vadd.f32 %v1169, %v1217
      %v1219 = vpop.f32.mrf.mxu0
      %v1220 = vadd.f32 %v1171, %v1219
      %1221 = vmatmul.bf16.gmra.mxu0 %v821
      %v1222 = vpop.f32.mrf.mxu0
      %v1223 = vadd.f32 %v1174, %v1222
      %v1224 = vpop.f32.mrf.mxu0
      %v1225 = vadd.f32 %v1176, %v1224
      %1226 = vmatmul.bf16.gmra.mxu0 %v824
      %v1227 = vpop.f32.mrf.mxu0
      %v1228 = vadd.f32 %v1179, %v1227
      %v1229 = vpop.f32.mrf.mxu0
      %v1230 = vadd.f32 %v1181, %v1229
      %1231 = vmatmul.bf16.gmra.mxu0 %v827
      %v1232 = vpop.f32.mrf.mxu0
      %v1233 = vadd.f32 %v1184, %v1232
      %v1234 = vpop.f32.mrf.mxu0
      %v1235 = vadd.f32 %v1186, %v1234
      %1236 = vmatmul.bf16.gmra.mxu0 %v901
      %v1237 = vpop.f32.mrf.mxu0
      %v1238 = vadd.f32 %v1189, %v1237
      %v1239 = vpop.f32.mrf.mxu0
      %v1240 = vadd.f32 %v1191, %v1239
      %1241 = vdwg.mxu0
      %v1290 = vunpack.c.l.b16 %v836
      %v1291 = vunpack.c.l.b16 %v837
      %v1292 = vunpack.c.l.b16 %v838
      %v1293 = vunpack.c.l.b16 %v839
      %v1294 = vunpack.c.l.b16 %v840
      %v1295 = vunpack.c.l.b16 %v841
      %v1296 = vunpack.c.l.b16 %v842
      %v1297 = vunpack.c.l.b16 %v843
      %v1298 = vunpack.c.l.b16 %v844
      %v1299 = vunpack.c.l.b16 %v845
      %v1300 = vunpack.c.l.b16 %v846
      %v1301 = vunpack.c.l.b16 %v847
      %v1302 = vunpack.c.l.b16 %v848
      %v1303 = vunpack.c.l.b16 %v849
      %v1304 = vunpack.c.l.b16 %v850
      %v1305 = vunpack.c.l.b16 %v851
      %v1306 = vunpack.c.l.b16 %v852
      %v1307 = vunpack.c.l.b16 %v853
      %v1308 = vunpack.c.l.b16 %v854
      %v1309 = vunpack.c.l.b16 %v855
      %v1310 = vunpack.c.l.b16 %v856
      %v1311 = vunpack.c.l.b16 %v857
      %v1312 = vunpack.c.l.b16 %v858
      %v1313 = vunpack.c.l.b16 %v859
      %v1314 = vunpack.c.l.b16 %v860
      %v1315 = vunpack.c.l.b16 %v861
      %v1316 = vunpack.c.l.b16 %v862
      %v1317 = vunpack.c.l.b16 %v863
      %v1318 = vunpack.c.l.b16 %v864
      %v1319 = vunpack.c.l.b16 %v865
      %v1320 = vunpack.c.l.b16 %v866
      %v1321 = vunpack.c.l.b16 %v867
      %v1322 = vunpack.c.l.b16 %v868
      %v1323 = vunpack.c.l.b16 %v869
      %v1324 = vunpack.c.l.b16 %v870
      %v1325 = vunpack.c.l.b16 %v871
      %v1326 = vunpack.c.l.b16 %v872
      %v1327 = vunpack.c.l.b16 %v873
      %v1328 = vunpack.c.l.b16 %v874
      %v1329 = vunpack.c.l.b16 %v875
      %v1330 = vunpack.c.l.b16 %v876
      %v1331 = vunpack.c.l.b16 %v877
      %v1332 = vunpack.c.l.b16 %v878
      %v1333 = vunpack.c.l.b16 %v879
      %v1334 = vunpack.c.l.b16 %v880
      %v1335 = vunpack.c.l.b16 %v881
      %v1336 = vunpack.c.l.b16 %v882
      %v1337 = vunpack.c.l.b16 %v883
      %v1338 = vpack.c.b16 %v1291, %v1290
      %v1339 = vpack.c.b16 %v1293, %v1292
      %v1340 = vpack.c.b16 %v1295, %v1294
      %v1341 = vpack.c.b16 %v1297, %v1296
      %v1342 = vpack.c.b16 %v1299, %v1298
      %v1343 = vpack.c.b16 %v1301, %v1300
      %v1344 = vpack.c.b16 %v1303, %v1302
      %v1345 = vpack.c.b16 %v1305, %v1304
      %v1346 = vpack.c.b16 %v1307, %v1306
      %v1347 = vpack.c.b16 %v1309, %v1308
      %v1348 = vpack.c.b16 %v1311, %v1310
      %v1349 = vpack.c.b16 %v1313, %v1312
      %v1350 = vpack.c.b16 %v1315, %v1314
      %v1351 = vpack.c.b16 %v1317, %v1316
      %v1352 = vpack.c.b16 %v1319, %v1318
      %v1353 = vpack.c.b16 %v1321, %v1320
      %v1354 = vpack.c.b16 %v1323, %v1322
      %v1355 = vpack.c.b16 %v1325, %v1324
      %v1356 = vpack.c.b16 %v1327, %v1326
      %v1357 = vpack.c.b16 %v1329, %v1328
      %v1358 = vpack.c.b16 %v1331, %v1330
      %v1359 = vpack.c.b16 %v1333, %v1332
      %v1360 = vpack.c.b16 %v1335, %v1334
      %v1361 = vpack.c.b16 %v1337, %v1336
      %1386 = vmatpush.bf16.msra.mxu0 %v1345
      %1387 = vmatpush.bf16.msra.mxu0 %v1344
      %1388 = vmatpush.bf16.msra.mxu0 %v1343
      %1389 = vmatpush.bf16.msra.mxu0 %v1342
      %1390 = vmatpush.bf16.msra.mxu0 %v1341
      %1391 = vmatpush.bf16.msra.mxu0 %v1340
      %1392 = vmatpush.bf16.msra.mxu0 %v1339
      %1393 = vmatpush.bf16.msra.mxu0 %v1338
      %1394 = vmatmul.bf16.gmra.mxu0 %v662
      %v1395 = vpop.f32.mrf.mxu0
      %v1396 = vadd.f32 %v1203, %v1395
      %v1397 = vpop.f32.mrf.mxu0
      %v1398 = vadd.f32 %v1205, %v1397
      %1399 = vmatmul.bf16.gmra.mxu0 %v663
      %v1400 = vpop.f32.mrf.mxu0
      %v1401 = vadd.f32 %v1208, %v1400
      %v1402 = vpop.f32.mrf.mxu0
      %v1403 = vadd.f32 %v1210, %v1402
      %1404 = vmatmul.bf16.gmra.mxu0 %v664
      %v1405 = vpop.f32.mrf.mxu0
      %v1406 = vadd.f32 %v1213, %v1405
      %v1407 = vpop.f32.mrf.mxu0
      %v1408 = vadd.f32 %v1215, %v1407
      %1409 = vmatmul.bf16.gmra.mxu0 %v665
      %v1410 = vpop.f32.mrf.mxu0
      %v1411 = vadd.f32 %v1218, %v1410
      %v1412 = vpop.f32.mrf.mxu0
      %v1413 = vadd.f32 %v1220, %v1412
      %1414 = vmatmul.bf16.gmra.mxu0 %v666
      %v1415 = vpop.f32.mrf.mxu0
      %v1416 = vadd.f32 %v1223, %v1415
      %v1417 = vpop.f32.mrf.mxu0
      %v1418 = vadd.f32 %v1225, %v1417
      %1419 = vmatmul.bf16.gmra.mxu0 %v667
      %v1420 = vpop.f32.mrf.mxu0
      %v1421 = vadd.f32 %v1228, %v1420
      %v1422 = vpop.f32.mrf.mxu0
      %v1423 = vadd.f32 %v1230, %v1422
      %1424 = vmatmul.bf16.gmra.mxu0 %v668
      %v1425 = vpop.f32.mrf.mxu0
      %v1426 = vadd.f32 %v1233, %v1425
      %v1427 = vpop.f32.mrf.mxu0
      %v1428 = vadd.f32 %v1235, %v1427
      %1429 = vmatmul.bf16.gmra.mxu0 %v669
      %v1430 = vpop.f32.mrf.mxu0
      %v1431 = vadd.f32 %v1238, %v1430
      %v1432 = vpop.f32.mrf.mxu0
      %v1433 = vadd.f32 %v1240, %v1432
      %1434 = vdwg.mxu0
      %1435 = vmatpush.bf16.msra.mxu0 %v1353
      %1436 = vmatpush.bf16.msra.mxu0 %v1352
      %1437 = vmatpush.bf16.msra.mxu0 %v1351
      %1438 = vmatpush.bf16.msra.mxu0 %v1350
      %1439 = vmatpush.bf16.msra.mxu0 %v1349
      %1440 = vmatpush.bf16.msra.mxu0 %v1348
      %1441 = vmatpush.bf16.msra.mxu0 %v1347
      %1442 = vmatpush.bf16.msra.mxu0 %v1346
      %1443 = vmatmul.bf16.gmra.mxu0 %v694
      %v1444 = vpop.f32.mrf.mxu0
      %v1445 = vadd.f32 %v1396, %v1444
      %v1446 = vpop.f32.mrf.mxu0
      %v1447 = vadd.f32 %v1398, %v1446
      %1448 = vmatmul.bf16.gmra.mxu0 %v706
      %v1449 = vpop.f32.mrf.mxu0
      %v1450 = vadd.f32 %v1401, %v1449
      %v1451 = vpop.f32.mrf.mxu0
      %v1452 = vadd.f32 %v1403, %v1451
      %1453 = vmatmul.bf16.gmra.mxu0 %v718
      %v1454 = vpop.f32.mrf.mxu0
      %v1455 = vadd.f32 %v1406, %v1454
      %v1456 = vpop.f32.mrf.mxu0
      %v1457 = vadd.f32 %v1408, %v1456
      %1458 = vmatmul.bf16.gmra.mxu0 %v730
      %v1459 = vpop.f32.mrf.mxu0
      %v1460 = vadd.f32 %v1411, %v1459
      %v1461 = vpop.f32.mrf.mxu0
      %v1462 = vadd.f32 %v1413, %v1461
      %1463 = vmatmul.bf16.gmra.mxu0 %v742
      %v1464 = vpop.f32.mrf.mxu0
      %v1465 = vadd.f32 %v1416, %v1464
      %v1466 = vpop.f32.mrf.mxu0
      %v1467 = vadd.f32 %v1418, %v1466
      %1468 = vmatmul.bf16.gmra.mxu0 %v754
      %v1469 = vpop.f32.mrf.mxu0
      %v1470 = vadd.f32 %v1421, %v1469
      %v1471 = vpop.f32.mrf.mxu0
      %v1472 = vadd.f32 %v1423, %v1471
      %1473 = vmatmul.bf16.gmra.mxu0 %v766
      %v1474 = vpop.f32.mrf.mxu0
      %v1475 = vadd.f32 %v1426, %v1474
      %v1476 = vpop.f32.mrf.mxu0
      %v1477 = vadd.f32 %v1428, %v1476
      %1478 = vmatmul.bf16.gmra.mxu0 %v778
      %v1479 = vpop.f32.mrf.mxu0
      %v1480 = vadd.f32 %v1431, %v1479
      %v1481 = vpop.f32.mrf.mxu0
      %v1482 = vadd.f32 %v1433, %v1481
      %1483 = vdwg.mxu0
      %1484 = vmatpush.bf16.msra.mxu0 %v1361
      %1485 = vmatpush.bf16.msra.mxu0 %v1360
      %1486 = vmatpush.bf16.msra.mxu0 %v1359
      %1487 = vmatpush.bf16.msra.mxu0 %v1358
      %1488 = vmatpush.bf16.msra.mxu0 %v1357
      %1489 = vmatpush.bf16.msra.mxu0 %v1356
      %1490 = vmatpush.bf16.msra.mxu0 %v1355
      %1491 = vmatpush.bf16.msra.mxu0 %v1354
      %1492 = vmatmul.bf16.gmra.mxu0 %v806
      %v1493 = vpop.f32.mrf.mxu0
      %v1494 = vadd.f32 %v1445, %v1493
      %v1495 = vpop.f32.mrf.mxu0
      %v1496 = vadd.f32 %v1447, %v1495
      %1497 = vmatmul.bf16.gmra.mxu0 %v809
      %v1498 = vpop.f32.mrf.mxu0
      %v1499 = vadd.f32 %v1450, %v1498
      %v1500 = vpop.f32.mrf.mxu0
      %v1501 = vadd.f32 %v1452, %v1500
      %1502 = vmatmul.bf16.gmra.mxu0 %v812
      %v1503 = vpop.f32.mrf.mxu0
      %v1504 = vadd.f32 %v1455, %v1503
      %v1505 = vpop.f32.mrf.mxu0
      %v1506 = vadd.f32 %v1457, %v1505
      %1507 = vmatmul.bf16.gmra.mxu0 %v815
      %v1508 = vpop.f32.mrf.mxu0
      %v1509 = vadd.f32 %v1460, %v1508
      %v1510 = vpop.f32.mrf.mxu0
      %v1511 = vadd.f32 %v1462, %v1510
      %1512 = vmatmul.bf16.gmra.mxu0 %v818
      %v1513 = vpop.f32.mrf.mxu0
      %v1514 = vadd.f32 %v1465, %v1513
      %v1515 = vpop.f32.mrf.mxu0
      %v1516 = vadd.f32 %v1467, %v1515
      %1517 = vmatmul.bf16.gmra.mxu0 %v821
      %v1518 = vpop.f32.mrf.mxu0
      %v1519 = vadd.f32 %v1470, %v1518
      %v1520 = vpop.f32.mrf.mxu0
      %v1521 = vadd.f32 %v1472, %v1520
      %1522 = vmatmul.bf16.gmra.mxu0 %v824
      %v1523 = vpop.f32.mrf.mxu0
      %v1524 = vadd.f32 %v1475, %v1523
      %v1525 = vpop.f32.mrf.mxu0
      %v1526 = vadd.f32 %v1477, %v1525
      %1527 = vmatmul.bf16.gmra.mxu0 %v827
      %v1528 = vpop.f32.mrf.mxu0
      %v1529 = vadd.f32 %v1480, %v1528
      %v1530 = vpop.f32.mrf.mxu0
      %v1531 = vadd.f32 %v1482, %v1530
      %1532 = vdwg.mxu0
      %v1534 = vshrl.u32 %v671, 16
      %v1536 = vshll.u32 %v671, 16
      %v1538 = vrot.slane %v1536, 1
      %v1539 = vor.u32 %v1534, %v1538
      %v1541 = vshll.u32 %v681, 16
      %v1543 = vrot.slane %v1541, 1
      %v1544 = vsel %vm682, %v1539, %v1543
      %v1548 = vrot.slane %v671, 1
      %v1549 = vrot.slane %v681, 1
      %v1550 = vsel %vm803, %v1548, %v1549
      %v1552 = vld [vmem:[%s4 + $0x180] sm:$0xf]
      %v1553 = vld [vmem:[%s4 + $0x184] sm:$0xf]
      %v1554 = vld [vmem:[%s4 + $0x188] sm:$0xf]
      %v1555 = vld [vmem:[%s4 + $0x18c] sm:$0xf]
      %v1556 = vld [vmem:[%s4 + $0x190] sm:$0xf]
      %v1557 = vld [vmem:[%s4 + $0x194] sm:$0xf]
      %v1558 = vld [vmem:[%s4 + $0x198] sm:$0xf]
      %v1559 = vld [vmem:[%s4 + $0x19c] sm:$0xf]
      %v1560 = vld [vmem:[%s4 + $0x1a0] sm:$0xf]
      %v1561 = vld [vmem:[%s4 + $0x1a4] sm:$0xf]
      %v1562 = vld [vmem:[%s4 + $0x1a8] sm:$0xf]
      %v1563 = vld [vmem:[%s4 + $0x1ac] sm:$0xf]
      %v1564 = vld [vmem:[%s4 + $0x1b0] sm:$0xf]
      %v1565 = vld [vmem:[%s4 + $0x1b4] sm:$0xf]
      %v1566 = vld [vmem:[%s4 + $0x1b8] sm:$0xf]
      %v1567 = vld [vmem:[%s4 + $0x1bc] sm:$0xf]
      %v1568 = vld [vmem:[%s4 + $0x1c0] sm:$0xf]
      %v1569 = vld [vmem:[%s4 + $0x1c4] sm:$0xf]
      %v1570 = vld [vmem:[%s4 + $0x1c8] sm:$0xf]
      %v1571 = vld [vmem:[%s4 + $0x1cc] sm:$0xf]
      %v1572 = vld [vmem:[%s4 + $0x1d0] sm:$0xf]
      %v1573 = vld [vmem:[%s4 + $0x1d4] sm:$0xf]
      %v1574 = vld [vmem:[%s4 + $0x1d8] sm:$0xf]
      %v1575 = vld [vmem:[%s4 + $0x1dc] sm:$0xf]
      %v1576 = vld [vmem:[%s4 + $0x1e0] sm:$0xf]
      %v1577 = vld [vmem:[%s4 + $0x1e4] sm:$0xf]
      %v1578 = vld [vmem:[%s4 + $0x1e8] sm:$0xf]
      %v1579 = vld [vmem:[%s4 + $0x1ec] sm:$0xf]
      %v1580 = vld [vmem:[%s4 + $0x1f0] sm:$0xf]
      %v1581 = vld [vmem:[%s4 + $0x1f4] sm:$0xf]
      %v1582 = vld [vmem:[%s4 + $0x1f8] sm:$0xf]
      %v1583 = vld [vmem:[%s4 + $0x1fc] sm:$0xf]
      %v1584 = vld [vmem:[%s4 + $0x200] sm:$0xf]
      %v1585 = vld [vmem:[%s4 + $0x204] sm:$0xf]
      %v1586 = vld [vmem:[%s4 + $0x208] sm:$0xf]
      %v1587 = vld [vmem:[%s4 + $0x20c] sm:$0xf]
      %v1588 = vld [vmem:[%s4 + $0x210] sm:$0xf]
      %v1589 = vld [vmem:[%s4 + $0x214] sm:$0xf]
      %v1590 = vld [vmem:[%s4 + $0x218] sm:$0xf]
      %v1591 = vld [vmem:[%s4 + $0x21c] sm:$0xf]
      %v1592 = vld [vmem:[%s4 + $0x220] sm:$0xf]
      %v1593 = vld [vmem:[%s4 + $0x224] sm:$0xf]
      %v1594 = vld [vmem:[%s4 + $0x228] sm:$0xf]
      %v1595 = vld [vmem:[%s4 + $0x22c] sm:$0xf]
      %v1596 = vld [vmem:[%s4 + $0x230] sm:$0xf]
      %v1597 = vld [vmem:[%s4 + $0x234] sm:$0xf]
      %v1598 = vld [vmem:[%s4 + $0x238] sm:$0xf]
      %v1599 = vld [vmem:[%s4 + $0x23c] sm:$0xf]
      %v1648 = vunpack.c.l.b16 %v1552
      %v1649 = vunpack.c.l.b16 %v1553
      %v1650 = vunpack.c.l.b16 %v1554
      %v1651 = vunpack.c.l.b16 %v1555
      %v1652 = vunpack.c.l.b16 %v1556
      %v1653 = vunpack.c.l.b16 %v1557
      %v1654 = vunpack.c.l.b16 %v1558
      %v1655 = vunpack.c.l.b16 %v1559
      %v1656 = vunpack.c.l.b16 %v1560
      %v1657 = vunpack.c.l.b16 %v1561
      %v1658 = vunpack.c.l.b16 %v1562
      %v1659 = vunpack.c.l.b16 %v1563
      %v1660 = vunpack.c.l.b16 %v1564
      %v1661 = vunpack.c.l.b16 %v1565
      %v1662 = vunpack.c.l.b16 %v1566
      %v1663 = vunpack.c.l.b16 %v1567
      %v1664 = vunpack.c.l.b16 %v1568
      %v1665 = vunpack.c.l.b16 %v1569
      %v1666 = vunpack.c.l.b16 %v1570
      %v1667 = vunpack.c.l.b16 %v1571
      %v1668 = vunpack.c.l.b16 %v1572
      %v1669 = vunpack.c.l.b16 %v1573
      %v1670 = vunpack.c.l.b16 %v1574
      %v1671 = vunpack.c.l.b16 %v1575
      %v1672 = vunpack.c.l.b16 %v1576
      %v1673 = vunpack.c.l.b16 %v1577
      %v1674 = vunpack.c.l.b16 %v1578
      %v1675 = vunpack.c.l.b16 %v1579
      %v1676 = vunpack.c.l.b16 %v1580
      %v1677 = vunpack.c.l.b16 %v1581
      %v1678 = vunpack.c.l.b16 %v1582
      %v1679 = vunpack.c.l.b16 %v1583
      %v1680 = vunpack.c.l.b16 %v1584
      %v1681 = vunpack.c.l.b16 %v1585
      %v1682 = vunpack.c.l.b16 %v1586
      %v1683 = vunpack.c.l.b16 %v1587
      %v1684 = vunpack.c.l.b16 %v1588
      %v1685 = vunpack.c.l.b16 %v1589
      %v1686 = vunpack.c.l.b16 %v1590
      %v1687 = vunpack.c.l.b16 %v1591
      %v1688 = vunpack.c.l.b16 %v1592
      %v1689 = vunpack.c.l.b16 %v1593
      %v1690 = vunpack.c.l.b16 %v1594
      %v1691 = vunpack.c.l.b16 %v1595
      %v1692 = vunpack.c.l.b16 %v1596
      %v1693 = vunpack.c.l.b16 %v1597
      %v1694 = vunpack.c.l.b16 %v1598
      %v1695 = vunpack.c.l.b16 %v1599
      %v1696 = vpack.c.b16 %v1649, %v1648
      %v1697 = vpack.c.b16 %v1651, %v1650
      %v1698 = vpack.c.b16 %v1653, %v1652
      %v1699 = vpack.c.b16 %v1655, %v1654
      %v1700 = vpack.c.b16 %v1657, %v1656
      %v1701 = vpack.c.b16 %v1659, %v1658
      %v1702 = vpack.c.b16 %v1661, %v1660
      %v1703 = vpack.c.b16 %v1663, %v1662
      %v1704 = vpack.c.b16 %v1665, %v1664
      %v1705 = vpack.c.b16 %v1667, %v1666
      %v1706 = vpack.c.b16 %v1669, %v1668
      %v1707 = vpack.c.b16 %v1671, %v1670
      %v1708 = vpack.c.b16 %v1673, %v1672
      %v1709 = vpack.c.b16 %v1675, %v1674
      %v1710 = vpack.c.b16 %v1677, %v1676
      %v1711 = vpack.c.b16 %v1679, %v1678
      %v1712 = vpack.c.b16 %v1681, %v1680
      %v1713 = vpack.c.b16 %v1683, %v1682
      %v1714 = vpack.c.b16 %v1685, %v1684
      %v1715 = vpack.c.b16 %v1687, %v1686
      %v1716 = vpack.c.b16 %v1689, %v1688
      %v1717 = vpack.c.b16 %v1691, %v1690
      %v1718 = vpack.c.b16 %v1693, %v1692
      %v1719 = vpack.c.b16 %v1695, %v1694
      %1744 = vmatpush.bf16.msra.mxu0 %v1703
      %1745 = vmatpush.bf16.msra.mxu0 %v1702
      %1746 = vmatpush.bf16.msra.mxu0 %v1701
      %1747 = vmatpush.bf16.msra.mxu0 %v1700
      %1748 = vmatpush.bf16.msra.mxu0 %v1699
      %1749 = vmatpush.bf16.msra.mxu0 %v1698
      %1750 = vmatpush.bf16.msra.mxu0 %v1697
      %1751 = vmatpush.bf16.msra.mxu0 %v1696
      %1752 = vmatmul.bf16.gmra.mxu0 %v664
      %v1753 = vpop.f32.mrf.mxu0
      %v1754 = vadd.f32 0.0, %v1753
      %v1755 = vpop.f32.mrf.mxu0
      %v1756 = vadd.f32 0.0, %v1755
      %1757 = vmatmul.bf16.gmra.mxu0 %v665
      %v1758 = vpop.f32.mrf.mxu0
      %v1759 = vadd.f32 0.0, %v1758
      %v1760 = vpop.f32.mrf.mxu0
      %v1761 = vadd.f32 0.0, %v1760
      %1762 = vmatmul.bf16.gmra.mxu0 %v666
      %v1763 = vpop.f32.mrf.mxu0
      %v1764 = vadd.f32 0.0, %v1763
      %v1765 = vpop.f32.mrf.mxu0
      %v1766 = vadd.f32 0.0, %v1765
      %1767 = vmatmul.bf16.gmra.mxu0 %v667
      %v1768 = vpop.f32.mrf.mxu0
      %v1769 = vadd.f32 0.0, %v1768
      %v1770 = vpop.f32.mrf.mxu0
      %v1771 = vadd.f32 0.0, %v1770
      %1772 = vmatmul.bf16.gmra.mxu0 %v668
      %v1773 = vpop.f32.mrf.mxu0
      %v1774 = vadd.f32 0.0, %v1773
      %v1775 = vpop.f32.mrf.mxu0
      %v1776 = vadd.f32 0.0, %v1775
      %1777 = vmatmul.bf16.gmra.mxu0 %v669
      %v1778 = vpop.f32.mrf.mxu0
      %v1779 = vadd.f32 0.0, %v1778
      %v1780 = vpop.f32.mrf.mxu0
      %v1781 = vadd.f32 0.0, %v1780
      %1782 = vmatmul.bf16.gmra.mxu0 %v670
      %v1783 = vpop.f32.mrf.mxu0
      %v1784 = vadd.f32 0.0, %v1783
      %v1785 = vpop.f32.mrf.mxu0
      %v1786 = vadd.f32 0.0, %v1785
      %1787 = vmatmul.bf16.gmra.mxu0 %v671
      %v1788 = vpop.f32.mrf.mxu0
      %v1789 = vadd.f32 0.0, %v1788
      %v1790 = vpop.f32.mrf.mxu0
      %v1791 = vadd.f32 0.0, %v1790
      %1792 = vdwg.mxu0
      %1793 = vmatpush.bf16.msra.mxu0 %v1711
      %1794 = vmatpush.bf16.msra.mxu0 %v1710
      %1795 = vmatpush.bf16.msra.mxu0 %v1709
      %1796 = vmatpush.bf16.msra.mxu0 %v1708
      %1797 = vmatpush.bf16.msra.mxu0 %v1707
      %1798 = vmatpush.bf16.msra.mxu0 %v1706
      %1799 = vmatpush.bf16.msra.mxu0 %v1705
      %1800 = vmatpush.bf16.msra.mxu0 %v1704
      %1801 = vmatmul.bf16.gmra.mxu0 %v718
      %v1802 = vpop.f32.mrf.mxu0
      %v1803 = vadd.f32 %v1754, %v1802
      %v1804 = vpop.f32.mrf.mxu0
      %v1805 = vadd.f32 %v1756, %v1804
      %1806 = vmatmul.bf16.gmra.mxu0 %v730
      %v1807 = vpop.f32.mrf.mxu0
      %v1808 = vadd.f32 %v1759, %v1807
      %v1809 = vpop.f32.mrf.mxu0
      %v1810 = vadd.f32 %v1761, %v1809
      %1811 = vmatmul.bf16.gmra.mxu0 %v742
      %v1812 = vpop.f32.mrf.mxu0
      %v1813 = vadd.f32 %v1764, %v1812
      %v1814 = vpop.f32.mrf.mxu0
      %v1815 = vadd.f32 %v1766, %v1814
      %1816 = vmatmul.bf16.gmra.mxu0 %v754
      %v1817 = vpop.f32.mrf.mxu0
      %v1818 = vadd.f32 %v1769, %v1817
      %v1819 = vpop.f32.mrf.mxu0
      %v1820 = vadd.f32 %v1771, %v1819
      %1821 = vmatmul.bf16.gmra.mxu0 %v766
      %v1822 = vpop.f32.mrf.mxu0
      %v1823 = vadd.f32 %v1774, %v1822
      %v1824 = vpop.f32.mrf.mxu0
      %v1825 = vadd.f32 %v1776, %v1824
      %1826 = vmatmul.bf16.gmra.mxu0 %v778
      %v1827 = vpop.f32.mrf.mxu0
      %v1828 = vadd.f32 %v1779, %v1827
      %v1829 = vpop.f32.mrf.mxu0
      %v1830 = vadd.f32 %v1781, %v1829
      %1831 = vmatmul.bf16.gmra.mxu0 %v895
      %v1832 = vpop.f32.mrf.mxu0
      %v1833 = vadd.f32 %v1784, %v1832
      %v1834 = vpop.f32.mrf.mxu0
      %v1835 = vadd.f32 %v1786, %v1834
      %1836 = vmatmul.bf16.gmra.mxu0 %v1544
      %v1837 = vpop.f32.mrf.mxu0
      %v1838 = vadd.f32 %v1789, %v1837
      %v1839 = vpop.f32.mrf.mxu0
      %v1840 = vadd.f32 %v1791, %v1839
      %1841 = vdwg.mxu0
      %1842 = vmatpush.bf16.msra.mxu0 %v1719
      %1843 = vmatpush.bf16.msra.mxu0 %v1718
      %1844 = vmatpush.bf16.msra.mxu0 %v1717
      %1845 = vmatpush.bf16.msra.mxu0 %v1716
      %1846 = vmatpush.bf16.msra.mxu0 %v1715
      %1847 = vmatpush.bf16.msra.mxu0 %v1714
      %1848 = vmatpush.bf16.msra.mxu0 %v1713
      %1849 = vmatpush.bf16.msra.mxu0 %v1712
      %1850 = vmatmul.bf16.gmra.mxu0 %v812
      %v1851 = vpop.f32.mrf.mxu0
      %v1852 = vadd.f32 %v1803, %v1851
      %v1853 = vpop.f32.mrf.mxu0
      %v1854 = vadd.f32 %v1805, %v1853
      %1855 = vmatmul.bf16.gmra.mxu0 %v815
      %v1856 = vpop.f32.mrf.mxu0
      %v1857 = vadd.f32 %v1808, %v1856
      %v1858 = vpop.f32.mrf.mxu0
      %v1859 = vadd.f32 %v1810, %v1858
      %1860 = vmatmul.bf16.gmra.mxu0 %v818
      %v1861 = vpop.f32.mrf.mxu0
      %v1862 = vadd.f32 %v1813, %v1861
      %v1863 = vpop.f32.mrf.mxu0
      %v1864 = vadd.f32 %v1815, %v1863
      %1865 = vmatmul.bf16.gmra.mxu0 %v821
      %v1866 = vpop.f32.mrf.mxu0
      %v1867 = vadd.f32 %v1818, %v1866
      %v1868 = vpop.f32.mrf.mxu0
      %v1869 = vadd.f32 %v1820, %v1868
      %1870 = vmatmul.bf16.gmra.mxu0 %v824
      %v1871 = vpop.f32.mrf.mxu0
      %v1872 = vadd.f32 %v1823, %v1871
      %v1873 = vpop.f32.mrf.mxu0
      %v1874 = vadd.f32 %v1825, %v1873
      %1875 = vmatmul.bf16.gmra.mxu0 %v827
      %v1876 = vpop.f32.mrf.mxu0
      %v1877 = vadd.f32 %v1828, %v1876
      %v1878 = vpop.f32.mrf.mxu0
      %v1879 = vadd.f32 %v1830, %v1878
      %1880 = vmatmul.bf16.gmra.mxu0 %v901
      %v1881 = vpop.f32.mrf.mxu0
      %v1882 = vadd.f32 %v1833, %v1881
      %v1883 = vpop.f32.mrf.mxu0
      %v1884 = vadd.f32 %v1835, %v1883
      %1885 = vmatmul.bf16.gmra.mxu0 %v1550
      %v1886 = vpop.f32.mrf.mxu0
      %v1887 = vadd.f32 %v1838, %v1886
      %v1888 = vpop.f32.mrf.mxu0
      %v1889 = vadd.f32 %v1840, %v1888
      %1890 = vdwg.mxu0
      %v1891 = vadd.f32 %v1494, %v1852
      %v1892 = vadd.f32 %v1496, %v1854
      %v1893 = vadd.f32 %v1499, %v1857
      %v1894 = vadd.f32 %v1501, %v1859
      %v1895 = vadd.f32 %v1504, %v1862
      %v1896 = vadd.f32 %v1506, %v1864
      %v1897 = vadd.f32 %v1509, %v1867
      %v1898 = vadd.f32 %v1511, %v1869
      %v1899 = vadd.f32 %v1514, %v1872
      %v1900 = vadd.f32 %v1516, %v1874
      %v1901 = vadd.f32 %v1519, %v1877
      %v1902 = vadd.f32 %v1521, %v1879
      %v1903 = vadd.f32 %v1524, %v1882
      %v1904 = vadd.f32 %v1526, %v1884
      %v1905 = vadd.f32 %v1529, %v1887
      %v1906 = vadd.f32 %v1531, %v1889
      %v1907 = vld [vmem:[%s5] sm:$0x1]
      %v1909 = vperm.slane %v1907, 0
      %v1911 = vadd.f32 %v1891, %v1909
      %v1912 = vadd.f32 %v1892, %v1909
      %v1913 = vadd.f32 %v1893, %v1909
      %v1914 = vadd.f32 %v1894, %v1909
      %v1915 = vadd.f32 %v1895, %v1909
      %v1916 = vadd.f32 %v1896, %v1909
      %v1917 = vadd.f32 %v1897, %v1909
      %v1918 = vadd.f32 %v1898, %v1909
      %v1919 = vadd.f32 %v1899, %v1909
      %v1920 = vadd.f32 %v1900, %v1909
      %v1921 = vadd.f32 %v1901, %v1909
      %v1922 = vadd.f32 %v1902, %v1909
      %v1923 = vadd.f32 %v1903, %v1909
      %v1924 = vadd.f32 %v1904, %v1909
      %v1925 = vadd.f32 %v1905, %v1909
      %v1926 = vadd.f32 %v1906, %v1909
      %v1927 = vpack.c.bf16 %v1911, %v1911
      %v1928 = vpack.c.bf16 %v1912, %v1912
      %v1929 = vpack.c.bf16 %v1913, %v1913
      %v1930 = vpack.c.bf16 %v1914, %v1914
      %v1931 = vpack.c.bf16 %v1915, %v1915
      %v1932 = vpack.c.bf16 %v1916, %v1916
      %v1933 = vpack.c.bf16 %v1917, %v1917
      %v1934 = vpack.c.bf16 %v1918, %v1918
      %v1935 = vpack.c.bf16 %v1919, %v1919
      %v1936 = vpack.c.bf16 %v1920, %v1920
      %v1937 = vpack.c.bf16 %v1921, %v1921
      %v1938 = vpack.c.bf16 %v1922, %v1922
      %v1939 = vpack.c.bf16 %v1923, %v1923
      %v1940 = vpack.c.bf16 %v1924, %v1924
      %v1941 = vpack.c.bf16 %v1925, %v1925
      %v1942 = vpack.c.bf16 %v1926, %v1926
      %1943 = vst [vmem:[%s368] sm:$0xf] %v1927
      %1944 = vst [vmem:[%s368 + $0x4] sm:$0xf] %v1928
      %1945 = vst [vmem:[%s368 + $0x8] sm:$0xf] %v1929
      %1946 = vst [vmem:[%s368 + $0xc] sm:$0xf] %v1930
      %1947 = vst [vmem:[%s368 + $0x10] sm:$0xf] %v1931
      %1948 = vst [vmem:[%s368 + $0x14] sm:$0xf] %v1932
      %1949 = vst [vmem:[%s368 + $0x18] sm:$0xf] %v1933
      %1950 = vst [vmem:[%s368 + $0x1c] sm:$0xf] %v1934
      %1951 = vst [vmem:[%s368 + $0x20] sm:$0xf] %v1935
      %1952 = vst [vmem:[%s368 + $0x24] sm:$0xf] %v1936
      %1953 = vst [vmem:[%s368 + $0x28] sm:$0xf] %v1937
      %1954 = vst [vmem:[%s368 + $0x2c] sm:$0xf] %v1938
      %1955 = vst [vmem:[%s368 + $0x30] sm:$0xf] %v1939
      %1956 = vst [vmem:[%s368 + $0x34] sm:$0xf] %v1940
      %1957 = vst [vmem:[%s368 + $0x38] sm:$0xf] %v1941
      %1958 = vst [vmem:[%s368 + $0x3c] sm:$0xf] %v1942
      %v1959 = vadd.f32 %v1911, %v1912
      %v1960 = vadd.f32 %v1959, %v1913
      %v1961 = vadd.f32 %v1960, %v1914
      %v1962 = vadd.f32 %v1961, %v1915
      %v1963 = vadd.f32 %v1962, %v1916
      %v1964 = vadd.f32 %v1963, %v1917
      %v1965 = vadd.f32 %v1964, %v1918
      %v1966 = vadd.f32 %v1965, %v1919
      %v1967 = vadd.f32 %v1966, %v1920
      %v1968 = vadd.f32 %v1967, %v1921
      %v1969 = vadd.f32 %v1968, %v1922
      %v1970 = vadd.f32 %v1969, %v1923
      %v1971 = vadd.f32 %v1970, %v1924
      %v1972 = vadd.f32 %v1971, %v1925
      %v1973 = vadd.f32 %v1972, %v1926
      %v1974 = vrot.slane %v1973, 4
      %v1975 = vadd.f32 %v1973, %v1974
      %v1976 = vrot.slane %v1975, 2
      %v1977 = vadd.f32 %v1975, %v1976
      %v1978 = vrot.slane %v1977, 1
      %v1979 = vadd.f32 %v1977, %v1978
      %v1980 = vmul.f32 %v1911, %v1911
      %v1981 = vmul.f32 %v1912, %v1912
      %v1982 = vmul.f32 %v1913, %v1913
      %v1983 = vmul.f32 %v1914, %v1914
      %v1984 = vmul.f32 %v1915, %v1915
      %v1985 = vmul.f32 %v1916, %v1916
      %v1986 = vmul.f32 %v1917, %v1917
      %v1987 = vmul.f32 %v1918, %v1918
      %v1988 = vmul.f32 %v1919, %v1919
      %v1989 = vmul.f32 %v1920, %v1920
      %v1990 = vmul.f32 %v1921, %v1921
      %v1991 = vmul.f32 %v1922, %v1922
      %v1992 = vmul.f32 %v1923, %v1923
      %v1993 = vmul.f32 %v1924, %v1924
      %v1994 = vmul.f32 %v1925, %v1925
      %v1995 = vmul.f32 %v1926, %v1926
      %v1996 = vadd.f32 %v1980, %v1981
      %v1997 = vadd.f32 %v1996, %v1982
      %v1998 = vadd.f32 %v1997, %v1983
      %v1999 = vadd.f32 %v1998, %v1984
      %v2000 = vadd.f32 %v1999, %v1985
      %v2001 = vadd.f32 %v2000, %v1986
      %v2002 = vadd.f32 %v2001, %v1987
      %v2003 = vadd.f32 %v2002, %v1988
      %v2004 = vadd.f32 %v2003, %v1989
      %v2005 = vadd.f32 %v2004, %v1990
      %v2006 = vadd.f32 %v2005, %v1991
      %v2007 = vadd.f32 %v2006, %v1992
      %v2008 = vadd.f32 %v2007, %v1993
      %v2009 = vadd.f32 %v2008, %v1994
      %v2010 = vadd.f32 %v2009, %v1995
      %v2011 = vrot.slane %v2010, 4
      %v2012 = vadd.f32 %v2010, %v2011
      %v2013 = vrot.slane %v2012, 2
      %v2014 = vadd.f32 %v2012, %v2013
      %v2015 = vrot.slane %v2014, 1
      %v2016 = vadd.f32 %v2014, %v2015
      %vm2017 = vcmask 1040384
      %v2018 = vsel %vm2017, %v1979, %v2016
      %vm2019 = vcmask 1041408
      %v2020 = vsel %vm2019, %v2018, 0.0
      %2021 = vst [vmem:[%s377] sm:$0xff] %v2020
      %s2022 = smul.u32 8, %s24
      %p2023 = scmp.lt.s32.totalorder %s23, 1
      %s2024 = scalar_select %p2023, %s23, 1
      %p2025 = scmp.lt.s32.totalorder %s2022, 15
      %s2026 = scalar_select %p2025, %s2022, 15
      %s2027 = smul.addr %s2026, 2
      %s2028 = smul.addr %s2024, 32
      %s2029 = sadd.s32 %s2027, %s2028
      %s2030 = smul.addr %s2029, 4
      %s2031 = scalar_lea.vmem %s6, %s2030
      %p2032 = scmp.lt.s32.totalorder %s23, 1
      %s2033 = scalar_select %p2032, %s23, 1
      %p2034 = scmp.lt.s32.totalorder %s24, 1
      %s2035 = scalar_select %p2034, %s24, 1
      %s2036 = smul.addr %s2033, 2
      %s2037 = sadd.s32 %s2035, %s2036
      %s2038 = smul.addr %s2037, 8
      %s2039 = scalar_lea.vmem %s7, %s2038
      // Predicated region
      $region45: #{decoder_block_forward.6} parent=43 // pred_check
        %p2040 = pneg %p191
      $region46: #{decoder_block_forward.6} parent=43 // pred_check_branch
        %2042 = sbr.rel (%p2040) target = $region48
      $region47: #{decoder_block_forward.6} parent=43 // pred_region
        %s2043 = smul.u32 8, %s24
      $region48: #{decoder_block_forward.6} parent=43 // pred_fallthru
        _
      // Predicated region
      $region49: #{decoder_block_forward.6} parent=43 // pred_check
        %p2044 = pneg %p219
      $region50: #{decoder_block_forward.6} parent=43 // pred_check_branch
        %2046 = sbr.rel (%p2044) target = $region52
      $region51: #{decoder_block_forward.6} parent=43 // pred_region
        _
      $region52: #{decoder_block_forward.6} parent=43 // pred_fallthru
        _
    $region44: #{decoder_block_forward.6} parent=5 // pred_fallthru
      _
    %p2047 = scmp.le.s32.totalorder 2, %s14
    // Predicated region
    $region53: #{decoder_block_forward.6} parent=5 // pred_check
      %p2048 = pneg %p2047
    $region54: #{decoder_block_forward.6} parent=5 // pred_check_branch
      %2050 = sbr.rel (%p2048) target = $region56
    $region55: #{decoder_block_forward.6} parent=5 // pred_region
      %s2051 = ssub.s32 %s14, 2
      // Predicated region
      $region57: #{decoder_block_forward.6} parent=55 // pred_check
        %p2052 = pneg %p197
      $region58: #{decoder_block_forward.6} parent=55 // pred_check_branch
        %2054 = sbr.rel (%p2052) target = $region60
      $region59: #{decoder_block_forward.6} parent=55 // pred_region
        %s2055 = smul.u32 8, %s26
        %p2056 = scmp.lt.s32.totalorder %s25, 1
        %s2057 = scalar_select %p2056, %s25, 1
        %p2058 = scmp.lt.s32.totalorder %s2055, 15
        %s2059 = scalar_select %p2058, %s2055, 15
        %s2060 = smul.addr %s2059, 2
        %s2061 = smul.addr %s2057, 32
        %s2062 = sadd.s32 %s2060, %s2061
        %s2063 = smul.addr %s2062, 4
        %s2064 = scalar_lea.vmem %s6, %s2063
      $region60: #{decoder_block_forward.6} parent=55 // pred_fallthru
        _
      // Predicated region
      $region61: #{decoder_block_forward.6} parent=55 // pred_check
        %p2065 = pneg %p225
      $region62: #{decoder_block_forward.6} parent=55 // pred_check_branch
        %2067 = sbr.rel (%p2065) target = $region64
      $region63: #{decoder_block_forward.6} parent=55 // pred_region
        %p2068 = scmp.lt.s32.totalorder %s25, 1
        %s2069 = scalar_select %p2068, %s25, 1
        %p2070 = scmp.lt.s32.totalorder %s26, 1
        %s2071 = scalar_select %p2070, %s26, 1
        %s2072 = smul.addr %s2069, 2
        %s2073 = sadd.s32 %s2071, %s2072
        %s2074 = smul.addr %s2073, 8
        %s2075 = scalar_lea.vmem %s7, %s2074
      $region64: #{decoder_block_forward.6} parent=55 // pred_fallthru
        _
    $region56: #{decoder_block_forward.6} parent=5 // pred_fallthru
      _
  $region6: #{decoder_block_forward.6} parent=0 // loop_footer
    %s18 = sadd.s32 1, %s14
  $region7: #{decoder_block_forward.6} parent=0 // loop_footer_branch
    %13 = sbr.rel target = $region3
  $region8: #{decoder_block_forward.6} parent=0 // loop_exit
    _

// kernel: decoder_block_forward.5
$region0: #{decoder_block_forward.5}
  #allocation0 [shape = 'u32[]', space=smem, size = 0x4, offset = 0x4, fixed_abs, tag = 'smem constant byte address 0x4 - core index']
  #allocation1 [shape = 'u32[72,128]{1,0:T(1,128)}', space=vmem, size = 0x9000, scoped, tag = 'internal scratch']
  %s0 = inlined_call_operand.vmem [shape: bf16[2,16,16,128], index: 0, kind: input, shape index: {}]
  %s1 = inlined_call_operand.vmem [shape: bf16[2,2,2,16,128], index: 1, kind: input, shape index: {}]
  %s2 = inlined_call_operand.vmem [shape: bf16[2,16,16,128], index: 2, kind: input, shape index: {}]
  %s3 = inlined_call_operand.vmem [shape: bf16[2,2,2,16,128], index: 3, kind: input, shape index: {}]
  %s4 = inlined_call_operand.vmem [shape: bf16[1152,128], index: 4, kind: input, shape index: {}]
  %s5 = inlined_call_operand.vmem [shape: bf16[1152,128], index: 5, kind: input, shape index: {}]
  %s6 = inlined_call_operand.vmem [shape: f32[1,128], index: 6, kind: input, shape index: {}]
  %s7 = inlined_call_operand.vmem [shape: bf16[2,16,16,128], index: 7, kind: output, shape index: {0}]
  %s8 = inlined_call_operand.vmem [shape: f32[2,2,8,128], index: 8, kind: output, shape index: {1}]
  %9 = xla_tuple %s7, %s8
  %s10 = sld [smem:[#allocation0]]
  $region69: #{decoder_block_forward.5} parent=0
    _
  %s12 = ssub.s32 1, %s10
  %s13 = scalar_select 0, %s12, %s10
  loop: start=0, step=1, limit=6
  $region2: #{decoder_block_forward.5} parent=0 // loop_pre_header
    _
  $region3: #{decoder_block_forward.5} parent=0 // loop_header
    %s15 = sphi 0, %s19
    %p16 = scmp.ge.s32.totalorder %s15, 6
    %s22 = sphi 0, %s34
    %s23 = sphi 0, %s30
    %s24 = sphi 0, %s22
    %s25 = sphi 0, %s23
    %s26 = sphi 0, %s24
    %s27 = sphi 0, %s25
    %s39 = sphi 0, %s41
    %s42 = sphi 0, %s39
    %s43 = sphi 0, %s42
    %s59 = sphi 0, %s43
    %s67 = sphi 0, %s69
    %s70 = sphi 0, %s67
    %s71 = sphi 0, %s70
    %s87 = sphi 0, %s71
    %s95 = sphi 0, %s97
    %s98 = sphi 0, %s95
    %s99 = sphi 0, %s98
    %s115 = sphi 0, %s99
    %s123 = sphi 0, %s125
    %s126 = sphi 0, %s123
    %s127 = sphi 0, %s126
    %s143 = sphi 0, %s127
    %s147 = sphi 0, %s147
    %s149 = sphi 0, %s147
    %s150 = sphi 0, %s149
    %s164 = sphi 0, %s150
    %s168 = sphi 0, %s168
    %s170 = sphi 0, %s168
    %s171 = sphi 0, %s170
    %s185 = sphi 0, %s171
    %s189 = sphi 0, %s189
    %s191 = sphi 0, %s189
    %s192 = sphi 0, %s191
    %s206 = sphi 0, %s192
    %s214 = sphi 0, %s216
    %s217 = sphi 0, %s214
    %s218 = sphi 0, %s217
    %s234 = sphi 0, %s218
    %s242 = sphi 0, %s244
    %s245 = sphi 0, %s242
    %s246 = sphi 0, %s245
    %s262 = sphi 0, %s246
  $region4: #{decoder_block_forward.5} parent=0 // loop_header_branch
    %18 = sbr.rel (%p16) target = $region8
  $region5: #{decoder_block_forward.5} parent=0 // loop_body
    %s20 = ssub.s32 %s15, 1
    %s21 = ssub.s32 %s15, 2
    %s28 = sadd.s32 1, %s23
    %p29 = scmp.ge.s32.totalorder %s28, 2
    %s30 = scalar_select %p29, 0, %s28
    %s31 = sadd.s32 1, %s22
    %s32 = scalar_select %p29, %s31, %s22
    %p33 = scmp.ge.s32.totalorder %s32, 2
    %s34 = scalar_select %p33, 0, %s32
    %s35 = ssub.s32 %s22, %s34
    %s36 = ssub.s32 %s23, %s30
    %s37 = sor.u32 %s35, %s36
    %p38 = scmp.eq.s32.totalorder %s37, 0
    %s40 = sadd.s32 %s39, 1
    %s41 = scalar_select %p38, %s39, %s40
    %p44 = pneg %p38
    %p45 = scmp.eq.s32.totalorder %s15, 3
    %p46 = por %p44, %p45
    %p47 = scmp.ne.s32.totalorder %s39, %s42
    %p48 = scmp.eq.s32.totalorder %s15, 0
    %p49 = por %p47, %p48
    %p50 = scmp.ne.s32.totalorder %s39, %s42
    %p51 = scmp.eq.s32.totalorder %s20, 3
    %p52 = por %p50, %p51
    %p53 = scmp.ne.s32.totalorder %s42, %s43
    %p54 = scmp.eq.s32.totalorder %s20, 0
    %p55 = por %p53, %p54
    %p56 = scmp.ne.s32.totalorder %s42, %s43
    %p57 = scmp.eq.s32.totalorder %s21, 3
    %p58 = por %p56, %p57
    %p60 = scmp.ne.s32.totalorder %s43, %s59
    %p61 = scmp.eq.s32.totalorder %s21, 0
    %p62 = por %p60, %p61
    %s63 = ssub.s32 %s22, %s34
    %s64 = ssub.s32 %s23, %s30
    %s65 = sor.u32 %s63, %s64
    %p66 = scmp.eq.s32.totalorder %s65, 0
    %s68 = sadd.s32 %s67, 1
    %s69 = scalar_select %p66, %s67, %s68
    %p72 = pneg %p66
    %p73 = scmp.eq.s32.totalorder %s15, 3
    %p74 = por %p72, %p73
    %p75 = scmp.ne.s32.totalorder %s67, %s70
    %p76 = scmp.eq.s32.totalorder %s15, 0
    %p77 = por %p75, %p76
    %p78 = scmp.ne.s32.totalorder %s67, %s70
    %p79 = scmp.eq.s32.totalorder %s20, 3
    %p80 = por %p78, %p79
    %p81 = scmp.ne.s32.totalorder %s70, %s71
    %p82 = scmp.eq.s32.totalorder %s20, 0
    %p83 = por %p81, %p82
    %p84 = scmp.ne.s32.totalorder %s70, %s71
    %p85 = scmp.eq.s32.totalorder %s21, 3
    %p86 = por %p84, %p85
    %p88 = scmp.ne.s32.totalorder %s71, %s87
    %p89 = scmp.eq.s32.totalorder %s21, 0
    %p90 = por %p88, %p89
    %s91 = ssub.s32 %s22, %s34
    %s92 = ssub.s32 %s23, %s30
    %s93 = sor.u32 %s91, %s92
    %p94 = scmp.eq.s32.totalorder %s93, 0
    %s96 = sadd.s32 %s95, 1
    %s97 = scalar_select %p94, %s95, %s96
    %p100 = pneg %p94
    %p101 = scmp.eq.s32.totalorder %s15, 3
    %p102 = por %p100, %p101
    %p103 = scmp.ne.s32.totalorder %s95, %s98
    %p104 = scmp.eq.s32.totalorder %s15, 0
    %p105 = por %p103, %p104
    %p106 = scmp.ne.s32.totalorder %s95, %s98
    %p107 = scmp.eq.s32.totalorder %s20, 3
    %p108 = por %p106, %p107
    %p109 = scmp.ne.s32.totalorder %s98, %s99
    %p110 = scmp.eq.s32.totalorder %s20, 0
    %p111 = por %p109, %p110
    %p112 = scmp.ne.s32.totalorder %s98, %s99
    %p113 = scmp.eq.s32.totalorder %s21, 3
    %p114 = por %p112, %p113
    %p116 = scmp.ne.s32.totalorder %s99, %s115
    %p117 = scmp.eq.s32.totalorder %s21, 0
    %p118 = por %p116, %p117
    %s119 = ssub.s32 %s22, %s34
    %s120 = ssub.s32 %s23, %s30
    %s121 = sor.u32 %s119, %s120
    %p122 = scmp.eq.s32.totalorder %s121, 0
    %s124 = sadd.s32 %s123, 1
    %s125 = scalar_select %p122, %s123, %s124
    %p128 = pneg %p122
    %p129 = scmp.eq.s32.totalorder %s15, 3
    %p130 = por %p128, %p129
    %p131 = scmp.ne.s32.totalorder %s123, %s126
    %p132 = scmp.eq.s32.totalorder %s15, 0
    %p133 = por %p131, %p132
    %p134 = scmp.ne.s32.totalorder %s123, %s126
    %p135 = scmp.eq.s32.totalorder %s20, 3
    %p136 = por %p134, %p135
    %p137 = scmp.ne.s32.totalorder %s126, %s127
    %p138 = scmp.eq.s32.totalorder %s20, 0
    %p139 = por %p137, %p138
    %p140 = scmp.ne.s32.totalorder %s126, %s127
    %p141 = scmp.eq.s32.totalorder %s21, 3
    %p142 = por %p140, %p141
    %p144 = scmp.ne.s32.totalorder %s127, %s143
    %p145 = scmp.eq.s32.totalorder %s21, 0
    %p146 = por %p144, %p145
    %s148 = sadd.s32 %s147, 1
    %p151 = scmp.eq.s32.totalorder %s15, 3
    %p152 = scmp.ne.s32.totalorder %s147, %s149
    %p153 = scmp.eq.s32.totalorder %s15, 0
    %p154 = por %p152, %p153
    %p155 = scmp.ne.s32.totalorder %s147, %s149
    %p156 = scmp.eq.s32.totalorder %s20, 3
    %p157 = por %p155, %p156
    %p158 = scmp.ne.s32.totalorder %s149, %s150
    %p159 = scmp.eq.s32.totalorder %s20, 0
    %p160 = por %p158, %p159
    %p161 = scmp.ne.s32.totalorder %s149, %s150
    %p162 = scmp.eq.s32.totalorder %s21, 3
    %p163 = por %p161, %p162
    %p165 = scmp.ne.s32.totalorder %s150, %s164
    %p166 = scmp.eq.s32.totalorder %s21, 0
    %p167 = por %p165, %p166
    %s169 = sadd.s32 %s168, 1
    %p172 = scmp.eq.s32.totalorder %s15, 3
    %p173 = scmp.ne.s32.totalorder %s168, %s170
    %p174 = scmp.eq.s32.totalorder %s15, 0
    %p175 = por %p173, %p174
    %p176 = scmp.ne.s32.totalorder %s168, %s170
    %p177 = scmp.eq.s32.totalorder %s20, 3
    %p178 = por %p176, %p177
    %p179 = scmp.ne.s32.totalorder %s170, %s171
    %p180 = scmp.eq.s32.totalorder %s20, 0
    %p181 = por %p179, %p180
    %p182 = scmp.ne.s32.totalorder %s170, %s171
    %p183 = scmp.eq.s32.totalorder %s21, 3
    %p184 = por %p182, %p183
    %p186 = scmp.ne.s32.totalorder %s171, %s185
    %p187 = scmp.eq.s32.totalorder %s21, 0
    %p188 = por %p186, %p187
    %s190 = sadd.s32 %s189, 1
    %p193 = scmp.eq.s32.totalorder %s15, 3
    %p194 = scmp.ne.s32.totalorder %s189, %s191
    %p195 = scmp.eq.s32.totalorder %s15, 0
    %p196 = por %p194, %p195
    %p197 = scmp.ne.s32.totalorder %s189, %s191
    %p198 = scmp.eq.s32.totalorder %s20, 3
    %p199 = por %p197, %p198
    %p200 = scmp.ne.s32.totalorder %s191, %s192
    %p201 = scmp.eq.s32.totalorder %s20, 0
    %p202 = por %p200, %p201
    %p203 = scmp.ne.s32.totalorder %s191, %s192
    %p204 = scmp.eq.s32.totalorder %s21, 3
    %p205 = por %p203, %p204
    %p207 = scmp.ne.s32.totalorder %s192, %s206
    %p208 = scmp.eq.s32.totalorder %s21, 0
    %p209 = por %p207, %p208
    %s210 = ssub.s32 %s22, %s34
    %s211 = ssub.s32 %s23, %s30
    %s212 = sor.u32 %s210, %s211
    %p213 = scmp.eq.s32.totalorder %s212, 0
    %s215 = sadd.s32 %s214, 1
    %s216 = scalar_select %p213, %s214, %s215
    %p219 = pneg %p213
    %p220 = scmp.eq.s32.totalorder %s15, 3
    %p221 = por %p219, %p220
    %p222 = scmp.ne.s32.totalorder %s214, %s217
    %p223 = scmp.eq.s32.totalorder %s15, 0
    %p224 = por %p222, %p223
    %p225 = scmp.ne.s32.totalorder %s214, %s217
    %p226 = scmp.eq.s32.totalorder %s20, 3
    %p227 = por %p225, %p226
    %p228 = scmp.ne.s32.totalorder %s217, %s218
    %p229 = scmp.eq.s32.totalorder %s20, 0
    %p230 = por %p228, %p229
    %p231 = scmp.ne.s32.totalorder %s217, %s218
    %p232 = scmp.eq.s32.totalorder %s21, 3
    %p233 = por %p231, %p232
    %p235 = scmp.ne.s32.totalorder %s218, %s234
    %p236 = scmp.eq.s32.totalorder %s21, 0
    %p237 = por %p235, %p236
    %s238 = ssub.s32 %s22, %s34
    %s239 = ssub.s32 %s23, %s30
    %s240 = sor.u32 %s238, %s239
    %p241 = scmp.eq.s32.totalorder %s240, 0
    %s243 = sadd.s32 %s242, 1
    %s244 = scalar_select %p241, %s242, %s243
    %p247 = pneg %p241
    %p248 = scmp.eq.s32.totalorder %s15, 3
    %p249 = por %p247, %p248
    %p250 = scmp.ne.s32.totalorder %s242, %s245
    %p251 = scmp.eq.s32.totalorder %s15, 0
    %p252 = por %p250, %p251
    %p253 = scmp.ne.s32.totalorder %s242, %s245
    %p254 = scmp.eq.s32.totalorder %s20, 3
    %p255 = por %p253, %p254
    %p256 = scmp.ne.s32.totalorder %s245, %s246
    %p257 = scmp.eq.s32.totalorder %s20, 0
    %p258 = por %p256, %p257
    %p259 = scmp.ne.s32.totalorder %s245, %s246
    %p260 = scmp.eq.s32.totalorder %s21, 3
    %p261 = por %p259, %p260
    %p263 = scmp.ne.s32.totalorder %s246, %s262
    %p264 = scmp.eq.s32.totalorder %s21, 0
    %p265 = por %p263, %p264
    %p266 = scmp.le.s32.totalorder 1, %s15
    %p267 = scmp.lt.s32.totalorder %s15, 5
    %p268 = pnand %p266, %p267
    %p269 = pneg %p268
    // Predicated region
    $region9: #{decoder_block_forward.5} parent=5 // pred_check
      _
    $region10: #{decoder_block_forward.5} parent=5 // pred_check_branch
      %271 = sbr.rel (%p268) target = $region12
    $region11: #{decoder_block_forward.5} parent=5 // pred_region
      %s272 = ssub.s32 %s15, 1
      // Predicated region
      $region13: #{decoder_block_forward.5} parent=11 // pred_check
        %p273 = pneg %p160
      $region14: #{decoder_block_forward.5} parent=11 // pred_check_branch
        %275 = sbr.rel (%p273) target = $region16
      $region15: #{decoder_block_forward.5} parent=11 // pred_region
        _
      $region16: #{decoder_block_forward.5} parent=11 // pred_fallthru
        _
      // Predicated region
      $region17: #{decoder_block_forward.5} parent=11 // pred_check
        %p276 = pneg %p181
      $region18: #{decoder_block_forward.5} parent=11 // pred_check_branch
        %278 = sbr.rel (%p276) target = $region20
      $region19: #{decoder_block_forward.5} parent=11 // pred_region
        _
      $region20: #{decoder_block_forward.5} parent=11 // pred_fallthru
        _
      // Predicated region
      $region21: #{decoder_block_forward.5} parent=11 // pred_check
        %p279 = pneg %p202
      $region22: #{decoder_block_forward.5} parent=11 // pred_check_branch
        %281 = sbr.rel (%p279) target = $region24
      $region23: #{decoder_block_forward.5} parent=11 // pred_region
        _
      $region24: #{decoder_block_forward.5} parent=11 // pred_fallthru
        _
    $region12: #{decoder_block_forward.5} parent=5 // pred_fallthru
      _
    %p282 = scmp.lt.s32.totalorder %s15, 4
    // Predicated region
    $region25: #{decoder_block_forward.5} parent=5 // pred_check
      %p283 = pneg %p282
    $region26: #{decoder_block_forward.5} parent=5 // pred_check_branch
      %285 = sbr.rel (%p283) target = $region28
    $region27: #{decoder_block_forward.5} parent=5 // pred_region
      // Predicated region
      $region29: #{decoder_block_forward.5} parent=27 // pred_check
        %p286 = pneg %p49
      $region30: #{decoder_block_forward.5} parent=27 // pred_check_branch
        %288 = sbr.rel (%p286) target = $region32
      $region31: #{decoder_block_forward.5} parent=27 // pred_region
        %s289 = smul.u32 8, %s23
        %p290 = scmp.lt.s32.totalorder %s22, 1
        %s291 = scalar_select %p290, %s22, 1
        %p292 = scmp.lt.s32.totalorder %s289, 15
        %s293 = scalar_select %p292, %s289, 15
        %s294 = smul.addr %s293, 2
        %s295 = smul.addr %s291, 32
        %s296 = sadd.s32 %s294, %s295
        %s297 = smul.addr %s296, 4
        %s298 = scalar_lea.vmem %s0, %s297
        %s299 = smul.u32 8, %s23
      $region32: #{decoder_block_forward.5} parent=27 // pred_fallthru
        _
      // Predicated region
      $region33: #{decoder_block_forward.5} parent=27 // pred_check
        %p300 = pneg %p77
      $region34: #{decoder_block_forward.5} parent=27 // pred_check_branch
        %302 = sbr.rel (%p300) target = $region36
      $region35: #{decoder_block_forward.5} parent=27 // pred_region
        %p303 = scmp.lt.s32.totalorder %s22, 1
        %s304 = scalar_select %p303, %s22, 1
        %p305 = scmp.lt.s32.totalorder %s23, 1
        %s306 = scalar_select %p305, %s23, 1
        %s307 = smul.addr %s306, 4
        %s308 = smul.addr %s304, 8
        %s309 = sadd.s32 %s307, %s308
        %s310 = smul.addr %s309, 4
        %s311 = scalar_lea.vmem %s1, %s310
      $region36: #{decoder_block_forward.5} parent=27 // pred_fallthru
        _
      // Predicated region
      $region37: #{decoder_block_forward.5} parent=27 // pred_check
        %p312 = pneg %p105
      $region38: #{decoder_block_forward.5} parent=27 // pred_check_branch
        %314 = sbr.rel (%p312) target = $region40
      $region39: #{decoder_block_forward.5} parent=27 // pred_region
        %s315 = smul.u32 8, %s23
        %p316 = scmp.lt.s32.totalorder %s22, 1
        %s317 = scalar_select %p316, %s22, 1
        %p318 = scmp.lt.s32.totalorder %s315, 15
        %s319 = scalar_select %p318, %s315, 15
        %s320 = smul.addr %s319, 2
        %s321 = smul.addr %s317, 32
        %s322 = sadd.s32 %s320, %s321
        %s323 = smul.addr %s322, 4
        %s324 = scalar_lea.vmem %s2, %s323
        %s325 = smul.u32 8, %s23
      $region40: #{decoder_block_forward.5} parent=27 // pred_fallthru
        _
      // Predicated region
      $region41: #{decoder_block_forward.5} parent=27 // pred_check
        %p326 = pneg %p133
      $region42: #{decoder_block_forward.5} parent=27 // pred_check_branch
        %328 = sbr.rel (%p326) target = $region44
      $region43: #{decoder_block_forward.5} parent=27 // pred_region
        %p329 = scmp.lt.s32.totalorder %s22, 1
        %s330 = scalar_select %p329, %s22, 1
        %p331 = scmp.lt.s32.totalorder %s23, 1
        %s332 = scalar_select %p331, %s23, 1
        %s333 = smul.addr %s332, 4
        %s334 = smul.addr %s330, 8
        %s335 = sadd.s32 %s333, %s334
        %s336 = smul.addr %s335, 4
        %s337 = scalar_lea.vmem %s3, %s336
      $region44: #{decoder_block_forward.5} parent=27 // pred_fallthru
        _
    $region28: #{decoder_block_forward.5} parent=5 // pred_fallthru
      _
    %p338 = scmp.le.s32.totalorder 1, %s15
    %p339 = scmp.lt.s32.totalorder %s15, 5
    %p340 = pnand %p338, %p339
    %p341 = pneg %p340
    // Predicated region
    $region45: #{decoder_block_forward.5} parent=5 // pred_check
      _
    $region46: #{decoder_block_forward.5} parent=5 // pred_check_branch
      %343 = sbr.rel (%p340) target = $region48
    $region47: #{decoder_block_forward.5} parent=5 // pred_region
      %s344 = ssub.s32 %s15, 1
      %s345 = smul.u32 8, %s25
      %p346 = scmp.lt.s32.totalorder %s24, 1
      %s347 = scalar_select %p346, %s24, 1
      %p348 = scmp.lt.s32.totalorder %s345, 15
      %s349 = scalar_select %p348, %s345, 15
      %s350 = smul.addr %s349, 2
      %s351 = smul.addr %s347, 32
      %s352 = sadd.s32 %s350, %s351
      %s353 = smul.addr %s352, 4
      %s354 = scalar_lea.vmem %s0, %s353
      %p355 = pneg %p55
      %p356 = pneg %p52
      %p357 = scmp.lt.s32.totalorder %s24, 1
      %s358 = scalar_select %p357, %s24, 1
      %p359 = scmp.lt.s32.totalorder %s25, 1
      %s360 = scalar_select %p359, %s25, 1
      %s361 = smul.addr %s360, 4
      %s362 = smul.addr %s358, 8
      %s363 = sadd.s32 %s361, %s362
      %s364 = smul.addr %s363, 4
      %s365 = scalar_lea.vmem %s1, %s364
      %p366 = pneg %p83
      %p367 = pneg %p80
      %s368 = smul.u32 8, %s25
      %p369 = scmp.lt.s32.totalorder %s24, 1
      %s370 = scalar_select %p369, %s24, 1
      %p371 = scmp.lt.s32.totalorder %s368, 15
      %s372 = scalar_select %p371, %s368, 15
      %s373 = smul.addr %s372, 2
      %s374 = smul.addr %s370, 32
      %s375 = sadd.s32 %s373, %s374
      %s376 = smul.addr %s375, 4
      %s377 = scalar_lea.vmem %s2, %s376
      %p378 = pneg %p111
      %p379 = pneg %p108
      %p380 = scmp.lt.s32.totalorder %s24, 1
      %s381 = scalar_select %p380, %s24, 1
      %p382 = scmp.lt.s32.totalorder %s25, 1
      %s383 = scalar_select %p382, %s25, 1
      %s384 = smul.addr %s383, 4
      %s385 = smul.addr %s381, 8
      %s386 = sadd.s32 %s384, %s385
      %s387 = smul.addr %s386, 4
      %s388 = scalar_lea.vmem %s3, %s387
      %p389 = pneg %p139
      %p390 = pneg %p136
      %p391 = pneg %p160
      %p392 = pneg %p157
      %p393 = pneg %p181
      %p394 = pneg %p178
      %p395 = pneg %p202
      %p396 = pneg %p199
      %p397 = pneg %p230
      %p398 = pneg %p227
      %s399 = smul.u32 8, %s25
      %p400 = scmp.lt.s32.totalorder %s24, 1
      %s401 = scalar_select %p400, %s24, 1
      %p402 = scmp.lt.s32.totalorder %s399, 15
      %s403 = scalar_select %p402, %s399, 15
      %s404 = smul.addr %s403, 2
      %s405 = smul.addr %s401, 32
      %s406 = sadd.s32 %s404, %s405
      %s407 = smul.addr %s406, 4
      %s408 = scalar_lea.vmem %s7, %s407
      %p409 = pneg %p258
      %p410 = pneg %p255
      %p411 = scmp.lt.s32.totalorder %s24, 1
      %s412 = scalar_select %p411, %s24, 1
      %p413 = scmp.lt.s32.totalorder %s25, 1
      %s414 = scalar_select %p413, %s25, 1
      %s415 = smul.addr %s412, 2
      %s416 = sadd.s32 %s414, %s415
      %s417 = smul.addr %s416, 8
      %s418 = scalar_lea.vmem %s8, %s417
      %s419 = smul.u32 8, %s25
      %p420 = scmp.lt.s32.totalorder %s24, 1
      %s421 = scalar_select %p420, %s24, 1
      %p422 = scmp.lt.s32.totalorder %s419, 15
      %s423 = scalar_select %p422, %s419, 15
      %s424 = smul.addr %s423, 2
      %s425 = smul.addr %s421, 32
      %s426 = sadd.s32 %s424, %s425
      %s427 = smul.addr %s426, 4
      %s428 = scalar_lea.vmem %s0, %s427
      %s429 = smul.u32 8, %s25
      %p430 = scmp.lt.s32.totalorder %s24, 1
      %s431 = scalar_select %p430, %s24, 1
      %p432 = scmp.lt.s32.totalorder %s25, 1
      %s433 = scalar_select %p432, %s25, 1
      %s434 = smul.addr %s433, 4
      %s435 = smul.addr %s431, 8
      %s436 = sadd.s32 %s434, %s435
      %s437 = smul.addr %s436, 4
      %s438 = scalar_lea.vmem %s1, %s437
      %s439 = smul.u32 8, %s25
      %p440 = scmp.lt.s32.totalorder %s24, 1
      %s441 = scalar_select %p440, %s24, 1
      %p442 = scmp.lt.s32.totalorder %s439, 15
      %s443 = scalar_select %p442, %s439, 15
      %s444 = smul.addr %s443, 2
      %s445 = smul.addr %s441, 32
      %s446 = sadd.s32 %s444, %s445
      %s447 = smul.addr %s446, 4
      %s448 = scalar_lea.vmem %s2, %s447
      %s449 = smul.u32 8, %s25
      %p450 = scmp.lt.s32.totalorder %s24, 1
      %s451 = scalar_select %p450, %s24, 1
      %p452 = scmp.lt.s32.totalorder %s25, 1
      %s453 = scalar_select %p452, %s25, 1
      %s454 = smul.addr %s453, 4
      %s455 = smul.addr %s451, 8
      %s456 = sadd.s32 %s454, %s455
      %s457 = smul.addr %s456, 4
      %s458 = scalar_lea.vmem %s3, %s457
      %s459 = smul.u32 8, %s25
      %p460 = scmp.lt.s32.totalorder %s24, 1
      %s461 = scalar_select %p460, %s24, 1
      %p462 = scmp.lt.s32.totalorder %s459, 15
      %s463 = scalar_select %p462, %s459, 15
      %s464 = smul.addr %s463, 2
      %s465 = smul.addr %s461, 32
      %s466 = sadd.s32 %s464, %s465
      %s467 = smul.addr %s466, 4
      %s468 = scalar_lea.vmem %s7, %s467
      %s469 = smul.u32 8, %s25
      %p470 = scmp.lt.s32.totalorder %s24, 1
      %s471 = scalar_select %p470, %s24, 1
      %p472 = scmp.lt.s32.totalorder %s25, 1
      %s473 = scalar_select %p472, %s25, 1
      %s474 = smul.addr %s471, 2
      %s475 = sadd.s32 %s473, %s474
      %s476 = smul.addr %s475, 8
      %s477 = scalar_lea.vmem %s8, %s476
      %v479 = vld [vmem:[%s438] sm:$0xf]
      %v480 = vld [vmem:[%s438 + $0x4] sm:$0xf]
      %v481 = vld [vmem:[%s438 + $0x8] sm:$0xf]
      %v482 = vld [vmem:[%s438 + $0xc] sm:$0xf]
      %v483 = vld [vmem:[%s428] sm:$0xf]
      %v484 = vld [vmem:[%s428 + $0x4] sm:$0xf]
      %v485 = vld [vmem:[%s428 + $0x8] sm:$0xf]
      %v486 = vld [vmem:[%s428 + $0xc] sm:$0xf]
      %v487 = vld [vmem:[%s428 + $0x10] sm:$0xf]
      %v488 = vld [vmem:[%s428 + $0x14] sm:$0xf]
      %v489 = vld [vmem:[%s428 + $0x18] sm:$0xf]
      %v490 = vld [vmem:[%s428 + $0x1c] sm:$0xf]
      %v491 = vld [vmem:[%s428 + $0x20] sm:$0xf]
      %v492 = vld [vmem:[%s428 + $0x24] sm:$0xf]
      %v493 = vld [vmem:[%s428 + $0x28] sm:$0xf]
      %v494 = vld [vmem:[%s428 + $0x2c] sm:$0xf]
      %v495 = vld [vmem:[%s428 + $0x30] sm:$0xf]
      %v496 = vld [vmem:[%s428 + $0x34] sm:$0xf]
      %v497 = vld [vmem:[%s428 + $0x38] sm:$0xf]
      %v498 = vld [vmem:[%s428 + $0x3c] sm:$0xf]
      %v519 = vunpack.c.l.b16 %v479
      %v520 = vunpack.c.l.b16 %v480
      %v521 = vunpack.c.l.b16 %v483
      %v522 = vunpack.c.l.b16 %v484
      %v523 = vunpack.c.l.b16 %v485
      %v524 = vunpack.c.l.b16 %v486
      %v525 = vunpack.c.l.b16 %v487
      %v526 = vunpack.c.l.b16 %v488
      %v527 = vunpack.c.l.b16 %v489
      %v528 = vunpack.c.l.b16 %v490
      %v529 = vunpack.c.l.b16 %v491
      %v530 = vunpack.c.l.b16 %v492
      %v531 = vunpack.c.l.b16 %v493
      %v532 = vunpack.c.l.b16 %v494
      %v533 = vunpack.c.l.b16 %v495
      %v534 = vunpack.c.l.b16 %v496
      %v535 = vunpack.c.l.b16 %v497
      %v536 = vunpack.c.l.b16 %v498
      %v537 = vunpack.c.l.b16 %v481
      %v538 = vunpack.c.l.b16 %v482
      %v539 = vpack.c.b16 %v520, %v519
      %v540 = vpack.c.b16 %v522, %v521
      %v541 = vpack.c.b16 %v524, %v523
      %v542 = vpack.c.b16 %v526, %v525
      %v543 = vpack.c.b16 %v528, %v527
      %v544 = vpack.c.b16 %v530, %v529
      %v545 = vpack.c.b16 %v532, %v531
      %v546 = vpack.c.b16 %v534, %v533
      %v547 = vpack.c.b16 %v536, %v535
      %v548 = vpack.c.b16 %v538, %v537
      %v550 = vshrl.u32 %v539, 16
      %v552 = vrot.slane %v550, 7
      %v553 = vshll.u32 %v539, 16
      %v555 = vor.u32 %v552, %v553
      %v557 = vshrl.u32 %v540, 16
      %v559 = vrot.slane %v557, 7
      %v560 = vshll.u32 %v540, 16
      %v562 = vor.u32 %v559, %v560
      %v564 = vshrl.u32 %v541, 16
      %v566 = vrot.slane %v564, 7
      %v567 = vshll.u32 %v541, 16
      %v569 = vor.u32 %v566, %v567
      %v571 = vshrl.u32 %v542, 16
      %v573 = vrot.slane %v571, 7
      %v574 = vshll.u32 %v542, 16
      %v576 = vor.u32 %v573, %v574
      %v578 = vshrl.u32 %v543, 16
      %v580 = vrot.slane %v578, 7
      %v581 = vshll.u32 %v543, 16
      %v583 = vor.u32 %v580, %v581
      %v585 = vshrl.u32 %v544, 16
      %v587 = vrot.slane %v585, 7
      %v588 = vshll.u32 %v544, 16
      %v590 = vor.u32 %v587, %v588
      %v592 = vshrl.u32 %v545, 16
      %v594 = vrot.slane %v592, 7
      %v595 = vshll.u32 %v545, 16
      %v597 = vor.u32 %v594, %v595
      %v599 = vshrl.u32 %v546, 16
      %v601 = vrot.slane %v599, 7
      %v602 = vshll.u32 %v546, 16
      %v604 = vor.u32 %v601, %v602
      %v606 = vshrl.u32 %v547, 16
      %v608 = vrot.slane %v606, 7
      %v609 = vshll.u32 %v547, 16
      %v611 = vor.u32 %v608, %v609
      %v613 = vshrl.u32 %v548, 16
      %v615 = vrot.slane %v613, 7
      %v616 = vshll.u32 %v548, 16
      %v618 = vor.u32 %v615, %v616
      %vm639 = vcmask 1040384
      %vm640 = vsmask.f32 256
      %vm641 = vmand %vm639, %vm640
      %v642 = vsel %vm641, 0, %v555
      %v643 = vsel %vm641, 0, %v562
      %v644 = vsel %vm641, 0, %v569
      %v645 = vsel %vm641, 0, %v576
      %v646 = vsel %vm641, 0, %v583
      %v647 = vsel %vm641, 0, %v590
      %v648 = vsel %vm641, 0, %v597
      %v649 = vsel %vm641, 0, %v604
      %v650 = vsel %vm641, 0, %v611
      %v651 = vsel %vm641, 0, %v618
      %v652 = vsel %vm641, %v552, 0
      %v653 = vsel %vm641, %v559, 0
      %v654 = vsel %vm641, %v566, 0
      %v655 = vsel %vm641, %v573, 0
      %v656 = vsel %vm641, %v580, 0
      %v657 = vsel %vm641, %v587, 0
      %v658 = vsel %vm641, %v594, 0
      %v659 = vsel %vm641, %v601, 0
      %v660 = vsel %vm641, %v608, 0
      %v661 = vsel %vm641, %v615, 0
      %vm662 = vsmask.f32 7424
      %v664 = vshrl.u32 %v642, 16
      %v666 = vshll.u32 %v642, 16
      %v668 = vrot.slane %v666, 1
      %v669 = vor.u32 %v664, %v668
      %v671 = vshll.u32 %v652, 16
      %v673 = vrot.slane %v671, 1
      %v674 = vsel %vm662, %v669, %v673
      %v676 = vshrl.u32 %v643, 16
      %v678 = vshll.u32 %v643, 16
      %v680 = vrot.slane %v678, 1
      %v681 = vor.u32 %v676, %v680
      %v683 = vshll.u32 %v653, 16
      %v685 = vrot.slane %v683, 1
      %v686 = vsel %vm662, %v681, %v685
      %v688 = vshrl.u32 %v644, 16
      %v690 = vshll.u32 %v644, 16
      %v692 = vrot.slane %v690, 1
      %v693 = vor.u32 %v688, %v692
      %v695 = vshll.u32 %v654, 16
      %v697 = vrot.slane %v695, 1
      %v698 = vsel %vm662, %v693, %v697
      %v700 = vshrl.u32 %v645, 16
      %v702 = vshll.u32 %v645, 16
      %v704 = vrot.slane %v702, 1
      %v705 = vor.u32 %v700, %v704
      %v707 = vshll.u32 %v655, 16
      %v709 = vrot.slane %v707, 1
      %v710 = vsel %vm662, %v705, %v709
      %v712 = vshrl.u32 %v646, 16
      %v714 = vshll.u32 %v646, 16
      %v716 = vrot.slane %v714, 1
      %v717 = vor.u32 %v712, %v716
      %v719 = vshll.u32 %v656, 16
      %v721 = vrot.slane %v719, 1
      %v722 = vsel %vm662, %v717, %v721
      %v724 = vshrl.u32 %v647, 16
      %v726 = vshll.u32 %v647, 16
      %v728 = vrot.slane %v726, 1
      %v729 = vor.u32 %v724, %v728
      %v731 = vshll.u32 %v657, 16
      %v733 = vrot.slane %v731, 1
      %v734 = vsel %vm662, %v729, %v733
      %v736 = vshrl.u32 %v648, 16
      %v738 = vshll.u32 %v648, 16
      %v740 = vrot.slane %v738, 1
      %v741 = vor.u32 %v736, %v740
      %v743 = vshll.u32 %v658, 16
      %v745 = vrot.slane %v743, 1
      %v746 = vsel %vm662, %v741, %v745
      %v748 = vshrl.u32 %v649, 16
      %v750 = vshll.u32 %v649, 16
      %v752 = vrot.slane %v750, 1
      %v753 = vor.u32 %v748, %v752
      %v755 = vshll.u32 %v659, 16
      %v757 = vrot.slane %v755, 1
      %v758 = vsel %vm662, %v753, %v757
      %vm783 = vcmask 1046528
      %v784 = vrot.slane %v642, 1
      %v785 = vrot.slane %v652, 1
      %v786 = vsel %vm783, %v784, %v785
      %v787 = vrot.slane %v643, 1
      %v788 = vrot.slane %v653, 1
      %v789 = vsel %vm783, %v787, %v788
      %v790 = vrot.slane %v644, 1
      %v791 = vrot.slane %v654, 1
      %v792 = vsel %vm783, %v790, %v791
      %v793 = vrot.slane %v645, 1
      %v794 = vrot.slane %v655, 1
      %v795 = vsel %vm783, %v793, %v794
      %v796 = vrot.slane %v646, 1
      %v797 = vrot.slane %v656, 1
      %v798 = vsel %vm783, %v796, %v797
      %v799 = vrot.slane %v647, 1
      %v800 = vrot.slane %v657, 1
      %v801 = vsel %vm783, %v799, %v800
      %v802 = vrot.slane %v648, 1
      %v803 = vrot.slane %v658, 1
      %v804 = vsel %vm783, %v802, %v803
      %v805 = vrot.slane %v649, 1
      %v806 = vrot.slane %v659, 1
      %v807 = vsel %vm783, %v805, %v806
      %v816 = vld [vmem:[%s4] sm:$0xf]
      %v817 = vld [vmem:[%s4 + $0x4] sm:$0xf]
      %v818 = vld [vmem:[%s4 + $0x8] sm:$0xf]
      %v819 = vld [vmem:[%s4 + $0xc] sm:$0xf]
      %v820 = vld [vmem:[%s4 + $0x10] sm:$0xf]
      %v821 = vld [vmem:[%s4 + $0x14] sm:$0xf]
      %v822 = vld [vmem:[%s4 + $0x18] sm:$0xf]
      %v823 = vld [vmem:[%s4 + $0x1c] sm:$0xf]
      %v824 = vld [vmem:[%s4 + $0x20] sm:$0xf]
      %v825 = vld [vmem:[%s4 + $0x24] sm:$0xf]
      %v826 = vld [vmem:[%s4 + $0x28] sm:$0xf]
      %v827 = vld [vmem:[%s4 + $0x2c] sm:$0xf]
      %v828 = vld [vmem:[%s4 + $0x30] sm:$0xf]
      %v829 = vld [vmem:[%s4 + $0x34] sm:$0xf]
      %v830 = vld [vmem:[%s4 + $0x38] sm:$0xf]
      %v831 = vld [vmem:[%s4 + $0x3c] sm:$0xf]
      %v832 = vld [vmem:[%s4 + $0x40] sm:$0xf]
      %v833 = vld [vmem:[%s4 + $0x44] sm:$0xf]
      %v834 = vld [vmem:[%s4 + $0x48] sm:$0xf]
      %v835 = vld [vmem:[%s4 + $0x4c] sm:$0xf]
      %v836 = vld [vmem:[%s4 + $0x50] sm:$0xf]
      %v837 = vld [vmem:[%s4 + $0x54] sm:$0xf]
      %v838 = vld [vmem:[%s4 + $0x58] sm:$0xf]
      %v839 = vld [vmem:[%s4 + $0x5c] sm:$0xf]
      %v840 = vld [vmem:[%s4 + $0x60] sm:$0xf]
      %v841 = vld [vmem:[%s4 + $0x64] sm:$0xf]
      %v842 = vld [vmem:[%s4 + $0x68] sm:$0xf]
      %v843 = vld [vmem:[%s4 + $0x6c] sm:$0xf]
      %v844 = vld [vmem:[%s4 + $0x70] sm:$0xf]
      %v845 = vld [vmem:[%s4 + $0x74] sm:$0xf]
      %v846 = vld [vmem:[%s4 + $0x78] sm:$0xf]
      %v847 = vld [vmem:[%s4 + $0x7c] sm:$0xf]
      %v848 = vld [vmem:[%s4 + $0x80] sm:$0xf]
      %v849 = vld [vmem:[%s4 + $0x84] sm:$0xf]
      %v850 = vld [vmem:[%s4 + $0x88] sm:$0xf]
      %v851 = vld [vmem:[%s4 + $0x8c] sm:$0xf]
      %v852 = vld [vmem:[%s4 + $0x90] sm:$0xf]
      %v853 = vld [vmem:[%s4 + $0x94] sm:$0xf]
      %v854 = vld [vmem:[%s4 + $0x98] sm:$0xf]
      %v855 = vld [vmem:[%s4 + $0x9c] sm:$0xf]
      %v856 = vld [vmem:[%s4 + $0xa0] sm:$0xf]
      %v857 = vld [vmem:[%s4 + $0xa4] sm:$0xf]
      %v858 = vld [vmem:[%s4 + $0xa8] sm:$0xf]
      %v859 = vld [vmem:[%s4 + $0xac] sm:$0xf]
      %v860 = vld [vmem:[%s4 + $0xb0] sm:$0xf]
      %v861 = vld [vmem:[%s4 + $0xb4] sm:$0xf]
      %v862 = vld [vmem:[%s4 + $0xb8] sm:$0xf]
      %v863 = vld [vmem:[%s4 + $0xbc] sm:$0xf]
      %v865 = vshrl.u32 %v650, 16
      %v867 = vshll.u32 %v650, 16
      %v869 = vrot.slane %v867, 1
      %v870 = vor.u32 %v865, %v869
      %v872 = vshll.u32 %v660, 16
      %v874 = vrot.slane %v872, 1
      %v875 = vsel %vm662, %v870, %v874
      %v879 = vrot.slane %v650, 1
      %v880 = vrot.slane %v660, 1
      %v881 = vsel %vm783, %v879, %v880
      %v883 = vld [vmem:[%s4 + $0xc0] sm:$0xf]
      %v884 = vld [vmem:[%s4 + $0xc4] sm:$0xf]
      %v885 = vld [vmem:[%s4 + $0xc8] sm:$0xf]
      %v886 = vld [vmem:[%s4 + $0xcc] sm:$0xf]
      %v887 = vld [vmem:[%s4 + $0xd0] sm:$0xf]
      %v888 = vld [vmem:[%s4 + $0xd4] sm:$0xf]
      %v889 = vld [vmem:[%s4 + $0xd8] sm:$0xf]
      %v890 = vld [vmem:[%s4 + $0xdc] sm:$0xf]
      %v891 = vld [vmem:[%s4 + $0xe0] sm:$0xf]
      %v892 = vld [vmem:[%s4 + $0xe4] sm:$0xf]
      %v893 = vld [vmem:[%s4 + $0xe8] sm:$0xf]
      %v894 = vld [vmem:[%s4 + $0xec] sm:$0xf]
      %v895 = vld [vmem:[%s4 + $0xf0] sm:$0xf]
      %v896 = vld [vmem:[%s4 + $0xf4] sm:$0xf]
      %v897 = vld [vmem:[%s4 + $0xf8] sm:$0xf]
      %v898 = vld [vmem:[%s4 + $0xfc] sm:$0xf]
      %v899 = vld [vmem:[%s4 + $0x100] sm:$0xf]
      %v900 = vld [vmem:[%s4 + $0x104] sm:$0xf]
      %v901 = vld [vmem:[%s4 + $0x108] sm:$0xf]
      %v902 = vld [vmem:[%s4 + $0x10c] sm:$0xf]
      %v903 = vld [vmem:[%s4 + $0x110] sm:$0xf]
      %v904 = vld [vmem:[%s4 + $0x114] sm:$0xf]
      %v905 = vld [vmem:[%s4 + $0x118] sm:$0xf]
      %v906 = vld [vmem:[%s4 + $0x11c] sm:$0xf]
      %v907 = vld [vmem:[%s4 + $0x120] sm:$0xf]
      %v908 = vld [vmem:[%s4 + $0x124] sm:$0xf]
      %v909 = vld [vmem:[%s4 + $0x128] sm:$0xf]
      %v910 = vld [vmem:[%s4 + $0x12c] sm:$0xf]
      %v911 = vld [vmem:[%s4 + $0x130] sm:$0xf]
      %v912 = vld [vmem:[%s4 + $0x134] sm:$0xf]
      %v913 = vld [vmem:[%s4 + $0x138] sm:$0xf]
      %v914 = vld [vmem:[%s4 + $0x13c] sm:$0xf]
      %v915 = vld [vmem:[%s4 + $0x140] sm:$0xf]
      %v916 = vld [vmem:[%s4 + $0x144] sm:$0xf]
      %v917 = vld [vmem:[%s4 + $0x148] sm:$0xf]
      %v918 = vld [vmem:[%s4 + $0x14c] sm:$0xf]
      %v919 = vld [vmem:[%s4 + $0x150] sm:$0xf]
      %v920 = vld [vmem:[%s4 + $0x154] sm:$0xf]
      %v921 = vld [vmem:[%s4 + $0x158] sm:$0xf]
      %v922 = vld [vmem:[%s4 + $0x15c] sm:$0xf]
      %v923 = vld [vmem:[%s4 + $0x160] sm:$0xf]
      %v924 = vld [vmem:[%s4 + $0x164] sm:$0xf]
      %v925 = vld [vmem:[%s4 + $0x168] sm:$0xf]
      %v926 = vld [vmem:[%s4 + $0x16c] sm:$0xf]
      %v927 = vld [vmem:[%s4 + $0x170] sm:$0xf]
      %v928 = vld [vmem:[%s4 + $0x174] sm:$0xf]
      %v929 = vld [vmem:[%s4 + $0x178] sm:$0xf]
      %v930 = vld [vmem:[%s4 + $0x17c] sm:$0xf]
      %v979 = vunpack.c.l.b16 %v883
      %v980 = vunpack.c.l.b16 %v884
      %v981 = vunpack.c.l.b16 %v885
      %v982 = vunpack.c.l.b16 %v886
      %v983 = vunpack.c.l.b16 %v887
      %v984 = vunpack.c.l.b16 %v888
      %v985 = vunpack.c.l.b16 %v889
      %v986 = vunpack.c.l.b16 %v890
      %v987 = vunpack.c.l.b16 %v891
      %v988 = vunpack.c.l.b16 %v892
      %v989 = vunpack.c.l.b16 %v893
      %v990 = vunpack.c.l.b16 %v894
      %v991 = vunpack.c.l.b16 %v895
      %v992 = vunpack.c.l.b16 %v896
      %v993 = vunpack.c.l.b16 %v897
      %v994 = vunpack.c.l.b16 %v898
      %v995 = vunpack.c.l.b16 %v899
      %v996 = vunpack.c.l.b16 %v900
      %v997 = vunpack.c.l.b16 %v901
      %v998 = vunpack.c.l.b16 %v902
      %v999 = vunpack.c.l.b16 %v903
      %v1000 = vunpack.c.l.b16 %v904
      %v1001 = vunpack.c.l.b16 %v905
      %v1002 = vunpack.c.l.b16 %v906
      %v1003 = vunpack.c.l.b16 %v907
      %v1004 = vunpack.c.l.b16 %v908
      %v1005 = vunpack.c.l.b16 %v909
      %v1006 = vunpack.c.l.b16 %v910
      %v1007 = vunpack.c.l.b16 %v911
      %v1008 = vunpack.c.l.b16 %v912
      %v1009 = vunpack.c.l.b16 %v913
      %v1010 = vunpack.c.l.b16 %v914
      %v1011 = vunpack.c.l.b16 %v915
      %v1012 = vunpack.c.l.b16 %v916
      %v1013 = vunpack.c.l.b16 %v917
      %v1014 = vunpack.c.l.b16 %v918
      %v1015 = vunpack.c.l.b16 %v919
      %v1016 = vunpack.c.l.b16 %v920
      %v1017 = vunpack.c.l.b16 %v921
      %v1018 = vunpack.c.l.b16 %v922
      %v1019 = vunpack.c.l.b16 %v923
      %v1020 = vunpack.c.l.b16 %v924
      %v1021 = vunpack.c.l.b16 %v925
      %v1022 = vunpack.c.l.b16 %v926
      %v1023 = vunpack.c.l.b16 %v927
      %v1024 = vunpack.c.l.b16 %v928
      %v1025 = vunpack.c.l.b16 %v929
      %v1026 = vunpack.c.l.b16 %v930
      %v1027 = vpack.c.b16 %v980, %v979
      %v1028 = vpack.c.b16 %v982, %v981
      %v1029 = vpack.c.b16 %v984, %v983
      %v1030 = vpack.c.b16 %v986, %v985
      %v1031 = vpack.c.b16 %v988, %v987
      %v1032 = vpack.c.b16 %v990, %v989
      %v1033 = vpack.c.b16 %v992, %v991
      %v1034 = vpack.c.b16 %v994, %v993
      %v1035 = vpack.c.b16 %v996, %v995
      %v1036 = vpack.c.b16 %v998, %v997
      %v1037 = vpack.c.b16 %v1000, %v999
      %v1038 = vpack.c.b16 %v1002, %v1001
      %v1039 = vpack.c.b16 %v1004, %v1003
      %v1040 = vpack.c.b16 %v1006, %v1005
      %v1041 = vpack.c.b16 %v1008, %v1007
      %v1042 = vpack.c.b16 %v1010, %v1009
      %v1043 = vpack.c.b16 %v1012, %v1011
      %v1044 = vpack.c.b16 %v1014, %v1013
      %v1045 = vpack.c.b16 %v1016, %v1015
      %v1046 = vpack.c.b16 %v1018, %v1017
      %v1047 = vpack.c.b16 %v1020, %v1019
      %v1048 = vpack.c.b16 %v1022, %v1021
      %v1049 = vpack.c.b16 %v1024, %v1023
      %v1050 = vpack.c.b16 %v1026, %v1025
      %1075 = vmatpush.bf16.msra.mxu0 %v1034
      %1076 = vmatpush.bf16.msra.mxu0 %v1033
      %1077 = vmatpush.bf16.msra.mxu0 %v1032
      %1078 = vmatpush.bf16.msra.mxu0 %v1031
      %1079 = vmatpush.bf16.msra.mxu0 %v1030
      %1080 = vmatpush.bf16.msra.mxu0 %v1029
      %1081 = vmatpush.bf16.msra.mxu0 %v1028
      %1082 = vmatpush.bf16.msra.mxu0 %v1027
      %1083 = vmatmul.bf16.gmra.mxu0 %v643
      %v1084 = vpop.f32.mrf.mxu0
      %v1085 = vadd.f32 0.0, %v1084
      %v1086 = vpop.f32.mrf.mxu0
      %v1087 = vadd.f32 0.0, %v1086
      %1088 = vmatmul.bf16.gmra.mxu0 %v644
      %v1089 = vpop.f32.mrf.mxu0
      %v1090 = vadd.f32 0.0, %v1089
      %v1091 = vpop.f32.mrf.mxu0
      %v1092 = vadd.f32 0.0, %v1091
      %1093 = vmatmul.bf16.gmra.mxu0 %v645
      %v1094 = vpop.f32.mrf.mxu0
      %v1095 = vadd.f32 0.0, %v1094
      %v1096 = vpop.f32.mrf.mxu0
      %v1097 = vadd.f32 0.0, %v1096
      %1098 = vmatmul.bf16.gmra.mxu0 %v646
      %v1099 = vpop.f32.mrf.mxu0
      %v1100 = vadd.f32 0.0, %v1099
      %v1101 = vpop.f32.mrf.mxu0
      %v1102 = vadd.f32 0.0, %v1101
      %1103 = vmatmul.bf16.gmra.mxu0 %v647
      %v1104 = vpop.f32.mrf.mxu0
      %v1105 = vadd.f32 0.0, %v1104
      %v1106 = vpop.f32.mrf.mxu0
      %v1107 = vadd.f32 0.0, %v1106
      %1108 = vmatmul.bf16.gmra.mxu0 %v648
      %v1109 = vpop.f32.mrf.mxu0
      %v1110 = vadd.f32 0.0, %v1109
      %v1111 = vpop.f32.mrf.mxu0
      %v1112 = vadd.f32 0.0, %v1111
      %1113 = vmatmul.bf16.gmra.mxu0 %v649
      %v1114 = vpop.f32.mrf.mxu0
      %v1115 = vadd.f32 0.0, %v1114
      %v1116 = vpop.f32.mrf.mxu0
      %v1117 = vadd.f32 0.0, %v1116
      %1118 = vmatmul.bf16.gmra.mxu0 %v650
      %v1119 = vpop.f32.mrf.mxu0
      %v1120 = vadd.f32 0.0, %v1119
      %v1121 = vpop.f32.mrf.mxu0
      %v1122 = vadd.f32 0.0, %v1121
      %1123 = vdwg.mxu0
      %1124 = vmatpush.bf16.msra.mxu0 %v1042
      %1125 = vmatpush.bf16.msra.mxu0 %v1041
      %1126 = vmatpush.bf16.msra.mxu0 %v1040
      %1127 = vmatpush.bf16.msra.mxu0 %v1039
      %1128 = vmatpush.bf16.msra.mxu0 %v1038
      %1129 = vmatpush.bf16.msra.mxu0 %v1037
      %1130 = vmatpush.bf16.msra.mxu0 %v1036
      %1131 = vmatpush.bf16.msra.mxu0 %v1035
      %1132 = vmatmul.bf16.gmra.mxu0 %v686
      %v1133 = vpop.f32.mrf.mxu0
      %v1134 = vadd.f32 %v1085, %v1133
      %v1135 = vpop.f32.mrf.mxu0
      %v1136 = vadd.f32 %v1087, %v1135
      %1137 = vmatmul.bf16.gmra.mxu0 %v698
      %v1138 = vpop.f32.mrf.mxu0
      %v1139 = vadd.f32 %v1090, %v1138
      %v1140 = vpop.f32.mrf.mxu0
      %v1141 = vadd.f32 %v1092, %v1140
      %1142 = vmatmul.bf16.gmra.mxu0 %v710
      %v1143 = vpop.f32.mrf.mxu0
      %v1144 = vadd.f32 %v1095, %v1143
      %v1145 = vpop.f32.mrf.mxu0
      %v1146 = vadd.f32 %v1097, %v1145
      %1147 = vmatmul.bf16.gmra.mxu0 %v722
      %v1148 = vpop.f32.mrf.mxu0
      %v1149 = vadd.f32 %v1100, %v1148
      %v1150 = vpop.f32.mrf.mxu0
      %v1151 = vadd.f32 %v1102, %v1150
      %1152 = vmatmul.bf16.gmra.mxu0 %v734
      %v1153 = vpop.f32.mrf.mxu0
      %v1154 = vadd.f32 %v1105, %v1153
      %v1155 = vpop.f32.mrf.mxu0
      %v1156 = vadd.f32 %v1107, %v1155
      %1157 = vmatmul.bf16.gmra.mxu0 %v746
      %v1158 = vpop.f32.mrf.mxu0
      %v1159 = vadd.f32 %v1110, %v1158
      %v1160 = vpop.f32.mrf.mxu0
      %v1161 = vadd.f32 %v1112, %v1160
      %1162 = vmatmul.bf16.gmra.mxu0 %v758
      %v1163 = vpop.f32.mrf.mxu0
      %v1164 = vadd.f32 %v1115, %v1163
      %v1165 = vpop.f32.mrf.mxu0
      %v1166 = vadd.f32 %v1117, %v1165
      %1167 = vmatmul.bf16.gmra.mxu0 %v875
      %v1168 = vpop.f32.mrf.mxu0
      %v1169 = vadd.f32 %v1120, %v1168
      %v1170 = vpop.f32.mrf.mxu0
      %v1171 = vadd.f32 %v1122, %v1170
      %1172 = vdwg.mxu0
      %1173 = vmatpush.bf16.msra.mxu0 %v1050
      %1174 = vmatpush.bf16.msra.mxu0 %v1049
      %1175 = vmatpush.bf16.msra.mxu0 %v1048
      %1176 = vmatpush.bf16.msra.mxu0 %v1047
      %1177 = vmatpush.bf16.msra.mxu0 %v1046
      %1178 = vmatpush.bf16.msra.mxu0 %v1045
      %1179 = vmatpush.bf16.msra.mxu0 %v1044
      %1180 = vmatpush.bf16.msra.mxu0 %v1043
      %1181 = vmatmul.bf16.gmra.mxu0 %v789
      %v1182 = vpop.f32.mrf.mxu0
      %v1183 = vadd.f32 %v1134, %v1182
      %v1184 = vpop.f32.mrf.mxu0
      %v1185 = vadd.f32 %v1136, %v1184
      %1186 = vmatmul.bf16.gmra.mxu0 %v792
      %v1187 = vpop.f32.mrf.mxu0
      %v1188 = vadd.f32 %v1139, %v1187
      %v1189 = vpop.f32.mrf.mxu0
      %v1190 = vadd.f32 %v1141, %v1189
      %1191 = vmatmul.bf16.gmra.mxu0 %v795
      %v1192 = vpop.f32.mrf.mxu0
      %v1193 = vadd.f32 %v1144, %v1192
      %v1194 = vpop.f32.mrf.mxu0
      %v1195 = vadd.f32 %v1146, %v1194
      %1196 = vmatmul.bf16.gmra.mxu0 %v798
      %v1197 = vpop.f32.mrf.mxu0
      %v1198 = vadd.f32 %v1149, %v1197
      %v1199 = vpop.f32.mrf.mxu0
      %v1200 = vadd.f32 %v1151, %v1199
      %1201 = vmatmul.bf16.gmra.mxu0 %v801
      %v1202 = vpop.f32.mrf.mxu0
      %v1203 = vadd.f32 %v1154, %v1202
      %v1204 = vpop.f32.mrf.mxu0
      %v1205 = vadd.f32 %v1156, %v1204
      %1206 = vmatmul.bf16.gmra.mxu0 %v804
      %v1207 = vpop.f32.mrf.mxu0
      %v1208 = vadd.f32 %v1159, %v1207
      %v1209 = vpop.f32.mrf.mxu0
      %v1210 = vadd.f32 %v1161, %v1209
      %1211 = vmatmul.bf16.gmra.mxu0 %v807
      %v1212 = vpop.f32.mrf.mxu0
      %v1213 = vadd.f32 %v1164, %v1212
      %v1214 = vpop.f32.mrf.mxu0
      %v1215 = vadd.f32 %v1166, %v1214
      %1216 = vmatmul.bf16.gmra.mxu0 %v881
      %v1217 = vpop.f32.mrf.mxu0
      %v1218 = vadd.f32 %v1169, %v1217
      %v1219 = vpop.f32.mrf.mxu0
      %v1220 = vadd.f32 %v1171, %v1219
      %1221 = vdwg.mxu0
      %v1270 = vunpack.c.l.b16 %v816
      %v1271 = vunpack.c.l.b16 %v817
      %v1272 = vunpack.c.l.b16 %v818
      %v1273 = vunpack.c.l.b16 %v819
      %v1274 = vunpack.c.l.b16 %v820
      %v1275 = vunpack.c.l.b16 %v821
      %v1276 = vunpack.c.l.b16 %v822
      %v1277 = vunpack.c.l.b16 %v823
      %v1278 = vunpack.c.l.b16 %v824
      %v1279 = vunpack.c.l.b16 %v825
      %v1280 = vunpack.c.l.b16 %v826
      %v1281 = vunpack.c.l.b16 %v827
      %v1282 = vunpack.c.l.b16 %v828
      %v1283 = vunpack.c.l.b16 %v829
      %v1284 = vunpack.c.l.b16 %v830
      %v1285 = vunpack.c.l.b16 %v831
      %v1286 = vunpack.c.l.b16 %v832
      %v1287 = vunpack.c.l.b16 %v833
      %v1288 = vunpack.c.l.b16 %v834
      %v1289 = vunpack.c.l.b16 %v835
      %v1290 = vunpack.c.l.b16 %v836
      %v1291 = vunpack.c.l.b16 %v837
      %v1292 = vunpack.c.l.b16 %v838
      %v1293 = vunpack.c.l.b16 %v839
      %v1294 = vunpack.c.l.b16 %v840
      %v1295 = vunpack.c.l.b16 %v841
      %v1296 = vunpack.c.l.b16 %v842
      %v1297 = vunpack.c.l.b16 %v843
      %v1298 = vunpack.c.l.b16 %v844
      %v1299 = vunpack.c.l.b16 %v845
      %v1300 = vunpack.c.l.b16 %v846
      %v1301 = vunpack.c.l.b16 %v847
      %v1302 = vunpack.c.l.b16 %v848
      %v1303 = vunpack.c.l.b16 %v849
      %v1304 = vunpack.c.l.b16 %v850
      %v1305 = vunpack.c.l.b16 %v851
      %v1306 = vunpack.c.l.b16 %v852
      %v1307 = vunpack.c.l.b16 %v853
      %v1308 = vunpack.c.l.b16 %v854
      %v1309 = vunpack.c.l.b16 %v855
      %v1310 = vunpack.c.l.b16 %v856
      %v1311 = vunpack.c.l.b16 %v857
      %v1312 = vunpack.c.l.b16 %v858
      %v1313 = vunpack.c.l.b16 %v859
      %v1314 = vunpack.c.l.b16 %v860
      %v1315 = vunpack.c.l.b16 %v861
      %v1316 = vunpack.c.l.b16 %v862
      %v1317 = vunpack.c.l.b16 %v863
      %v1318 = vpack.c.b16 %v1271, %v1270
      %v1319 = vpack.c.b16 %v1273, %v1272
      %v1320 = vpack.c.b16 %v1275, %v1274
      %v1321 = vpack.c.b16 %v1277, %v1276
      %v1322 = vpack.c.b16 %v1279, %v1278
      %v1323 = vpack.c.b16 %v1281, %v1280
      %v1324 = vpack.c.b16 %v1283, %v1282
      %v1325 = vpack.c.b16 %v1285, %v1284
      %v1326 = vpack.c.b16 %v1287, %v1286
      %v1327 = vpack.c.b16 %v1289, %v1288
      %v1328 = vpack.c.b16 %v1291, %v1290
      %v1329 = vpack.c.b16 %v1293, %v1292
      %v1330 = vpack.c.b16 %v1295, %v1294
      %v1331 = vpack.c.b16 %v1297, %v1296
      %v1332 = vpack.c.b16 %v1299, %v1298
      %v1333 = vpack.c.b16 %v1301, %v1300
      %v1334 = vpack.c.b16 %v1303, %v1302
      %v1335 = vpack.c.b16 %v1305, %v1304
      %v1336 = vpack.c.b16 %v1307, %v1306
      %v1337 = vpack.c.b16 %v1309, %v1308
      %v1338 = vpack.c.b16 %v1311, %v1310
      %v1339 = vpack.c.b16 %v1313, %v1312
      %v1340 = vpack.c.b16 %v1315, %v1314
      %v1341 = vpack.c.b16 %v1317, %v1316
      %1366 = vmatpush.bf16.msra.mxu0 %v1325
      %1367 = vmatpush.bf16.msra.mxu0 %v1324
      %1368 = vmatpush.bf16.msra.mxu0 %v1323
      %1369 = vmatpush.bf16.msra.mxu0 %v1322
      %1370 = vmatpush.bf16.msra.mxu0 %v1321
      %1371 = vmatpush.bf16.msra.mxu0 %v1320
      %1372 = vmatpush.bf16.msra.mxu0 %v1319
      %1373 = vmatpush.bf16.msra.mxu0 %v1318
      %1374 = vmatmul.bf16.gmra.mxu0 %v642
      %v1375 = vpop.f32.mrf.mxu0
      %v1376 = vadd.f32 %v1183, %v1375
      %v1377 = vpop.f32.mrf.mxu0
      %v1378 = vadd.f32 %v1185, %v1377
      %1379 = vmatmul.bf16.gmra.mxu0 %v643
      %v1380 = vpop.f32.mrf.mxu0
      %v1381 = vadd.f32 %v1188, %v1380
      %v1382 = vpop.f32.mrf.mxu0
      %v1383 = vadd.f32 %v1190, %v1382
      %1384 = vmatmul.bf16.gmra.mxu0 %v644
      %v1385 = vpop.f32.mrf.mxu0
      %v1386 = vadd.f32 %v1193, %v1385
      %v1387 = vpop.f32.mrf.mxu0
      %v1388 = vadd.f32 %v1195, %v1387
      %1389 = vmatmul.bf16.gmra.mxu0 %v645
      %v1390 = vpop.f32.mrf.mxu0
      %v1391 = vadd.f32 %v1198, %v1390
      %v1392 = vpop.f32.mrf.mxu0
      %v1393 = vadd.f32 %v1200, %v1392
      %1394 = vmatmul.bf16.gmra.mxu0 %v646
      %v1395 = vpop.f32.mrf.mxu0
      %v1396 = vadd.f32 %v1203, %v1395
      %v1397 = vpop.f32.mrf.mxu0
      %v1398 = vadd.f32 %v1205, %v1397
      %1399 = vmatmul.bf16.gmra.mxu0 %v647
      %v1400 = vpop.f32.mrf.mxu0
      %v1401 = vadd.f32 %v1208, %v1400
      %v1402 = vpop.f32.mrf.mxu0
      %v1403 = vadd.f32 %v1210, %v1402
      %1404 = vmatmul.bf16.gmra.mxu0 %v648
      %v1405 = vpop.f32.mrf.mxu0
      %v1406 = vadd.f32 %v1213, %v1405
      %v1407 = vpop.f32.mrf.mxu0
      %v1408 = vadd.f32 %v1215, %v1407
      %1409 = vmatmul.bf16.gmra.mxu0 %v649
      %v1410 = vpop.f32.mrf.mxu0
      %v1411 = vadd.f32 %v1218, %v1410
      %v1412 = vpop.f32.mrf.mxu0
      %v1413 = vadd.f32 %v1220, %v1412
      %1414 = vdwg.mxu0
      %1415 = vmatpush.bf16.msra.mxu0 %v1333
      %1416 = vmatpush.bf16.msra.mxu0 %v1332
      %1417 = vmatpush.bf16.msra.mxu0 %v1331
      %1418 = vmatpush.bf16.msra.mxu0 %v1330
      %1419 = vmatpush.bf16.msra.mxu0 %v1329
      %1420 = vmatpush.bf16.msra.mxu0 %v1328
      %1421 = vmatpush.bf16.msra.mxu0 %v1327
      %1422 = vmatpush.bf16.msra.mxu0 %v1326
      %1423 = vmatmul.bf16.gmra.mxu0 %v674
      %v1424 = vpop.f32.mrf.mxu0
      %v1425 = vadd.f32 %v1376, %v1424
      %v1426 = vpop.f32.mrf.mxu0
      %v1427 = vadd.f32 %v1378, %v1426
      %1428 = vmatmul.bf16.gmra.mxu0 %v686
      %v1429 = vpop.f32.mrf.mxu0
      %v1430 = vadd.f32 %v1381, %v1429
      %v1431 = vpop.f32.mrf.mxu0
      %v1432 = vadd.f32 %v1383, %v1431
      %1433 = vmatmul.bf16.gmra.mxu0 %v698
      %v1434 = vpop.f32.mrf.mxu0
      %v1435 = vadd.f32 %v1386, %v1434
      %v1436 = vpop.f32.mrf.mxu0
      %v1437 = vadd.f32 %v1388, %v1436
      %1438 = vmatmul.bf16.gmra.mxu0 %v710
      %v1439 = vpop.f32.mrf.mxu0
      %v1440 = vadd.f32 %v1391, %v1439
      %v1441 = vpop.f32.mrf.mxu0
      %v1442 = vadd.f32 %v1393, %v1441
      %1443 = vmatmul.bf16.gmra.mxu0 %v722
      %v1444 = vpop.f32.mrf.mxu0
      %v1445 = vadd.f32 %v1396, %v1444
      %v1446 = vpop.f32.mrf.mxu0
      %v1447 = vadd.f32 %v1398, %v1446
      %1448 = vmatmul.bf16.gmra.mxu0 %v734
      %v1449 = vpop.f32.mrf.mxu0
      %v1450 = vadd.f32 %v1401, %v1449
      %v1451 = vpop.f32.mrf.mxu0
      %v1452 = vadd.f32 %v1403, %v1451
      %1453 = vmatmul.bf16.gmra.mxu0 %v746
      %v1454 = vpop.f32.mrf.mxu0
      %v1455 = vadd.f32 %v1406, %v1454
      %v1456 = vpop.f32.mrf.mxu0
      %v1457 = vadd.f32 %v1408, %v1456
      %1458 = vmatmul.bf16.gmra.mxu0 %v758
      %v1459 = vpop.f32.mrf.mxu0
      %v1460 = vadd.f32 %v1411, %v1459
      %v1461 = vpop.f32.mrf.mxu0
      %v1462 = vadd.f32 %v1413, %v1461
      %1463 = vdwg.mxu0
      %1464 = vmatpush.bf16.msra.mxu0 %v1341
      %1465 = vmatpush.bf16.msra.mxu0 %v1340
      %1466 = vmatpush.bf16.msra.mxu0 %v1339
      %1467 = vmatpush.bf16.msra.mxu0 %v1338
      %1468 = vmatpush.bf16.msra.mxu0 %v1337
      %1469 = vmatpush.bf16.msra.mxu0 %v1336
      %1470 = vmatpush.bf16.msra.mxu0 %v1335
      %1471 = vmatpush.bf16.msra.mxu0 %v1334
      %1472 = vmatmul.bf16.gmra.mxu0 %v786
      %v1473 = vpop.f32.mrf.mxu0
      %v1474 = vadd.f32 %v1425, %v1473
      %v1475 = vpop.f32.mrf.mxu0
      %v1476 = vadd.f32 %v1427, %v1475
      %1477 = vmatmul.bf16.gmra.mxu0 %v789
      %v1478 = vpop.f32.mrf.mxu0
      %v1479 = vadd.f32 %v1430, %v1478
      %v1480 = vpop.f32.mrf.mxu0
      %v1481 = vadd.f32 %v1432, %v1480
      %1482 = vmatmul.bf16.gmra.mxu0 %v792
      %v1483 = vpop.f32.mrf.mxu0
      %v1484 = vadd.f32 %v1435, %v1483
      %v1485 = vpop.f32.mrf.mxu0
      %v1486 = vadd.f32 %v1437, %v1485
      %1487 = vmatmul.bf16.gmra.mxu0 %v795
      %v1488 = vpop.f32.mrf.mxu0
      %v1489 = vadd.f32 %v1440, %v1488
      %v1490 = vpop.f32.mrf.mxu0
      %v1491 = vadd.f32 %v1442, %v1490
      %1492 = vmatmul.bf16.gmra.mxu0 %v798
      %v1493 = vpop.f32.mrf.mxu0
      %v1494 = vadd.f32 %v1445, %v1493
      %v1495 = vpop.f32.mrf.mxu0
      %v1496 = vadd.f32 %v1447, %v1495
      %1497 = vmatmul.bf16.gmra.mxu0 %v801
      %v1498 = vpop.f32.mrf.mxu0
      %v1499 = vadd.f32 %v1450, %v1498
      %v1500 = vpop.f32.mrf.mxu0
      %v1501 = vadd.f32 %v1452, %v1500
      %1502 = vmatmul.bf16.gmra.mxu0 %v804
      %v1503 = vpop.f32.mrf.mxu0
      %v1504 = vadd.f32 %v1455, %v1503
      %v1505 = vpop.f32.mrf.mxu0
      %v1506 = vadd.f32 %v1457, %v1505
      %1507 = vmatmul.bf16.gmra.mxu0 %v807
      %v1508 = vpop.f32.mrf.mxu0
      %v1509 = vadd.f32 %v1460, %v1508
      %v1510 = vpop.f32.mrf.mxu0
      %v1511 = vadd.f32 %v1462, %v1510
      %1512 = vdwg.mxu0
      %v1514 = vshrl.u32 %v651, 16
      %v1516 = vshll.u32 %v651, 16
      %v1518 = vrot.slane %v1516, 1
      %v1519 = vor.u32 %v1514, %v1518
      %v1521 = vshll.u32 %v661, 16
      %v1523 = vrot.slane %v1521, 1
      %v1524 = vsel %vm662, %v1519, %v1523
      %v1528 = vrot.slane %v651, 1
      %v1529 = vrot.slane %v661, 1
      %v1530 = vsel %vm783, %v1528, %v1529
      %v1532 = vld [vmem:[%s4 + $0x180] sm:$0xf]
      %v1533 = vld [vmem:[%s4 + $0x184] sm:$0xf]
      %v1534 = vld [vmem:[%s4 + $0x188] sm:$0xf]
      %v1535 = vld [vmem:[%s4 + $0x18c] sm:$0xf]
      %v1536 = vld [vmem:[%s4 + $0x190] sm:$0xf]
      %v1537 = vld [vmem:[%s4 + $0x194] sm:$0xf]
      %v1538 = vld [vmem:[%s4 + $0x198] sm:$0xf]
      %v1539 = vld [vmem:[%s4 + $0x19c] sm:$0xf]
      %v1540 = vld [vmem:[%s4 + $0x1a0] sm:$0xf]
      %v1541 = vld [vmem:[%s4 + $0x1a4] sm:$0xf]
      %v1542 = vld [vmem:[%s4 + $0x1a8] sm:$0xf]
      %v1543 = vld [vmem:[%s4 + $0x1ac] sm:$0xf]
      %v1544 = vld [vmem:[%s4 + $0x1b0] sm:$0xf]
      %v1545 = vld [vmem:[%s4 + $0x1b4] sm:$0xf]
      %v1546 = vld [vmem:[%s4 + $0x1b8] sm:$0xf]
      %v1547 = vld [vmem:[%s4 + $0x1bc] sm:$0xf]
      %v1548 = vld [vmem:[%s4 + $0x1c0] sm:$0xf]
      %v1549 = vld [vmem:[%s4 + $0x1c4] sm:$0xf]
      %v1550 = vld [vmem:[%s4 + $0x1c8] sm:$0xf]
      %v1551 = vld [vmem:[%s4 + $0x1cc] sm:$0xf]
      %v1552 = vld [vmem:[%s4 + $0x1d0] sm:$0xf]
      %v1553 = vld [vmem:[%s4 + $0x1d4] sm:$0xf]
      %v1554 = vld [vmem:[%s4 + $0x1d8] sm:$0xf]
      %v1555 = vld [vmem:[%s4 + $0x1dc] sm:$0xf]
      %v1556 = vld [vmem:[%s4 + $0x1e0] sm:$0xf]
      %v1557 = vld [vmem:[%s4 + $0x1e4] sm:$0xf]
      %v1558 = vld [vmem:[%s4 + $0x1e8] sm:$0xf]
      %v1559 = vld [vmem:[%s4 + $0x1ec] sm:$0xf]
      %v1560 = vld [vmem:[%s4 + $0x1f0] sm:$0xf]
      %v1561 = vld [vmem:[%s4 + $0x1f4] sm:$0xf]
      %v1562 = vld [vmem:[%s4 + $0x1f8] sm:$0xf]
      %v1563 = vld [vmem:[%s4 + $0x1fc] sm:$0xf]
      %v1564 = vld [vmem:[%s4 + $0x200] sm:$0xf]
      %v1565 = vld [vmem:[%s4 + $0x204] sm:$0xf]
      %v1566 = vld [vmem:[%s4 + $0x208] sm:$0xf]
      %v1567 = vld [vmem:[%s4 + $0x20c] sm:$0xf]
      %v1568 = vld [vmem:[%s4 + $0x210] sm:$0xf]
      %v1569 = vld [vmem:[%s4 + $0x214] sm:$0xf]
      %v1570 = vld [vmem:[%s4 + $0x218] sm:$0xf]
      %v1571 = vld [vmem:[%s4 + $0x21c] sm:$0xf]
      %v1572 = vld [vmem:[%s4 + $0x220] sm:$0xf]
      %v1573 = vld [vmem:[%s4 + $0x224] sm:$0xf]
      %v1574 = vld [vmem:[%s4 + $0x228] sm:$0xf]
      %v1575 = vld [vmem:[%s4 + $0x22c] sm:$0xf]
      %v1576 = vld [vmem:[%s4 + $0x230] sm:$0xf]
      %v1577 = vld [vmem:[%s4 + $0x234] sm:$0xf]
      %v1578 = vld [vmem:[%s4 + $0x238] sm:$0xf]
      %v1579 = vld [vmem:[%s4 + $0x23c] sm:$0xf]
      %v1628 = vunpack.c.l.b16 %v1532
      %v1629 = vunpack.c.l.b16 %v1533
      %v1630 = vunpack.c.l.b16 %v1534
      %v1631 = vunpack.c.l.b16 %v1535
      %v1632 = vunpack.c.l.b16 %v1536
      %v1633 = vunpack.c.l.b16 %v1537
      %v1634 = vunpack.c.l.b16 %v1538
      %v1635 = vunpack.c.l.b16 %v1539
      %v1636 = vunpack.c.l.b16 %v1540
      %v1637 = vunpack.c.l.b16 %v1541
      %v1638 = vunpack.c.l.b16 %v1542
      %v1639 = vunpack.c.l.b16 %v1543
      %v1640 = vunpack.c.l.b16 %v1544
      %v1641 = vunpack.c.l.b16 %v1545
      %v1642 = vunpack.c.l.b16 %v1546
      %v1643 = vunpack.c.l.b16 %v1547
      %v1644 = vunpack.c.l.b16 %v1548
      %v1645 = vunpack.c.l.b16 %v1549
      %v1646 = vunpack.c.l.b16 %v1550
      %v1647 = vunpack.c.l.b16 %v1551
      %v1648 = vunpack.c.l.b16 %v1552
      %v1649 = vunpack.c.l.b16 %v1553
      %v1650 = vunpack.c.l.b16 %v1554
      %v1651 = vunpack.c.l.b16 %v1555
      %v1652 = vunpack.c.l.b16 %v1556
      %v1653 = vunpack.c.l.b16 %v1557
      %v1654 = vunpack.c.l.b16 %v1558
      %v1655 = vunpack.c.l.b16 %v1559
      %v1656 = vunpack.c.l.b16 %v1560
      %v1657 = vunpack.c.l.b16 %v1561
      %v1658 = vunpack.c.l.b16 %v1562
      %v1659 = vunpack.c.l.b16 %v1563
      %v1660 = vunpack.c.l.b16 %v1564
      %v1661 = vunpack.c.l.b16 %v1565
      %v1662 = vunpack.c.l.b16 %v1566
      %v1663 = vunpack.c.l.b16 %v1567
      %v1664 = vunpack.c.l.b16 %v1568
      %v1665 = vunpack.c.l.b16 %v1569
      %v1666 = vunpack.c.l.b16 %v1570
      %v1667 = vunpack.c.l.b16 %v1571
      %v1668 = vunpack.c.l.b16 %v1572
      %v1669 = vunpack.c.l.b16 %v1573
      %v1670 = vunpack.c.l.b16 %v1574
      %v1671 = vunpack.c.l.b16 %v1575
      %v1672 = vunpack.c.l.b16 %v1576
      %v1673 = vunpack.c.l.b16 %v1577
      %v1674 = vunpack.c.l.b16 %v1578
      %v1675 = vunpack.c.l.b16 %v1579
      %v1676 = vpack.c.b16 %v1629, %v1628
      %v1677 = vpack.c.b16 %v1631, %v1630
      %v1678 = vpack.c.b16 %v1633, %v1632
      %v1679 = vpack.c.b16 %v1635, %v1634
      %v1680 = vpack.c.b16 %v1637, %v1636
      %v1681 = vpack.c.b16 %v1639, %v1638
      %v1682 = vpack.c.b16 %v1641, %v1640
      %v1683 = vpack.c.b16 %v1643, %v1642
      %v1684 = vpack.c.b16 %v1645, %v1644
      %v1685 = vpack.c.b16 %v1647, %v1646
      %v1686 = vpack.c.b16 %v1649, %v1648
      %v1687 = vpack.c.b16 %v1651, %v1650
      %v1688 = vpack.c.b16 %v1653, %v1652
      %v1689 = vpack.c.b16 %v1655, %v1654
      %v1690 = vpack.c.b16 %v1657, %v1656
      %v1691 = vpack.c.b16 %v1659, %v1658
      %v1692 = vpack.c.b16 %v1661, %v1660
      %v1693 = vpack.c.b16 %v1663, %v1662
      %v1694 = vpack.c.b16 %v1665, %v1664
      %v1695 = vpack.c.b16 %v1667, %v1666
      %v1696 = vpack.c.b16 %v1669, %v1668
      %v1697 = vpack.c.b16 %v1671, %v1670
      %v1698 = vpack.c.b16 %v1673, %v1672
      %v1699 = vpack.c.b16 %v1675, %v1674
      %1724 = vmatpush.bf16.msra.mxu0 %v1683
      %1725 = vmatpush.bf16.msra.mxu0 %v1682
      %1726 = vmatpush.bf16.msra.mxu0 %v1681
      %1727 = vmatpush.bf16.msra.mxu0 %v1680
      %1728 = vmatpush.bf16.msra.mxu0 %v1679
      %1729 = vmatpush.bf16.msra.mxu0 %v1678
      %1730 = vmatpush.bf16.msra.mxu0 %v1677
      %1731 = vmatpush.bf16.msra.mxu0 %v1676
      %1732 = vmatmul.bf16.gmra.mxu0 %v644
      %v1733 = vpop.f32.mrf.mxu0
      %v1734 = vadd.f32 0.0, %v1733
      %v1735 = vpop.f32.mrf.mxu0
      %v1736 = vadd.f32 0.0, %v1735
      %1737 = vmatmul.bf16.gmra.mxu0 %v645
      %v1738 = vpop.f32.mrf.mxu0
      %v1739 = vadd.f32 0.0, %v1738
      %v1740 = vpop.f32.mrf.mxu0
      %v1741 = vadd.f32 0.0, %v1740
      %1742 = vmatmul.bf16.gmra.mxu0 %v646
      %v1743 = vpop.f32.mrf.mxu0
      %v1744 = vadd.f32 0.0, %v1743
      %v1745 = vpop.f32.mrf.mxu0
      %v1746 = vadd.f32 0.0, %v1745
      %1747 = vmatmul.bf16.gmra.mxu0 %v647
      %v1748 = vpop.f32.mrf.mxu0
      %v1749 = vadd.f32 0.0, %v1748
      %v1750 = vpop.f32.mrf.mxu0
      %v1751 = vadd.f32 0.0, %v1750
      %1752 = vmatmul.bf16.gmra.mxu0 %v648
      %v1753 = vpop.f32.mrf.mxu0
      %v1754 = vadd.f32 0.0, %v1753
      %v1755 = vpop.f32.mrf.mxu0
      %v1756 = vadd.f32 0.0, %v1755
      %1757 = vmatmul.bf16.gmra.mxu0 %v649
      %v1758 = vpop.f32.mrf.mxu0
      %v1759 = vadd.f32 0.0, %v1758
      %v1760 = vpop.f32.mrf.mxu0
      %v1761 = vadd.f32 0.0, %v1760
      %1762 = vmatmul.bf16.gmra.mxu0 %v650
      %v1763 = vpop.f32.mrf.mxu0
      %v1764 = vadd.f32 0.0, %v1763
      %v1765 = vpop.f32.mrf.mxu0
      %v1766 = vadd.f32 0.0, %v1765
      %1767 = vmatmul.bf16.gmra.mxu0 %v651
      %v1768 = vpop.f32.mrf.mxu0
      %v1769 = vadd.f32 0.0, %v1768
      %v1770 = vpop.f32.mrf.mxu0
      %v1771 = vadd.f32 0.0, %v1770
      %1772 = vdwg.mxu0
      %1773 = vmatpush.bf16.msra.mxu0 %v1691
      %1774 = vmatpush.bf16.msra.mxu0 %v1690
      %1775 = vmatpush.bf16.msra.mxu0 %v1689
      %1776 = vmatpush.bf16.msra.mxu0 %v1688
      %1777 = vmatpush.bf16.msra.mxu0 %v1687
      %1778 = vmatpush.bf16.msra.mxu0 %v1686
      %1779 = vmatpush.bf16.msra.mxu0 %v1685
      %1780 = vmatpush.bf16.msra.mxu0 %v1684
      %1781 = vmatmul.bf16.gmra.mxu0 %v698
      %v1782 = vpop.f32.mrf.mxu0
      %v1783 = vadd.f32 %v1734, %v1782
      %v1784 = vpop.f32.mrf.mxu0
      %v1785 = vadd.f32 %v1736, %v1784
      %1786 = vmatmul.bf16.gmra.mxu0 %v710
      %v1787 = vpop.f32.mrf.mxu0
      %v1788 = vadd.f32 %v1739, %v1787
      %v1789 = vpop.f32.mrf.mxu0
      %v1790 = vadd.f32 %v1741, %v1789
      %1791 = vmatmul.bf16.gmra.mxu0 %v722
      %v1792 = vpop.f32.mrf.mxu0
      %v1793 = vadd.f32 %v1744, %v1792
      %v1794 = vpop.f32.mrf.mxu0
      %v1795 = vadd.f32 %v1746, %v1794
      %1796 = vmatmul.bf16.gmra.mxu0 %v734
      %v1797 = vpop.f32.mrf.mxu0
      %v1798 = vadd.f32 %v1749, %v1797
      %v1799 = vpop.f32.mrf.mxu0
      %v1800 = vadd.f32 %v1751, %v1799
      %1801 = vmatmul.bf16.gmra.mxu0 %v746
      %v1802 = vpop.f32.mrf.mxu0
      %v1803 = vadd.f32 %v1754, %v1802
      %v1804 = vpop.f32.mrf.mxu0
      %v1805 = vadd.f32 %v1756, %v1804
      %1806 = vmatmul.bf16.gmra.mxu0 %v758
      %v1807 = vpop.f32.mrf.mxu0
      %v1808 = vadd.f32 %v1759, %v1807
      %v1809 = vpop.f32.mrf.mxu0
      %v1810 = vadd.f32 %v1761, %v1809
      %1811 = vmatmul.bf16.gmra.mxu0 %v875
      %v1812 = vpop.f32.mrf.mxu0
      %v1813 = vadd.f32 %v1764, %v1812
      %v1814 = vpop.f32.mrf.mxu0
      %v1815 = vadd.f32 %v1766, %v1814
      %1816 = vmatmul.bf16.gmra.mxu0 %v1524
      %v1817 = vpop.f32.mrf.mxu0
      %v1818 = vadd.f32 %v1769, %v1817
      %v1819 = vpop.f32.mrf.mxu0
      %v1820 = vadd.f32 %v1771, %v1819
      %1821 = vdwg.mxu0
      %1822 = vmatpush.bf16.msra.mxu0 %v1699
      %1823 = vmatpush.bf16.msra.mxu0 %v1698
      %1824 = vmatpush.bf16.msra.mxu0 %v1697
      %1825 = vmatpush.bf16.msra.mxu0 %v1696
      %1826 = vmatpush.bf16.msra.mxu0 %v1695
      %1827 = vmatpush.bf16.msra.mxu0 %v1694
      %1828 = vmatpush.bf16.msra.mxu0 %v1693
      %1829 = vmatpush.bf16.msra.mxu0 %v1692
      %1830 = vmatmul.bf16.gmra.mxu0 %v792
      %v1831 = vpop.f32.mrf.mxu0
      %v1832 = vadd.f32 %v1783, %v1831
      %v1833 = vpop.f32.mrf.mxu0
      %v1834 = vadd.f32 %v1785, %v1833
      %1835 = vmatmul.bf16.gmra.mxu0 %v795
      %v1836 = vpop.f32.mrf.mxu0
      %v1837 = vadd.f32 %v1788, %v1836
      %v1838 = vpop.f32.mrf.mxu0
      %v1839 = vadd.f32 %v1790, %v1838
      %1840 = vmatmul.bf16.gmra.mxu0 %v798
      %v1841 = vpop.f32.mrf.mxu0
      %v1842 = vadd.f32 %v1793, %v1841
      %v1843 = vpop.f32.mrf.mxu0
      %v1844 = vadd.f32 %v1795, %v1843
      %1845 = vmatmul.bf16.gmra.mxu0 %v801
      %v1846 = vpop.f32.mrf.mxu0
      %v1847 = vadd.f32 %v1798, %v1846
      %v1848 = vpop.f32.mrf.mxu0
      %v1849 = vadd.f32 %v1800, %v1848
      %1850 = vmatmul.bf16.gmra.mxu0 %v804
      %v1851 = vpop.f32.mrf.mxu0
      %v1852 = vadd.f32 %v1803, %v1851
      %v1853 = vpop.f32.mrf.mxu0
      %v1854 = vadd.f32 %v1805, %v1853
      %1855 = vmatmul.bf16.gmra.mxu0 %v807
      %v1856 = vpop.f32.mrf.mxu0
      %v1857 = vadd.f32 %v1808, %v1856
      %v1858 = vpop.f32.mrf.mxu0
      %v1859 = vadd.f32 %v1810, %v1858
      %1860 = vmatmul.bf16.gmra.mxu0 %v881
      %v1861 = vpop.f32.mrf.mxu0
      %v1862 = vadd.f32 %v1813, %v1861
      %v1863 = vpop.f32.mrf.mxu0
      %v1864 = vadd.f32 %v1815, %v1863
      %1865 = vmatmul.bf16.gmra.mxu0 %v1530
      %v1866 = vpop.f32.mrf.mxu0
      %v1867 = vadd.f32 %v1818, %v1866
      %v1868 = vpop.f32.mrf.mxu0
      %v1869 = vadd.f32 %v1820, %v1868
      %1870 = vdwg.mxu0
      %v1871 = vadd.f32 %v1474, %v1832
      %v1872 = vadd.f32 %v1476, %v1834
      %v1873 = vadd.f32 %v1479, %v1837
      %v1874 = vadd.f32 %v1481, %v1839
      %v1875 = vadd.f32 %v1484, %v1842
      %v1876 = vadd.f32 %v1486, %v1844
      %v1877 = vadd.f32 %v1489, %v1847
      %v1878 = vadd.f32 %v1491, %v1849
      %v1879 = vadd.f32 %v1494, %v1852
      %v1880 = vadd.f32 %v1496, %v1854
      %v1881 = vadd.f32 %v1499, %v1857
      %v1882 = vadd.f32 %v1501, %v1859
      %v1883 = vadd.f32 %v1504, %v1862
      %v1884 = vadd.f32 %v1506, %v1864
      %v1885 = vadd.f32 %v1509, %v1867
      %v1886 = vadd.f32 %v1511, %v1869
      %v1887 = vld [vmem:[%s458] sm:$0xf]
      %v1888 = vld [vmem:[%s458 + $0x4] sm:$0xf]
      %v1889 = vld [vmem:[%s458 + $0x8] sm:$0xf]
      %v1890 = vld [vmem:[%s458 + $0xc] sm:$0xf]
      %v1891 = vld [vmem:[%s448] sm:$0xf]
      %v1892 = vld [vmem:[%s448 + $0x4] sm:$0xf]
      %v1893 = vld [vmem:[%s448 + $0x8] sm:$0xf]
      %v1894 = vld [vmem:[%s448 + $0xc] sm:$0xf]
      %v1895 = vld [vmem:[%s448 + $0x10] sm:$0xf]
      %v1896 = vld [vmem:[%s448 + $0x14] sm:$0xf]
      %v1897 = vld [vmem:[%s448 + $0x18] sm:$0xf]
      %v1898 = vld [vmem:[%s448 + $0x1c] sm:$0xf]
      %v1899 = vld [vmem:[%s448 + $0x20] sm:$0xf]
      %v1900 = vld [vmem:[%s448 + $0x24] sm:$0xf]
      %v1901 = vld [vmem:[%s448 + $0x28] sm:$0xf]
      %v1902 = vld [vmem:[%s448 + $0x2c] sm:$0xf]
      %v1903 = vld [vmem:[%s448 + $0x30] sm:$0xf]
      %v1904 = vld [vmem:[%s448 + $0x34] sm:$0xf]
      %v1905 = vld [vmem:[%s448 + $0x38] sm:$0xf]
      %v1906 = vld [vmem:[%s448 + $0x3c] sm:$0xf]
      %v1927 = vunpack.c.l.b16 %v1887
      %v1928 = vunpack.c.l.b16 %v1888
      %v1929 = vunpack.c.l.b16 %v1891
      %v1930 = vunpack.c.l.b16 %v1892
      %v1931 = vunpack.c.l.b16 %v1893
      %v1932 = vunpack.c.l.b16 %v1894
      %v1933 = vunpack.c.l.b16 %v1895
      %v1934 = vunpack.c.l.b16 %v1896
      %v1935 = vunpack.c.l.b16 %v1897
      %v1936 = vunpack.c.l.b16 %v1898
      %v1937 = vunpack.c.l.b16 %v1899
      %v1938 = vunpack.c.l.b16 %v1900
      %v1939 = vunpack.c.l.b16 %v1901
      %v1940 = vunpack.c.l.b16 %v1902
      %v1941 = vunpack.c.l.b16 %v1903
      %v1942 = vunpack.c.l.b16 %v1904
      %v1943 = vunpack.c.l.b16 %v1905
      %v1944 = vunpack.c.l.b16 %v1906
      %v1945 = vunpack.c.l.b16 %v1889
      %v1946 = vunpack.c.l.b16 %v1890
      %v1947 = vpack.c.b16 %v1928, %v1927
      %v1948 = vpack.c.b16 %v1930, %v1929
      %v1949 = vpack.c.b16 %v1932, %v1931
      %v1950 = vpack.c.b16 %v1934, %v1933
      %v1951 = vpack.c.b16 %v1936, %v1935
      %v1952 = vpack.c.b16 %v1938, %v1937
      %v1953 = vpack.c.b16 %v1940, %v1939
      %v1954 = vpack.c.b16 %v1942, %v1941
      %v1955 = vpack.c.b16 %v1944, %v1943
      %v1956 = vpack.c.b16 %v1946, %v1945
      %v1958 = vshrl.u32 %v1947, 16
      %v1960 = vrot.slane %v1958, 7
      %v1961 = vshll.u32 %v1947, 16
      %v1963 = vor.u32 %v1960, %v1961
      %v1965 = vshrl.u32 %v1948, 16
      %v1967 = vrot.slane %v1965, 7
      %v1968 = vshll.u32 %v1948, 16
      %v1970 = vor.u32 %v1967, %v1968
      %v1972 = vshrl.u32 %v1949, 16
      %v1974 = vrot.slane %v1972, 7
      %v1975 = vshll.u32 %v1949, 16
      %v1977 = vor.u32 %v1974, %v1975
      %v1979 = vshrl.u32 %v1950, 16
      %v1981 = vrot.slane %v1979, 7
      %v1982 = vshll.u32 %v1950, 16
      %v1984 = vor.u32 %v1981, %v1982
      %v1986 = vshrl.u32 %v1951, 16
      %v1988 = vrot.slane %v1986, 7
      %v1989 = vshll.u32 %v1951, 16
      %v1991 = vor.u32 %v1988, %v1989
      %v1993 = vshrl.u32 %v1952, 16
      %v1995 = vrot.slane %v1993, 7
      %v1996 = vshll.u32 %v1952, 16
      %v1998 = vor.u32 %v1995, %v1996
      %v2000 = vshrl.u32 %v1953, 16
      %v2002 = vrot.slane %v2000, 7
      %v2003 = vshll.u32 %v1953, 16
      %v2005 = vor.u32 %v2002, %v2003
      %v2007 = vshrl.u32 %v1954, 16
      %v2009 = vrot.slane %v2007, 7
      %v2010 = vshll.u32 %v1954, 16
      %v2012 = vor.u32 %v2009, %v2010
      %v2014 = vshrl.u32 %v1955, 16
      %v2016 = vrot.slane %v2014, 7
      %v2017 = vshll.u32 %v1955, 16
      %v2019 = vor.u32 %v2016, %v2017
      %v2021 = vshrl.u32 %v1956, 16
      %v2023 = vrot.slane %v2021, 7
      %v2024 = vshll.u32 %v1956, 16
      %v2026 = vor.u32 %v2023, %v2024
      %v2047 = vsel %vm641, 0, %v1963
      %v2048 = vsel %vm641, 0, %v1970
      %v2049 = vsel %vm641, 0, %v1977
      %v2050 = vsel %vm641, 0, %v1984
      %v2051 = vsel %vm641, 0, %v1991
      %v2052 = vsel %vm641, 0, %v1998
      %v2053 = vsel %vm641, 0, %v2005
      %v2054 = vsel %vm641, 0, %v2012
      %v2055 = vsel %vm641, 0, %v2019
      %v2056 = vsel %vm641, 0, %v2026
      %v2057 = vsel %vm641, %v1960, 0
      %v2058 = vsel %vm641, %v1967, 0
      %v2059 = vsel %vm641, %v1974, 0
      %v2060 = vsel %vm641, %v1981, 0
      %v2061 = vsel %vm641, %v1988, 0
      %v2062 = vsel %vm641, %v1995, 0
      %v2063 = vsel %vm641, %v2002, 0
      %v2064 = vsel %vm641, %v2009, 0
      %v2065 = vsel %vm641, %v2016, 0
      %v2066 = vsel %vm641, %v2023, 0
      %v2068 = vshrl.u32 %v2047, 16
      %v2070 = vshll.u32 %v2047, 16
      %v2072 = vrot.slane %v2070, 1
      %v2073 = vor.u32 %v2068, %v2072
      %v2075 = vshll.u32 %v2057, 16
      %v2077 = vrot.slane %v2075, 1
      %v2078 = vsel %vm662, %v2073, %v2077
      %v2080 = vshrl.u32 %v2048, 16
      %v2082 = vshll.u32 %v2048, 16
      %v2084 = vrot.slane %v2082, 1
      %v2085 = vor.u32 %v2080, %v2084
      %v2087 = vshll.u32 %v2058, 16
      %v2089 = vrot.slane %v2087, 1
      %v2090 = vsel %vm662, %v2085, %v2089
      %v2092 = vshrl.u32 %v2049, 16
      %v2094 = vshll.u32 %v2049, 16
      %v2096 = vrot.slane %v2094, 1
      %v2097 = vor.u32 %v2092, %v2096
      %v2099 = vshll.u32 %v2059, 16
      %v2101 = vrot.slane %v2099, 1
      %v2102 = vsel %vm662, %v2097, %v2101
      %v2104 = vshrl.u32 %v2050, 16
      %v2106 = vshll.u32 %v2050, 16
      %v2108 = vrot.slane %v2106, 1
      %v2109 = vor.u32 %v2104, %v2108
      %v2111 = vshll.u32 %v2060, 16
      %v2113 = vrot.slane %v2111, 1
      %v2114 = vsel %vm662, %v2109, %v2113
      %v2116 = vshrl.u32 %v2051, 16
      %v2118 = vshll.u32 %v2051, 16
      %v2120 = vrot.slane %v2118, 1
      %v2121 = vor.u32 %v2116, %v2120
      %v2123 = vshll.u32 %v2061, 16
      %v2125 = vrot.slane %v2123, 1
      %v2126 = vsel %vm662, %v2121, %v2125
      %v2128 = vshrl.u32 %v2052, 16
      %v2130 = vshll.u32 %v2052, 16
      %v2132 = vrot.slane %v2130, 1
      %v2133 = vor.u32 %v2128, %v2132
      %v2135 = vshll.u32 %v2062, 16
      %v2137 = vrot.slane %v2135, 1
      %v2138 = vsel %vm662, %v2133, %v2137
      %v2140 = vshrl.u32 %v2053, 16
      %v2142 = vshll.u32 %v2053, 16
      %v2144 = vrot.slane %v2142, 1
      %v2145 = vor.u32 %v2140, %v2144
      %v2147 = vshll.u32 %v2063, 16
      %v2149 = vrot.slane %v2147, 1
      %v2150 = vsel %vm662, %v2145, %v2149
      %v2152 = vshrl.u32 %v2054, 16
      %v2154 = vshll.u32 %v2054, 16
      %v2156 = vrot.slane %v2154, 1
      %v2157 = vor.u32 %v2152, %v2156
      %v2159 = vshll.u32 %v2064, 16
      %v2161 = vrot.slane %v2159, 1
      %v2162 = vsel %vm662, %v2157, %v2161
      %v2187 = vrot.slane %v2047, 1
      %v2188 = vrot.slane %v2057, 1
      %v2189 = vsel %vm783, %v2187, %v2188
      %v2190 = vrot.slane %v2048, 1
      %v2191 = vrot.slane %v2058, 1
      %v2192 = vsel %vm783, %v2190, %v2191
      %v2193 = vrot.slane %v2049, 1
      %v2194 = vrot.slane %v2059, 1
      %v2195 = vsel %vm783, %v2193, %v2194
      %v2196 = vrot.slane %v2050, 1
      %v2197 = vrot.slane %v2060, 1
      %v2198 = vsel %vm783, %v2196, %v2197
      %v2199 = vrot.slane %v2051, 1
      %v2200 = vrot.slane %v2061, 1
      %v2201 = vsel %vm783, %v2199, %v2200
      %v2202 = vrot.slane %v2052, 1
      %v2203 = vrot.slane %v2062, 1
      %v2204 = vsel %vm783, %v2202, %v2203
      %v2205 = vrot.slane %v2053, 1
      %v2206 = vrot.slane %v2063, 1
      %v2207 = vsel %vm783, %v2205, %v2206
      %v2208 = vrot.slane %v2054, 1
      %v2209 = vrot.slane %v2064, 1
      %v2210 = vsel %vm783, %v2208, %v2209
      %v2219 = vld [vmem:[%s5] sm:$0xf]
      %v2220 = vld [vmem:[%s5 + $0x4] sm:$0xf]
      %v2221 = vld [vmem:[%s5 + $0x8] sm:$0xf]
      %v2222 = vld [vmem:[%s5 + $0xc] sm:$0xf]
      %v2223 = vld [vmem:[%s5 + $0x10] sm:$0xf]
      %v2224 = vld [vmem:[%s5 + $0x14] sm:$0xf]
      %v2225 = vld [vmem:[%s5 + $0x18] sm:$0xf]
      %v2226 = vld [vmem:[%s5 + $0x1c] sm:$0xf]
      %v2227 = vld [vmem:[%s5 + $0x20] sm:$0xf]
      %v2228 = vld [vmem:[%s5 + $0x24] sm:$0xf]
      %v2229 = vld [vmem:[%s5 + $0x28] sm:$0xf]
      %v2230 = vld [vmem:[%s5 + $0x2c] sm:$0xf]
      %v2231 = vld [vmem:[%s5 + $0x30] sm:$0xf]
      %v2232 = vld [vmem:[%s5 + $0x34] sm:$0xf]
      %v2233 = vld [vmem:[%s5 + $0x38] sm:$0xf]
      %v2234 = vld [vmem:[%s5 + $0x3c] sm:$0xf]
      %v2235 = vld [vmem:[%s5 + $0x40] sm:$0xf]
      %v2236 = vld [vmem:[%s5 + $0x44] sm:$0xf]
      %v2237 = vld [vmem:[%s5 + $0x48] sm:$0xf]
      %v2238 = vld [vmem:[%s5 + $0x4c] sm:$0xf]
      %v2239 = vld [vmem:[%s5 + $0x50] sm:$0xf]
      %v2240 = vld [vmem:[%s5 + $0x54] sm:$0xf]
      %v2241 = vld [vmem:[%s5 + $0x58] sm:$0xf]
      %v2242 = vld [vmem:[%s5 + $0x5c] sm:$0xf]
      %v2243 = vld [vmem:[%s5 + $0x60] sm:$0xf]
      %v2244 = vld [vmem:[%s5 + $0x64] sm:$0xf]
      %v2245 = vld [vmem:[%s5 + $0x68] sm:$0xf]
      %v2246 = vld [vmem:[%s5 + $0x6c] sm:$0xf]
      %v2247 = vld [vmem:[%s5 + $0x70] sm:$0xf]
      %v2248 = vld [vmem:[%s5 + $0x74] sm:$0xf]
      %v2249 = vld [vmem:[%s5 + $0x78] sm:$0xf]
      %v2250 = vld [vmem:[%s5 + $0x7c] sm:$0xf]
      %v2251 = vld [vmem:[%s5 + $0x80] sm:$0xf]
      %v2252 = vld [vmem:[%s5 + $0x84] sm:$0xf]
      %v2253 = vld [vmem:[%s5 + $0x88] sm:$0xf]
      %v2254 = vld [vmem:[%s5 + $0x8c] sm:$0xf]
      %v2255 = vld [vmem:[%s5 + $0x90] sm:$0xf]
      %v2256 = vld [vmem:[%s5 + $0x94] sm:$0xf]
      %v2257 = vld [vmem:[%s5 + $0x98] sm:$0xf]
      %v2258 = vld [vmem:[%s5 + $0x9c] sm:$0xf]
      %v2259 = vld [vmem:[%s5 + $0xa0] sm:$0xf]
      %v2260 = vld [vmem:[%s5 + $0xa4] sm:$0xf]
      %v2261 = vld [vmem:[%s5 + $0xa8] sm:$0xf]
      %v2262 = vld [vmem:[%s5 + $0xac] sm:$0xf]
      %v2263 = vld [vmem:[%s5 + $0xb0] sm:$0xf]
      %v2264 = vld [vmem:[%s5 + $0xb4] sm:$0xf]
      %v2265 = vld [vmem:[%s5 + $0xb8] sm:$0xf]
      %v2266 = vld [vmem:[%s5 + $0xbc] sm:$0xf]
      %v2315 = vunpack.c.l.b16 %v2219
      %v2316 = vunpack.c.l.b16 %v2220
      %v2317 = vunpack.c.l.b16 %v2221
      %v2318 = vunpack.c.l.b16 %v2222
      %v2319 = vunpack.c.l.b16 %v2223
      %v2320 = vunpack.c.l.b16 %v2224
      %v2321 = vunpack.c.l.b16 %v2225
      %v2322 = vunpack.c.l.b16 %v2226
      %v2323 = vunpack.c.l.b16 %v2227
      %v2324 = vunpack.c.l.b16 %v2228
      %v2325 = vunpack.c.l.b16 %v2229
      %v2326 = vunpack.c.l.b16 %v2230
      %v2327 = vunpack.c.l.b16 %v2231
      %v2328 = vunpack.c.l.b16 %v2232
      %v2329 = vunpack.c.l.b16 %v2233
      %v2330 = vunpack.c.l.b16 %v2234
      %v2331 = vunpack.c.l.b16 %v2235
      %v2332 = vunpack.c.l.b16 %v2236
      %v2333 = vunpack.c.l.b16 %v2237
      %v2334 = vunpack.c.l.b16 %v2238
      %v2335 = vunpack.c.l.b16 %v2239
      %v2336 = vunpack.c.l.b16 %v2240
      %v2337 = vunpack.c.l.b16 %v2241
      %v2338 = vunpack.c.l.b16 %v2242
      %v2339 = vunpack.c.l.b16 %v2243
      %v2340 = vunpack.c.l.b16 %v2244
      %v2341 = vunpack.c.l.b16 %v2245
      %v2342 = vunpack.c.l.b16 %v2246
      %v2343 = vunpack.c.l.b16 %v2247
      %v2344 = vunpack.c.l.b16 %v2248
      %v2345 = vunpack.c.l.b16 %v2249
      %v2346 = vunpack.c.l.b16 %v2250
      %v2347 = vunpack.c.l.b16 %v2251
      %v2348 = vunpack.c.l.b16 %v2252
      %v2349 = vunpack.c.l.b16 %v2253
      %v2350 = vunpack.c.l.b16 %v2254
      %v2351 = vunpack.c.l.b16 %v2255
      %v2352 = vunpack.c.l.b16 %v2256
      %v2353 = vunpack.c.l.b16 %v2257
      %v2354 = vunpack.c.l.b16 %v2258
      %v2355 = vunpack.c.l.b16 %v2259
      %v2356 = vunpack.c.l.b16 %v2260
      %v2357 = vunpack.c.l.b16 %v2261
      %v2358 = vunpack.c.l.b16 %v2262
      %v2359 = vunpack.c.l.b16 %v2263
      %v2360 = vunpack.c.l.b16 %v2264
      %v2361 = vunpack.c.l.b16 %v2265
      %v2362 = vunpack.c.l.b16 %v2266
      %v2363 = vpack.c.b16 %v2316, %v2315
      %v2364 = vpack.c.b16 %v2318, %v2317
      %v2365 = vpack.c.b16 %v2320, %v2319
      %v2366 = vpack.c.b16 %v2322, %v2321
      %v2367 = vpack.c.b16 %v2324, %v2323
      %v2368 = vpack.c.b16 %v2326, %v2325
      %v2369 = vpack.c.b16 %v2328, %v2327
      %v2370 = vpack.c.b16 %v2330, %v2329
      %v2371 = vpack.c.b16 %v2332, %v2331
      %v2372 = vpack.c.b16 %v2334, %v2333
      %v2373 = vpack.c.b16 %v2336, %v2335
      %v2374 = vpack.c.b16 %v2338, %v2337
      %v2375 = vpack.c.b16 %v2340, %v2339
      %v2376 = vpack.c.b16 %v2342, %v2341
      %v2377 = vpack.c.b16 %v2344, %v2343
      %v2378 = vpack.c.b16 %v2346, %v2345
      %v2379 = vpack.c.b16 %v2348, %v2347
      %v2380 = vpack.c.b16 %v2350, %v2349
      %v2381 = vpack.c.b16 %v2352, %v2351
      %v2382 = vpack.c.b16 %v2354, %v2353
      %v2383 = vpack.c.b16 %v2356, %v2355
      %v2384 = vpack.c.b16 %v2358, %v2357
      %v2385 = vpack.c.b16 %v2360, %v2359
      %v2386 = vpack.c.b16 %v2362, %v2361
      %2411 = vmatpush.bf16.msra.mxu0 %v2370
      %2412 = vmatpush.bf16.msra.mxu0 %v2369
      %2413 = vmatpush.bf16.msra.mxu0 %v2368
      %2414 = vmatpush.bf16.msra.mxu0 %v2367
      %2415 = vmatpush.bf16.msra.mxu0 %v2366
      %2416 = vmatpush.bf16.msra.mxu0 %v2365
      %2417 = vmatpush.bf16.msra.mxu0 %v2364
      %2418 = vmatpush.bf16.msra.mxu0 %v2363
      %2419 = vmatmul.bf16.gmra.mxu0 %v2047
      %v2420 = vpop.f32.mrf.mxu0
      %v2421 = vadd.f32 0.0, %v2420
      %v2422 = vpop.f32.mrf.mxu0
      %v2423 = vadd.f32 0.0, %v2422
      %2424 = vmatmul.bf16.gmra.mxu0 %v2048
      %v2425 = vpop.f32.mrf.mxu0
      %v2426 = vadd.f32 0.0, %v2425
      %v2427 = vpop.f32.mrf.mxu0
      %v2428 = vadd.f32 0.0, %v2427
      %2429 = vmatmul.bf16.gmra.mxu0 %v2049
      %v2430 = vpop.f32.mrf.mxu0
      %v2431 = vadd.f32 0.0, %v2430
      %v2432 = vpop.f32.mrf.mxu0
      %v2433 = vadd.f32 0.0, %v2432
      %2434 = vmatmul.bf16.gmra.mxu0 %v2050
      %v2435 = vpop.f32.mrf.mxu0
      %v2436 = vadd.f32 0.0, %v2435
      %v2437 = vpop.f32.mrf.mxu0
      %v2438 = vadd.f32 0.0, %v2437
      %2439 = vmatmul.bf16.gmra.mxu0 %v2051
      %v2440 = vpop.f32.mrf.mxu0
      %v2441 = vadd.f32 0.0, %v2440
      %v2442 = vpop.f32.mrf.mxu0
      %v2443 = vadd.f32 0.0, %v2442
      %2444 = vmatmul.bf16.gmra.mxu0 %v2052
      %v2445 = vpop.f32.mrf.mxu0
      %v2446 = vadd.f32 0.0, %v2445
      %v2447 = vpop.f32.mrf.mxu0
      %v2448 = vadd.f32 0.0, %v2447
      %2449 = vmatmul.bf16.gmra.mxu0 %v2053
      %v2450 = vpop.f32.mrf.mxu0
      %v2451 = vadd.f32 0.0, %v2450
      %v2452 = vpop.f32.mrf.mxu0
      %v2453 = vadd.f32 0.0, %v2452
      %2454 = vmatmul.bf16.gmra.mxu0 %v2054
      %v2455 = vpop.f32.mrf.mxu0
      %v2456 = vadd.f32 0.0, %v2455
      %v2457 = vpop.f32.mrf.mxu0
      %v2458 = vadd.f32 0.0, %v2457
      %2459 = vdwg.mxu0
      %2460 = vmatpush.bf16.msra.mxu0 %v2378
      %2461 = vmatpush.bf16.msra.mxu0 %v2377
      %2462 = vmatpush.bf16.msra.mxu0 %v2376
      %2463 = vmatpush.bf16.msra.mxu0 %v2375
      %2464 = vmatpush.bf16.msra.mxu0 %v2374
      %2465 = vmatpush.bf16.msra.mxu0 %v2373
      %2466 = vmatpush.bf16.msra.mxu0 %v2372
      %2467 = vmatpush.bf16.msra.mxu0 %v2371
      %2468 = vmatmul.bf16.gmra.mxu0 %v2078
      %v2469 = vpop.f32.mrf.mxu0
      %v2470 = vadd.f32 %v2421, %v2469
      %v2471 = vpop.f32.mrf.mxu0
      %v2472 = vadd.f32 %v2423, %v2471
      %2473 = vmatmul.bf16.gmra.mxu0 %v2090
      %v2474 = vpop.f32.mrf.mxu0
      %v2475 = vadd.f32 %v2426, %v2474
      %v2476 = vpop.f32.mrf.mxu0
      %v2477 = vadd.f32 %v2428, %v2476
      %2478 = vmatmul.bf16.gmra.mxu0 %v2102
      %v2479 = vpop.f32.mrf.mxu0
      %v2480 = vadd.f32 %v2431, %v2479
      %v2481 = vpop.f32.mrf.mxu0
      %v2482 = vadd.f32 %v2433, %v2481
      %2483 = vmatmul.bf16.gmra.mxu0 %v2114
      %v2484 = vpop.f32.mrf.mxu0
      %v2485 = vadd.f32 %v2436, %v2484
      %v2486 = vpop.f32.mrf.mxu0
      %v2487 = vadd.f32 %v2438, %v2486
      %2488 = vmatmul.bf16.gmra.mxu0 %v2126
      %v2489 = vpop.f32.mrf.mxu0
      %v2490 = vadd.f32 %v2441, %v2489
      %v2491 = vpop.f32.mrf.mxu0
      %v2492 = vadd.f32 %v2443, %v2491
      %2493 = vmatmul.bf16.gmra.mxu0 %v2138
      %v2494 = vpop.f32.mrf.mxu0
      %v2495 = vadd.f32 %v2446, %v2494
      %v2496 = vpop.f32.mrf.mxu0
      %v2497 = vadd.f32 %v2448, %v2496
      %2498 = vmatmul.bf16.gmra.mxu0 %v2150
      %v2499 = vpop.f32.mrf.mxu0
      %v2500 = vadd.f32 %v2451, %v2499
      %v2501 = vpop.f32.mrf.mxu0
      %v2502 = vadd.f32 %v2453, %v2501
      %2503 = vmatmul.bf16.gmra.mxu0 %v2162
      %v2504 = vpop.f32.mrf.mxu0
      %v2505 = vadd.f32 %v2456, %v2504
      %v2506 = vpop.f32.mrf.mxu0
      %v2507 = vadd.f32 %v2458, %v2506
      %2508 = vdwg.mxu0
      %2509 = vmatpush.bf16.msra.mxu0 %v2386
      %2510 = vmatpush.bf16.msra.mxu0 %v2385
      %2511 = vmatpush.bf16.msra.mxu0 %v2384
      %2512 = vmatpush.bf16.msra.mxu0 %v2383
      %2513 = vmatpush.bf16.msra.mxu0 %v2382
      %2514 = vmatpush.bf16.msra.mxu0 %v2381
      %2515 = vmatpush.bf16.msra.mxu0 %v2380
      %2516 = vmatpush.bf16.msra.mxu0 %v2379
      %2517 = vmatmul.bf16.gmra.mxu0 %v2189
      %v2518 = vpop.f32.mrf.mxu0
      %v2519 = vadd.f32 %v2470, %v2518
      %v2520 = vpop.f32.mrf.mxu0
      %v2521 = vadd.f32 %v2472, %v2520
      %2522 = vmatmul.bf16.gmra.mxu0 %v2192
      %v2523 = vpop.f32.mrf.mxu0
      %v2524 = vadd.f32 %v2475, %v2523
      %v2525 = vpop.f32.mrf.mxu0
      %v2526 = vadd.f32 %v2477, %v2525
      %2527 = vmatmul.bf16.gmra.mxu0 %v2195
      %v2528 = vpop.f32.mrf.mxu0
      %v2529 = vadd.f32 %v2480, %v2528
      %v2530 = vpop.f32.mrf.mxu0
      %v2531 = vadd.f32 %v2482, %v2530
      %2532 = vmatmul.bf16.gmra.mxu0 %v2198
      %v2533 = vpop.f32.mrf.mxu0
      %v2534 = vadd.f32 %v2485, %v2533
      %v2535 = vpop.f32.mrf.mxu0
      %v2536 = vadd.f32 %v2487, %v2535
      %2537 = vmatmul.bf16.gmra.mxu0 %v2201
      %v2538 = vpop.f32.mrf.mxu0
      %v2539 = vadd.f32 %v2490, %v2538
      %v2540 = vpop.f32.mrf.mxu0
      %v2541 = vadd.f32 %v2492, %v2540
      %2542 = vmatmul.bf16.gmra.mxu0 %v2204
      %v2543 = vpop.f32.mrf.mxu0
      %v2544 = vadd.f32 %v2495, %v2543
      %v2545 = vpop.f32.mrf.mxu0
      %v2546 = vadd.f32 %v2497, %v2545
      %2547 = vmatmul.bf16.gmra.mxu0 %v2207
      %v2548 = vpop.f32.mrf.mxu0
      %v2549 = vadd.f32 %v2500, %v2548
      %v2550 = vpop.f32.mrf.mxu0
      %v2551 = vadd.f32 %v2502, %v2550
      %2552 = vmatmul.bf16.gmra.mxu0 %v2210
      %v2553 = vpop.f32.mrf.mxu0
      %v2554 = vadd.f32 %v2505, %v2553
      %v2555 = vpop.f32.mrf.mxu0
      %v2556 = vadd.f32 %v2507, %v2555
      %2557 = vdwg.mxu0
      %v2558 = vadd.f32 %v1871, %v2519
      %v2559 = vadd.f32 %v1872, %v2521
      %v2560 = vadd.f32 %v1873, %v2524
      %v2561 = vadd.f32 %v1874, %v2526
      %v2562 = vadd.f32 %v1875, %v2529
      %v2563 = vadd.f32 %v1876, %v2531
      %v2564 = vadd.f32 %v1877, %v2534
      %v2565 = vadd.f32 %v1878, %v2536
      %v2566 = vadd.f32 %v1879, %v2539
      %v2567 = vadd.f32 %v1880, %v2541
      %v2568 = vadd.f32 %v1881, %v2544
      %v2569 = vadd.f32 %v1882, %v2546
      %v2570 = vadd.f32 %v1883, %v2549
      %v2571 = vadd.f32 %v1884, %v2551
      %v2572 = vadd.f32 %v1885, %v2554
      %v2573 = vadd.f32 %v1886, %v2556
      %v2575 = vshrl.u32 %v2055, 16
      %v2577 = vshll.u32 %v2055, 16
      %v2579 = vrot.slane %v2577, 1
      %v2580 = vor.u32 %v2575, %v2579
      %v2582 = vshll.u32 %v2065, 16
      %v2584 = vrot.slane %v2582, 1
      %v2585 = vsel %vm662, %v2580, %v2584
      %v2589 = vrot.slane %v2055, 1
      %v2590 = vrot.slane %v2065, 1
      %v2591 = vsel %vm783, %v2589, %v2590
      %v2593 = vld [vmem:[%s5 + $0xc0] sm:$0xf]
      %v2594 = vld [vmem:[%s5 + $0xc4] sm:$0xf]
      %v2595 = vld [vmem:[%s5 + $0xc8] sm:$0xf]
      %v2596 = vld [vmem:[%s5 + $0xcc] sm:$0xf]
      %v2597 = vld [vmem:[%s5 + $0xd0] sm:$0xf]
      %v2598 = vld [vmem:[%s5 + $0xd4] sm:$0xf]
      %v2599 = vld [vmem:[%s5 + $0xd8] sm:$0xf]
      %v2600 = vld [vmem:[%s5 + $0xdc] sm:$0xf]
      %v2601 = vld [vmem:[%s5 + $0xe0] sm:$0xf]
      %v2602 = vld [vmem:[%s5 + $0xe4] sm:$0xf]
      %v2603 = vld [vmem:[%s5 + $0xe8] sm:$0xf]
      %v2604 = vld [vmem:[%s5 + $0xec] sm:$0xf]
      %v2605 = vld [vmem:[%s5 + $0xf0] sm:$0xf]
      %v2606 = vld [vmem:[%s5 + $0xf4] sm:$0xf]
      %v2607 = vld [vmem:[%s5 + $0xf8] sm:$0xf]
      %v2608 = vld [vmem:[%s5 + $0xfc] sm:$0xf]
      %v2609 = vld [vmem:[%s5 + $0x100] sm:$0xf]
      %v2610 = vld [vmem:[%s5 + $0x104] sm:$0xf]
      %v2611 = vld [vmem:[%s5 + $0x108] sm:$0xf]
      %v2612 = vld [vmem:[%s5 + $0x10c] sm:$0xf]
      %v2613 = vld [vmem:[%s5 + $0x110] sm:$0xf]
      %v2614 = vld [vmem:[%s5 + $0x114] sm:$0xf]
      %v2615 = vld [vmem:[%s5 + $0x118] sm:$0xf]
      %v2616 = vld [vmem:[%s5 + $0x11c] sm:$0xf]
      %v2617 = vld [vmem:[%s5 + $0x120] sm:$0xf]
      %v2618 = vld [vmem:[%s5 + $0x124] sm:$0xf]
      %v2619 = vld [vmem:[%s5 + $0x128] sm:$0xf]
      %v2620 = vld [vmem:[%s5 + $0x12c] sm:$0xf]
      %v2621 = vld [vmem:[%s5 + $0x130] sm:$0xf]
      %v2622 = vld [vmem:[%s5 + $0x134] sm:$0xf]
      %v2623 = vld [vmem:[%s5 + $0x138] sm:$0xf]
      %v2624 = vld [vmem:[%s5 + $0x13c] sm:$0xf]
      %v2625 = vld [vmem:[%s5 + $0x140] sm:$0xf]
      %v2626 = vld [vmem:[%s5 + $0x144] sm:$0xf]
      %v2627 = vld [vmem:[%s5 + $0x148] sm:$0xf]
      %v2628 = vld [vmem:[%s5 + $0x14c] sm:$0xf]
      %v2629 = vld [vmem:[%s5 + $0x150] sm:$0xf]
      %v2630 = vld [vmem:[%s5 + $0x154] sm:$0xf]
      %v2631 = vld [vmem:[%s5 + $0x158] sm:$0xf]
      %v2632 = vld [vmem:[%s5 + $0x15c] sm:$0xf]
      %v2633 = vld [vmem:[%s5 + $0x160] sm:$0xf]
      %v2634 = vld [vmem:[%s5 + $0x164] sm:$0xf]
      %v2635 = vld [vmem:[%s5 + $0x168] sm:$0xf]
      %v2636 = vld [vmem:[%s5 + $0x16c] sm:$0xf]
      %v2637 = vld [vmem:[%s5 + $0x170] sm:$0xf]
      %v2638 = vld [vmem:[%s5 + $0x174] sm:$0xf]
      %v2639 = vld [vmem:[%s5 + $0x178] sm:$0xf]
      %v2640 = vld [vmem:[%s5 + $0x17c] sm:$0xf]
      %v2689 = vunpack.c.l.b16 %v2593
      %v2690 = vunpack.c.l.b16 %v2594
      %v2691 = vunpack.c.l.b16 %v2595
      %v2692 = vunpack.c.l.b16 %v2596
      %v2693 = vunpack.c.l.b16 %v2597
      %v2694 = vunpack.c.l.b16 %v2598
      %v2695 = vunpack.c.l.b16 %v2599
      %v2696 = vunpack.c.l.b16 %v2600
      %v2697 = vunpack.c.l.b16 %v2601
      %v2698 = vunpack.c.l.b16 %v2602
      %v2699 = vunpack.c.l.b16 %v2603
      %v2700 = vunpack.c.l.b16 %v2604
      %v2701 = vunpack.c.l.b16 %v2605
      %v2702 = vunpack.c.l.b16 %v2606
      %v2703 = vunpack.c.l.b16 %v2607
      %v2704 = vunpack.c.l.b16 %v2608
      %v2705 = vunpack.c.l.b16 %v2609
      %v2706 = vunpack.c.l.b16 %v2610
      %v2707 = vunpack.c.l.b16 %v2611
      %v2708 = vunpack.c.l.b16 %v2612
      %v2709 = vunpack.c.l.b16 %v2613
      %v2710 = vunpack.c.l.b16 %v2614
      %v2711 = vunpack.c.l.b16 %v2615
      %v2712 = vunpack.c.l.b16 %v2616
      %v2713 = vunpack.c.l.b16 %v2617
      %v2714 = vunpack.c.l.b16 %v2618
      %v2715 = vunpack.c.l.b16 %v2619
      %v2716 = vunpack.c.l.b16 %v2620
      %v2717 = vunpack.c.l.b16 %v2621
      %v2718 = vunpack.c.l.b16 %v2622
      %v2719 = vunpack.c.l.b16 %v2623
      %v2720 = vunpack.c.l.b16 %v2624
      %v2721 = vunpack.c.l.b16 %v2625
      %v2722 = vunpack.c.l.b16 %v2626
      %v2723 = vunpack.c.l.b16 %v2627
      %v2724 = vunpack.c.l.b16 %v2628
      %v2725 = vunpack.c.l.b16 %v2629
      %v2726 = vunpack.c.l.b16 %v2630
      %v2727 = vunpack.c.l.b16 %v2631
      %v2728 = vunpack.c.l.b16 %v2632
      %v2729 = vunpack.c.l.b16 %v2633
      %v2730 = vunpack.c.l.b16 %v2634
      %v2731 = vunpack.c.l.b16 %v2635
      %v2732 = vunpack.c.l.b16 %v2636
      %v2733 = vunpack.c.l.b16 %v2637
      %v2734 = vunpack.c.l.b16 %v2638
      %v2735 = vunpack.c.l.b16 %v2639
      %v2736 = vunpack.c.l.b16 %v2640
      %v2737 = vpack.c.b16 %v2690, %v2689
      %v2738 = vpack.c.b16 %v2692, %v2691
      %v2739 = vpack.c.b16 %v2694, %v2693
      %v2740 = vpack.c.b16 %v2696, %v2695
      %v2741 = vpack.c.b16 %v2698, %v2697
      %v2742 = vpack.c.b16 %v2700, %v2699
      %v2743 = vpack.c.b16 %v2702, %v2701
      %v2744 = vpack.c.b16 %v2704, %v2703
      %v2745 = vpack.c.b16 %v2706, %v2705
      %v2746 = vpack.c.b16 %v2708, %v2707
      %v2747 = vpack.c.b16 %v2710, %v2709
      %v2748 = vpack.c.b16 %v2712, %v2711
      %v2749 = vpack.c.b16 %v2714, %v2713
      %v2750 = vpack.c.b16 %v2716, %v2715
      %v2751 = vpack.c.b16 %v2718, %v2717
      %v2752 = vpack.c.b16 %v2720, %v2719
      %v2753 = vpack.c.b16 %v2722, %v2721
      %v2754 = vpack.c.b16 %v2724, %v2723
      %v2755 = vpack.c.b16 %v2726, %v2725
      %v2756 = vpack.c.b16 %v2728, %v2727
      %v2757 = vpack.c.b16 %v2730, %v2729
      %v2758 = vpack.c.b16 %v2732, %v2731
      %v2759 = vpack.c.b16 %v2734, %v2733
      %v2760 = vpack.c.b16 %v2736, %v2735
      %2785 = vmatpush.bf16.msra.mxu0 %v2744
      %2786 = vmatpush.bf16.msra.mxu0 %v2743
      %2787 = vmatpush.bf16.msra.mxu0 %v2742
      %2788 = vmatpush.bf16.msra.mxu0 %v2741
      %2789 = vmatpush.bf16.msra.mxu0 %v2740
      %2790 = vmatpush.bf16.msra.mxu0 %v2739
      %2791 = vmatpush.bf16.msra.mxu0 %v2738
      %2792 = vmatpush.bf16.msra.mxu0 %v2737
      %2793 = vmatmul.bf16.gmra.mxu0 %v2048
      %v2794 = vpop.f32.mrf.mxu0
      %v2795 = vadd.f32 0.0, %v2794
      %v2796 = vpop.f32.mrf.mxu0
      %v2797 = vadd.f32 0.0, %v2796
      %2798 = vmatmul.bf16.gmra.mxu0 %v2049
      %v2799 = vpop.f32.mrf.mxu0
      %v2800 = vadd.f32 0.0, %v2799
      %v2801 = vpop.f32.mrf.mxu0
      %v2802 = vadd.f32 0.0, %v2801
      %2803 = vmatmul.bf16.gmra.mxu0 %v2050
      %v2804 = vpop.f32.mrf.mxu0
      %v2805 = vadd.f32 0.0, %v2804
      %v2806 = vpop.f32.mrf.mxu0
      %v2807 = vadd.f32 0.0, %v2806
      %2808 = vmatmul.bf16.gmra.mxu0 %v2051
      %v2809 = vpop.f32.mrf.mxu0
      %v2810 = vadd.f32 0.0, %v2809
      %v2811 = vpop.f32.mrf.mxu0
      %v2812 = vadd.f32 0.0, %v2811
      %2813 = vmatmul.bf16.gmra.mxu0 %v2052
      %v2814 = vpop.f32.mrf.mxu0
      %v2815 = vadd.f32 0.0, %v2814
      %v2816 = vpop.f32.mrf.mxu0
      %v2817 = vadd.f32 0.0, %v2816
      %2818 = vmatmul.bf16.gmra.mxu0 %v2053
      %v2819 = vpop.f32.mrf.mxu0
      %v2820 = vadd.f32 0.0, %v2819
      %v2821 = vpop.f32.mrf.mxu0
      %v2822 = vadd.f32 0.0, %v2821
      %2823 = vmatmul.bf16.gmra.mxu0 %v2054
      %v2824 = vpop.f32.mrf.mxu0
      %v2825 = vadd.f32 0.0, %v2824
      %v2826 = vpop.f32.mrf.mxu0
      %v2827 = vadd.f32 0.0, %v2826
      %2828 = vmatmul.bf16.gmra.mxu0 %v2055
      %v2829 = vpop.f32.mrf.mxu0
      %v2830 = vadd.f32 0.0, %v2829
      %v2831 = vpop.f32.mrf.mxu0
      %v2832 = vadd.f32 0.0, %v2831
      %2833 = vdwg.mxu0
      %2834 = vmatpush.bf16.msra.mxu0 %v2752
      %2835 = vmatpush.bf16.msra.mxu0 %v2751
      %2836 = vmatpush.bf16.msra.mxu0 %v2750
      %2837 = vmatpush.bf16.msra.mxu0 %v2749
      %2838 = vmatpush.bf16.msra.mxu0 %v2748
      %2839 = vmatpush.bf16.msra.mxu0 %v2747
      %2840 = vmatpush.bf16.msra.mxu0 %v2746
      %2841 = vmatpush.bf16.msra.mxu0 %v2745
      %2842 = vmatmul.bf16.gmra.mxu0 %v2090
      %v2843 = vpop.f32.mrf.mxu0
      %v2844 = vadd.f32 %v2795, %v2843
      %v2845 = vpop.f32.mrf.mxu0
      %v2846 = vadd.f32 %v2797, %v2845
      %2847 = vmatmul.bf16.gmra.mxu0 %v2102
      %v2848 = vpop.f32.mrf.mxu0
      %v2849 = vadd.f32 %v2800, %v2848
      %v2850 = vpop.f32.mrf.mxu0
      %v2851 = vadd.f32 %v2802, %v2850
      %2852 = vmatmul.bf16.gmra.mxu0 %v2114
      %v2853 = vpop.f32.mrf.mxu0
      %v2854 = vadd.f32 %v2805, %v2853
      %v2855 = vpop.f32.mrf.mxu0
      %v2856 = vadd.f32 %v2807, %v2855
      %2857 = vmatmul.bf16.gmra.mxu0 %v2126
      %v2858 = vpop.f32.mrf.mxu0
      %v2859 = vadd.f32 %v2810, %v2858
      %v2860 = vpop.f32.mrf.mxu0
      %v2861 = vadd.f32 %v2812, %v2860
      %2862 = vmatmul.bf16.gmra.mxu0 %v2138
      %v2863 = vpop.f32.mrf.mxu0
      %v2864 = vadd.f32 %v2815, %v2863
      %v2865 = vpop.f32.mrf.mxu0
      %v2866 = vadd.f32 %v2817, %v2865
      %2867 = vmatmul.bf16.gmra.mxu0 %v2150
      %v2868 = vpop.f32.mrf.mxu0
      %v2869 = vadd.f32 %v2820, %v2868
      %v2870 = vpop.f32.mrf.mxu0
      %v2871 = vadd.f32 %v2822, %v2870
      %2872 = vmatmul.bf16.gmra.mxu0 %v2162
      %v2873 = vpop.f32.mrf.mxu0
      %v2874 = vadd.f32 %v2825, %v2873
      %v2875 = vpop.f32.mrf.mxu0
      %v2876 = vadd.f32 %v2827, %v2875
      %2877 = vmatmul.bf16.gmra.mxu0 %v2585
      %v2878 = vpop.f32.mrf.mxu0
      %v2879 = vadd.f32 %v2830, %v2878
      %v2880 = vpop.f32.mrf.mxu0
      %v2881 = vadd.f32 %v2832, %v2880
      %2882 = vdwg.mxu0
      %2883 = vmatpush.bf16.msra.mxu0 %v2760
      %2884 = vmatpush.bf16.msra.mxu0 %v2759
      %2885 = vmatpush.bf16.msra.mxu0 %v2758
      %2886 = vmatpush.bf16.msra.mxu0 %v2757
      %2887 = vmatpush.bf16.msra.mxu0 %v2756
      %2888 = vmatpush.bf16.msra.mxu0 %v2755
      %2889 = vmatpush.bf16.msra.mxu0 %v2754
      %2890 = vmatpush.bf16.msra.mxu0 %v2753
      %2891 = vmatmul.bf16.gmra.mxu0 %v2192
      %v2892 = vpop.f32.mrf.mxu0
      %v2893 = vadd.f32 %v2844, %v2892
      %v2894 = vpop.f32.mrf.mxu0
      %v2895 = vadd.f32 %v2846, %v2894
      %2896 = vmatmul.bf16.gmra.mxu0 %v2195
      %v2897 = vpop.f32.mrf.mxu0
      %v2898 = vadd.f32 %v2849, %v2897
      %v2899 = vpop.f32.mrf.mxu0
      %v2900 = vadd.f32 %v2851, %v2899
      %2901 = vmatmul.bf16.gmra.mxu0 %v2198
      %v2902 = vpop.f32.mrf.mxu0
      %v2903 = vadd.f32 %v2854, %v2902
      %v2904 = vpop.f32.mrf.mxu0
      %v2905 = vadd.f32 %v2856, %v2904
      %2906 = vmatmul.bf16.gmra.mxu0 %v2201
      %v2907 = vpop.f32.mrf.mxu0
      %v2908 = vadd.f32 %v2859, %v2907
      %v2909 = vpop.f32.mrf.mxu0
      %v2910 = vadd.f32 %v2861, %v2909
      %2911 = vmatmul.bf16.gmra.mxu0 %v2204
      %v2912 = vpop.f32.mrf.mxu0
      %v2913 = vadd.f32 %v2864, %v2912
      %v2914 = vpop.f32.mrf.mxu0
      %v2915 = vadd.f32 %v2866, %v2914
      %2916 = vmatmul.bf16.gmra.mxu0 %v2207
      %v2917 = vpop.f32.mrf.mxu0
      %v2918 = vadd.f32 %v2869, %v2917
      %v2919 = vpop.f32.mrf.mxu0
      %v2920 = vadd.f32 %v2871, %v2919
      %2921 = vmatmul.bf16.gmra.mxu0 %v2210
      %v2922 = vpop.f32.mrf.mxu0
      %v2923 = vadd.f32 %v2874, %v2922
      %v2924 = vpop.f32.mrf.mxu0
      %v2925 = vadd.f32 %v2876, %v2924
      %2926 = vmatmul.bf16.gmra.mxu0 %v2591
      %v2927 = vpop.f32.mrf.mxu0
      %v2928 = vadd.f32 %v2879, %v2927
      %v2929 = vpop.f32.mrf.mxu0
      %v2930 = vadd.f32 %v2881, %v2929
      %2931 = vdwg.mxu0
      %v2932 = vadd.f32 %v2558, %v2893
      %v2933 = vadd.f32 %v2559, %v2895
      %v2934 = vadd.f32 %v2560, %v2898
      %v2935 = vadd.f32 %v2561, %v2900
      %v2936 = vadd.f32 %v2562, %v2903
      %v2937 = vadd.f32 %v2563, %v2905
      %v2938 = vadd.f32 %v2564, %v2908
      %v2939 = vadd.f32 %v2565, %v2910
      %v2940 = vadd.f32 %v2566, %v2913
      %v2941 = vadd.f32 %v2567, %v2915
      %v2942 = vadd.f32 %v2568, %v2918
      %v2943 = vadd.f32 %v2569, %v2920
      %v2944 = vadd.f32 %v2570, %v2923
      %v2945 = vadd.f32 %v2571, %v2925
      %v2946 = vadd.f32 %v2572, %v2928
      %v2947 = vadd.f32 %v2573, %v2930
      %v2949 = vshrl.u32 %v2056, 16
      %v2951 = vshll.u32 %v2056, 16
      %v2953 = vrot.slane %v2951, 1
      %v2954 = vor.u32 %v2949, %v2953
      %v2956 = vshll.u32 %v2066, 16
      %v2958 = vrot.slane %v2956, 1
      %v2959 = vsel %vm662, %v2954, %v2958
      %v2963 = vrot.slane %v2056, 1
      %v2964 = vrot.slane %v2066, 1
      %v2965 = vsel %vm783, %v2963, %v2964
      %v2967 = vld [vmem:[%s5 + $0x180] sm:$0xf]
      %v2968 = vld [vmem:[%s5 + $0x184] sm:$0xf]
      %v2969 = vld [vmem:[%s5 + $0x188] sm:$0xf]
      %v2970 = vld [vmem:[%s5 + $0x18c] sm:$0xf]
      %v2971 = vld [vmem:[%s5 + $0x190] sm:$0xf]
      %v2972 = vld [vmem:[%s5 + $0x194] sm:$0xf]
      %v2973 = vld [vmem:[%s5 + $0x198] sm:$0xf]
      %v2974 = vld [vmem:[%s5 + $0x19c] sm:$0xf]
      %v2975 = vld [vmem:[%s5 + $0x1a0] sm:$0xf]
      %v2976 = vld [vmem:[%s5 + $0x1a4] sm:$0xf]
      %v2977 = vld [vmem:[%s5 + $0x1a8] sm:$0xf]
      %v2978 = vld [vmem:[%s5 + $0x1ac] sm:$0xf]
      %v2979 = vld [vmem:[%s5 + $0x1b0] sm:$0xf]
      %v2980 = vld [vmem:[%s5 + $0x1b4] sm:$0xf]
      %v2981 = vld [vmem:[%s5 + $0x1b8] sm:$0xf]
      %v2982 = vld [vmem:[%s5 + $0x1bc] sm:$0xf]
      %v2983 = vld [vmem:[%s5 + $0x1c0] sm:$0xf]
      %v2984 = vld [vmem:[%s5 + $0x1c4] sm:$0xf]
      %v2985 = vld [vmem:[%s5 + $0x1c8] sm:$0xf]
      %v2986 = vld [vmem:[%s5 + $0x1cc] sm:$0xf]
      %v2987 = vld [vmem:[%s5 + $0x1d0] sm:$0xf]
      %v2988 = vld [vmem:[%s5 + $0x1d4] sm:$0xf]
      %v2989 = vld [vmem:[%s5 + $0x1d8] sm:$0xf]
      %v2990 = vld [vmem:[%s5 + $0x1dc] sm:$0xf]
      %v2991 = vld [vmem:[%s5 + $0x1e0] sm:$0xf]
      %v2992 = vld [vmem:[%s5 + $0x1e4] sm:$0xf]
      %v2993 = vld [vmem:[%s5 + $0x1e8] sm:$0xf]
      %v2994 = vld [vmem:[%s5 + $0x1ec] sm:$0xf]
      %v2995 = vld [vmem:[%s5 + $0x1f0] sm:$0xf]
      %v2996 = vld [vmem:[%s5 + $0x1f4] sm:$0xf]
      %v2997 = vld [vmem:[%s5 + $0x1f8] sm:$0xf]
      %v2998 = vld [vmem:[%s5 + $0x1fc] sm:$0xf]
      %v2999 = vld [vmem:[%s5 + $0x200] sm:$0xf]
      %v3000 = vld [vmem:[%s5 + $0x204] sm:$0xf]
      %v3001 = vld [vmem:[%s5 + $0x208] sm:$0xf]
      %v3002 = vld [vmem:[%s5 + $0x20c] sm:$0xf]
      %v3003 = vld [vmem:[%s5 + $0x210] sm:$0xf]
      %v3004 = vld [vmem:[%s5 + $0x214] sm:$0xf]
      %v3005 = vld [vmem:[%s5 + $0x218] sm:$0xf]
      %v3006 = vld [vmem:[%s5 + $0x21c] sm:$0xf]
      %v3007 = vld [vmem:[%s5 + $0x220] sm:$0xf]
      %v3008 = vld [vmem:[%s5 + $0x224] sm:$0xf]
      %v3009 = vld [vmem:[%s5 + $0x228] sm:$0xf]
      %v3010 = vld [vmem:[%s5 + $0x22c] sm:$0xf]
      %v3011 = vld [vmem:[%s5 + $0x230] sm:$0xf]
      %v3012 = vld [vmem:[%s5 + $0x234] sm:$0xf]
      %v3013 = vld [vmem:[%s5 + $0x238] sm:$0xf]
      %v3014 = vld [vmem:[%s5 + $0x23c] sm:$0xf]
      %v3063 = vunpack.c.l.b16 %v2967
      %v3064 = vunpack.c.l.b16 %v2968
      %v3065 = vunpack.c.l.b16 %v2969
      %v3066 = vunpack.c.l.b16 %v2970
      %v3067 = vunpack.c.l.b16 %v2971
      %v3068 = vunpack.c.l.b16 %v2972
      %v3069 = vunpack.c.l.b16 %v2973
      %v3070 = vunpack.c.l.b16 %v2974
      %v3071 = vunpack.c.l.b16 %v2975
      %v3072 = vunpack.c.l.b16 %v2976
      %v3073 = vunpack.c.l.b16 %v2977
      %v3074 = vunpack.c.l.b16 %v2978
      %v3075 = vunpack.c.l.b16 %v2979
      %v3076 = vunpack.c.l.b16 %v2980
      %v3077 = vunpack.c.l.b16 %v2981
      %v3078 = vunpack.c.l.b16 %v2982
      %v3079 = vunpack.c.l.b16 %v2983
      %v3080 = vunpack.c.l.b16 %v2984
      %v3081 = vunpack.c.l.b16 %v2985
      %v3082 = vunpack.c.l.b16 %v2986
      %v3083 = vunpack.c.l.b16 %v2987
      %v3084 = vunpack.c.l.b16 %v2988
      %v3085 = vunpack.c.l.b16 %v2989
      %v3086 = vunpack.c.l.b16 %v2990
      %v3087 = vunpack.c.l.b16 %v2991
      %v3088 = vunpack.c.l.b16 %v2992
      %v3089 = vunpack.c.l.b16 %v2993
      %v3090 = vunpack.c.l.b16 %v2994
      %v3091 = vunpack.c.l.b16 %v2995
      %v3092 = vunpack.c.l.b16 %v2996
      %v3093 = vunpack.c.l.b16 %v2997
      %v3094 = vunpack.c.l.b16 %v2998
      %v3095 = vunpack.c.l.b16 %v2999
      %v3096 = vunpack.c.l.b16 %v3000
      %v3097 = vunpack.c.l.b16 %v3001
      %v3098 = vunpack.c.l.b16 %v3002
      %v3099 = vunpack.c.l.b16 %v3003
      %v3100 = vunpack.c.l.b16 %v3004
      %v3101 = vunpack.c.l.b16 %v3005
      %v3102 = vunpack.c.l.b16 %v3006
      %v3103 = vunpack.c.l.b16 %v3007
      %v3104 = vunpack.c.l.b16 %v3008
      %v3105 = vunpack.c.l.b16 %v3009
      %v3106 = vunpack.c.l.b16 %v3010
      %v3107 = vunpack.c.l.b16 %v3011
      %v3108 = vunpack.c.l.b16 %v3012
      %v3109 = vunpack.c.l.b16 %v3013
      %v3110 = vunpack.c.l.b16 %v3014
      %v3111 = vpack.c.b16 %v3064, %v3063
      %v3112 = vpack.c.b16 %v3066, %v3065
      %v3113 = vpack.c.b16 %v3068, %v3067
      %v3114 = vpack.c.b16 %v3070, %v3069
      %v3115 = vpack.c.b16 %v3072, %v3071
      %v3116 = vpack.c.b16 %v3074, %v3073
      %v3117 = vpack.c.b16 %v3076, %v3075
      %v3118 = vpack.c.b16 %v3078, %v3077
      %v3119 = vpack.c.b16 %v3080, %v3079
      %v3120 = vpack.c.b16 %v3082, %v3081
      %v3121 = vpack.c.b16 %v3084, %v3083
      %v3122 = vpack.c.b16 %v3086, %v3085
      %v3123 = vpack.c.b16 %v3088, %v3087
      %v3124 = vpack.c.b16 %v3090, %v3089
      %v3125 = vpack.c.b16 %v3092, %v3091
      %v3126 = vpack.c.b16 %v3094, %v3093
      %v3127 = vpack.c.b16 %v3096, %v3095
      %v3128 = vpack.c.b16 %v3098, %v3097
      %v3129 = vpack.c.b16 %v3100, %v3099
      %v3130 = vpack.c.b16 %v3102, %v3101
      %v3131 = vpack.c.b16 %v3104, %v3103
      %v3132 = vpack.c.b16 %v3106, %v3105
      %v3133 = vpack.c.b16 %v3108, %v3107
      %v3134 = vpack.c.b16 %v3110, %v3109
      %3159 = vmatpush.bf16.msra.mxu0 %v3118
      %3160 = vmatpush.bf16.msra.mxu0 %v3117
      %3161 = vmatpush.bf16.msra.mxu0 %v3116
      %3162 = vmatpush.bf16.msra.mxu0 %v3115
      %3163 = vmatpush.bf16.msra.mxu0 %v3114
      %3164 = vmatpush.bf16.msra.mxu0 %v3113
      %3165 = vmatpush.bf16.msra.mxu0 %v3112
      %3166 = vmatpush.bf16.msra.mxu0 %v3111
      %3167 = vmatmul.bf16.gmra.mxu0 %v2049
      %v3168 = vpop.f32.mrf.mxu0
      %v3169 = vadd.f32 0.0, %v3168
      %v3170 = vpop.f32.mrf.mxu0
      %v3171 = vadd.f32 0.0, %v3170
      %3172 = vmatmul.bf16.gmra.mxu0 %v2050
      %v3173 = vpop.f32.mrf.mxu0
      %v3174 = vadd.f32 0.0, %v3173
      %v3175 = vpop.f32.mrf.mxu0
      %v3176 = vadd.f32 0.0, %v3175
      %3177 = vmatmul.bf16.gmra.mxu0 %v2051
      %v3178 = vpop.f32.mrf.mxu0
      %v3179 = vadd.f32 0.0, %v3178
      %v3180 = vpop.f32.mrf.mxu0
      %v3181 = vadd.f32 0.0, %v3180
      %3182 = vmatmul.bf16.gmra.mxu0 %v2052
      %v3183 = vpop.f32.mrf.mxu0
      %v3184 = vadd.f32 0.0, %v3183
      %v3185 = vpop.f32.mrf.mxu0
      %v3186 = vadd.f32 0.0, %v3185
      %3187 = vmatmul.bf16.gmra.mxu0 %v2053
      %v3188 = vpop.f32.mrf.mxu0
      %v3189 = vadd.f32 0.0, %v3188
      %v3190 = vpop.f32.mrf.mxu0
      %v3191 = vadd.f32 0.0, %v3190
      %3192 = vmatmul.bf16.gmra.mxu0 %v2054
      %v3193 = vpop.f32.mrf.mxu0
      %v3194 = vadd.f32 0.0, %v3193
      %v3195 = vpop.f32.mrf.mxu0
      %v3196 = vadd.f32 0.0, %v3195
      %3197 = vmatmul.bf16.gmra.mxu0 %v2055
      %v3198 = vpop.f32.mrf.mxu0
      %v3199 = vadd.f32 0.0, %v3198
      %v3200 = vpop.f32.mrf.mxu0
      %v3201 = vadd.f32 0.0, %v3200
      %3202 = vmatmul.bf16.gmra.mxu0 %v2056
      %v3203 = vpop.f32.mrf.mxu0
      %v3204 = vadd.f32 0.0, %v3203
      %v3205 = vpop.f32.mrf.mxu0
      %v3206 = vadd.f32 0.0, %v3205
      %3207 = vdwg.mxu0
      %3208 = vmatpush.bf16.msra.mxu0 %v3126
      %3209 = vmatpush.bf16.msra.mxu0 %v3125
      %3210 = vmatpush.bf16.msra.mxu0 %v3124
      %3211 = vmatpush.bf16.msra.mxu0 %v3123
      %3212 = vmatpush.bf16.msra.mxu0 %v3122
      %3213 = vmatpush.bf16.msra.mxu0 %v3121
      %3214 = vmatpush.bf16.msra.mxu0 %v3120
      %3215 = vmatpush.bf16.msra.mxu0 %v3119
      %3216 = vmatmul.bf16.gmra.mxu0 %v2102
      %v3217 = vpop.f32.mrf.mxu0
      %v3218 = vadd.f32 %v3169, %v3217
      %v3219 = vpop.f32.mrf.mxu0
      %v3220 = vadd.f32 %v3171, %v3219
      %3221 = vmatmul.bf16.gmra.mxu0 %v2114
      %v3222 = vpop.f32.mrf.mxu0
      %v3223 = vadd.f32 %v3174, %v3222
      %v3224 = vpop.f32.mrf.mxu0
      %v3225 = vadd.f32 %v3176, %v3224
      %3226 = vmatmul.bf16.gmra.mxu0 %v2126
      %v3227 = vpop.f32.mrf.mxu0
      %v3228 = vadd.f32 %v3179, %v3227
      %v3229 = vpop.f32.mrf.mxu0
      %v3230 = vadd.f32 %v3181, %v3229
      %3231 = vmatmul.bf16.gmra.mxu0 %v2138
      %v3232 = vpop.f32.mrf.mxu0
      %v3233 = vadd.f32 %v3184, %v3232
      %v3234 = vpop.f32.mrf.mxu0
      %v3235 = vadd.f32 %v3186, %v3234
      %3236 = vmatmul.bf16.gmra.mxu0 %v2150
      %v3237 = vpop.f32.mrf.mxu0
      %v3238 = vadd.f32 %v3189, %v3237
      %v3239 = vpop.f32.mrf.mxu0
      %v3240 = vadd.f32 %v3191, %v3239
      %3241 = vmatmul.bf16.gmra.mxu0 %v2162
      %v3242 = vpop.f32.mrf.mxu0
      %v3243 = vadd.f32 %v3194, %v3242
      %v3244 = vpop.f32.mrf.mxu0
      %v3245 = vadd.f32 %v3196, %v3244
      %3246 = vmatmul.bf16.gmra.mxu0 %v2585
      %v3247 = vpop.f32.mrf.mxu0
      %v3248 = vadd.f32 %v3199, %v3247
      %v3249 = vpop.f32.mrf.mxu0
      %v3250 = vadd.f32 %v3201, %v3249
      %3251 = vmatmul.bf16.gmra.mxu0 %v2959
      %v3252 = vpop.f32.mrf.mxu0
      %v3253 = vadd.f32 %v3204, %v3252
      %v3254 = vpop.f32.mrf.mxu0
      %v3255 = vadd.f32 %v3206, %v3254
      %3256 = vdwg.mxu0
      %3257 = vmatpush.bf16.msra.mxu0 %v3134
      %3258 = vmatpush.bf16.msra.mxu0 %v3133
      %3259 = vmatpush.bf16.msra.mxu0 %v3132
      %3260 = vmatpush.bf16.msra.mxu0 %v3131
      %3261 = vmatpush.bf16.msra.mxu0 %v3130
      %3262 = vmatpush.bf16.msra.mxu0 %v3129
      %3263 = vmatpush.bf16.msra.mxu0 %v3128
      %3264 = vmatpush.bf16.msra.mxu0 %v3127
      %3265 = vmatmul.bf16.gmra.mxu0 %v2195
      %v3266 = vpop.f32.mrf.mxu0
      %v3267 = vadd.f32 %v3218, %v3266
      %v3268 = vpop.f32.mrf.mxu0
      %v3269 = vadd.f32 %v3220, %v3268
      %3270 = vmatmul.bf16.gmra.mxu0 %v2198
      %v3271 = vpop.f32.mrf.mxu0
      %v3272 = vadd.f32 %v3223, %v3271
      %v3273 = vpop.f32.mrf.mxu0
      %v3274 = vadd.f32 %v3225, %v3273
      %3275 = vmatmul.bf16.gmra.mxu0 %v2201
      %v3276 = vpop.f32.mrf.mxu0
      %v3277 = vadd.f32 %v3228, %v3276
      %v3278 = vpop.f32.mrf.mxu0
      %v3279 = vadd.f32 %v3230, %v3278
      %3280 = vmatmul.bf16.gmra.mxu0 %v2204
      %v3281 = vpop.f32.mrf.mxu0
      %v3282 = vadd.f32 %v3233, %v3281
      %v3283 = vpop.f32.mrf.mxu0
      %v3284 = vadd.f32 %v3235, %v3283
      %3285 = vmatmul.bf16.gmra.mxu0 %v2207
      %v3286 = vpop.f32.mrf.mxu0
      %v3287 = vadd.f32 %v3238, %v3286
      %v3288 = vpop.f32.mrf.mxu0
      %v3289 = vadd.f32 %v3240, %v3288
      %3290 = vmatmul.bf16.gmra.mxu0 %v2210
      %v3291 = vpop.f32.mrf.mxu0
      %v3292 = vadd.f32 %v3243, %v3291
      %v3293 = vpop.f32.mrf.mxu0
      %v3294 = vadd.f32 %v3245, %v3293
      %3295 = vmatmul.bf16.gmra.mxu0 %v2591
      %v3296 = vpop.f32.mrf.mxu0
      %v3297 = vadd.f32 %v3248, %v3296
      %v3298 = vpop.f32.mrf.mxu0
      %v3299 = vadd.f32 %v3250, %v3298
      %3300 = vmatmul.bf16.gmra.mxu0 %v2965
      %v3301 = vpop.f32.mrf.mxu0
      %v3302 = vadd.f32 %v3253, %v3301
      %v3303 = vpop.f32.mrf.mxu0
      %v3304 = vadd.f32 %v3255, %v3303
      %3305 = vdwg.mxu0
      %v3306 = vadd.f32 %v2932, %v3267
      %v3307 = vadd.f32 %v2933, %v3269
      %v3308 = vadd.f32 %v2934, %v3272
      %v3309 = vadd.f32 %v2935, %v3274
      %v3310 = vadd.f32 %v2936, %v3277
      %v3311 = vadd.f32 %v2937, %v3279
      %v3312 = vadd.f32 %v2938, %v3282
      %v3313 = vadd.f32 %v2939, %v3284
      %v3314 = vadd.f32 %v2940, %v3287
      %v3315 = vadd.f32 %v2941, %v3289
      %v3316 = vadd.f32 %v2942, %v3292
      %v3317 = vadd.f32 %v2943, %v3294
      %v3318 = vadd.f32 %v2944, %v3297
      %v3319 = vadd.f32 %v2945, %v3299
      %v3320 = vadd.f32 %v2946, %v3302
      %v3321 = vadd.f32 %v2947, %v3304
      %v3322 = vld [vmem:[%s6] sm:$0x1]
      %v3324 = vperm.slane %v3322, 0
      %v3326 = vadd.f32 %v3306, %v3324
      %v3327 = vadd.f32 %v3307, %v3324
      %v3328 = vadd.f32 %v3308, %v3324
      %v3329 = vadd.f32 %v3309, %v3324
      %v3330 = vadd.f32 %v3310, %v3324
      %v3331 = vadd.f32 %v3311, %v3324
      %v3332 = vadd.f32 %v3312, %v3324
      %v3333 = vadd.f32 %v3313, %v3324
      %v3334 = vadd.f32 %v3314, %v3324
      %v3335 = vadd.f32 %v3315, %v3324
      %v3336 = vadd.f32 %v3316, %v3324
      %v3337 = vadd.f32 %v3317, %v3324
      %v3338 = vadd.f32 %v3318, %v3324
      %v3339 = vadd.f32 %v3319, %v3324
      %v3340 = vadd.f32 %v3320, %v3324
      %v3341 = vadd.f32 %v3321, %v3324
      %v3342 = vpack.c.bf16 %v3326, %v3326
      %v3343 = vpack.c.bf16 %v3327, %v3327
      %v3344 = vpack.c.bf16 %v3328, %v3328
      %v3345 = vpack.c.bf16 %v3329, %v3329
      %v3346 = vpack.c.bf16 %v3330, %v3330
      %v3347 = vpack.c.bf16 %v3331, %v3331
      %v3348 = vpack.c.bf16 %v3332, %v3332
      %v3349 = vpack.c.bf16 %v3333, %v3333
      %v3350 = vpack.c.bf16 %v3334, %v3334
      %v3351 = vpack.c.bf16 %v3335, %v3335
      %v3352 = vpack.c.bf16 %v3336, %v3336
      %v3353 = vpack.c.bf16 %v3337, %v3337
      %v3354 = vpack.c.bf16 %v3338, %v3338
      %v3355 = vpack.c.bf16 %v3339, %v3339
      %v3356 = vpack.c.bf16 %v3340, %v3340
      %v3357 = vpack.c.bf16 %v3341, %v3341
      %3358 = vst [vmem:[%s468] sm:$0xf] %v3342
      %3359 = vst [vmem:[%s468 + $0x4] sm:$0xf] %v3343
      %3360 = vst [vmem:[%s468 + $0x8] sm:$0xf] %v3344
      %3361 = vst [vmem:[%s468 + $0xc] sm:$0xf] %v3345
      %3362 = vst [vmem:[%s468 + $0x10] sm:$0xf] %v3346
      %3363 = vst [vmem:[%s468 + $0x14] sm:$0xf] %v3347
      %3364 = vst [vmem:[%s468 + $0x18] sm:$0xf] %v3348
      %3365 = vst [vmem:[%s468 + $0x1c] sm:$0xf] %v3349
      %3366 = vst [vmem:[%s468 + $0x20] sm:$0xf] %v3350
      %3367 = vst [vmem:[%s468 + $0x24] sm:$0xf] %v3351
      %3368 = vst [vmem:[%s468 + $0x28] sm:$0xf] %v3352
      %3369 = vst [vmem:[%s468 + $0x2c] sm:$0xf] %v3353
      %3370 = vst [vmem:[%s468 + $0x30] sm:$0xf] %v3354
      %3371 = vst [vmem:[%s468 + $0x34] sm:$0xf] %v3355
      %3372 = vst [vmem:[%s468 + $0x38] sm:$0xf] %v3356
      %3373 = vst [vmem:[%s468 + $0x3c] sm:$0xf] %v3357
      %v3374 = vadd.f32 %v3326, %v3327
      %v3375 = vadd.f32 %v3374, %v3328
      %v3376 = vadd.f32 %v3375, %v3329
      %v3377 = vadd.f32 %v3376, %v3330
      %v3378 = vadd.f32 %v3377, %v3331
      %v3379 = vadd.f32 %v3378, %v3332
      %v3380 = vadd.f32 %v3379, %v3333
      %v3381 = vadd.f32 %v3380, %v3334
      %v3382 = vadd.f32 %v3381, %v3335
      %v3383 = vadd.f32 %v3382, %v3336
      %v3384 = vadd.f32 %v3383, %v3337
      %v3385 = vadd.f32 %v3384, %v3338
      %v3386 = vadd.f32 %v3385, %v3339
      %v3387 = vadd.f32 %v3386, %v3340
      %v3388 = vadd.f32 %v3387, %v3341
      %v3389 = vrot.slane %v3388, 4
      %v3390 = vadd.f32 %v3388, %v3389
      %v3391 = vrot.slane %v3390, 2
      %v3392 = vadd.f32 %v3390, %v3391
      %v3393 = vrot.slane %v3392, 1
      %v3394 = vadd.f32 %v3392, %v3393
      %v3395 = vmul.f32 %v3326, %v3326
      %v3396 = vmul.f32 %v3327, %v3327
      %v3397 = vmul.f32 %v3328, %v3328
      %v3398 = vmul.f32 %v3329, %v3329
      %v3399 = vmul.f32 %v3330, %v3330
      %v3400 = vmul.f32 %v3331, %v3331
      %v3401 = vmul.f32 %v3332, %v3332
      %v3402 = vmul.f32 %v3333, %v3333
      %v3403 = vmul.f32 %v3334, %v3334
      %v3404 = vmul.f32 %v3335, %v3335
      %v3405 = vmul.f32 %v3336, %v3336
      %v3406 = vmul.f32 %v3337, %v3337
      %v3407 = vmul.f32 %v3338, %v3338
      %v3408 = vmul.f32 %v3339, %v3339
      %v3409 = vmul.f32 %v3340, %v3340
      %v3410 = vmul.f32 %v3341, %v3341
      %v3411 = vadd.f32 %v3395, %v3396
      %v3412 = vadd.f32 %v3411, %v3397
      %v3413 = vadd.f32 %v3412, %v3398
      %v3414 = vadd.f32 %v3413, %v3399
      %v3415 = vadd.f32 %v3414, %v3400
      %v3416 = vadd.f32 %v3415, %v3401
      %v3417 = vadd.f32 %v3416, %v3402
      %v3418 = vadd.f32 %v3417, %v3403
      %v3419 = vadd.f32 %v3418, %v3404
      %v3420 = vadd.f32 %v3419, %v3405
      %v3421 = vadd.f32 %v3420, %v3406
      %v3422 = vadd.f32 %v3421, %v3407
      %v3423 = vadd.f32 %v3422, %v3408
      %v3424 = vadd.f32 %v3423, %v3409
      %v3425 = vadd.f32 %v3424, %v3410
      %v3426 = vrot.slane %v3425, 4
      %v3427 = vadd.f32 %v3425, %v3426
      %v3428 = vrot.slane %v3427, 2
      %v3429 = vadd.f32 %v3427, %v3428
      %v3430 = vrot.slane %v3429, 1
      %v3431 = vadd.f32 %v3429, %v3430
      %vm3432 = vcmask 1040384
      %v3433 = vsel %vm3432, %v3394, %v3431
      %vm3434 = vcmask 1041408
      %v3435 = vsel %vm3434, %v3433, 0.0
      %3436 = vst [vmem:[%s477] sm:$0xff] %v3435
      %s3437 = smul.u32 8, %s25
      %p3438 = scmp.lt.s32.totalorder %s24, 1
      %s3439 = scalar_select %p3438, %s24, 1
      %p3440 = scmp.lt.s32.totalorder %s3437, 15
      %s3441 = scalar_select %p3440, %s3437, 15
      %s3442 = smul.addr %s3441, 2
      %s3443 = smul.addr %s3439, 32
      %s3444 = sadd.s32 %s3442, %s3443
      %s3445 = smul.addr %s3444, 4
      %s3446 = scalar_lea.vmem %s7, %s3445
      %p3447 = scmp.lt.s32.totalorder %s24, 1
      %s3448 = scalar_select %p3447, %s24, 1
      %p3449 = scmp.lt.s32.totalorder %s25, 1
      %s3450 = scalar_select %p3449, %s25, 1
      %s3451 = smul.addr %s3448, 2
      %s3452 = sadd.s32 %s3450, %s3451
      %s3453 = smul.addr %s3452, 8
      %s3454 = scalar_lea.vmem %s8, %s3453
      // Predicated region
      $region49: #{decoder_block_forward.5} parent=47 // pred_check
        %p3455 = pneg %p227
      $region50: #{decoder_block_forward.5} parent=47 // pred_check_branch
        %3457 = sbr.rel (%p3455) target = $region52
      $region51: #{decoder_block_forward.5} parent=47 // pred_region
        %s3458 = smul.u32 8, %s25
      $region52: #{decoder_block_forward.5} parent=47 // pred_fallthru
        _
      // Predicated region
      $region53: #{decoder_block_forward.5} parent=47 // pred_check
        %p3459 = pneg %p255
      $region54: #{decoder_block_forward.5} parent=47 // pred_check_branch
        %3461 = sbr.rel (%p3459) target = $region56
      $region55: #{decoder_block_forward.5} parent=47 // pred_region
        _
      $region56: #{decoder_block_forward.5} parent=47 // pred_fallthru
        _
    $region48: #{decoder_block_forward.5} parent=5 // pred_fallthru
      _
    %p3462 = scmp.le.s32.totalorder 2, %s15
    // Predicated region
    $region57: #{decoder_block_forward.5} parent=5 // pred_check
      %p3463 = pneg %p3462
    $region58: #{decoder_block_forward.5} parent=5 // pred_check_branch
      %3465 = sbr.rel (%p3463) target = $region60
    $region59: #{decoder_block_forward.5} parent=5 // pred_region
      %s3466 = ssub.s32 %s15, 2
      // Predicated region
      $region61: #{decoder_block_forward.5} parent=59 // pred_check
        %p3467 = pneg %p233
      $region62: #{decoder_block_forward.5} parent=59 // pred_check_branch
        %3469 = sbr.rel (%p3467) target = $region64
      $region63: #{decoder_block_forward.5} parent=59 // pred_region
        %s3470 = smul.u32 8, %s27
        %p3471 = scmp.lt.s32.totalorder %s26, 1
        %s3472 = scalar_select %p3471, %s26, 1
        %p3473 = scmp.lt.s32.totalorder %s3470, 15
        %s3474 = scalar_select %p3473, %s3470, 15
        %s3475 = smul.addr %s3474, 2
        %s3476 = smul.addr %s3472, 32
        %s3477 = sadd.s32 %s3475, %s3476
        %s3478 = smul.addr %s3477, 4
        %s3479 = scalar_lea.vmem %s7, %s3478
      $region64: #{decoder_block_forward.5} parent=59 // pred_fallthru
        _
      // Predicated region
      $region65: #{decoder_block_forward.5} parent=59 // pred_check
        %p3480 = pneg %p261
      $region66: #{decoder_block_forward.5} parent=59 // pred_check_branch
        %3482 = sbr.rel (%p3480) target = $region68
      $region67: #{decoder_block_forward.5} parent=59 // pred_region
        %p3483 = scmp.lt.s32.totalorder %s26, 1
        %s3484 = scalar_select %p3483, %s26, 1
        %p3485 = scmp.lt.s32.totalorder %s27, 1
        %s3486 = scalar_select %p3485, %s27, 1
        %s3487 = smul.addr %s3484, 2
        %s3488 = sadd.s32 %s3486, %s3487
        %s3489 = smul.addr %s3488, 8
        %s3490 = scalar_lea.vmem %s8, %s3489
      $region68: #{decoder_block_forward.5} parent=59 // pred_fallthru
        _
    $region60: #{decoder_block_forward.5} parent=5 // pred_fallthru
      _
  $region6: #{decoder_block_forward.5} parent=0 // loop_footer
    %s19 = sadd.s32 1, %s15
  $region7: #{decoder_block_forward.5} parent=0 // loop_footer_branch
    %14 = sbr.rel target = $region3
  $region8: #{decoder_block_forward.5} parent=0 // loop_exit
    _

</llo_original>
